<compile_context>
chip_gen: v7x
topology: tpu7x:2x2x1
jax: 0.10.0
libtpu: 0.0.40
codegen_flags: <defaults>
</compile_context>

<pallas_src>
from functools import partial

import jax
import jax.numpy as jnp
from jax.experimental import pallas as pl
from jax.experimental.pallas import tpu as pltpu

NEG_SLOPE = 0.2


def _cdiv(a, b):
    return -(-a // b)


def _round_up(a, m):
    return _cdiv(a, m) * m


# ----------------------------------------------------------------------------
# Kernel 1: 3x3 'same' conv (C_in -> 32) + bias + LeakyReLU on the temporal-
# derivative image.  Output is written directly in zero-ring-padded NHWC form
# so the conv2 kernel can consume it without any further padding in HBM.
# ----------------------------------------------------------------------------
def _conv1_kernel(x_ref, w_ref, b_ref, o_ref, *, H, W, th, wout):
    # x_ref : (Hext+2, wout+2, Cin) bf16  whole 2-ring-padded derivative image,
    #                                     VMEM-resident across row tiles.
    # w_ref : (9, Cin, C1)          bf16  w[k] = W1[:, :, di, dj].T, k = 3*di+dj
    # b_ref : (1, C1)               f32
    # o_ref : (th, wout, C1)        bf16  row tile of the ring-padded output
    rt = pl.program_id(1)
    row0 = rt * th
    cin = x_ref.shape[-1]
    c1 = w_ref.shape[-1]

    acc = jnp.zeros((th * wout, c1), jnp.float32)
    for k in range(9):                       # fused im2col: 9 shifted MXU matmuls
        di, dj = k // 3, k % 3
        xk = x_ref[pl.ds(row0 + di, th), dj:dj + wout, :].reshape(th * wout, cin)
        acc = acc + jnp.dot(xk, w_ref[k], preferred_element_type=jnp.float32)

    y = acc + b_ref[...]
    y = jnp.where(y > 0, y, NEG_SLOPE * y)          # f32 epilogue on the VPU
    y = y.reshape(th, wout, c1)

    # Zero everything outside the true HxW interior (padded-row r / padded-col c
    # are valid iff 1 <= r <= H and 1 <= c <= W) so the stored tile is exactly
    # the zero-padded 'same' input that conv2 expects.
    r = row0 + jax.lax.broadcasted_iota(jnp.int32, (th, wout, 1), 0)
    c = jax.lax.broadcasted_iota(jnp.int32, (th, wout, 1), 1)
    valid = (r >= 1) & (r <= H) & (c >= 1) & (c <= W)
    o_ref[...] = jnp.where(valid, y, 0.0).astype(o_ref.dtype)


def conv1_lrelu_padded(dx2, w1_9, b1, *, H, W, th):
    """dx2: (B, Hext+2, Wout+2, Cin) bf16 -> (B, Hext, Wout, C1) bf16 (ring-padded)."""
    B, hrows, wcols, cin = dx2.shape
    hext, wout = hrows - 2, wcols - 2
    c1 = w1_9.shape[-1]
    rt_a = hext // th
    return pl.pallas_call(
        partial(_conv1_kernel, H=H, W=W, th=th, wout=wout),
        out_shape=jax.ShapeDtypeStruct((B, hext, wout, c1), jnp.bfloat16),
        grid=(B, rt_a),
        in_specs=[
            pl.BlockSpec((None, hrows, wcols, cin), lambda b, r: (b, 0, 0, 0)),
            pl.BlockSpec((9, cin, c1), lambda b, r: (0, 0, 0)),
            pl.BlockSpec((1, c1), lambda b, r: (0, 0)),
        ],
        out_specs=pl.BlockSpec((None, th, wout, c1), lambda b, r: (b, r, 0, 0)),
        compiler_params=pltpu.CompilerParams(
            dimension_semantics=("parallel", "parallel")),
    )(dx2, w1_9, b1)


# ----------------------------------------------------------------------------
# Kernel 2: 3x3 'same' conv (32 -> 64) + bias + LeakyReLU, fused with the global
# mean pool (VMEM accumulator over the 'arbitrary' row-tile axis) and the final
# Linear(64 -> 128).  conv2 activations never touch HBM.
# ----------------------------------------------------------------------------
def _conv2_pool_fc_kernel(h_ref, w_ref, b_ref, wf_ref, bf_ref, o_ref, acc_ref,
                          *, H, W, th):
    # h_ref  : (Hext, Wout, C1) bf16   ring-padded conv1 output (resident per b)
    # w_ref  : (9, C1, C2)      bf16
    # b_ref  : (1, C2)          f32
    # wf_ref : (C2, M)          f32
    # bf_ref : (1, M)           f32
    # o_ref  : (1, M)           f32
    # acc_ref: (1, C2)          f32    running per-channel sum for the mean pool
    rt = pl.program_id(1)

    @pl.when(rt == 0)
    def _():
        acc_ref[...] = jnp.zeros_like(acc_ref)

    row0 = rt * th
    c1 = w_ref.shape[1]
    c2 = w_ref.shape[2]

    s = jnp.zeros((th * W, c2), jnp.float32)
    for k in range(9):                       # fused im2col: 9 shifted MXU matmuls
        di, dj = k // 3, k % 3
        xk = h_ref[pl.ds(row0 + di, th), dj:dj + W, :].reshape(th * W, c1)
        s = s + jnp.dot(xk, w_ref[k], preferred_element_type=jnp.float32)

    y = s + b_ref[...]
    y = jnp.where(y > 0, y, NEG_SLOPE * y)          # f32 epilogue on the VPU
    y = y.reshape(th, W, c2)

    # Mask the row-tile remainder beyond the true image height, then accumulate
    # the mean-pool sum in VMEM.
    r = row0 + jax.lax.broadcasted_iota(jnp.int32, (th, W, 1), 0)
    y = jnp.where(r < H, y, 0.0)
    acc_ref[...] += jnp.sum(y, axis=(0, 1), keepdims=True).reshape(1, c2)

    @pl.when(rt == pl.num_programs(1) - 1)
    def _():
        pooled = acc_ref[...] * (1.0 / (H * W))      # divide by the TRUE count
        o_ref[...] = (jnp.dot(pooled, wf_ref[...],
                              preferred_element_type=jnp.float32) + bf_ref[...])


def conv2_pool_fc(h1, w2_9, b2, wf, bf, *, H, W, th):
    B, hext, wout, c1 = h1.shape
    c2 = w2_9.shape[-1]
    m = wf.shape[-1]
    rt = _cdiv(H, th)
    out = pl.pallas_call(
        partial(_conv2_pool_fc_kernel, H=H, W=W, th=th),
        out_shape=jax.ShapeDtypeStruct((B, 1, m), jnp.float32),
        grid=(B, rt),
        in_specs=[
            pl.BlockSpec((None, hext, wout, c1), lambda b, r: (b, 0, 0, 0)),
            pl.BlockSpec((9, c1, c2), lambda b, r: (0, 0, 0)),
            pl.BlockSpec((1, c2), lambda b, r: (0, 0)),
            pl.BlockSpec((c2, m), lambda b, r: (0, 0)),
            pl.BlockSpec((1, m), lambda b, r: (0, 0)),
        ],
        out_specs=pl.BlockSpec((None, 1, m), lambda b, r: (b, 0, 0)),
        scratch_shapes=[pltpu.VMEM((1, c2), jnp.float32)],
        compiler_params=pltpu.CompilerParams(
            dimension_semantics=("parallel", "arbitrary")),
    )(h1, w2_9, b2, wf, bf)
    return out[:, 0, :]


# ----------------------------------------------------------------------------
# Parameters (deterministic synthetic init — same architecture as before)
# ----------------------------------------------------------------------------
def init_params(key, c_in):
    k1, k2, k3 = jax.random.split(key, 3)
    w1 = jax.random.normal(k1, (32, c_in, 3, 3), jnp.float32) * (2.0 / (c_in * 9)) ** 0.5
    b1 = jnp.zeros((32,), jnp.float32)
    w2 = jax.random.normal(k2, (64, 32, 3, 3), jnp.float32) * (2.0 / (32 * 9)) ** 0.5
    b2 = jnp.zeros((64,), jnp.float32)
    wf = jax.random.normal(k3, (64, 128), jnp.float32) * (1.0 / 64) ** 0.5
    bf = jnp.zeros((128,), jnp.float32)
    return dict(w1=w1, b1=b1, w2=w2, b2=b2, wf=wf, bf=bf)


# ----------------------------------------------------------------------------
# Full forward: AudioDerivativeEncoder
# ----------------------------------------------------------------------------
def audio_derivative_encoder(params, x, *, row_tile=8):
    """x: (batch, channels, t, values)  ->  (batch, 128)"""
    B, C, T, V = x.shape
    H, W = T - 1, V            # spatial extent after the temporal derivative
    th = row_tile              # at realistic sizes choose th so th*W ~ 0.5k-2k rows

    # Row/col-tiling geometry: conv2 tiles the true H rows; conv1 emits the
    # ring-padded slab conv2 needs, with the padded width rounded to a multiple
    # of 8 so in-kernel (th, W, C) <-> (th*W, C) reshapes are layout no-ops.
    rt2 = _cdiv(H, th)
    hp2 = rt2 * th + 2              # padded rows conv2 reads
    hext = _round_up(hp2, th)       # padded rows conv1 emits (multiple of th)
    wout = _round_up(W + 2, 8)      # padded cols conv1 emits

    # Temporal derivative (the module itself) + NHWC + conv-input padding:
    # plain JAX on the smallest tensor in the pipeline, fused by XLA.
    dx = x[:, :, 1:, :] - x[:, :, :-1, :]                 # (B, C, H, V)
    dx = jnp.transpose(dx, (0, 2, 3, 1))                   # (B, H, W, C)
    dx2 = jnp.pad(dx, ((0, 0), (2, hext - H), (2, wout - W), (0, 0)))
    dx2 = dx2.astype(jnp.bfloat16)                         # (B, hext+2, wout+2, C)

    # Weights in "9 shifted matmuls" form: w9[k] = W[:, :, di, dj].T, k = 3*di+dj
    c1 = params["w1"].shape[0]
    c2 = params["w2"].shape[0]
    w1_9 = jnp.transpose(params["w1"], (2, 3, 1, 0)).reshape(9, C, c1).astype(jnp.bfloat16)
    w2_9 = jnp.transpose(params["w2"], (2, 3, 1, 0)).reshape(9, c1, c2).astype(jnp.bfloat16)
    b1 = params["b1"].reshape(1, c1).astype(jnp.float32)
    b2 = params["b2"].reshape(1, c2).astype(jnp.float32)
    wf = params["wf"].astype(jnp.float32)
    bf = params["bf"].reshape(1, -1).astype(jnp.float32)

    h1 = conv1_lrelu_padded(dx2, w1_9, b1, H=H, W=W, th=th)      # (B, hext, wout, 32) bf16
    return conv2_pool_fc(h1, w2_9, b2, wf, bf, H=H, W=W, th=th)  # (B, 128) f32


# ----------------------------------------------------------------------------
# Pure-JAX f32 reference (XLA convs) for a correctness check
# ----------------------------------------------------------------------------
def _reference_forward(params, x):
    dn = ("NCHW", "OIHW", "NCHW")
    dx = x[:, :, 1:, :] - x[:, :, :-1, :]
    h = jax.lax.conv_general_dilated(dx, params["w1"], (1, 1), "SAME", dimension_numbers=dn)
    h = h + params["b1"][None, :, None, None]
    h = jnp.where(h > 0, h, NEG_SLOPE * h)
    h = jax.lax.conv_general_dilated(h, params["w2"], (1, 1), "SAME", dimension_numbers=dn)
    h = h + params["b2"][None, :, None, None]
    h = jnp.where(h > 0, h, NEG_SLOPE * h)
    pooled = jnp.mean(h, axis=(2, 3))                      # (B, 64)
    return pooled @ params["wf"] + params["bf"]


if __name__ == "__main__":
    key = jax.random.PRNGKey(0)
    kx, kp = jax.random.split(key)

    B, C, T, V = 2, 4, 16, 16
    x = jax.random.normal(kx, (B, C, T, V), jnp.float32)
    params = init_params(kp, C)

    fwd = jax.jit(audio_derivative_encoder)
    out = jax.block_until_ready(fwd(params, x))

    assert out.shape == (B, 128), out.shape
    assert bool(jnp.all(jnp.isfinite(out)))

    # bf16 MXU path vs. f32 XLA reference (generous tolerance for bf16 operands).
    ref = _reference_forward(params, x)
    err = float(jnp.max(jnp.abs(out - ref)))
    assert err < 0.25, f"max abs err vs reference: {err}"

    print("KERNEL_OK")
</pallas_src>

<mosaic_0001>
module attributes {stable_mosaic.version = 11 : i64} {
  func.func @_conv1_kernel(%arg0: i32, %arg1: i32, %arg2: memref<1x26x26x4xbf16, #tpu.memory_space<vmem>>, %arg3: memref<9x4x32xbf16, #tpu.memory_space<vmem>>, %arg4: memref<1x32xf32, #tpu.memory_space<vmem>>, %arg5: memref<1x8x24x32xbf16, #tpu.memory_space<vmem>>) attributes {dimension_semantics = [#tpu.dimension_semantics<parallel>, #tpu.dimension_semantics<parallel>], iteration_bounds = array<i64: 2, 3>, scalar_prefetch = 0 : i64, scratch_operands = 0 : i64, tpu.core_type = #tpu.core_type<tc>, window_params = [{transform_indices = @transform_0, window_bounds = array<i64: 1, 26, 26, 4>}, {pipeline_mode = #tpu.pipeline_mode<synchronous>, transform_indices = @transform_1, window_bounds = array<i64: 9, 4, 32>}, {pipeline_mode = #tpu.pipeline_mode<synchronous>, transform_indices = @transform_2, window_bounds = array<i64: 1, 32>}, {transform_indices = @transform_3, window_bounds = array<i64: 1, 8, 24, 32>}]} {
    %c8_i32 = arith.constant 8 : i32
    %0 = arith.muli %arg1, %c8_i32 : i32
    %cst = arith.constant 0.000000e+00 : f32
    %1 = vector.broadcast %cst : f32 to vector<192x32xf32>
    %c0_i32 = arith.constant 0 : i32
    %2 = arith.addi %0, %c0_i32 : i32
    %c0 = arith.constant 0 : index
    %3 = arith.index_cast %2 : i32 to index
    %c0_0 = arith.constant 0 : index
    %c0_1 = arith.constant 0 : index
    %4 = vector.load %arg2[%c0, %3, %c0_0, %c0_1] : memref<1x26x26x4xbf16, #tpu.memory_space<vmem>>, vector<1x8x24x4xbf16>
    %5 = vector.shape_cast %4 : vector<1x8x24x4xbf16> to vector<8x24x4xbf16>
    %6 = vector.shape_cast %5 : vector<8x24x4xbf16> to vector<192x4xbf16>
    %c0_2 = arith.constant 0 : index
    %c0_3 = arith.constant 0 : index
    %c0_4 = arith.constant 0 : index
    %7 = vector.load %arg3[%c0_2, %c0_3, %c0_4] : memref<9x4x32xbf16, #tpu.memory_space<vmem>>, vector<1x4x32xbf16>
    %8 = vector.shape_cast %7 : vector<1x4x32xbf16> to vector<4x32xbf16>
    %cst_5 = arith.constant dense<0.000000e+00> : vector<192x32xf32>
    %9 = tpu.matmul %6, %8, %cst_5 {dimension_numbers = #tpu.dot_dimension_numbers<[1], [0], [0], [1], [0, 0, 1, 1], [], []>} : vector<192x4xbf16>, vector<4x32xbf16>, vector<192x32xf32> -> vector<192x32xf32>
    %10 = arith.addf %1, %9 : vector<192x32xf32>
    %c0_i32_6 = arith.constant 0 : i32
    %11 = arith.addi %0, %c0_i32_6 : i32
    %c0_7 = arith.constant 0 : index
    %12 = arith.index_cast %11 : i32 to index
    %c1 = arith.constant 1 : index
    %c0_8 = arith.constant 0 : index
    %13 = vector.load %arg2[%c0_7, %12, %c1, %c0_8] : memref<1x26x26x4xbf16, #tpu.memory_space<vmem>>, vector<1x8x24x4xbf16>
    %14 = vector.shape_cast %13 : vector<1x8x24x4xbf16> to vector<8x24x4xbf16>
    %15 = vector.shape_cast %14 : vector<8x24x4xbf16> to vector<192x4xbf16>
    %c1_9 = arith.constant 1 : index
    %c0_10 = arith.constant 0 : index
    %c0_11 = arith.constant 0 : index
    %16 = vector.load %arg3[%c1_9, %c0_10, %c0_11] : memref<9x4x32xbf16, #tpu.memory_space<vmem>>, vector<1x4x32xbf16>
    %17 = vector.shape_cast %16 : vector<1x4x32xbf16> to vector<4x32xbf16>
    %cst_12 = arith.constant dense<0.000000e+00> : vector<192x32xf32>
    %18 = tpu.matmul %15, %17, %cst_12 {dimension_numbers = #tpu.dot_dimension_numbers<[1], [0], [0], [1], [0, 0, 1, 1], [], []>} : vector<192x4xbf16>, vector<4x32xbf16>, vector<192x32xf32> -> vector<192x32xf32>
    %19 = arith.addf %10, %18 : vector<192x32xf32>
    %c0_i32_13 = arith.constant 0 : i32
    %20 = arith.addi %0, %c0_i32_13 : i32
    %c0_14 = arith.constant 0 : index
    %21 = arith.index_cast %20 : i32 to index
    %c2 = arith.constant 2 : index
    %c0_15 = arith.constant 0 : index
    %22 = vector.load %arg2[%c0_14, %21, %c2, %c0_15] : memref<1x26x26x4xbf16, #tpu.memory_space<vmem>>, vector<1x8x24x4xbf16>
    %23 = vector.shape_cast %22 : vector<1x8x24x4xbf16> to vector<8x24x4xbf16>
    %24 = vector.shape_cast %23 : vector<8x24x4xbf16> to vector<192x4xbf16>
    %c2_16 = arith.constant 2 : index
    %c0_17 = arith.constant 0 : index
    %c0_18 = arith.constant 0 : index
    %25 = vector.load %arg3[%c2_16, %c0_17, %c0_18] : memref<9x4x32xbf16, #tpu.memory_space<vmem>>, vector<1x4x32xbf16>
    %26 = vector.shape_cast %25 : vector<1x4x32xbf16> to vector<4x32xbf16>
    %cst_19 = arith.constant dense<0.000000e+00> : vector<192x32xf32>
    %27 = tpu.matmul %24, %26, %cst_19 {dimension_numbers = #tpu.dot_dimension_numbers<[1], [0], [0], [1], [0, 0, 1, 1], [], []>} : vector<192x4xbf16>, vector<4x32xbf16>, vector<192x32xf32> -> vector<192x32xf32>
    %28 = arith.addf %19, %27 : vector<192x32xf32>
    %c1_i32 = arith.constant 1 : i32
    %29 = arith.addi %0, %c1_i32 : i32
    %c0_20 = arith.constant 0 : index
    %30 = arith.index_cast %29 : i32 to index
    %c0_21 = arith.constant 0 : index
    %c0_22 = arith.constant 0 : index
    %31 = vector.load %arg2[%c0_20, %30, %c0_21, %c0_22] : memref<1x26x26x4xbf16, #tpu.memory_space<vmem>>, vector<1x8x24x4xbf16>
    %32 = vector.shape_cast %31 : vector<1x8x24x4xbf16> to vector<8x24x4xbf16>
    %33 = vector.shape_cast %32 : vector<8x24x4xbf16> to vector<192x4xbf16>
    %c3 = arith.constant 3 : index
    %c0_23 = arith.constant 0 : index
    %c0_24 = arith.constant 0 : index
    %34 = vector.load %arg3[%c3, %c0_23, %c0_24] : memref<9x4x32xbf16, #tpu.memory_space<vmem>>, vector<1x4x32xbf16>
    %35 = vector.shape_cast %34 : vector<1x4x32xbf16> to vector<4x32xbf16>
    %cst_25 = arith.constant dense<0.000000e+00> : vector<192x32xf32>
    %36 = tpu.matmul %33, %35, %cst_25 {dimension_numbers = #tpu.dot_dimension_numbers<[1], [0], [0], [1], [0, 0, 1, 1], [], []>} : vector<192x4xbf16>, vector<4x32xbf16>, vector<192x32xf32> -> vector<192x32xf32>
    %37 = arith.addf %28, %36 : vector<192x32xf32>
    %c1_i32_26 = arith.constant 1 : i32
    %38 = arith.addi %0, %c1_i32_26 : i32
    %c0_27 = arith.constant 0 : index
    %39 = arith.index_cast %38 : i32 to index
    %c1_28 = arith.constant 1 : index
    %c0_29 = arith.constant 0 : index
    %40 = vector.load %arg2[%c0_27, %39, %c1_28, %c0_29] : memref<1x26x26x4xbf16, #tpu.memory_space<vmem>>, vector<1x8x24x4xbf16>
    %41 = vector.shape_cast %40 : vector<1x8x24x4xbf16> to vector<8x24x4xbf16>
    %42 = vector.shape_cast %41 : vector<8x24x4xbf16> to vector<192x4xbf16>
    %c4 = arith.constant 4 : index
    %c0_30 = arith.constant 0 : index
    %c0_31 = arith.constant 0 : index
    %43 = vector.load %arg3[%c4, %c0_30, %c0_31] : memref<9x4x32xbf16, #tpu.memory_space<vmem>>, vector<1x4x32xbf16>
    %44 = vector.shape_cast %43 : vector<1x4x32xbf16> to vector<4x32xbf16>
    %cst_32 = arith.constant dense<0.000000e+00> : vector<192x32xf32>
    %45 = tpu.matmul %42, %44, %cst_32 {dimension_numbers = #tpu.dot_dimension_numbers<[1], [0], [0], [1], [0, 0, 1, 1], [], []>} : vector<192x4xbf16>, vector<4x32xbf16>, vector<192x32xf32> -> vector<192x32xf32>
    %46 = arith.addf %37, %45 : vector<192x32xf32>
    %c1_i32_33 = arith.constant 1 : i32
    %47 = arith.addi %0, %c1_i32_33 : i32
    %c0_34 = arith.constant 0 : index
    %48 = arith.index_cast %47 : i32 to index
    %c2_35 = arith.constant 2 : index
    %c0_36 = arith.constant 0 : index
    %49 = vector.load %arg2[%c0_34, %48, %c2_35, %c0_36] : memref<1x26x26x4xbf16, #tpu.memory_space<vmem>>, vector<1x8x24x4xbf16>
    %50 = vector.shape_cast %49 : vector<1x8x24x4xbf16> to vector<8x24x4xbf16>
    %51 = vector.shape_cast %50 : vector<8x24x4xbf16> to vector<192x4xbf16>
    %c5 = arith.constant 5 : index
    %c0_37 = arith.constant 0 : index
    %c0_38 = arith.constant 0 : index
    %52 = vector.load %arg3[%c5, %c0_37, %c0_38] : memref<9x4x32xbf16, #tpu.memory_space<vmem>>, vector<1x4x32xbf16>
    %53 = vector.shape_cast %52 : vector<1x4x32xbf16> to vector<4x32xbf16>
    %cst_39 = arith.constant dense<0.000000e+00> : vector<192x32xf32>
    %54 = tpu.matmul %51, %53, %cst_39 {dimension_numbers = #tpu.dot_dimension_numbers<[1], [0], [0], [1], [0, 0, 1, 1], [], []>} : vector<192x4xbf16>, vector<4x32xbf16>, vector<192x32xf32> -> vector<192x32xf32>
    %55 = arith.addf %46, %54 : vector<192x32xf32>
    %c2_i32 = arith.constant 2 : i32
    %56 = arith.addi %0, %c2_i32 : i32
    %c0_40 = arith.constant 0 : index
    %57 = arith.index_cast %56 : i32 to index
    %c0_41 = arith.constant 0 : index
    %c0_42 = arith.constant 0 : index
    %58 = vector.load %arg2[%c0_40, %57, %c0_41, %c0_42] : memref<1x26x26x4xbf16, #tpu.memory_space<vmem>>, vector<1x8x24x4xbf16>
    %59 = vector.shape_cast %58 : vector<1x8x24x4xbf16> to vector<8x24x4xbf16>
    %60 = vector.shape_cast %59 : vector<8x24x4xbf16> to vector<192x4xbf16>
    %c6 = arith.constant 6 : index
    %c0_43 = arith.constant 0 : index
    %c0_44 = arith.constant 0 : index
    %61 = vector.load %arg3[%c6, %c0_43, %c0_44] : memref<9x4x32xbf16, #tpu.memory_space<vmem>>, vector<1x4x32xbf16>
    %62 = vector.shape_cast %61 : vector<1x4x32xbf16> to vector<4x32xbf16>
    %cst_45 = arith.constant dense<0.000000e+00> : vector<192x32xf32>
    %63 = tpu.matmul %60, %62, %cst_45 {dimension_numbers = #tpu.dot_dimension_numbers<[1], [0], [0], [1], [0, 0, 1, 1], [], []>} : vector<192x4xbf16>, vector<4x32xbf16>, vector<192x32xf32> -> vector<192x32xf32>
    %64 = arith.addf %55, %63 : vector<192x32xf32>
    %c2_i32_46 = arith.constant 2 : i32
    %65 = arith.addi %0, %c2_i32_46 : i32
    %c0_47 = arith.constant 0 : index
    %66 = arith.index_cast %65 : i32 to index
    %c1_48 = arith.constant 1 : index
    %c0_49 = arith.constant 0 : index
    %67 = vector.load %arg2[%c0_47, %66, %c1_48, %c0_49] : memref<1x26x26x4xbf16, #tpu.memory_space<vmem>>, vector<1x8x24x4xbf16>
    %68 = vector.shape_cast %67 : vector<1x8x24x4xbf16> to vector<8x24x4xbf16>
    %69 = vector.shape_cast %68 : vector<8x24x4xbf16> to vector<192x4xbf16>
    %c7 = arith.constant 7 : index
    %c0_50 = arith.constant 0 : index
    %c0_51 = arith.constant 0 : index
    %70 = vector.load %arg3[%c7, %c0_50, %c0_51] : memref<9x4x32xbf16, #tpu.memory_space<vmem>>, vector<1x4x32xbf16>
    %71 = vector.shape_cast %70 : vector<1x4x32xbf16> to vector<4x32xbf16>
    %cst_52 = arith.constant dense<0.000000e+00> : vector<192x32xf32>
    %72 = tpu.matmul %69, %71, %cst_52 {dimension_numbers = #tpu.dot_dimension_numbers<[1], [0], [0], [1], [0, 0, 1, 1], [], []>} : vector<192x4xbf16>, vector<4x32xbf16>, vector<192x32xf32> -> vector<192x32xf32>
    %73 = arith.addf %64, %72 : vector<192x32xf32>
    %c2_i32_53 = arith.constant 2 : i32
    %74 = arith.addi %0, %c2_i32_53 : i32
    %c0_54 = arith.constant 0 : index
    %75 = arith.index_cast %74 : i32 to index
    %c2_55 = arith.constant 2 : index
    %c0_56 = arith.constant 0 : index
    %76 = vector.load %arg2[%c0_54, %75, %c2_55, %c0_56] : memref<1x26x26x4xbf16, #tpu.memory_space<vmem>>, vector<1x8x24x4xbf16>
    %77 = vector.shape_cast %76 : vector<1x8x24x4xbf16> to vector<8x24x4xbf16>
    %78 = vector.shape_cast %77 : vector<8x24x4xbf16> to vector<192x4xbf16>
    %c8 = arith.constant 8 : index
    %c0_57 = arith.constant 0 : index
    %c0_58 = arith.constant 0 : index
    %79 = vector.load %arg3[%c8, %c0_57, %c0_58] : memref<9x4x32xbf16, #tpu.memory_space<vmem>>, vector<1x4x32xbf16>
    %80 = vector.shape_cast %79 : vector<1x4x32xbf16> to vector<4x32xbf16>
    %cst_59 = arith.constant dense<0.000000e+00> : vector<192x32xf32>
    %81 = tpu.matmul %78, %80, %cst_59 {dimension_numbers = #tpu.dot_dimension_numbers<[1], [0], [0], [1], [0, 0, 1, 1], [], []>} : vector<192x4xbf16>, vector<4x32xbf16>, vector<192x32xf32> -> vector<192x32xf32>
    %82 = arith.addf %73, %81 : vector<192x32xf32>
    %c0_60 = arith.constant 0 : index
    %c0_61 = arith.constant 0 : index
    %83 = vector.load %arg4[%c0_60, %c0_61] : memref<1x32xf32, #tpu.memory_space<vmem>>, vector<1x32xf32>
    %84 = vector.broadcast %83 : vector<1x32xf32> to vector<192x32xf32>
    %85 = arith.addf %82, %84 : vector<192x32xf32>
    %cst_62 = arith.constant 0.000000e+00 : f32
    %86 = vector.broadcast %cst_62 : f32 to vector<192x32xf32>
    %87 = arith.cmpf ogt, %85, %86 : vector<192x32xf32>
    %cst_63 = arith.constant 2.000000e-01 : f32
    %88 = vector.broadcast %cst_63 : f32 to vector<192x32xf32>
    %89 = arith.mulf %88, %85 : vector<192x32xf32>
    %90 = arith.select %87, %85, %89 : vector<192x32xi1>, vector<192x32xf32>
    %91 = vector.shape_cast %90 : vector<192x32xf32> to vector<8x24x32xf32>
    %92 = tpu.iota {dimensions = array<i32: 0>} : vector<8x24x1xi32>
    %93 = vector.broadcast %0 : i32 to vector<8x24x1xi32>
    %94 = arith.addi %93, %92 : vector<8x24x1xi32>
    %95 = tpu.iota {dimensions = array<i32: 1>} : vector<8x24x1xi32>
    %c1_i32_64 = arith.constant 1 : i32
    %96 = vector.broadcast %c1_i32_64 : i32 to vector<8x24x1xi32>
    %97 = arith.cmpi sge, %94, %96 : vector<8x24x1xi32>
    %c15_i32 = arith.constant 15 : i32
    %98 = vector.broadcast %c15_i32 : i32 to vector<8x24x1xi32>
    %99 = arith.cmpi sle, %94, %98 : vector<8x24x1xi32>
    %100 = arith.andi %97, %99 : vector<8x24x1xi1>
    %c1_i32_65 = arith.constant 1 : i32
    %101 = vector.broadcast %c1_i32_65 : i32 to vector<8x24x1xi32>
    %102 = arith.cmpi sge, %95, %101 : vector<8x24x1xi32>
    %103 = arith.andi %100, %102 : vector<8x24x1xi1>
    %c16_i32 = arith.constant 16 : i32
    %104 = vector.broadcast %c16_i32 : i32 to vector<8x24x1xi32>
    %105 = arith.cmpi sle, %95, %104 : vector<8x24x1xi32>
    %106 = arith.andi %103, %105 : vector<8x24x1xi1>
    %cst_66 = arith.constant 0.000000e+00 : f32
    %107 = vector.shape_cast %106 : vector<8x24x1xi1> to vector<8x24x1xi1>
    %108 = vector.broadcast %107 : vector<8x24x1xi1> to vector<8x24x32xi1>
    %109 = vector.broadcast %cst_66 : f32 to vector<8x24x32xf32>
    %110 = arith.select %108, %91, %109 : vector<8x24x32xi1>, vector<8x24x32xf32>
    %111 = arith.truncf %110 : vector<8x24x32xf32> to vector<8x24x32xbf16>
    %c0_67 = arith.constant 0 : index
    %c0_68 = arith.constant 0 : index
    %c0_69 = arith.constant 0 : index
    %c0_70 = arith.constant 0 : index
    %112 = vector.load %arg5[%c0_67, %c0_68, %c0_69, %c0_70] : memref<1x8x24x32xbf16, #tpu.memory_space<vmem>>, vector<1x8x24x32xbf16>
    %113 = vector.shape_cast %112 : vector<1x8x24x32xbf16> to vector<8x24x32xbf16>
    %114 = vector.shape_cast %111 : vector<8x24x32xbf16> to vector<1x8x24x32xbf16>
    tpu.vector_store %arg5[%c0_67, %c0_68, %c0_69, %c0_70], %114 {strides = array<i32>} : memref<1x8x24x32xbf16, #tpu.memory_space<vmem>>, vector<1x8x24x32xbf16>,
    return
  }
  func.func @transform_0(%arg0: i32, %arg1: i32) -> (i32, i32, i32, i32) {
    %c0_i32 = arith.constant 0 : i32
    %c0_i32_0 = arith.constant 0 : i32
    %c0_i32_1 = arith.constant 0 : i32
    %c0_i32_2 = arith.constant 0 : i32
    return %arg0, %c0_i32, %c0_i32_0, %c0_i32_1 : i32, i32, i32, i32
  }
  func.func @transform_1(%arg0: i32, %arg1: i32) -> (i32, i32, i32) {
    %c0_i32 = arith.constant 0 : i32
    %c0_i32_0 = arith.constant 0 : i32
    %c0_i32_1 = arith.constant 0 : i32
    %c0_i32_2 = arith.constant 0 : i32
    return %c0_i32, %c0_i32_0, %c0_i32_1 : i32, i32, i32
  }
  func.func @transform_2(%arg0: i32, %arg1: i32) -> (i32, i32) {
    %c0_i32 = arith.constant 0 : i32
    %c0_i32_0 = arith.constant 0 : i32
    %c0_i32_1 = arith.constant 0 : i32
    return %c0_i32, %c0_i32_0 : i32, i32
  }
  func.func @transform_3(%arg0: i32, %arg1: i32) -> (i32, i32, i32, i32) {
    %c0_i32 = arith.constant 0 : i32
    %c0_i32_0 = arith.constant 0 : i32
    %c0_i32_1 = arith.constant 0 : i32
    return %arg0, %arg1, %c0_i32, %c0_i32_0 : i32, i32, i32, i32
  }
}

module attributes {stable_mosaic.version = 11 : i64} {
  func.func @_conv2_pool_fc_kernel(%arg0: i32, %arg1: i32, %arg2: memref<1x24x24x32xbf16, #tpu.memory_space<vmem>>, %arg3: memref<9x32x64xbf16, #tpu.memory_space<vmem>>, %arg4: memref<1x64xf32, #tpu.memory_space<vmem>>, %arg5: memref<64x128xf32, #tpu.memory_space<vmem>>, %arg6: memref<1x128xf32, #tpu.memory_space<vmem>>, %arg7: memref<1x1x128xf32, #tpu.memory_space<vmem>>, %arg8: memref<1x64xf32, #tpu.memory_space<vmem>>) attributes {dimension_semantics = [#tpu.dimension_semantics<parallel>, #tpu.dimension_semantics<arbitrary>], iteration_bounds = array<i64: 2, 2>, scalar_prefetch = 0 : i64, scratch_operands = 1 : i64, tpu.core_type = #tpu.core_type<tc>, window_params = [{transform_indices = @transform_0, window_bounds = array<i64: 1, 24, 24, 32>}, {pipeline_mode = #tpu.pipeline_mode<synchronous>, transform_indices = @transform_1, window_bounds = array<i64: 9, 32, 64>}, {pipeline_mode = #tpu.pipeline_mode<synchronous>, transform_indices = @transform_2, window_bounds = array<i64: 1, 64>}, {pipeline_mode = #tpu.pipeline_mode<synchronous>, transform_indices = @transform_3, window_bounds = array<i64: 64, 128>}, {pipeline_mode = #tpu.pipeline_mode<synchronous>, transform_indices = @transform_4, window_bounds = array<i64: 1, 128>}, {transform_indices = @transform_5, window_bounds = array<i64: 1, 1, 128>}]} {
    %c0_i32 = arith.constant 0 : i32
    %0 = arith.cmpi eq, %arg1, %c0_i32 : i32
    %1 = arith.extui %0 : i1 to i32
    %c0_i32_0 = arith.constant 0 : i32
    %2 = arith.cmpi ne, %1, %c0_i32_0 : i32
    scf.if %2 {
      %cst_74 = arith.constant 0.000000e+00 : f32
      %113 = vector.broadcast %cst_74 : f32 to vector<1x64xf32>
      %c0_75 = arith.constant 0 : index
      %c0_76 = arith.constant 0 : index
      %114 = vector.load %arg8[%c0_75, %c0_76] : memref<1x64xf32, #tpu.memory_space<vmem>>, vector<1x64xf32>
      tpu.vector_store %arg8[%c0_75, %c0_76], %113 {strides = array<i32>} : memref<1x64xf32, #tpu.memory_space<vmem>>, vector<1x64xf32>,
    } else {
    }
    %c8_i32 = arith.constant 8 : i32
    %3 = arith.muli %arg1, %c8_i32 : i32
    %cst = arith.constant 0.000000e+00 : f32
    %4 = vector.broadcast %cst : f32 to vector<128x64xf32>
    %c0_i32_1 = arith.constant 0 : i32
    %5 = arith.addi %3, %c0_i32_1 : i32
    %c0 = arith.constant 0 : index
    %6 = arith.index_cast %5 : i32 to index
    %c0_2 = arith.constant 0 : index
    %c0_3 = arith.constant 0 : index
    %7 = vector.load %arg2[%c0, %6, %c0_2, %c0_3] : memref<1x24x24x32xbf16, #tpu.memory_space<vmem>>, vector<1x8x16x32xbf16>
    %8 = vector.shape_cast %7 : vector<1x8x16x32xbf16> to vector<8x16x32xbf16>
    %9 = vector.shape_cast %8 : vector<8x16x32xbf16> to vector<128x32xbf16>
    %c0_4 = arith.constant 0 : index
    %c0_5 = arith.constant 0 : index
    %c0_6 = arith.constant 0 : index
    %10 = vector.load %arg3[%c0_4, %c0_5, %c0_6] : memref<9x32x64xbf16, #tpu.memory_space<vmem>>, vector<1x32x64xbf16>
    %11 = vector.shape_cast %10 : vector<1x32x64xbf16> to vector<32x64xbf16>
    %cst_7 = arith.constant dense<0.000000e+00> : vector<128x64xf32>
    %12 = tpu.matmul %9, %11, %cst_7 {dimension_numbers = #tpu.dot_dimension_numbers<[1], [0], [0], [1], [0, 0, 1, 1], [], []>} : vector<128x32xbf16>, vector<32x64xbf16>, vector<128x64xf32> -> vector<128x64xf32>
    %13 = arith.addf %4, %12 : vector<128x64xf32>
    %c0_i32_8 = arith.constant 0 : i32
    %14 = arith.addi %3, %c0_i32_8 : i32
    %c0_9 = arith.constant 0 : index
    %15 = arith.index_cast %14 : i32 to index
    %c1 = arith.constant 1 : index
    %c0_10 = arith.constant 0 : index
    %16 = vector.load %arg2[%c0_9, %15, %c1, %c0_10] : memref<1x24x24x32xbf16, #tpu.memory_space<vmem>>, vector<1x8x16x32xbf16>
    %17 = vector.shape_cast %16 : vector<1x8x16x32xbf16> to vector<8x16x32xbf16>
    %18 = vector.shape_cast %17 : vector<8x16x32xbf16> to vector<128x32xbf16>
    %c1_11 = arith.constant 1 : index
    %c0_12 = arith.constant 0 : index
    %c0_13 = arith.constant 0 : index
    %19 = vector.load %arg3[%c1_11, %c0_12, %c0_13] : memref<9x32x64xbf16, #tpu.memory_space<vmem>>, vector<1x32x64xbf16>
    %20 = vector.shape_cast %19 : vector<1x32x64xbf16> to vector<32x64xbf16>
    %cst_14 = arith.constant dense<0.000000e+00> : vector<128x64xf32>
    %21 = tpu.matmul %18, %20, %cst_14 {dimension_numbers = #tpu.dot_dimension_numbers<[1], [0], [0], [1], [0, 0, 1, 1], [], []>} : vector<128x32xbf16>, vector<32x64xbf16>, vector<128x64xf32> -> vector<128x64xf32>
    %22 = arith.addf %13, %21 : vector<128x64xf32>
    %c0_i32_15 = arith.constant 0 : i32
    %23 = arith.addi %3, %c0_i32_15 : i32
    %c0_16 = arith.constant 0 : index
    %24 = arith.index_cast %23 : i32 to index
    %c2 = arith.constant 2 : index
    %c0_17 = arith.constant 0 : index
    %25 = vector.load %arg2[%c0_16, %24, %c2, %c0_17] : memref<1x24x24x32xbf16, #tpu.memory_space<vmem>>, vector<1x8x16x32xbf16>
    %26 = vector.shape_cast %25 : vector<1x8x16x32xbf16> to vector<8x16x32xbf16>
    %27 = vector.shape_cast %26 : vector<8x16x32xbf16> to vector<128x32xbf16>
    %c2_18 = arith.constant 2 : index
    %c0_19 = arith.constant 0 : index
    %c0_20 = arith.constant 0 : index
    %28 = vector.load %arg3[%c2_18, %c0_19, %c0_20] : memref<9x32x64xbf16, #tpu.memory_space<vmem>>, vector<1x32x64xbf16>
    %29 = vector.shape_cast %28 : vector<1x32x64xbf16> to vector<32x64xbf16>
    %cst_21 = arith.constant dense<0.000000e+00> : vector<128x64xf32>
    %30 = tpu.matmul %27, %29, %cst_21 {dimension_numbers = #tpu.dot_dimension_numbers<[1], [0], [0], [1], [0, 0, 1, 1], [], []>} : vector<128x32xbf16>, vector<32x64xbf16>, vector<128x64xf32> -> vector<128x64xf32>
    %31 = arith.addf %22, %30 : vector<128x64xf32>
    %c1_i32 = arith.constant 1 : i32
    %32 = arith.addi %3, %c1_i32 : i32
    %c0_22 = arith.constant 0 : index
    %33 = arith.index_cast %32 : i32 to index
    %c0_23 = arith.constant 0 : index
    %c0_24 = arith.constant 0 : index
    %34 = vector.load %arg2[%c0_22, %33, %c0_23, %c0_24] : memref<1x24x24x32xbf16, #tpu.memory_space<vmem>>, vector<1x8x16x32xbf16>
    %35 = vector.shape_cast %34 : vector<1x8x16x32xbf16> to vector<8x16x32xbf16>
    %36 = vector.shape_cast %35 : vector<8x16x32xbf16> to vector<128x32xbf16>
    %c3 = arith.constant 3 : index
    %c0_25 = arith.constant 0 : index
    %c0_26 = arith.constant 0 : index
    %37 = vector.load %arg3[%c3, %c0_25, %c0_26] : memref<9x32x64xbf16, #tpu.memory_space<vmem>>, vector<1x32x64xbf16>
    %38 = vector.shape_cast %37 : vector<1x32x64xbf16> to vector<32x64xbf16>
    %cst_27 = arith.constant dense<0.000000e+00> : vector<128x64xf32>
    %39 = tpu.matmul %36, %38, %cst_27 {dimension_numbers = #tpu.dot_dimension_numbers<[1], [0], [0], [1], [0, 0, 1, 1], [], []>} : vector<128x32xbf16>, vector<32x64xbf16>, vector<128x64xf32> -> vector<128x64xf32>
    %40 = arith.addf %31, %39 : vector<128x64xf32>
    %c1_i32_28 = arith.constant 1 : i32
    %41 = arith.addi %3, %c1_i32_28 : i32
    %c0_29 = arith.constant 0 : index
    %42 = arith.index_cast %41 : i32 to index
    %c1_30 = arith.constant 1 : index
    %c0_31 = arith.constant 0 : index
    %43 = vector.load %arg2[%c0_29, %42, %c1_30, %c0_31] : memref<1x24x24x32xbf16, #tpu.memory_space<vmem>>, vector<1x8x16x32xbf16>
    %44 = vector.shape_cast %43 : vector<1x8x16x32xbf16> to vector<8x16x32xbf16>
    %45 = vector.shape_cast %44 : vector<8x16x32xbf16> to vector<128x32xbf16>
    %c4 = arith.constant 4 : index
    %c0_32 = arith.constant 0 : index
    %c0_33 = arith.constant 0 : index
    %46 = vector.load %arg3[%c4, %c0_32, %c0_33] : memref<9x32x64xbf16, #tpu.memory_space<vmem>>, vector<1x32x64xbf16>
    %47 = vector.shape_cast %46 : vector<1x32x64xbf16> to vector<32x64xbf16>
    %cst_34 = arith.constant dense<0.000000e+00> : vector<128x64xf32>
    %48 = tpu.matmul %45, %47, %cst_34 {dimension_numbers = #tpu.dot_dimension_numbers<[1], [0], [0], [1], [0, 0, 1, 1], [], []>} : vector<128x32xbf16>, vector<32x64xbf16>, vector<128x64xf32> -> vector<128x64xf32>
    %49 = arith.addf %40, %48 : vector<128x64xf32>
    %c1_i32_35 = arith.constant 1 : i32
    %50 = arith.addi %3, %c1_i32_35 : i32
    %c0_36 = arith.constant 0 : index
    %51 = arith.index_cast %50 : i32 to index
    %c2_37 = arith.constant 2 : index
    %c0_38 = arith.constant 0 : index
    %52 = vector.load %arg2[%c0_36, %51, %c2_37, %c0_38] : memref<1x24x24x32xbf16, #tpu.memory_space<vmem>>, vector<1x8x16x32xbf16>
    %53 = vector.shape_cast %52 : vector<1x8x16x32xbf16> to vector<8x16x32xbf16>
    %54 = vector.shape_cast %53 : vector<8x16x32xbf16> to vector<128x32xbf16>
    %c5 = arith.constant 5 : index
    %c0_39 = arith.constant 0 : index
    %c0_40 = arith.constant 0 : index
    %55 = vector.load %arg3[%c5, %c0_39, %c0_40] : memref<9x32x64xbf16, #tpu.memory_space<vmem>>, vector<1x32x64xbf16>
    %56 = vector.shape_cast %55 : vector<1x32x64xbf16> to vector<32x64xbf16>
    %cst_41 = arith.constant dense<0.000000e+00> : vector<128x64xf32>
    %57 = tpu.matmul %54, %56, %cst_41 {dimension_numbers = #tpu.dot_dimension_numbers<[1], [0], [0], [1], [0, 0, 1, 1], [], []>} : vector<128x32xbf16>, vector<32x64xbf16>, vector<128x64xf32> -> vector<128x64xf32>
    %58 = arith.addf %49, %57 : vector<128x64xf32>
    %c2_i32 = arith.constant 2 : i32
    %59 = arith.addi %3, %c2_i32 : i32
    %c0_42 = arith.constant 0 : index
    %60 = arith.index_cast %59 : i32 to index
    %c0_43 = arith.constant 0 : index
    %c0_44 = arith.constant 0 : index
    %61 = vector.load %arg2[%c0_42, %60, %c0_43, %c0_44] : memref<1x24x24x32xbf16, #tpu.memory_space<vmem>>, vector<1x8x16x32xbf16>
    %62 = vector.shape_cast %61 : vector<1x8x16x32xbf16> to vector<8x16x32xbf16>
    %63 = vector.shape_cast %62 : vector<8x16x32xbf16> to vector<128x32xbf16>
    %c6 = arith.constant 6 : index
    %c0_45 = arith.constant 0 : index
    %c0_46 = arith.constant 0 : index
    %64 = vector.load %arg3[%c6, %c0_45, %c0_46] : memref<9x32x64xbf16, #tpu.memory_space<vmem>>, vector<1x32x64xbf16>
    %65 = vector.shape_cast %64 : vector<1x32x64xbf16> to vector<32x64xbf16>
    %cst_47 = arith.constant dense<0.000000e+00> : vector<128x64xf32>
    %66 = tpu.matmul %63, %65, %cst_47 {dimension_numbers = #tpu.dot_dimension_numbers<[1], [0], [0], [1], [0, 0, 1, 1], [], []>} : vector<128x32xbf16>, vector<32x64xbf16>, vector<128x64xf32> -> vector<128x64xf32>
    %67 = arith.addf %58, %66 : vector<128x64xf32>
    %c2_i32_48 = arith.constant 2 : i32
    %68 = arith.addi %3, %c2_i32_48 : i32
    %c0_49 = arith.constant 0 : index
    %69 = arith.index_cast %68 : i32 to index
    %c1_50 = arith.constant 1 : index
    %c0_51 = arith.constant 0 : index
    %70 = vector.load %arg2[%c0_49, %69, %c1_50, %c0_51] : memref<1x24x24x32xbf16, #tpu.memory_space<vmem>>, vector<1x8x16x32xbf16>
    %71 = vector.shape_cast %70 : vector<1x8x16x32xbf16> to vector<8x16x32xbf16>
    %72 = vector.shape_cast %71 : vector<8x16x32xbf16> to vector<128x32xbf16>
    %c7 = arith.constant 7 : index
    %c0_52 = arith.constant 0 : index
    %c0_53 = arith.constant 0 : index
    %73 = vector.load %arg3[%c7, %c0_52, %c0_53] : memref<9x32x64xbf16, #tpu.memory_space<vmem>>, vector<1x32x64xbf16>
    %74 = vector.shape_cast %73 : vector<1x32x64xbf16> to vector<32x64xbf16>
    %cst_54 = arith.constant dense<0.000000e+00> : vector<128x64xf32>
    %75 = tpu.matmul %72, %74, %cst_54 {dimension_numbers = #tpu.dot_dimension_numbers<[1], [0], [0], [1], [0, 0, 1, 1], [], []>} : vector<128x32xbf16>, vector<32x64xbf16>, vector<128x64xf32> -> vector<128x64xf32>
    %76 = arith.addf %67, %75 : vector<128x64xf32>
    %c2_i32_55 = arith.constant 2 : i32
    %77 = arith.addi %3, %c2_i32_55 : i32
    %c0_56 = arith.constant 0 : index
    %78 = arith.index_cast %77 : i32 to index
    %c2_57 = arith.constant 2 : index
    %c0_58 = arith.constant 0 : index
    %79 = vector.load %arg2[%c0_56, %78, %c2_57, %c0_58] : memref<1x24x24x32xbf16, #tpu.memory_space<vmem>>, vector<1x8x16x32xbf16>
    %80 = vector.shape_cast %79 : vector<1x8x16x32xbf16> to vector<8x16x32xbf16>
    %81 = vector.shape_cast %80 : vector<8x16x32xbf16> to vector<128x32xbf16>
    %c8 = arith.constant 8 : index
    %c0_59 = arith.constant 0 : index
    %c0_60 = arith.constant 0 : index
    %82 = vector.load %arg3[%c8, %c0_59, %c0_60] : memref<9x32x64xbf16, #tpu.memory_space<vmem>>, vector<1x32x64xbf16>
    %83 = vector.shape_cast %82 : vector<1x32x64xbf16> to vector<32x64xbf16>
    %cst_61 = arith.constant dense<0.000000e+00> : vector<128x64xf32>
    %84 = tpu.matmul %81, %83, %cst_61 {dimension_numbers = #tpu.dot_dimension_numbers<[1], [0], [0], [1], [0, 0, 1, 1], [], []>} : vector<128x32xbf16>, vector<32x64xbf16>, vector<128x64xf32> -> vector<128x64xf32>
    %85 = arith.addf %76, %84 : vector<128x64xf32>
    %c0_62 = arith.constant 0 : index
    %c0_63 = arith.constant 0 : index
    %86 = vector.load %arg4[%c0_62, %c0_63] : memref<1x64xf32, #tpu.memory_space<vmem>>, vector<1x64xf32>
    %87 = vector.broadcast %86 : vector<1x64xf32> to vector<128x64xf32>
    %88 = arith.addf %85, %87 : vector<128x64xf32>
    %cst_64 = arith.constant 0.000000e+00 : f32
    %89 = vector.broadcast %cst_64 : f32 to vector<128x64xf32>
    %90 = arith.cmpf ogt, %88, %89 : vector<128x64xf32>
    %cst_65 = arith.constant 2.000000e-01 : f32
    %91 = vector.broadcast %cst_65 : f32 to vector<128x64xf32>
    %92 = arith.mulf %91, %88 : vector<128x64xf32>
    %93 = arith.select %90, %88, %92 : vector<128x64xi1>, vector<128x64xf32>
    %94 = vector.shape_cast %93 : vector<128x64xf32> to vector<8x16x64xf32>
    %95 = tpu.iota {dimensions = array<i32: 0>} : vector<8x16x1xi32>
    %96 = vector.broadcast %3 : i32 to vector<8x16x1xi32>
    %97 = arith.addi %96, %95 : vector<8x16x1xi32>
    %c15_i32 = arith.constant 15 : i32
    %98 = vector.broadcast %c15_i32 : i32 to vector<8x16x1xi32>
    %99 = arith.cmpi slt, %97, %98 : vector<8x16x1xi32>
    %cst_66 = arith.constant 0.000000e+00 : f32
    %100 = vector.shape_cast %99 : vector<8x16x1xi1> to vector<8x16x1xi1>
    %101 = vector.broadcast %100 : vector<8x16x1xi1> to vector<8x16x64xi1>
    %102 = vector.broadcast %cst_66 : f32 to vector<8x16x64xf32>
    %103 = arith.select %101, %94, %102 : vector<8x16x64xi1>, vector<8x16x64xf32>
    %c0_67 = arith.constant 0 : index
    %c0_68 = arith.constant 0 : index
    %104 = vector.load %arg8[%c0_67, %c0_68] : memref<1x64xf32, #tpu.memory_space<vmem>>, vector<1x64xf32>
    %cst_69 = arith.constant dense<0.000000e+00> : vector<64xf32>
    %105 = vector.multi_reduction <add>, %103, %cst_69 [0, 1] : vector<8x16x64xf32> to vector<64xf32>
    %106 = vector.shape_cast %105 : vector<64xf32> to vector<1x1x64xf32>
    %107 = vector.shape_cast %106 : vector<1x1x64xf32> to vector<1x64xf32>
    %108 = arith.addf %104, %107 : vector<1x64xf32>
    %c0_70 = arith.constant 0 : index
    %c0_71 = arith.constant 0 : index
    %109 = vector.load %arg8[%c0_70, %c0_71] : memref<1x64xf32, #tpu.memory_space<vmem>>, vector<1x64xf32>
    tpu.vector_store %arg8[%c0_70, %c0_71], %108 {strides = array<i32>} : memref<1x64xf32, #tpu.memory_space<vmem>>, vector<1x64xf32>,
    %c1_i32_72 = arith.constant 1 : i32
    %110 = arith.cmpi eq, %arg1, %c1_i32_72 : i32
    %111 = arith.extui %110 : i1 to i32
    %c0_i32_73 = arith.constant 0 : i32
    %112 = arith.cmpi ne, %111, %c0_i32_73 : i32
    scf.if %112 {
      %c0_74 = arith.constant 0 : index
      %c0_75 = arith.constant 0 : index
      %113 = vector.load %arg8[%c0_74, %c0_75] : memref<1x64xf32, #tpu.memory_space<vmem>>, vector<1x64xf32>
      %cst_76 = arith.constant 0.00416666688 : f32
      %114 = vector.broadcast %cst_76 : f32 to vector<1x64xf32>
      %115 = arith.mulf %113, %114 : vector<1x64xf32>
      %c0_77 = arith.constant 0 : index
      %c0_78 = arith.constant 0 : index
      %116 = vector.load %arg5[%c0_77, %c0_78] : memref<64x128xf32, #tpu.memory_space<vmem>>, vector<64x128xf32>
      %cst_79 = arith.constant dense<0.000000e+00> : vector<1x128xf32>
      %117 = tpu.matmul %115, %116, %cst_79 {dimension_numbers = #tpu.dot_dimension_numbers<[1], [0], [0], [1], [0, 0, 1, 1], [], []>} : vector<1x64xf32>, vector<64x128xf32>, vector<1x128xf32> -> vector<1x128xf32>
      %c0_80 = arith.constant 0 : index
      %c0_81 = arith.constant 0 : index
      %118 = vector.load %arg6[%c0_80, %c0_81] : memref<1x128xf32, #tpu.memory_space<vmem>>, vector<1x128xf32>
      %119 = arith.addf %117, %118 : vector<1x128xf32>
      %c0_82 = arith.constant 0 : index
      %c0_83 = arith.constant 0 : index
      %c0_84 = arith.constant 0 : index
      %120 = vector.load %arg7[%c0_82, %c0_83, %c0_84] : memref<1x1x128xf32, #tpu.memory_space<vmem>>, vector<1x1x128xf32>
      %121 = vector.shape_cast %120 : vector<1x1x128xf32> to vector<1x128xf32>
      %122 = vector.shape_cast %119 : vector<1x128xf32> to vector<1x1x128xf32>
      tpu.vector_store %arg7[%c0_82, %c0_83, %c0_84], %122 {strides = array<i32>} : memref<1x1x128xf32, #tpu.memory_space<vmem>>, vector<1x1x128xf32>,
    } else {
    }
    return
  }
  func.func @transform_0(%arg0: i32, %arg1: i32) -> (i32, i32, i32, i32) {
    %c0_i32 = arith.constant 0 : i32
    %c0_i32_0 = arith.constant 0 : i32
    %c0_i32_1 = arith.constant 0 : i32
    %c0_i32_2 = arith.constant 0 : i32
    return %arg0, %c0_i32, %c0_i32_0, %c0_i32_1 : i32, i32, i32, i32
  }
  func.func @transform_1(%arg0: i32, %arg1: i32) -> (i32, i32, i32) {
    %c0_i32 = arith.constant 0 : i32
    %c0_i32_0 = arith.constant 0 : i32
    %c0_i32_1 = arith.constant 0 : i32
    %c0_i32_2 = arith.constant 0 : i32
    return %c0_i32, %c0_i32_0, %c0_i32_1 : i32, i32, i32
  }
  func.func @transform_2(%arg0: i32, %arg1: i32) -> (i32, i32) {
    %c0_i32 = arith.constant 0 : i32
    %c0_i32_0 = arith.constant 0 : i32
    %c0_i32_1 = arith.constant 0 : i32
    return %c0_i32, %c0_i32_0 : i32, i32
  }
  func.func @transform_3(%arg0: i32, %arg1: i32) -> (i32, i32) {
    %c0_i32 = arith.constant 0 : i32
    %c0_i32_0 = arith.constant 0 : i32
    %c0_i32_1 = arith.constant 0 : i32
    return %c0_i32, %c0_i32_0 : i32, i32
  }
  func.func @transform_4(%arg0: i32, %arg1: i32) -> (i32, i32) {
    %c0_i32 = arith.constant 0 : i32
    %c0_i32_0 = arith.constant 0 : i32
    %c0_i32_1 = arith.constant 0 : i32
    return %c0_i32, %c0_i32_0 : i32, i32
  }
  func.func @transform_5(%arg0: i32, %arg1: i32) -> (i32, i32, i32) {
    %c0_i32 = arith.constant 0 : i32
    %c0_i32_0 = arith.constant 0 : i32
    %c0_i32_1 = arith.constant 0 : i32
    return %arg0, %c0_i32, %c0_i32_0 : i32, i32, i32
  }
}

</mosaic_0001>

<llo_original>
// kernel: audio_derivative_encoder.3
$region0: #{audio_derivative_encoder.3}
  #allocation0 [shape = 'u32[]', space=smem, size = 0x4, offset = 0x4, fixed_abs, tag = 'smem constant byte address 0x4 - core index']
  #allocation1 [shape = 'u32[144,128]{1,0:T(1,128)}', space=vmem, size = 0x12000, scoped, tag = 'internal scratch']
  #allocation2 [shape = 'f32[1,64]{1,0:T(1,128)}', space=vmem, size = 0x200, scoped, tag = 'scratch operand']
  %s0 = inlined_call_operand.vmem [shape: bf16[2,24,24,32], index: 0, kind: input, shape index: {}]
  %s1 = inlined_call_operand.vmem [shape: bf16[9,32,64], index: 1, kind: input, shape index: {}]
  %s2 = inlined_call_operand.vmem [shape: f32[1,64], index: 2, kind: input, shape index: {}]
  %s3 = inlined_call_operand.vmem [shape: f32[64,128], index: 3, kind: input, shape index: {}]
  %s4 = inlined_call_operand.vmem [shape: f32[1,128], index: 4, kind: input, shape index: {}]
  %s5 = inlined_call_operand.hbm [shape: f32[2,1,128], index: 5, kind: output, shape index: {}]
  %s6 = sld [smem:[#allocation0]]
  $region61: #{audio_derivative_encoder.3} parent=0
    _
  %s8 = ssub.s32 1, %s6
  %s9 = scalar_select 0, %s8, %s6
  $region1: #{audio_derivative_encoder.3} parent=0
    #allocation3 [shape = 'u8[1024]{0}', space=vmem, size = 0x400, scoped, tag = 'output window, operand 0']
    #allocation4 [shape = 's32[2]{0}', space=sflag, size = 0x8, scoped, tag = 'scoped memory for audio_derivative_encoder.3']
    %10 = vsyncpa [#allocation4], 0
    %s11 = scalar_lea.sflag [#allocation4], 1
    %12 = vsyncpa %s11, 0
    loop: start=0, step=1, limit=6
    $region2: #{audio_derivative_encoder.3} parent=1 // loop_pre_header
      _
    $region3: #{audio_derivative_encoder.3} parent=1 // loop_header
      %s14 = sphi 0, %s18
      %p15 = scmp.ge.s32.totalorder %s14, 6
      %s21 = sphi 0, %s33
      %s22 = sphi 0, %s29
      %s23 = sphi 0, %s21
      %s24 = sphi 0, %s22
      %s25 = sphi 0, %s23
      %s26 = sphi 0, %s24
      %s36 = sphi 0, %s38
      %s39 = sphi 0, %s36
      %s40 = sphi 0, %s39
      %s56 = sphi 0, %s40
      %s60 = sphi 0, %s60
      %s62 = sphi 0, %s60
      %s63 = sphi 0, %s62
      %s77 = sphi 0, %s63
      %s81 = sphi 0, %s81
      %s83 = sphi 0, %s81
      %s84 = sphi 0, %s83
      %s98 = sphi 0, %s84
      %s102 = sphi 0, %s102
      %s104 = sphi 0, %s102
      %s105 = sphi 0, %s104
      %s119 = sphi 0, %s105
      %s123 = sphi 0, %s123
      %s125 = sphi 0, %s123
      %s126 = sphi 0, %s125
      %s140 = sphi 0, %s126
      %s146 = sphi 0, %s148
      %s149 = sphi 0, %s146
      %s150 = sphi 0, %s149
      %s166 = sphi 0, %s150
    $region4: #{audio_derivative_encoder.3} parent=1 // loop_header_branch
      %17 = sbr.rel (%p15) target = $region8
    $region5: #{audio_derivative_encoder.3} parent=1 // loop_body
      %s19 = ssub.s32 %s14, 1
      %s20 = ssub.s32 %s14, 2
      %s27 = sadd.s32 1, %s22
      %p28 = scmp.ge.s32.totalorder %s27, 2
      %s29 = scalar_select %p28, 0, %s27
      %s30 = sadd.s32 1, %s21
      %s31 = scalar_select %p28, %s30, %s21
      %p32 = scmp.ge.s32.totalorder %s31, 2
      %s33 = scalar_select %p32, 0, %s31
      %s34 = ssub.s32 %s21, %s33
      %p35 = scmp.eq.s32.totalorder %s34, 0
      %s37 = sadd.s32 %s36, 1
      %s38 = scalar_select %p35, %s36, %s37
      %p41 = pneg %p35
      %p42 = scmp.eq.s32.totalorder %s14, 3
      %p43 = por %p41, %p42
      %p44 = scmp.ne.s32.totalorder %s36, %s39
      %p45 = scmp.eq.s32.totalorder %s14, 0
      %p46 = por %p44, %p45
      %p47 = scmp.ne.s32.totalorder %s36, %s39
      %p48 = scmp.eq.s32.totalorder %s19, 3
      %p49 = por %p47, %p48
      %p50 = scmp.ne.s32.totalorder %s39, %s40
      %p51 = scmp.eq.s32.totalorder %s19, 0
      %p52 = por %p50, %p51
      %p53 = scmp.ne.s32.totalorder %s39, %s40
      %p54 = scmp.eq.s32.totalorder %s20, 3
      %p55 = por %p53, %p54
      %p57 = scmp.ne.s32.totalorder %s40, %s56
      %p58 = scmp.eq.s32.totalorder %s20, 0
      %p59 = por %p57, %p58
      %s61 = sadd.s32 %s60, 1
      %p64 = scmp.eq.s32.totalorder %s14, 3
      %p65 = scmp.ne.s32.totalorder %s60, %s62
      %p66 = scmp.eq.s32.totalorder %s14, 0
      %p67 = por %p65, %p66
      %p68 = scmp.ne.s32.totalorder %s60, %s62
      %p69 = scmp.eq.s32.totalorder %s19, 3
      %p70 = por %p68, %p69
      %p71 = scmp.ne.s32.totalorder %s62, %s63
      %p72 = scmp.eq.s32.totalorder %s19, 0
      %p73 = por %p71, %p72
      %p74 = scmp.ne.s32.totalorder %s62, %s63
      %p75 = scmp.eq.s32.totalorder %s20, 3
      %p76 = por %p74, %p75
      %p78 = scmp.ne.s32.totalorder %s63, %s77
      %p79 = scmp.eq.s32.totalorder %s20, 0
      %p80 = por %p78, %p79
      %s82 = sadd.s32 %s81, 1
      %p85 = scmp.eq.s32.totalorder %s14, 3
      %p86 = scmp.ne.s32.totalorder %s81, %s83
      %p87 = scmp.eq.s32.totalorder %s14, 0
      %p88 = por %p86, %p87
      %p89 = scmp.ne.s32.totalorder %s81, %s83
      %p90 = scmp.eq.s32.totalorder %s19, 3
      %p91 = por %p89, %p90
      %p92 = scmp.ne.s32.totalorder %s83, %s84
      %p93 = scmp.eq.s32.totalorder %s19, 0
      %p94 = por %p92, %p93
      %p95 = scmp.ne.s32.totalorder %s83, %s84
      %p96 = scmp.eq.s32.totalorder %s20, 3
      %p97 = por %p95, %p96
      %p99 = scmp.ne.s32.totalorder %s84, %s98
      %p100 = scmp.eq.s32.totalorder %s20, 0
      %p101 = por %p99, %p100
      %s103 = sadd.s32 %s102, 1
      %p106 = scmp.eq.s32.totalorder %s14, 3
      %p107 = scmp.ne.s32.totalorder %s102, %s104
      %p108 = scmp.eq.s32.totalorder %s14, 0
      %p109 = por %p107, %p108
      %p110 = scmp.ne.s32.totalorder %s102, %s104
      %p111 = scmp.eq.s32.totalorder %s19, 3
      %p112 = por %p110, %p111
      %p113 = scmp.ne.s32.totalorder %s104, %s105
      %p114 = scmp.eq.s32.totalorder %s19, 0
      %p115 = por %p113, %p114
      %p116 = scmp.ne.s32.totalorder %s104, %s105
      %p117 = scmp.eq.s32.totalorder %s20, 3
      %p118 = por %p116, %p117
      %p120 = scmp.ne.s32.totalorder %s105, %s119
      %p121 = scmp.eq.s32.totalorder %s20, 0
      %p122 = por %p120, %p121
      %s124 = sadd.s32 %s123, 1
      %p127 = scmp.eq.s32.totalorder %s14, 3
      %p128 = scmp.ne.s32.totalorder %s123, %s125
      %p129 = scmp.eq.s32.totalorder %s14, 0
      %p130 = por %p128, %p129
      %p131 = scmp.ne.s32.totalorder %s123, %s125
      %p132 = scmp.eq.s32.totalorder %s19, 3
      %p133 = por %p131, %p132
      %p134 = scmp.ne.s32.totalorder %s125, %s126
      %p135 = scmp.eq.s32.totalorder %s19, 0
      %p136 = por %p134, %p135
      %p137 = scmp.ne.s32.totalorder %s125, %s126
      %p138 = scmp.eq.s32.totalorder %s20, 3
      %p139 = por %p137, %p138
      %p141 = scmp.ne.s32.totalorder %s126, %s140
      %p142 = scmp.eq.s32.totalorder %s20, 0
      %p143 = por %p141, %p142
      %s144 = ssub.s32 %s21, %s33
      %p145 = scmp.eq.s32.totalorder %s144, 0
      %s147 = sadd.s32 %s146, 1
      %s148 = scalar_select %p145, %s146, %s147
      %p151 = pneg %p145
      %p152 = scmp.eq.s32.totalorder %s14, 3
      %p153 = por %p151, %p152
      %p154 = scmp.ne.s32.totalorder %s146, %s149
      %p155 = scmp.eq.s32.totalorder %s14, 0
      %p156 = por %p154, %p155
      %p157 = scmp.ne.s32.totalorder %s146, %s149
      %p158 = scmp.eq.s32.totalorder %s19, 3
      %p159 = por %p157, %p158
      %p160 = scmp.ne.s32.totalorder %s149, %s150
      %p161 = scmp.eq.s32.totalorder %s19, 0
      %p162 = por %p160, %p161
      %p163 = scmp.ne.s32.totalorder %s149, %s150
      %p164 = scmp.eq.s32.totalorder %s20, 3
      %p165 = por %p163, %p164
      %p167 = scmp.ne.s32.totalorder %s150, %s166
      %p168 = scmp.eq.s32.totalorder %s20, 0
      %p169 = por %p167, %p168
      %p170 = scmp.le.s32.totalorder 1, %s14
      %p171 = scmp.lt.s32.totalorder %s14, 5
      %p172 = pnand %p170, %p171
      %p173 = pneg %p172
      // Predicated region
      $region9: #{audio_derivative_encoder.3} parent=5 // pred_check
        _
      $region10: #{audio_derivative_encoder.3} parent=5 // pred_check_branch
        %175 = sbr.rel (%p172) target = $region12
      $region11: #{audio_derivative_encoder.3} parent=5 // pred_region
        %s176 = ssub.s32 %s14, 1
        // Predicated region
        $region13: #{audio_derivative_encoder.3} parent=11 // pred_check
          %p177 = pneg %p73
        $region14: #{audio_derivative_encoder.3} parent=11 // pred_check_branch
          %179 = sbr.rel (%p177) target = $region16
        $region15: #{audio_derivative_encoder.3} parent=11 // pred_region
          _
        $region16: #{audio_derivative_encoder.3} parent=11 // pred_fallthru
          _
        // Predicated region
        $region17: #{audio_derivative_encoder.3} parent=11 // pred_check
          %p180 = pneg %p94
        $region18: #{audio_derivative_encoder.3} parent=11 // pred_check_branch
          %182 = sbr.rel (%p180) target = $region20
        $region19: #{audio_derivative_encoder.3} parent=11 // pred_region
          _
        $region20: #{audio_derivative_encoder.3} parent=11 // pred_fallthru
          _
        // Predicated region
        $region21: #{audio_derivative_encoder.3} parent=11 // pred_check
          %p183 = pneg %p115
        $region22: #{audio_derivative_encoder.3} parent=11 // pred_check_branch
          %185 = sbr.rel (%p183) target = $region24
        $region23: #{audio_derivative_encoder.3} parent=11 // pred_region
          _
        $region24: #{audio_derivative_encoder.3} parent=11 // pred_fallthru
          _
        // Predicated region
        $region25: #{audio_derivative_encoder.3} parent=11 // pred_check
          %p186 = pneg %p136
        $region26: #{audio_derivative_encoder.3} parent=11 // pred_check_branch
          %188 = sbr.rel (%p186) target = $region28
        $region27: #{audio_derivative_encoder.3} parent=11 // pred_region
          _
        $region28: #{audio_derivative_encoder.3} parent=11 // pred_fallthru
          _
      $region12: #{audio_derivative_encoder.3} parent=5 // pred_fallthru
        _
      %p189 = scmp.lt.s32.totalorder %s14, 4
      // Predicated region
      $region29: #{audio_derivative_encoder.3} parent=5 // pred_check
        %p190 = pneg %p189
      $region30: #{audio_derivative_encoder.3} parent=5 // pred_check_branch
        %192 = sbr.rel (%p190) target = $region32
      $region31: #{audio_derivative_encoder.3} parent=5 // pred_region
        // Predicated region
        $region33: #{audio_derivative_encoder.3} parent=31 // pred_check
          %p193 = pneg %p46
        $region34: #{audio_derivative_encoder.3} parent=31 // pred_check_branch
          %195 = sbr.rel (%p193) target = $region36
        $region35: #{audio_derivative_encoder.3} parent=31 // pred_region
          %p196 = scmp.lt.s32.totalorder %s21, 1
          %s197 = scalar_select %p196, %s21, 1
          %s198 = smul.addr %s197, 72
          %s199 = smul.addr %s198, 4
          %s200 = scalar_lea.vmem %s0, %s199
        $region36: #{audio_derivative_encoder.3} parent=31 // pred_fallthru
          _
      $region32: #{audio_derivative_encoder.3} parent=5 // pred_fallthru
        _
      %p201 = scmp.le.s32.totalorder 1, %s14
      %p202 = scmp.lt.s32.totalorder %s14, 5
      %p203 = pnand %p201, %p202
      %p204 = pneg %p203
      // Predicated region
      $region37: #{audio_derivative_encoder.3} parent=5 // pred_check
        _
      $region38: #{audio_derivative_encoder.3} parent=5 // pred_check_branch
        %206 = sbr.rel (%p203) target = $region40
      $region39: #{audio_derivative_encoder.3} parent=5 // pred_region
        %s207 = ssub.s32 %s14, 1
        %p208 = scmp.lt.s32.totalorder %s23, 1
        %s209 = scalar_select %p208, %s23, 1
        %s210 = smul.addr %s209, 72
        %s211 = smul.addr %s210, 4
        %s212 = scalar_lea.vmem %s0, %s211
        %p213 = pneg %p52
        %p214 = pneg %p49
        %p215 = pneg %p73
        %p216 = pneg %p70
        %p217 = pneg %p94
        %p218 = pneg %p91
        %p219 = pneg %p115
        %p220 = pneg %p112
        %p221 = pneg %p136
        %p222 = pneg %p133
        %p223 = pneg %p162
        %p224 = pneg %p159
        %s225 = sand.u32 %s149, 1
        %s226 = scalar_lea.sflag [#allocation4], %s225
        %s227 = sand.u32 %s149, 1
        %s228 = scalar_lea.vmem [#allocation3], %s227
        %p229 = scmp.lt.s32.totalorder %s23, 1
        %s230 = scalar_select %p229, %s23, 1
        %s231 = smul.addr %s230, 72
        %s232 = smul.addr %s231, 4
        %s233 = scalar_lea.vmem %s0, %s232
        %p235 = scmp.eq.s32.totalorder %s24, 0
        // Predicated region
        $region41: #{audio_derivative_encoder.3} parent=39 // pred_check
          %p236 = pneg %p235
        $region42: #{audio_derivative_encoder.3} parent=39 // pred_check_branch
          %238 = sbr.rel (%p236) target = $region44
        $region43: #{audio_derivative_encoder.3} parent=39 // pred_region
          %vm239 = vcmask 516096
          %240 = vst.msk [vmem:[#allocation2] sm:$0x1] %vm239, 0.0
        $region44: #{audio_derivative_encoder.3} parent=39 // pred_fallthru
          _
        %s241 = smul.u32 %s24, 8
        %s242 = smul.u32 %s241, 3
        %s243 = smul.addr %s242, 4
        %s244 = scalar_lea.vmem %s233, %s243
        %v245 = vld [vmem:[%s244] sm:$0xf]
        %v246 = vld [vmem:[%s244 + $0x4] sm:$0xf]
        %v247 = vld [vmem:[%s244 + $0xc] sm:$0xf]
        %v248 = vld [vmem:[%s244 + $0x10] sm:$0xf]
        %v249 = vld [vmem:[%s244 + $0x18] sm:$0xf]
        %v250 = vld [vmem:[%s244 + $0x1c] sm:$0xf]
        %v251 = vld [vmem:[%s244 + $0x24] sm:$0xf]
        %v252 = vld [vmem:[%s244 + $0x28] sm:$0xf]
        %v253 = vld [vmem:[%s244 + $0x30] sm:$0xf]
        %v254 = vld [vmem:[%s244 + $0x34] sm:$0xf]
        %v255 = vld [vmem:[%s244 + $0x3c] sm:$0xf]
        %v256 = vld [vmem:[%s244 + $0x40] sm:$0xf]
        %v257 = vld [vmem:[%s244 + $0x48] sm:$0xf]
        %v258 = vld [vmem:[%s244 + $0x4c] sm:$0xf]
        %v259 = vld [vmem:[%s244 + $0x54] sm:$0xf]
        %v260 = vld [vmem:[%s244 + $0x58] sm:$0xf]
        %v261 = vld [vmem:[%s1] sm:$0xf]
        %v262 = vld [vmem:[%s1 + $0x4] sm:$0xf]
        %v263 = vld [vmem:[%s1 + $0x8] sm:$0xf]
        %v264 = vld [vmem:[%s1 + $0xc] sm:$0xf]
        %v265 = vld [vmem:[%s244 + $0x8] sm:$0x1]
        %v266 = vld [vmem:[%s244 + $0x14] sm:$0x1]
        %v267 = vld [vmem:[%s244 + $0x20] sm:$0x1]
        %v268 = vld [vmem:[%s244 + $0x2c] sm:$0x1]
        %v269 = vld [vmem:[%s244 + $0x38] sm:$0x1]
        %v270 = vld [vmem:[%s244 + $0x44] sm:$0x1]
        %v271 = vld [vmem:[%s244 + $0x50] sm:$0x1]
        %v272 = vld [vmem:[%s244 + $0x5c] sm:$0x1]
        %vm273 = vsmask.f32 3328
        %vm274 = vsmask.f32 7440
        %vm275 = vmor %vm273, %vm274
        %v277 = vshrl.u32 %v245, 16
        %v279 = vrot.slane %v277, 4
        %v280 = vshll.u32 %v245, 16
        %v282 = vrot.slane %v280, 5
        %v283 = vor.u32 %v279, %v282
        %v284 = vrot.slane %v283, 4
        %v286 = vshll.u32 %v246, 16
        %v288 = vrot.slane %v286, 5
        %v289 = vsel %vm275, %v284, %v288
        %v290 = vshrl.u32 %v246, 16
        %v292 = vrot.slane %v290, 4
        %v293 = vor.u32 %v292, %v288
        %v294 = vrot.slane %v293, 4
        %v296 = vshll.u32 %v265, 16
        %v298 = vrot.slane %v296, 5
        %v299 = vsel %vm275, %v294, %v298
        %v301 = vshrl.u32 %v247, 16
        %v303 = vrot.slane %v301, 4
        %v304 = vshll.u32 %v247, 16
        %v306 = vrot.slane %v304, 5
        %v307 = vor.u32 %v303, %v306
        %v308 = vrot.slane %v307, 4
        %v310 = vshll.u32 %v248, 16
        %v312 = vrot.slane %v310, 5
        %v313 = vsel %vm275, %v308, %v312
        %v314 = vshrl.u32 %v248, 16
        %v316 = vrot.slane %v314, 4
        %v317 = vor.u32 %v316, %v312
        %v318 = vrot.slane %v317, 4
        %v320 = vshll.u32 %v266, 16
        %v322 = vrot.slane %v320, 5
        %v323 = vsel %vm275, %v318, %v322
        %v325 = vshrl.u32 %v249, 16
        %v327 = vrot.slane %v325, 4
        %v328 = vshll.u32 %v249, 16
        %v330 = vrot.slane %v328, 5
        %v331 = vor.u32 %v327, %v330
        %v332 = vrot.slane %v331, 4
        %v334 = vshll.u32 %v250, 16
        %v336 = vrot.slane %v334, 5
        %v337 = vsel %vm275, %v332, %v336
        %v338 = vshrl.u32 %v250, 16
        %v340 = vrot.slane %v338, 4
        %v341 = vor.u32 %v340, %v336
        %v342 = vrot.slane %v341, 4
        %v344 = vshll.u32 %v267, 16
        %v346 = vrot.slane %v344, 5
        %v347 = vsel %vm275, %v342, %v346
        %v349 = vshrl.u32 %v251, 16
        %v351 = vrot.slane %v349, 4
        %v352 = vshll.u32 %v251, 16
        %v354 = vrot.slane %v352, 5
        %v355 = vor.u32 %v351, %v354
        %v356 = vrot.slane %v355, 4
        %v358 = vshll.u32 %v252, 16
        %v360 = vrot.slane %v358, 5
        %v361 = vsel %vm275, %v356, %v360
        %v362 = vshrl.u32 %v252, 16
        %v364 = vrot.slane %v362, 4
        %v365 = vor.u32 %v364, %v360
        %v366 = vrot.slane %v365, 4
        %v368 = vshll.u32 %v268, 16
        %v370 = vrot.slane %v368, 5
        %v371 = vsel %vm275, %v366, %v370
        %v373 = vshrl.u32 %v253, 16
        %v375 = vrot.slane %v373, 4
        %v376 = vshll.u32 %v253, 16
        %v378 = vrot.slane %v376, 5
        %v379 = vor.u32 %v375, %v378
        %v380 = vrot.slane %v379, 4
        %v382 = vshll.u32 %v254, 16
        %v384 = vrot.slane %v382, 5
        %v385 = vsel %vm275, %v380, %v384
        %v386 = vshrl.u32 %v254, 16
        %v388 = vrot.slane %v386, 4
        %v389 = vor.u32 %v388, %v384
        %v390 = vrot.slane %v389, 4
        %v392 = vshll.u32 %v269, 16
        %v394 = vrot.slane %v392, 5
        %v395 = vsel %vm275, %v390, %v394
        %v397 = vshrl.u32 %v255, 16
        %v399 = vrot.slane %v397, 4
        %v400 = vshll.u32 %v255, 16
        %v402 = vrot.slane %v400, 5
        %v403 = vor.u32 %v399, %v402
        %v404 = vrot.slane %v403, 4
        %v406 = vshll.u32 %v256, 16
        %v408 = vrot.slane %v406, 5
        %v409 = vsel %vm275, %v404, %v408
        %v410 = vshrl.u32 %v256, 16
        %v412 = vrot.slane %v410, 4
        %v413 = vor.u32 %v412, %v408
        %v414 = vrot.slane %v413, 4
        %v416 = vshll.u32 %v270, 16
        %v418 = vrot.slane %v416, 5
        %v419 = vsel %vm275, %v414, %v418
        %v421 = vshrl.u32 %v257, 16
        %v423 = vrot.slane %v421, 4
        %v424 = vshll.u32 %v257, 16
        %v426 = vrot.slane %v424, 5
        %v427 = vor.u32 %v423, %v426
        %v428 = vrot.slane %v427, 4
        %v430 = vshll.u32 %v258, 16
        %v432 = vrot.slane %v430, 5
        %v433 = vsel %vm275, %v428, %v432
        %v434 = vshrl.u32 %v258, 16
        %v436 = vrot.slane %v434, 4
        %v437 = vor.u32 %v436, %v432
        %v438 = vrot.slane %v437, 4
        %v440 = vshll.u32 %v271, 16
        %v442 = vrot.slane %v440, 5
        %v443 = vsel %vm275, %v438, %v442
        %v445 = vshrl.u32 %v259, 16
        %v447 = vrot.slane %v445, 4
        %v448 = vshll.u32 %v259, 16
        %v450 = vrot.slane %v448, 5
        %v451 = vor.u32 %v447, %v450
        %v452 = vrot.slane %v451, 4
        %v454 = vshll.u32 %v260, 16
        %v456 = vrot.slane %v454, 5
        %v457 = vsel %vm275, %v452, %v456
        %v458 = vshrl.u32 %v260, 16
        %v460 = vrot.slane %v458, 4
        %v461 = vor.u32 %v460, %v456
        %v462 = vrot.slane %v461, 4
        %v464 = vshll.u32 %v272, 16
        %v466 = vrot.slane %v464, 5
        %v467 = vsel %vm275, %v462, %v466
        %s468 = scalar_lea.vmem %s1, 16
        %v469 = vld [vmem:[%s468] sm:$0xf]
        %v470 = vld [vmem:[%s468 + $0x4] sm:$0xf]
        %v471 = vld [vmem:[%s468 + $0x8] sm:$0xf]
        %v472 = vld [vmem:[%s468 + $0xc] sm:$0xf]
        %v473 = vunpack.c.l.b16 %v289
        %v474 = vunpack.c.l.b16 %v299
        %v475 = vunpack.c.l.b16 %v313
        %v476 = vunpack.c.l.b16 %v323
        %v477 = vunpack.c.l.b16 %v337
        %v478 = vunpack.c.l.b16 %v347
        %v479 = vunpack.c.l.b16 %v361
        %v480 = vunpack.c.l.b16 %v371
        %v481 = vunpack.c.l.b16 %v385
        %v482 = vunpack.c.l.b16 %v395
        %v483 = vunpack.c.l.b16 %v409
        %v484 = vunpack.c.l.b16 %v419
        %v485 = vunpack.c.l.b16 %v433
        %v486 = vunpack.c.l.b16 %v443
        %v487 = vunpack.c.l.b16 %v457
        %v488 = vunpack.c.l.b16 %v467
        %v489 = vpack.c.b16 %v474, %v473
        %v490 = vpack.c.b16 %v476, %v475
        %v491 = vpack.c.b16 %v478, %v477
        %v492 = vpack.c.b16 %v480, %v479
        %v493 = vpack.c.b16 %v482, %v481
        %v494 = vpack.c.b16 %v484, %v483
        %v495 = vpack.c.b16 %v486, %v485
        %v496 = vpack.c.b16 %v488, %v487
        %v501 = vunpack.c.l.b16 %v469
        %v502 = vunpack.c.l.b16 %v470
        %v503 = vunpack.c.l.b16 %v471
        %v504 = vunpack.c.l.b16 %v472
        %v505 = vpack.c.b16 %v502, %v501
        %v506 = vpack.c.b16 %v504, %v503
        %vm509 = vcmask 261120
        %v511 = vsel %vm509, %v489, 0
        %v514 = vsel %vm509, %v490, 0
        %v517 = vsel %vm509, %v491, 0
        %v520 = vsel %vm509, %v492, 0
        %v523 = vsel %vm509, %v493, 0
        %v526 = vsel %vm509, %v494, 0
        %v529 = vsel %vm509, %v495, 0
        %v532 = vsel %vm509, %v496, 0
        %534 = vmatprep.subr.bf16.mxu0 0
        %535 = vmatpush1.bf16.msra.mxu0 %v505
        %536 = vmatprep.subr.bf16.mxu0 0
        %537 = vmatpush1.bf16.msra.mxu0 %v506
        %538 = vmatprep.subr.bf16.mxu0 0
        %539 = vmatpush1.bf16.msra.mxu0 0
        %540 = vmatprep.subr.bf16.mxu0 0
        %541 = vmatpush1.bf16.msra.mxu0 0
        %542 = vmatprep.subr.bf16.mxu0 0
        %543 = vmatpush1.bf16.msra.mxu0 0
        %544 = vmatprep.subr.bf16.mxu0 0
        %545 = vmatpush1.bf16.msra.mxu0 0
        %546 = vmatprep.subr.bf16.mxu0 0
        %547 = vmatpush1.bf16.msra.mxu0 0
        %548 = vmatprep.subr.bf16.mxu0 0
        %549 = vmatpush1.bf16.msra.mxu0 0
        %550 = vmatprep.subr.bf16.mxu0 0
        %551 = vmatpush1.bf16.msra.mxu0 0
        %552 = vmatprep.subr.bf16.mxu0 0
        %553 = vmatpush1.bf16.msra.mxu0 0
        %554 = vmatprep.subr.bf16.mxu0 0
        %555 = vmatpush1.bf16.msra.mxu0 0
        %556 = vmatprep.subr.bf16.mxu0 0
        %557 = vmatpush1.bf16.msra.mxu0 0
        %558 = vmatprep.subr.bf16.mxu0 0
        %559 = vmatpush1.bf16.msra.mxu0 0
        %560 = vmatprep.subr.bf16.mxu0 0
        %561 = vmatpush1.bf16.msra.mxu0 0
        %562 = vmatprep.subr.bf16.mxu0 0
        %563 = vmatpush1.bf16.msra.mxu0 0
        %564 = vmatprep.subr.bf16.mxu0 0
        %565 = vmatpush1.bf16.msra.mxu0 0
        %566 = vmatprep.mubr.bf16.mxu0 0
        %567 = vmatmul.mubr.bf16.gmra.mrb[0].mxu0 %v511
        %v568 = vpop.f32.mrb[0].mxu0
        %v569 = vadd.f32 0.0, %v568
        %v570 = vpop.f32.mrb[0].mxu0
        %v571 = vpop.f32.mrb[0].mxu0
        %v572 = vadd.f32 0.0, %v571
        %v573 = vpop.f32.mrb[0].mxu0
        %574 = vmatprep.mubr.bf16.mxu0 0
        %575 = vmatmul.mubr.bf16.gmra.mrb[0].mxu0 %v514
        %v576 = vpop.f32.mrb[0].mxu0
        %v577 = vadd.f32 0.0, %v576
        %v578 = vpop.f32.mrb[0].mxu0
        %v579 = vpop.f32.mrb[0].mxu0
        %v580 = vadd.f32 0.0, %v579
        %v581 = vpop.f32.mrb[0].mxu0
        %582 = vmatprep.mubr.bf16.mxu0 0
        %583 = vmatmul.mubr.bf16.gmra.mrb[0].mxu0 %v517
        %v584 = vpop.f32.mrb[0].mxu0
        %v585 = vadd.f32 0.0, %v584
        %v586 = vpop.f32.mrb[0].mxu0
        %v587 = vpop.f32.mrb[0].mxu0
        %v588 = vadd.f32 0.0, %v587
        %v589 = vpop.f32.mrb[0].mxu0
        %590 = vmatprep.mubr.bf16.mxu0 0
        %591 = vmatmul.mubr.bf16.gmra.mrb[0].mxu0 %v520
        %v592 = vpop.f32.mrb[0].mxu0
        %v593 = vadd.f32 0.0, %v592
        %v594 = vpop.f32.mrb[0].mxu0
        %v595 = vpop.f32.mrb[0].mxu0
        %v596 = vadd.f32 0.0, %v595
        %v597 = vpop.f32.mrb[0].mxu0
        %598 = vmatprep.mubr.bf16.mxu0 0
        %599 = vmatmul.mubr.bf16.gmra.mrb[0].mxu0 %v523
        %v600 = vpop.f32.mrb[0].mxu0
        %v601 = vadd.f32 0.0, %v600
        %v602 = vpop.f32.mrb[0].mxu0
        %v603 = vpop.f32.mrb[0].mxu0
        %v604 = vadd.f32 0.0, %v603
        %v605 = vpop.f32.mrb[0].mxu0
        %606 = vmatprep.mubr.bf16.mxu0 0
        %607 = vmatmul.mubr.bf16.gmra.mrb[0].mxu0 %v526
        %v608 = vpop.f32.mrb[0].mxu0
        %v609 = vadd.f32 0.0, %v608
        %v610 = vpop.f32.mrb[0].mxu0
        %v611 = vpop.f32.mrb[0].mxu0
        %v612 = vadd.f32 0.0, %v611
        %v613 = vpop.f32.mrb[0].mxu0
        %614 = vmatprep.mubr.bf16.mxu0 0
        %615 = vmatmul.mubr.bf16.gmra.mrb[0].mxu0 %v529
        %v616 = vpop.f32.mrb[0].mxu0
        %v617 = vadd.f32 0.0, %v616
        %v618 = vpop.f32.mrb[0].mxu0
        %v619 = vpop.f32.mrb[0].mxu0
        %v620 = vadd.f32 0.0, %v619
        %v621 = vpop.f32.mrb[0].mxu0
        %622 = vmatprep.mubr.bf16.mxu0 0
        %623 = vmatmul.mubr.bf16.gmra.mrb[0].mxu0 %v532
        %v624 = vpop.f32.mrb[0].mxu0
        %v625 = vadd.f32 0.0, %v624
        %v626 = vpop.f32.mrb[0].mxu0
        %v627 = vpop.f32.mrb[0].mxu0
        %v628 = vadd.f32 0.0, %v627
        %v629 = vpop.f32.mrb[0].mxu0
        %630 = vdwg.mxu0
        %v647 = vunpack.c.l.b16 %v245
        %v648 = vunpack.c.l.b16 %v246
        %v649 = vunpack.c.l.b16 %v247
        %v650 = vunpack.c.l.b16 %v248
        %v651 = vunpack.c.l.b16 %v249
        %v652 = vunpack.c.l.b16 %v250
        %v653 = vunpack.c.l.b16 %v251
        %v654 = vunpack.c.l.b16 %v252
        %v655 = vunpack.c.l.b16 %v253
        %v656 = vunpack.c.l.b16 %v254
        %v657 = vunpack.c.l.b16 %v255
        %v658 = vunpack.c.l.b16 %v256
        %v659 = vunpack.c.l.b16 %v257
        %v660 = vunpack.c.l.b16 %v258
        %v661 = vunpack.c.l.b16 %v259
        %v662 = vunpack.c.l.b16 %v260
        %v663 = vpack.c.b16 %v648, %v647
        %v664 = vpack.c.b16 %v650, %v649
        %v665 = vpack.c.b16 %v652, %v651
        %v666 = vpack.c.b16 %v654, %v653
        %v667 = vpack.c.b16 %v656, %v655
        %v668 = vpack.c.b16 %v658, %v657
        %v669 = vpack.c.b16 %v660, %v659
        %v670 = vpack.c.b16 %v662, %v661
        %v675 = vunpack.c.l.b16 %v261
        %v676 = vunpack.c.l.b16 %v262
        %v677 = vunpack.c.l.b16 %v263
        %v678 = vunpack.c.l.b16 %v264
        %v679 = vpack.c.b16 %v676, %v675
        %v680 = vpack.c.b16 %v678, %v677
        %v684 = vsel %vm509, %v663, 0
        %v687 = vsel %vm509, %v664, 0
        %v690 = vsel %vm509, %v665, 0
        %v693 = vsel %vm509, %v666, 0
        %v696 = vsel %vm509, %v667, 0
        %v699 = vsel %vm509, %v668, 0
        %v702 = vsel %vm509, %v669, 0
        %v705 = vsel %vm509, %v670, 0
        %707 = vmatprep.subr.bf16.mxu0 0
        %708 = vmatpush1.bf16.msra.mxu0 %v679
        %709 = vmatprep.subr.bf16.mxu0 0
        %710 = vmatpush1.bf16.msra.mxu0 %v680
        %711 = vmatprep.subr.bf16.mxu0 0
        %712 = vmatpush1.bf16.msra.mxu0 0
        %713 = vmatprep.subr.bf16.mxu0 0
        %714 = vmatpush1.bf16.msra.mxu0 0
        %715 = vmatprep.subr.bf16.mxu0 0
        %716 = vmatpush1.bf16.msra.mxu0 0
        %717 = vmatprep.subr.bf16.mxu0 0
        %718 = vmatpush1.bf16.msra.mxu0 0
        %719 = vmatprep.subr.bf16.mxu0 0
        %720 = vmatpush1.bf16.msra.mxu0 0
        %721 = vmatprep.subr.bf16.mxu0 0
        %722 = vmatpush1.bf16.msra.mxu0 0
        %723 = vmatprep.subr.bf16.mxu0 0
        %724 = vmatpush1.bf16.msra.mxu0 0
        %725 = vmatprep.subr.bf16.mxu0 0
        %726 = vmatpush1.bf16.msra.mxu0 0
        %727 = vmatprep.subr.bf16.mxu0 0
        %728 = vmatpush1.bf16.msra.mxu0 0
        %729 = vmatprep.subr.bf16.mxu0 0
        %730 = vmatpush1.bf16.msra.mxu0 0
        %731 = vmatprep.subr.bf16.mxu0 0
        %732 = vmatpush1.bf16.msra.mxu0 0
        %733 = vmatprep.subr.bf16.mxu0 0
        %734 = vmatpush1.bf16.msra.mxu0 0
        %735 = vmatprep.subr.bf16.mxu0 0
        %736 = vmatpush1.bf16.msra.mxu0 0
        %737 = vmatprep.subr.bf16.mxu0 0
        %738 = vmatpush1.bf16.msra.mxu0 0
        %739 = vmatprep.mubr.bf16.mxu0 0
        %740 = vmatmul.mubr.bf16.gmra.mrb[0].mxu0 %v684
        %v741 = vpop.f32.mrb[0].mxu0
        %v742 = vadd.f32 %v569, %v741
        %v743 = vpop.f32.mrb[0].mxu0
        %v744 = vpop.f32.mrb[0].mxu0
        %v745 = vadd.f32 %v572, %v744
        %v746 = vpop.f32.mrb[0].mxu0
        %747 = vmatprep.mubr.bf16.mxu0 0
        %748 = vmatmul.mubr.bf16.gmra.mrb[0].mxu0 %v687
        %v749 = vpop.f32.mrb[0].mxu0
        %v750 = vadd.f32 %v577, %v749
        %v751 = vpop.f32.mrb[0].mxu0
        %v752 = vpop.f32.mrb[0].mxu0
        %v753 = vadd.f32 %v580, %v752
        %v754 = vpop.f32.mrb[0].mxu0
        %755 = vmatprep.mubr.bf16.mxu0 0
        %756 = vmatmul.mubr.bf16.gmra.mrb[0].mxu0 %v690
        %v757 = vpop.f32.mrb[0].mxu0
        %v758 = vadd.f32 %v585, %v757
        %v759 = vpop.f32.mrb[0].mxu0
        %v760 = vpop.f32.mrb[0].mxu0
        %v761 = vadd.f32 %v588, %v760
        %v762 = vpop.f32.mrb[0].mxu0
        %763 = vmatprep.mubr.bf16.mxu0 0
        %764 = vmatmul.mubr.bf16.gmra.mrb[0].mxu0 %v693
        %v765 = vpop.f32.mrb[0].mxu0
        %v766 = vadd.f32 %v593, %v765
        %v767 = vpop.f32.mrb[0].mxu0
        %v768 = vpop.f32.mrb[0].mxu0
        %v769 = vadd.f32 %v596, %v768
        %v770 = vpop.f32.mrb[0].mxu0
        %771 = vmatprep.mubr.bf16.mxu0 0
        %772 = vmatmul.mubr.bf16.gmra.mrb[0].mxu0 %v696
        %v773 = vpop.f32.mrb[0].mxu0
        %v774 = vadd.f32 %v601, %v773
        %v775 = vpop.f32.mrb[0].mxu0
        %v776 = vpop.f32.mrb[0].mxu0
        %v777 = vadd.f32 %v604, %v776
        %v778 = vpop.f32.mrb[0].mxu0
        %779 = vmatprep.mubr.bf16.mxu0 0
        %780 = vmatmul.mubr.bf16.gmra.mrb[0].mxu0 %v699
        %v781 = vpop.f32.mrb[0].mxu0
        %v782 = vadd.f32 %v609, %v781
        %v783 = vpop.f32.mrb[0].mxu0
        %v784 = vpop.f32.mrb[0].mxu0
        %v785 = vadd.f32 %v612, %v784
        %v786 = vpop.f32.mrb[0].mxu0
        %787 = vmatprep.mubr.bf16.mxu0 0
        %788 = vmatmul.mubr.bf16.gmra.mrb[0].mxu0 %v702
        %v789 = vpop.f32.mrb[0].mxu0
        %v790 = vadd.f32 %v617, %v789
        %v791 = vpop.f32.mrb[0].mxu0
        %v792 = vpop.f32.mrb[0].mxu0
        %v793 = vadd.f32 %v620, %v792
        %v794 = vpop.f32.mrb[0].mxu0
        %795 = vmatprep.mubr.bf16.mxu0 0
        %796 = vmatmul.mubr.bf16.gmra.mrb[0].mxu0 %v705
        %v797 = vpop.f32.mrb[0].mxu0
        %v798 = vadd.f32 %v625, %v797
        %v799 = vpop.f32.mrb[0].mxu0
        %v800 = vpop.f32.mrb[0].mxu0
        %v801 = vadd.f32 %v628, %v800
        %v802 = vpop.f32.mrb[0].mxu0
        %803 = vdwg.mxu0
        %v804 = vld [vmem:[%s244] sm:$0xe]
        %v805 = vld [vmem:[%s244 + $0xc] sm:$0xe]
        %v806 = vld [vmem:[%s244 + $0x18] sm:$0xe]
        %v807 = vld [vmem:[%s244 + $0x24] sm:$0xe]
        %v808 = vld [vmem:[%s244 + $0x30] sm:$0xe]
        %v809 = vld [vmem:[%s244 + $0x3c] sm:$0xe]
        %v810 = vld [vmem:[%s244 + $0x48] sm:$0xe]
        %v811 = vld [vmem:[%s244 + $0x54] sm:$0xe]
        %vm828 = vcmask 1042432
        %vm829 = vcmask 1046532
        %vm830 = vmor %vm828, %vm829
        %v831 = vrot.slane %v804, 5
        %v832 = vrot.slane %v831, 4
        %v833 = vrot.slane %v246, 5
        %v834 = vsel %vm830, %v832, %v833
        %v835 = vrot.slane %v833, 4
        %v836 = vrot.slane %v265, 5
        %v837 = vsel %vm830, %v835, %v836
        %v838 = vrot.slane %v805, 5
        %v839 = vrot.slane %v838, 4
        %v840 = vrot.slane %v248, 5
        %v841 = vsel %vm830, %v839, %v840
        %v842 = vrot.slane %v840, 4
        %v843 = vrot.slane %v266, 5
        %v844 = vsel %vm830, %v842, %v843
        %v845 = vrot.slane %v806, 5
        %v846 = vrot.slane %v845, 4
        %v847 = vrot.slane %v250, 5
        %v848 = vsel %vm830, %v846, %v847
        %v849 = vrot.slane %v847, 4
        %v850 = vrot.slane %v267, 5
        %v851 = vsel %vm830, %v849, %v850
        %v852 = vrot.slane %v807, 5
        %v853 = vrot.slane %v852, 4
        %v854 = vrot.slane %v252, 5
        %v855 = vsel %vm830, %v853, %v854
        %v856 = vrot.slane %v854, 4
        %v857 = vrot.slane %v268, 5
        %v858 = vsel %vm830, %v856, %v857
        %v859 = vrot.slane %v808, 5
        %v860 = vrot.slane %v859, 4
        %v861 = vrot.slane %v254, 5
        %v862 = vsel %vm830, %v860, %v861
        %v863 = vrot.slane %v861, 4
        %v864 = vrot.slane %v269, 5
        %v865 = vsel %vm830, %v863, %v864
        %v866 = vrot.slane %v809, 5
        %v867 = vrot.slane %v866, 4
        %v868 = vrot.slane %v256, 5
        %v869 = vsel %vm830, %v867, %v868
        %v870 = vrot.slane %v868, 4
        %v871 = vrot.slane %v270, 5
        %v872 = vsel %vm830, %v870, %v871
        %v873 = vrot.slane %v810, 5
        %v874 = vrot.slane %v873, 4
        %v875 = vrot.slane %v258, 5
        %v876 = vsel %vm830, %v874, %v875
        %v877 = vrot.slane %v875, 4
        %v878 = vrot.slane %v271, 5
        %v879 = vsel %vm830, %v877, %v878
        %v880 = vrot.slane %v811, 5
        %v881 = vrot.slane %v880, 4
        %v882 = vrot.slane %v260, 5
        %v883 = vsel %vm830, %v881, %v882
        %v884 = vrot.slane %v882, 4
        %v885 = vrot.slane %v272, 5
        %v886 = vsel %vm830, %v884, %v885
        %s887 = scalar_lea.vmem %s1, 32
        %v888 = vld [vmem:[%s887] sm:$0xf]
        %v889 = vld [vmem:[%s887 + $0x4] sm:$0xf]
        %v890 = vld [vmem:[%s887 + $0x8] sm:$0xf]
        %v891 = vld [vmem:[%s887 + $0xc] sm:$0xf]
        %v892 = vunpack.c.l.b16 %v834
        %v893 = vunpack.c.l.b16 %v837
        %v894 = vunpack.c.l.b16 %v841
        %v895 = vunpack.c.l.b16 %v844
        %v896 = vunpack.c.l.b16 %v848
        %v897 = vunpack.c.l.b16 %v851
        %v898 = vunpack.c.l.b16 %v855
        %v899 = vunpack.c.l.b16 %v858
        %v900 = vunpack.c.l.b16 %v862
        %v901 = vunpack.c.l.b16 %v865
        %v902 = vunpack.c.l.b16 %v869
        %v903 = vunpack.c.l.b16 %v872
        %v904 = vunpack.c.l.b16 %v876
        %v905 = vunpack.c.l.b16 %v879
        %v906 = vunpack.c.l.b16 %v883
        %v907 = vunpack.c.l.b16 %v886
        %v908 = vpack.c.b16 %v893, %v892
        %v909 = vpack.c.b16 %v895, %v894
        %v910 = vpack.c.b16 %v897, %v896
        %v911 = vpack.c.b16 %v899, %v898
        %v912 = vpack.c.b16 %v901, %v900
        %v913 = vpack.c.b16 %v903, %v902
        %v914 = vpack.c.b16 %v905, %v904
        %v915 = vpack.c.b16 %v907, %v906
        %v920 = vunpack.c.l.b16 %v888
        %v921 = vunpack.c.l.b16 %v889
        %v922 = vunpack.c.l.b16 %v890
        %v923 = vunpack.c.l.b16 %v891
        %v924 = vpack.c.b16 %v921, %v920
        %v925 = vpack.c.b16 %v923, %v922
        %v929 = vsel %vm509, %v908, 0
        %v932 = vsel %vm509, %v909, 0
        %v935 = vsel %vm509, %v910, 0
        %v938 = vsel %vm509, %v911, 0
        %v941 = vsel %vm509, %v912, 0
        %v944 = vsel %vm509, %v913, 0
        %v947 = vsel %vm509, %v914, 0
        %v950 = vsel %vm509, %v915, 0
        %952 = vmatprep.subr.bf16.mxu0 0
        %953 = vmatpush1.bf16.msra.mxu0 %v924
        %954 = vmatprep.subr.bf16.mxu0 0
        %955 = vmatpush1.bf16.msra.mxu0 %v925
        %956 = vmatprep.subr.bf16.mxu0 0
        %957 = vmatpush1.bf16.msra.mxu0 0
        %958 = vmatprep.subr.bf16.mxu0 0
        %959 = vmatpush1.bf16.msra.mxu0 0
        %960 = vmatprep.subr.bf16.mxu0 0
        %961 = vmatpush1.bf16.msra.mxu0 0
        %962 = vmatprep.subr.bf16.mxu0 0
        %963 = vmatpush1.bf16.msra.mxu0 0
        %964 = vmatprep.subr.bf16.mxu0 0
        %965 = vmatpush1.bf16.msra.mxu0 0
        %966 = vmatprep.subr.bf16.mxu0 0
        %967 = vmatpush1.bf16.msra.mxu0 0
        %968 = vmatprep.subr.bf16.mxu0 0
        %969 = vmatpush1.bf16.msra.mxu0 0
        %970 = vmatprep.subr.bf16.mxu0 0
        %971 = vmatpush1.bf16.msra.mxu0 0
        %972 = vmatprep.subr.bf16.mxu0 0
        %973 = vmatpush1.bf16.msra.mxu0 0
        %974 = vmatprep.subr.bf16.mxu0 0
        %975 = vmatpush1.bf16.msra.mxu0 0
        %976 = vmatprep.subr.bf16.mxu0 0
        %977 = vmatpush1.bf16.msra.mxu0 0
        %978 = vmatprep.subr.bf16.mxu0 0
        %979 = vmatpush1.bf16.msra.mxu0 0
        %980 = vmatprep.subr.bf16.mxu0 0
        %981 = vmatpush1.bf16.msra.mxu0 0
        %982 = vmatprep.subr.bf16.mxu0 0
        %983 = vmatpush1.bf16.msra.mxu0 0
        %984 = vmatprep.mubr.bf16.mxu0 0
        %985 = vmatmul.mubr.bf16.gmra.mrb[0].mxu0 %v929
        %v986 = vpop.f32.mrb[0].mxu0
        %v987 = vadd.f32 0.0, %v986
        %v988 = vpop.f32.mrb[0].mxu0
        %v989 = vpop.f32.mrb[0].mxu0
        %v990 = vadd.f32 0.0, %v989
        %v991 = vpop.f32.mrb[0].mxu0
        %992 = vmatprep.mubr.bf16.mxu0 0
        %993 = vmatmul.mubr.bf16.gmra.mrb[0].mxu0 %v932
        %v994 = vpop.f32.mrb[0].mxu0
        %v995 = vadd.f32 0.0, %v994
        %v996 = vpop.f32.mrb[0].mxu0
        %v997 = vpop.f32.mrb[0].mxu0
        %v998 = vadd.f32 0.0, %v997
        %v999 = vpop.f32.mrb[0].mxu0
        %1000 = vmatprep.mubr.bf16.mxu0 0
        %1001 = vmatmul.mubr.bf16.gmra.mrb[0].mxu0 %v935
        %v1002 = vpop.f32.mrb[0].mxu0
        %v1003 = vadd.f32 0.0, %v1002
        %v1004 = vpop.f32.mrb[0].mxu0
        %v1005 = vpop.f32.mrb[0].mxu0
        %v1006 = vadd.f32 0.0, %v1005
        %v1007 = vpop.f32.mrb[0].mxu0
        %1008 = vmatprep.mubr.bf16.mxu0 0
        %1009 = vmatmul.mubr.bf16.gmra.mrb[0].mxu0 %v938
        %v1010 = vpop.f32.mrb[0].mxu0
        %v1011 = vadd.f32 0.0, %v1010
        %v1012 = vpop.f32.mrb[0].mxu0
        %v1013 = vpop.f32.mrb[0].mxu0
        %v1014 = vadd.f32 0.0, %v1013
        %v1015 = vpop.f32.mrb[0].mxu0
        %1016 = vmatprep.mubr.bf16.mxu0 0
        %1017 = vmatmul.mubr.bf16.gmra.mrb[0].mxu0 %v941
        %v1018 = vpop.f32.mrb[0].mxu0
        %v1019 = vadd.f32 0.0, %v1018
        %v1020 = vpop.f32.mrb[0].mxu0
        %v1021 = vpop.f32.mrb[0].mxu0
        %v1022 = vadd.f32 0.0, %v1021
        %v1023 = vpop.f32.mrb[0].mxu0
        %1024 = vmatprep.mubr.bf16.mxu0 0
        %1025 = vmatmul.mubr.bf16.gmra.mrb[0].mxu0 %v944
        %v1026 = vpop.f32.mrb[0].mxu0
        %v1027 = vadd.f32 0.0, %v1026
        %v1028 = vpop.f32.mrb[0].mxu0
        %v1029 = vpop.f32.mrb[0].mxu0
        %v1030 = vadd.f32 0.0, %v1029
        %v1031 = vpop.f32.mrb[0].mxu0
        %1032 = vmatprep.mubr.bf16.mxu0 0
        %1033 = vmatmul.mubr.bf16.gmra.mrb[0].mxu0 %v947
        %v1034 = vpop.f32.mrb[0].mxu0
        %v1035 = vadd.f32 0.0, %v1034
        %v1036 = vpop.f32.mrb[0].mxu0
        %v1037 = vpop.f32.mrb[0].mxu0
        %v1038 = vadd.f32 0.0, %v1037
        %v1039 = vpop.f32.mrb[0].mxu0
        %1040 = vmatprep.mubr.bf16.mxu0 0
        %1041 = vmatmul.mubr.bf16.gmra.mrb[0].mxu0 %v950
        %v1042 = vpop.f32.mrb[0].mxu0
        %v1043 = vadd.f32 0.0, %v1042
        %v1044 = vpop.f32.mrb[0].mxu0
        %v1045 = vpop.f32.mrb[0].mxu0
        %v1046 = vadd.f32 0.0, %v1045
        %v1047 = vpop.f32.mrb[0].mxu0
        %1048 = vdwg.mxu0
        %v1049 = vadd.f32 %v742, %v987
        %v1050 = vadd.f32 %v745, %v990
        %v1051 = vadd.f32 %v750, %v995
        %v1052 = vadd.f32 %v753, %v998
        %v1053 = vadd.f32 %v758, %v1003
        %v1054 = vadd.f32 %v761, %v1006
        %v1055 = vadd.f32 %v766, %v1011
        %v1056 = vadd.f32 %v769, %v1014
        %v1057 = vadd.f32 %v774, %v1019
        %v1058 = vadd.f32 %v777, %v1022
        %v1059 = vadd.f32 %v782, %v1027
        %v1060 = vadd.f32 %v785, %v1030
        %v1061 = vadd.f32 %v790, %v1035
        %v1062 = vadd.f32 %v793, %v1038
        %v1063 = vadd.f32 %v798, %v1043
        %v1064 = vadd.f32 %v801, %v1046
        %s1065 = sadd.s32 %s241, 1
        %s1066 = smul.u32 %s1065, 3
        %s1067 = smul.addr %s1066, 4
        %s1068 = scalar_lea.vmem %s233, %s1067
        %v1069 = vld [vmem:[%s1068] sm:$0xf]
        %v1070 = vld [vmem:[%s1068 + $0x4] sm:$0xf]
        %v1071 = vld [vmem:[%s1068 + $0xc] sm:$0xf]
        %v1072 = vld [vmem:[%s1068 + $0x10] sm:$0xf]
        %v1073 = vld [vmem:[%s1068 + $0x18] sm:$0xf]
        %v1074 = vld [vmem:[%s1068 + $0x1c] sm:$0xf]
        %v1075 = vld [vmem:[%s1068 + $0x24] sm:$0xf]
        %v1076 = vld [vmem:[%s1068 + $0x28] sm:$0xf]
        %v1077 = vld [vmem:[%s1068 + $0x30] sm:$0xf]
        %v1078 = vld [vmem:[%s1068 + $0x34] sm:$0xf]
        %v1079 = vld [vmem:[%s1068 + $0x3c] sm:$0xf]
        %v1080 = vld [vmem:[%s1068 + $0x40] sm:$0xf]
        %v1081 = vld [vmem:[%s1068 + $0x48] sm:$0xf]
        %v1082 = vld [vmem:[%s1068 + $0x4c] sm:$0xf]
        %v1083 = vld [vmem:[%s1068 + $0x54] sm:$0xf]
        %v1084 = vld [vmem:[%s1068 + $0x58] sm:$0xf]
        %s1085 = scalar_lea.vmem %s1, 48
        %v1086 = vld [vmem:[%s1085] sm:$0xf]
        %v1087 = vld [vmem:[%s1085 + $0x4] sm:$0xf]
        %v1088 = vld [vmem:[%s1085 + $0x8] sm:$0xf]
        %v1089 = vld [vmem:[%s1085 + $0xc] sm:$0xf]
        %v1106 = vunpack.c.l.b16 %v1069
        %v1107 = vunpack.c.l.b16 %v1070
        %v1108 = vunpack.c.l.b16 %v1071
        %v1109 = vunpack.c.l.b16 %v1072
        %v1110 = vunpack.c.l.b16 %v1073
        %v1111 = vunpack.c.l.b16 %v1074
        %v1112 = vunpack.c.l.b16 %v1075
        %v1113 = vunpack.c.l.b16 %v1076
        %v1114 = vunpack.c.l.b16 %v1077
        %v1115 = vunpack.c.l.b16 %v1078
        %v1116 = vunpack.c.l.b16 %v1079
        %v1117 = vunpack.c.l.b16 %v1080
        %v1118 = vunpack.c.l.b16 %v1081
        %v1119 = vunpack.c.l.b16 %v1082
        %v1120 = vunpack.c.l.b16 %v1083
        %v1121 = vunpack.c.l.b16 %v1084
        %v1122 = vpack.c.b16 %v1107, %v1106
        %v1123 = vpack.c.b16 %v1109, %v1108
        %v1124 = vpack.c.b16 %v1111, %v1110
        %v1125 = vpack.c.b16 %v1113, %v1112
        %v1126 = vpack.c.b16 %v1115, %v1114
        %v1127 = vpack.c.b16 %v1117, %v1116
        %v1128 = vpack.c.b16 %v1119, %v1118
        %v1129 = vpack.c.b16 %v1121, %v1120
        %v1134 = vunpack.c.l.b16 %v1086
        %v1135 = vunpack.c.l.b16 %v1087
        %v1136 = vunpack.c.l.b16 %v1088
        %v1137 = vunpack.c.l.b16 %v1089
        %v1138 = vpack.c.b16 %v1135, %v1134
        %v1139 = vpack.c.b16 %v1137, %v1136
        %v1143 = vsel %vm509, %v1122, 0
        %v1146 = vsel %vm509, %v1123, 0
        %v1149 = vsel %vm509, %v1124, 0
        %v1152 = vsel %vm509, %v1125, 0
        %v1155 = vsel %vm509, %v1126, 0
        %v1158 = vsel %vm509, %v1127, 0
        %v1161 = vsel %vm509, %v1128, 0
        %v1164 = vsel %vm509, %v1129, 0
        %1166 = vmatprep.subr.bf16.mxu0 0
        %1167 = vmatpush1.bf16.msra.mxu0 %v1138
        %1168 = vmatprep.subr.bf16.mxu0 0
        %1169 = vmatpush1.bf16.msra.mxu0 %v1139
        %1170 = vmatprep.subr.bf16.mxu0 0
        %1171 = vmatpush1.bf16.msra.mxu0 0
        %1172 = vmatprep.subr.bf16.mxu0 0
        %1173 = vmatpush1.bf16.msra.mxu0 0
        %1174 = vmatprep.subr.bf16.mxu0 0
        %1175 = vmatpush1.bf16.msra.mxu0 0
        %1176 = vmatprep.subr.bf16.mxu0 0
        %1177 = vmatpush1.bf16.msra.mxu0 0
        %1178 = vmatprep.subr.bf16.mxu0 0
        %1179 = vmatpush1.bf16.msra.mxu0 0
        %1180 = vmatprep.subr.bf16.mxu0 0
        %1181 = vmatpush1.bf16.msra.mxu0 0
        %1182 = vmatprep.subr.bf16.mxu0 0
        %1183 = vmatpush1.bf16.msra.mxu0 0
        %1184 = vmatprep.subr.bf16.mxu0 0
        %1185 = vmatpush1.bf16.msra.mxu0 0
        %1186 = vmatprep.subr.bf16.mxu0 0
        %1187 = vmatpush1.bf16.msra.mxu0 0
        %1188 = vmatprep.subr.bf16.mxu0 0
        %1189 = vmatpush1.bf16.msra.mxu0 0
        %1190 = vmatprep.subr.bf16.mxu0 0
        %1191 = vmatpush1.bf16.msra.mxu0 0
        %1192 = vmatprep.subr.bf16.mxu0 0
        %1193 = vmatpush1.bf16.msra.mxu0 0
        %1194 = vmatprep.subr.bf16.mxu0 0
        %1195 = vmatpush1.bf16.msra.mxu0 0
        %1196 = vmatprep.subr.bf16.mxu0 0
        %1197 = vmatpush1.bf16.msra.mxu0 0
        %1198 = vmatprep.mubr.bf16.mxu0 0
        %1199 = vmatmul.mubr.bf16.gmra.mrb[0].mxu0 %v1143
        %v1200 = vpop.f32.mrb[0].mxu0
        %v1201 = vadd.f32 0.0, %v1200
        %v1202 = vpop.f32.mrb[0].mxu0
        %v1203 = vpop.f32.mrb[0].mxu0
        %v1204 = vadd.f32 0.0, %v1203
        %v1205 = vpop.f32.mrb[0].mxu0
        %1206 = vmatprep.mubr.bf16.mxu0 0
        %1207 = vmatmul.mubr.bf16.gmra.mrb[0].mxu0 %v1146
        %v1208 = vpop.f32.mrb[0].mxu0
        %v1209 = vadd.f32 0.0, %v1208
        %v1210 = vpop.f32.mrb[0].mxu0
        %v1211 = vpop.f32.mrb[0].mxu0
        %v1212 = vadd.f32 0.0, %v1211
        %v1213 = vpop.f32.mrb[0].mxu0
        %1214 = vmatprep.mubr.bf16.mxu0 0
        %1215 = vmatmul.mubr.bf16.gmra.mrb[0].mxu0 %v1149
        %v1216 = vpop.f32.mrb[0].mxu0
        %v1217 = vadd.f32 0.0, %v1216
        %v1218 = vpop.f32.mrb[0].mxu0
        %v1219 = vpop.f32.mrb[0].mxu0
        %v1220 = vadd.f32 0.0, %v1219
        %v1221 = vpop.f32.mrb[0].mxu0
        %1222 = vmatprep.mubr.bf16.mxu0 0
        %1223 = vmatmul.mubr.bf16.gmra.mrb[0].mxu0 %v1152
        %v1224 = vpop.f32.mrb[0].mxu0
        %v1225 = vadd.f32 0.0, %v1224
        %v1226 = vpop.f32.mrb[0].mxu0
        %v1227 = vpop.f32.mrb[0].mxu0
        %v1228 = vadd.f32 0.0, %v1227
        %v1229 = vpop.f32.mrb[0].mxu0
        %1230 = vmatprep.mubr.bf16.mxu0 0
        %1231 = vmatmul.mubr.bf16.gmra.mrb[0].mxu0 %v1155
        %v1232 = vpop.f32.mrb[0].mxu0
        %v1233 = vadd.f32 0.0, %v1232
        %v1234 = vpop.f32.mrb[0].mxu0
        %v1235 = vpop.f32.mrb[0].mxu0
        %v1236 = vadd.f32 0.0, %v1235
        %v1237 = vpop.f32.mrb[0].mxu0
        %1238 = vmatprep.mubr.bf16.mxu0 0
        %1239 = vmatmul.mubr.bf16.gmra.mrb[0].mxu0 %v1158
        %v1240 = vpop.f32.mrb[0].mxu0
        %v1241 = vadd.f32 0.0, %v1240
        %v1242 = vpop.f32.mrb[0].mxu0
        %v1243 = vpop.f32.mrb[0].mxu0
        %v1244 = vadd.f32 0.0, %v1243
        %v1245 = vpop.f32.mrb[0].mxu0
        %1246 = vmatprep.mubr.bf16.mxu0 0
        %1247 = vmatmul.mubr.bf16.gmra.mrb[0].mxu0 %v1161
        %v1248 = vpop.f32.mrb[0].mxu0
        %v1249 = vadd.f32 0.0, %v1248
        %v1250 = vpop.f32.mrb[0].mxu0
        %v1251 = vpop.f32.mrb[0].mxu0
        %v1252 = vadd.f32 0.0, %v1251
        %v1253 = vpop.f32.mrb[0].mxu0
        %1254 = vmatprep.mubr.bf16.mxu0 0
        %1255 = vmatmul.mubr.bf16.gmra.mrb[0].mxu0 %v1164
        %v1256 = vpop.f32.mrb[0].mxu0
        %v1257 = vadd.f32 0.0, %v1256
        %v1258 = vpop.f32.mrb[0].mxu0
        %v1259 = vpop.f32.mrb[0].mxu0
        %v1260 = vadd.f32 0.0, %v1259
        %v1261 = vpop.f32.mrb[0].mxu0
        %1262 = vdwg.mxu0
        %v1263 = vadd.f32 %v1049, %v1201
        %v1264 = vadd.f32 %v1050, %v1204
        %v1265 = vadd.f32 %v1051, %v1209
        %v1266 = vadd.f32 %v1052, %v1212
        %v1267 = vadd.f32 %v1053, %v1217
        %v1268 = vadd.f32 %v1054, %v1220
        %v1269 = vadd.f32 %v1055, %v1225
        %v1270 = vadd.f32 %v1056, %v1228
        %v1271 = vadd.f32 %v1057, %v1233
        %v1272 = vadd.f32 %v1058, %v1236
        %v1273 = vadd.f32 %v1059, %v1241
        %v1274 = vadd.f32 %v1060, %v1244
        %v1275 = vadd.f32 %v1061, %v1249
        %v1276 = vadd.f32 %v1062, %v1252
        %v1277 = vadd.f32 %v1063, %v1257
        %v1278 = vadd.f32 %v1064, %v1260
        %v1279 = vld [vmem:[%s1068] sm:$0xf]
        %v1280 = vld [vmem:[%s1068 + $0x4] sm:$0xf]
        %v1281 = vld [vmem:[%s1068 + $0x8] sm:$0x1]
        %v1282 = vld [vmem:[%s1068 + $0xc] sm:$0xf]
        %v1283 = vld [vmem:[%s1068 + $0x10] sm:$0xf]
        %v1284 = vld [vmem:[%s1068 + $0x14] sm:$0x1]
        %v1285 = vld [vmem:[%s1068 + $0x18] sm:$0xf]
        %v1286 = vld [vmem:[%s1068 + $0x1c] sm:$0xf]
        %v1287 = vld [vmem:[%s1068 + $0x20] sm:$0x1]
        %v1288 = vld [vmem:[%s1068 + $0x24] sm:$0xf]
        %v1289 = vld [vmem:[%s1068 + $0x28] sm:$0xf]
        %v1290 = vld [vmem:[%s1068 + $0x2c] sm:$0x1]
        %v1291 = vld [vmem:[%s1068 + $0x30] sm:$0xf]
        %v1292 = vld [vmem:[%s1068 + $0x34] sm:$0xf]
        %v1293 = vld [vmem:[%s1068 + $0x38] sm:$0x1]
        %v1294 = vld [vmem:[%s1068 + $0x3c] sm:$0xf]
        %v1295 = vld [vmem:[%s1068 + $0x40] sm:$0xf]
        %v1296 = vld [vmem:[%s1068 + $0x44] sm:$0x1]
        %v1297 = vld [vmem:[%s1068 + $0x48] sm:$0xf]
        %v1298 = vld [vmem:[%s1068 + $0x4c] sm:$0xf]
        %v1299 = vld [vmem:[%s1068 + $0x50] sm:$0x1]
        %v1300 = vld [vmem:[%s1068 + $0x54] sm:$0xf]
        %v1301 = vld [vmem:[%s1068 + $0x58] sm:$0xf]
        %v1302 = vld [vmem:[%s1068 + $0x5c] sm:$0x1]
        %v1304 = vshrl.u32 %v1279, 16
        %v1306 = vrot.slane %v1304, 4
        %v1307 = vshll.u32 %v1279, 16
        %v1309 = vrot.slane %v1307, 5
        %v1310 = vor.u32 %v1306, %v1309
        %v1311 = vrot.slane %v1310, 4
        %v1313 = vshll.u32 %v1280, 16
        %v1315 = vrot.slane %v1313, 5
        %v1316 = vsel %vm275, %v1311, %v1315
        %v1317 = vshrl.u32 %v1280, 16
        %v1319 = vrot.slane %v1317, 4
        %v1320 = vor.u32 %v1319, %v1315
        %v1321 = vrot.slane %v1320, 4
        %v1323 = vshll.u32 %v1281, 16
        %v1325 = vrot.slane %v1323, 5
        %v1326 = vsel %vm275, %v1321, %v1325
        %v1328 = vshrl.u32 %v1282, 16
        %v1330 = vrot.slane %v1328, 4
        %v1331 = vshll.u32 %v1282, 16
        %v1333 = vrot.slane %v1331, 5
        %v1334 = vor.u32 %v1330, %v1333
        %v1335 = vrot.slane %v1334, 4
        %v1337 = vshll.u32 %v1283, 16
        %v1339 = vrot.slane %v1337, 5
        %v1340 = vsel %vm275, %v1335, %v1339
        %v1341 = vshrl.u32 %v1283, 16
        %v1343 = vrot.slane %v1341, 4
        %v1344 = vor.u32 %v1343, %v1339
        %v1345 = vrot.slane %v1344, 4
        %v1347 = vshll.u32 %v1284, 16
        %v1349 = vrot.slane %v1347, 5
        %v1350 = vsel %vm275, %v1345, %v1349
        %v1352 = vshrl.u32 %v1285, 16
        %v1354 = vrot.slane %v1352, 4
        %v1355 = vshll.u32 %v1285, 16
        %v1357 = vrot.slane %v1355, 5
        %v1358 = vor.u32 %v1354, %v1357
        %v1359 = vrot.slane %v1358, 4
        %v1361 = vshll.u32 %v1286, 16
        %v1363 = vrot.slane %v1361, 5
        %v1364 = vsel %vm275, %v1359, %v1363
        %v1365 = vshrl.u32 %v1286, 16
        %v1367 = vrot.slane %v1365, 4
        %v1368 = vor.u32 %v1367, %v1363
        %v1369 = vrot.slane %v1368, 4
        %v1371 = vshll.u32 %v1287, 16
        %v1373 = vrot.slane %v1371, 5
        %v1374 = vsel %vm275, %v1369, %v1373
        %v1376 = vshrl.u32 %v1288, 16
        %v1378 = vrot.slane %v1376, 4
        %v1379 = vshll.u32 %v1288, 16
        %v1381 = vrot.slane %v1379, 5
        %v1382 = vor.u32 %v1378, %v1381
        %v1383 = vrot.slane %v1382, 4
        %v1385 = vshll.u32 %v1289, 16
        %v1387 = vrot.slane %v1385, 5
        %v1388 = vsel %vm275, %v1383, %v1387
        %v1389 = vshrl.u32 %v1289, 16
        %v1391 = vrot.slane %v1389, 4
        %v1392 = vor.u32 %v1391, %v1387
        %v1393 = vrot.slane %v1392, 4
        %v1395 = vshll.u32 %v1290, 16
        %v1397 = vrot.slane %v1395, 5
        %v1398 = vsel %vm275, %v1393, %v1397
        %v1400 = vshrl.u32 %v1291, 16
        %v1402 = vrot.slane %v1400, 4
        %v1403 = vshll.u32 %v1291, 16
        %v1405 = vrot.slane %v1403, 5
        %v1406 = vor.u32 %v1402, %v1405
        %v1407 = vrot.slane %v1406, 4
        %v1409 = vshll.u32 %v1292, 16
        %v1411 = vrot.slane %v1409, 5
        %v1412 = vsel %vm275, %v1407, %v1411
        %v1413 = vshrl.u32 %v1292, 16
        %v1415 = vrot.slane %v1413, 4
        %v1416 = vor.u32 %v1415, %v1411
        %v1417 = vrot.slane %v1416, 4
        %v1419 = vshll.u32 %v1293, 16
        %v1421 = vrot.slane %v1419, 5
        %v1422 = vsel %vm275, %v1417, %v1421
        %v1424 = vshrl.u32 %v1294, 16
        %v1426 = vrot.slane %v1424, 4
        %v1427 = vshll.u32 %v1294, 16
        %v1429 = vrot.slane %v1427, 5
        %v1430 = vor.u32 %v1426, %v1429
        %v1431 = vrot.slane %v1430, 4
        %v1433 = vshll.u32 %v1295, 16
        %v1435 = vrot.slane %v1433, 5
        %v1436 = vsel %vm275, %v1431, %v1435
        %v1437 = vshrl.u32 %v1295, 16
        %v1439 = vrot.slane %v1437, 4
        %v1440 = vor.u32 %v1439, %v1435
        %v1441 = vrot.slane %v1440, 4
        %v1443 = vshll.u32 %v1296, 16
        %v1445 = vrot.slane %v1443, 5
        %v1446 = vsel %vm275, %v1441, %v1445
        %v1448 = vshrl.u32 %v1297, 16
        %v1450 = vrot.slane %v1448, 4
        %v1451 = vshll.u32 %v1297, 16
        %v1453 = vrot.slane %v1451, 5
        %v1454 = vor.u32 %v1450, %v1453
        %v1455 = vrot.slane %v1454, 4
        %v1457 = vshll.u32 %v1298, 16
        %v1459 = vrot.slane %v1457, 5
        %v1460 = vsel %vm275, %v1455, %v1459
        %v1461 = vshrl.u32 %v1298, 16
        %v1463 = vrot.slane %v1461, 4
        %v1464 = vor.u32 %v1463, %v1459
        %v1465 = vrot.slane %v1464, 4
        %v1467 = vshll.u32 %v1299, 16
        %v1469 = vrot.slane %v1467, 5
        %v1470 = vsel %vm275, %v1465, %v1469
        %v1472 = vshrl.u32 %v1300, 16
        %v1474 = vrot.slane %v1472, 4
        %v1475 = vshll.u32 %v1300, 16
        %v1477 = vrot.slane %v1475, 5
        %v1478 = vor.u32 %v1474, %v1477
        %v1479 = vrot.slane %v1478, 4
        %v1481 = vshll.u32 %v1301, 16
        %v1483 = vrot.slane %v1481, 5
        %v1484 = vsel %vm275, %v1479, %v1483
        %v1485 = vshrl.u32 %v1301, 16
        %v1487 = vrot.slane %v1485, 4
        %v1488 = vor.u32 %v1487, %v1483
        %v1489 = vrot.slane %v1488, 4
        %v1491 = vshll.u32 %v1302, 16
        %v1493 = vrot.slane %v1491, 5
        %v1494 = vsel %vm275, %v1489, %v1493
        %s1495 = scalar_lea.vmem %s1, 64
        %v1496 = vld [vmem:[%s1495] sm:$0xf]
        %v1497 = vld [vmem:[%s1495 + $0x4] sm:$0xf]
        %v1498 = vld [vmem:[%s1495 + $0x8] sm:$0xf]
        %v1499 = vld [vmem:[%s1495 + $0xc] sm:$0xf]
        %v1500 = vunpack.c.l.b16 %v1316
        %v1501 = vunpack.c.l.b16 %v1326
        %v1502 = vunpack.c.l.b16 %v1340
        %v1503 = vunpack.c.l.b16 %v1350
        %v1504 = vunpack.c.l.b16 %v1364
        %v1505 = vunpack.c.l.b16 %v1374
        %v1506 = vunpack.c.l.b16 %v1388
        %v1507 = vunpack.c.l.b16 %v1398
        %v1508 = vunpack.c.l.b16 %v1412
        %v1509 = vunpack.c.l.b16 %v1422
        %v1510 = vunpack.c.l.b16 %v1436
        %v1511 = vunpack.c.l.b16 %v1446
        %v1512 = vunpack.c.l.b16 %v1460
        %v1513 = vunpack.c.l.b16 %v1470
        %v1514 = vunpack.c.l.b16 %v1484
        %v1515 = vunpack.c.l.b16 %v1494
        %v1516 = vpack.c.b16 %v1501, %v1500
        %v1517 = vpack.c.b16 %v1503, %v1502
        %v1518 = vpack.c.b16 %v1505, %v1504
        %v1519 = vpack.c.b16 %v1507, %v1506
        %v1520 = vpack.c.b16 %v1509, %v1508
        %v1521 = vpack.c.b16 %v1511, %v1510
        %v1522 = vpack.c.b16 %v1513, %v1512
        %v1523 = vpack.c.b16 %v1515, %v1514
        %v1528 = vunpack.c.l.b16 %v1496
        %v1529 = vunpack.c.l.b16 %v1497
        %v1530 = vunpack.c.l.b16 %v1498
        %v1531 = vunpack.c.l.b16 %v1499
        %v1532 = vpack.c.b16 %v1529, %v1528
        %v1533 = vpack.c.b16 %v1531, %v1530
        %v1537 = vsel %vm509, %v1516, 0
        %v1540 = vsel %vm509, %v1517, 0
        %v1543 = vsel %vm509, %v1518, 0
        %v1546 = vsel %vm509, %v1519, 0
        %v1549 = vsel %vm509, %v1520, 0
        %v1552 = vsel %vm509, %v1521, 0
        %v1555 = vsel %vm509, %v1522, 0
        %v1558 = vsel %vm509, %v1523, 0
        %1560 = vmatprep.subr.bf16.mxu0 0
        %1561 = vmatpush1.bf16.msra.mxu0 %v1532
        %1562 = vmatprep.subr.bf16.mxu0 0
        %1563 = vmatpush1.bf16.msra.mxu0 %v1533
        %1564 = vmatprep.subr.bf16.mxu0 0
        %1565 = vmatpush1.bf16.msra.mxu0 0
        %1566 = vmatprep.subr.bf16.mxu0 0
        %1567 = vmatpush1.bf16.msra.mxu0 0
        %1568 = vmatprep.subr.bf16.mxu0 0
        %1569 = vmatpush1.bf16.msra.mxu0 0
        %1570 = vmatprep.subr.bf16.mxu0 0
        %1571 = vmatpush1.bf16.msra.mxu0 0
        %1572 = vmatprep.subr.bf16.mxu0 0
        %1573 = vmatpush1.bf16.msra.mxu0 0
        %1574 = vmatprep.subr.bf16.mxu0 0
        %1575 = vmatpush1.bf16.msra.mxu0 0
        %1576 = vmatprep.subr.bf16.mxu0 0
        %1577 = vmatpush1.bf16.msra.mxu0 0
        %1578 = vmatprep.subr.bf16.mxu0 0
        %1579 = vmatpush1.bf16.msra.mxu0 0
        %1580 = vmatprep.subr.bf16.mxu0 0
        %1581 = vmatpush1.bf16.msra.mxu0 0
        %1582 = vmatprep.subr.bf16.mxu0 0
        %1583 = vmatpush1.bf16.msra.mxu0 0
        %1584 = vmatprep.subr.bf16.mxu0 0
        %1585 = vmatpush1.bf16.msra.mxu0 0
        %1586 = vmatprep.subr.bf16.mxu0 0
        %1587 = vmatpush1.bf16.msra.mxu0 0
        %1588 = vmatprep.subr.bf16.mxu0 0
        %1589 = vmatpush1.bf16.msra.mxu0 0
        %1590 = vmatprep.subr.bf16.mxu0 0
        %1591 = vmatpush1.bf16.msra.mxu0 0
        %1592 = vmatprep.mubr.bf16.mxu0 0
        %1593 = vmatmul.mubr.bf16.gmra.mrb[0].mxu0 %v1537
        %v1594 = vpop.f32.mrb[0].mxu0
        %v1595 = vadd.f32 0.0, %v1594
        %v1596 = vpop.f32.mrb[0].mxu0
        %v1597 = vpop.f32.mrb[0].mxu0
        %v1598 = vadd.f32 0.0, %v1597
        %v1599 = vpop.f32.mrb[0].mxu0
        %1600 = vmatprep.mubr.bf16.mxu0 0
        %1601 = vmatmul.mubr.bf16.gmra.mrb[0].mxu0 %v1540
        %v1602 = vpop.f32.mrb[0].mxu0
        %v1603 = vadd.f32 0.0, %v1602
        %v1604 = vpop.f32.mrb[0].mxu0
        %v1605 = vpop.f32.mrb[0].mxu0
        %v1606 = vadd.f32 0.0, %v1605
        %v1607 = vpop.f32.mrb[0].mxu0
        %1608 = vmatprep.mubr.bf16.mxu0 0
        %1609 = vmatmul.mubr.bf16.gmra.mrb[0].mxu0 %v1543
        %v1610 = vpop.f32.mrb[0].mxu0
        %v1611 = vadd.f32 0.0, %v1610
        %v1612 = vpop.f32.mrb[0].mxu0
        %v1613 = vpop.f32.mrb[0].mxu0
        %v1614 = vadd.f32 0.0, %v1613
        %v1615 = vpop.f32.mrb[0].mxu0
        %1616 = vmatprep.mubr.bf16.mxu0 0
        %1617 = vmatmul.mubr.bf16.gmra.mrb[0].mxu0 %v1546
        %v1618 = vpop.f32.mrb[0].mxu0
        %v1619 = vadd.f32 0.0, %v1618
        %v1620 = vpop.f32.mrb[0].mxu0
        %v1621 = vpop.f32.mrb[0].mxu0
        %v1622 = vadd.f32 0.0, %v1621
        %v1623 = vpop.f32.mrb[0].mxu0
        %1624 = vmatprep.mubr.bf16.mxu0 0
        %1625 = vmatmul.mubr.bf16.gmra.mrb[0].mxu0 %v1549
        %v1626 = vpop.f32.mrb[0].mxu0
        %v1627 = vadd.f32 0.0, %v1626
        %v1628 = vpop.f32.mrb[0].mxu0
        %v1629 = vpop.f32.mrb[0].mxu0
        %v1630 = vadd.f32 0.0, %v1629
        %v1631 = vpop.f32.mrb[0].mxu0
        %1632 = vmatprep.mubr.bf16.mxu0 0
        %1633 = vmatmul.mubr.bf16.gmra.mrb[0].mxu0 %v1552
        %v1634 = vpop.f32.mrb[0].mxu0
        %v1635 = vadd.f32 0.0, %v1634
        %v1636 = vpop.f32.mrb[0].mxu0
        %v1637 = vpop.f32.mrb[0].mxu0
        %v1638 = vadd.f32 0.0, %v1637
        %v1639 = vpop.f32.mrb[0].mxu0
        %1640 = vmatprep.mubr.bf16.mxu0 0
        %1641 = vmatmul.mubr.bf16.gmra.mrb[0].mxu0 %v1555
        %v1642 = vpop.f32.mrb[0].mxu0
        %v1643 = vadd.f32 0.0, %v1642
        %v1644 = vpop.f32.mrb[0].mxu0
        %v1645 = vpop.f32.mrb[0].mxu0
        %v1646 = vadd.f32 0.0, %v1645
        %v1647 = vpop.f32.mrb[0].mxu0
        %1648 = vmatprep.mubr.bf16.mxu0 0
        %1649 = vmatmul.mubr.bf16.gmra.mrb[0].mxu0 %v1558
        %v1650 = vpop.f32.mrb[0].mxu0
        %v1651 = vadd.f32 0.0, %v1650
        %v1652 = vpop.f32.mrb[0].mxu0
        %v1653 = vpop.f32.mrb[0].mxu0
        %v1654 = vadd.f32 0.0, %v1653
        %v1655 = vpop.f32.mrb[0].mxu0
        %1656 = vdwg.mxu0
        %v1657 = vadd.f32 %v1263, %v1595
        %v1658 = vadd.f32 %v1264, %v1598
        %v1659 = vadd.f32 %v1265, %v1603
        %v1660 = vadd.f32 %v1266, %v1606
        %v1661 = vadd.f32 %v1267, %v1611
        %v1662 = vadd.f32 %v1268, %v1614
        %v1663 = vadd.f32 %v1269, %v1619
        %v1664 = vadd.f32 %v1270, %v1622
        %v1665 = vadd.f32 %v1271, %v1627
        %v1666 = vadd.f32 %v1272, %v1630
        %v1667 = vadd.f32 %v1273, %v1635
        %v1668 = vadd.f32 %v1274, %v1638
        %v1669 = vadd.f32 %v1275, %v1643
        %v1670 = vadd.f32 %v1276, %v1646
        %v1671 = vadd.f32 %v1277, %v1651
        %v1672 = vadd.f32 %v1278, %v1654
        %v1673 = vld [vmem:[%s1068] sm:$0xe]
        %v1674 = vld [vmem:[%s1068 + $0xc] sm:$0xe]
        %v1675 = vld [vmem:[%s1068 + $0x18] sm:$0xe]
        %v1676 = vld [vmem:[%s1068 + $0x24] sm:$0xe]
        %v1677 = vld [vmem:[%s1068 + $0x30] sm:$0xe]
        %v1678 = vld [vmem:[%s1068 + $0x3c] sm:$0xe]
        %v1679 = vld [vmem:[%s1068 + $0x48] sm:$0xe]
        %v1680 = vld [vmem:[%s1068 + $0x54] sm:$0xe]
        %v1705 = vrot.slane %v1673, 5
        %v1706 = vrot.slane %v1705, 4
        %v1707 = vrot.slane %v1280, 5
        %v1708 = vsel %vm830, %v1706, %v1707
        %v1709 = vrot.slane %v1707, 4
        %v1710 = vrot.slane %v1281, 5
        %v1711 = vsel %vm830, %v1709, %v1710
        %v1712 = vrot.slane %v1674, 5
        %v1713 = vrot.slane %v1712, 4
        %v1714 = vrot.slane %v1283, 5
        %v1715 = vsel %vm830, %v1713, %v1714
        %v1716 = vrot.slane %v1714, 4
        %v1717 = vrot.slane %v1284, 5
        %v1718 = vsel %vm830, %v1716, %v1717
        %v1719 = vrot.slane %v1675, 5
        %v1720 = vrot.slane %v1719, 4
        %v1721 = vrot.slane %v1286, 5
        %v1722 = vsel %vm830, %v1720, %v1721
        %v1723 = vrot.slane %v1721, 4
        %v1724 = vrot.slane %v1287, 5
        %v1725 = vsel %vm830, %v1723, %v1724
        %v1726 = vrot.slane %v1676, 5
        %v1727 = vrot.slane %v1726, 4
        %v1728 = vrot.slane %v1289, 5
        %v1729 = vsel %vm830, %v1727, %v1728
        %v1730 = vrot.slane %v1728, 4
        %v1731 = vrot.slane %v1290, 5
        %v1732 = vsel %vm830, %v1730, %v1731
        %v1733 = vrot.slane %v1677, 5
        %v1734 = vrot.slane %v1733, 4
        %v1735 = vrot.slane %v1292, 5
        %v1736 = vsel %vm830, %v1734, %v1735
        %v1737 = vrot.slane %v1735, 4
        %v1738 = vrot.slane %v1293, 5
        %v1739 = vsel %vm830, %v1737, %v1738
        %v1740 = vrot.slane %v1678, 5
        %v1741 = vrot.slane %v1740, 4
        %v1742 = vrot.slane %v1295, 5
        %v1743 = vsel %vm830, %v1741, %v1742
        %v1744 = vrot.slane %v1742, 4
        %v1745 = vrot.slane %v1296, 5
        %v1746 = vsel %vm830, %v1744, %v1745
        %v1747 = vrot.slane %v1679, 5
        %v1748 = vrot.slane %v1747, 4
        %v1749 = vrot.slane %v1298, 5
        %v1750 = vsel %vm830, %v1748, %v1749
        %v1751 = vrot.slane %v1749, 4
        %v1752 = vrot.slane %v1299, 5
        %v1753 = vsel %vm830, %v1751, %v1752
        %v1754 = vrot.slane %v1680, 5
        %v1755 = vrot.slane %v1754, 4
        %v1756 = vrot.slane %v1301, 5
        %v1757 = vsel %vm830, %v1755, %v1756
        %v1758 = vrot.slane %v1756, 4
        %v1759 = vrot.slane %v1302, 5
        %v1760 = vsel %vm830, %v1758, %v1759
        %s1761 = scalar_lea.vmem %s1, 80
        %v1762 = vld [vmem:[%s1761] sm:$0xf]
        %v1763 = vld [vmem:[%s1761 + $0x4] sm:$0xf]
        %v1764 = vld [vmem:[%s1761 + $0x8] sm:$0xf]
        %v1765 = vld [vmem:[%s1761 + $0xc] sm:$0xf]
        %v1766 = vunpack.c.l.b16 %v1708
        %v1767 = vunpack.c.l.b16 %v1711
        %v1768 = vunpack.c.l.b16 %v1715
        %v1769 = vunpack.c.l.b16 %v1718
        %v1770 = vunpack.c.l.b16 %v1722
        %v1771 = vunpack.c.l.b16 %v1725
        %v1772 = vunpack.c.l.b16 %v1729
        %v1773 = vunpack.c.l.b16 %v1732
        %v1774 = vunpack.c.l.b16 %v1736
        %v1775 = vunpack.c.l.b16 %v1739
        %v1776 = vunpack.c.l.b16 %v1743
        %v1777 = vunpack.c.l.b16 %v1746
        %v1778 = vunpack.c.l.b16 %v1750
        %v1779 = vunpack.c.l.b16 %v1753
        %v1780 = vunpack.c.l.b16 %v1757
        %v1781 = vunpack.c.l.b16 %v1760
        %v1782 = vpack.c.b16 %v1767, %v1766
        %v1783 = vpack.c.b16 %v1769, %v1768
        %v1784 = vpack.c.b16 %v1771, %v1770
        %v1785 = vpack.c.b16 %v1773, %v1772
        %v1786 = vpack.c.b16 %v1775, %v1774
        %v1787 = vpack.c.b16 %v1777, %v1776
        %v1788 = vpack.c.b16 %v1779, %v1778
        %v1789 = vpack.c.b16 %v1781, %v1780
        %v1794 = vunpack.c.l.b16 %v1762
        %v1795 = vunpack.c.l.b16 %v1763
        %v1796 = vunpack.c.l.b16 %v1764
        %v1797 = vunpack.c.l.b16 %v1765
        %v1798 = vpack.c.b16 %v1795, %v1794
        %v1799 = vpack.c.b16 %v1797, %v1796
        %v1803 = vsel %vm509, %v1782, 0
        %v1806 = vsel %vm509, %v1783, 0
        %v1809 = vsel %vm509, %v1784, 0
        %v1812 = vsel %vm509, %v1785, 0
        %v1815 = vsel %vm509, %v1786, 0
        %v1818 = vsel %vm509, %v1787, 0
        %v1821 = vsel %vm509, %v1788, 0
        %v1824 = vsel %vm509, %v1789, 0
        %1826 = vmatprep.subr.bf16.mxu0 0
        %1827 = vmatpush1.bf16.msra.mxu0 %v1798
        %1828 = vmatprep.subr.bf16.mxu0 0
        %1829 = vmatpush1.bf16.msra.mxu0 %v1799
        %1830 = vmatprep.subr.bf16.mxu0 0
        %1831 = vmatpush1.bf16.msra.mxu0 0
        %1832 = vmatprep.subr.bf16.mxu0 0
        %1833 = vmatpush1.bf16.msra.mxu0 0
        %1834 = vmatprep.subr.bf16.mxu0 0
        %1835 = vmatpush1.bf16.msra.mxu0 0
        %1836 = vmatprep.subr.bf16.mxu0 0
        %1837 = vmatpush1.bf16.msra.mxu0 0
        %1838 = vmatprep.subr.bf16.mxu0 0
        %1839 = vmatpush1.bf16.msra.mxu0 0
        %1840 = vmatprep.subr.bf16.mxu0 0
        %1841 = vmatpush1.bf16.msra.mxu0 0
        %1842 = vmatprep.subr.bf16.mxu0 0
        %1843 = vmatpush1.bf16.msra.mxu0 0
        %1844 = vmatprep.subr.bf16.mxu0 0
        %1845 = vmatpush1.bf16.msra.mxu0 0
        %1846 = vmatprep.subr.bf16.mxu0 0
        %1847 = vmatpush1.bf16.msra.mxu0 0
        %1848 = vmatprep.subr.bf16.mxu0 0
        %1849 = vmatpush1.bf16.msra.mxu0 0
        %1850 = vmatprep.subr.bf16.mxu0 0
        %1851 = vmatpush1.bf16.msra.mxu0 0
        %1852 = vmatprep.subr.bf16.mxu0 0
        %1853 = vmatpush1.bf16.msra.mxu0 0
        %1854 = vmatprep.subr.bf16.mxu0 0
        %1855 = vmatpush1.bf16.msra.mxu0 0
        %1856 = vmatprep.subr.bf16.mxu0 0
        %1857 = vmatpush1.bf16.msra.mxu0 0
        %1858 = vmatprep.mubr.bf16.mxu0 0
        %1859 = vmatmul.mubr.bf16.gmra.mrb[0].mxu0 %v1803
        %v1860 = vpop.f32.mrb[0].mxu0
        %v1861 = vadd.f32 0.0, %v1860
        %v1862 = vpop.f32.mrb[0].mxu0
        %v1863 = vpop.f32.mrb[0].mxu0
        %v1864 = vadd.f32 0.0, %v1863
        %v1865 = vpop.f32.mrb[0].mxu0
        %1866 = vmatprep.mubr.bf16.mxu0 0
        %1867 = vmatmul.mubr.bf16.gmra.mrb[0].mxu0 %v1806
        %v1868 = vpop.f32.mrb[0].mxu0
        %v1869 = vadd.f32 0.0, %v1868
        %v1870 = vpop.f32.mrb[0].mxu0
        %v1871 = vpop.f32.mrb[0].mxu0
        %v1872 = vadd.f32 0.0, %v1871
        %v1873 = vpop.f32.mrb[0].mxu0
        %1874 = vmatprep.mubr.bf16.mxu0 0
        %1875 = vmatmul.mubr.bf16.gmra.mrb[0].mxu0 %v1809
        %v1876 = vpop.f32.mrb[0].mxu0
        %v1877 = vadd.f32 0.0, %v1876
        %v1878 = vpop.f32.mrb[0].mxu0
        %v1879 = vpop.f32.mrb[0].mxu0
        %v1880 = vadd.f32 0.0, %v1879
        %v1881 = vpop.f32.mrb[0].mxu0
        %1882 = vmatprep.mubr.bf16.mxu0 0
        %1883 = vmatmul.mubr.bf16.gmra.mrb[0].mxu0 %v1812
        %v1884 = vpop.f32.mrb[0].mxu0
        %v1885 = vadd.f32 0.0, %v1884
        %v1886 = vpop.f32.mrb[0].mxu0
        %v1887 = vpop.f32.mrb[0].mxu0
        %v1888 = vadd.f32 0.0, %v1887
        %v1889 = vpop.f32.mrb[0].mxu0
        %1890 = vmatprep.mubr.bf16.mxu0 0
        %1891 = vmatmul.mubr.bf16.gmra.mrb[0].mxu0 %v1815
        %v1892 = vpop.f32.mrb[0].mxu0
        %v1893 = vadd.f32 0.0, %v1892
        %v1894 = vpop.f32.mrb[0].mxu0
        %v1895 = vpop.f32.mrb[0].mxu0
        %v1896 = vadd.f32 0.0, %v1895
        %v1897 = vpop.f32.mrb[0].mxu0
        %1898 = vmatprep.mubr.bf16.mxu0 0
        %1899 = vmatmul.mubr.bf16.gmra.mrb[0].mxu0 %v1818
        %v1900 = vpop.f32.mrb[0].mxu0
        %v1901 = vadd.f32 0.0, %v1900
        %v1902 = vpop.f32.mrb[0].mxu0
        %v1903 = vpop.f32.mrb[0].mxu0
        %v1904 = vadd.f32 0.0, %v1903
        %v1905 = vpop.f32.mrb[0].mxu0
        %1906 = vmatprep.mubr.bf16.mxu0 0
        %1907 = vmatmul.mubr.bf16.gmra.mrb[0].mxu0 %v1821
        %v1908 = vpop.f32.mrb[0].mxu0
        %v1909 = vadd.f32 0.0, %v1908
        %v1910 = vpop.f32.mrb[0].mxu0
        %v1911 = vpop.f32.mrb[0].mxu0
        %v1912 = vadd.f32 0.0, %v1911
        %v1913 = vpop.f32.mrb[0].mxu0
        %1914 = vmatprep.mubr.bf16.mxu0 0
        %1915 = vmatmul.mubr.bf16.gmra.mrb[0].mxu0 %v1824
        %v1916 = vpop.f32.mrb[0].mxu0
        %v1917 = vadd.f32 0.0, %v1916
        %v1918 = vpop.f32.mrb[0].mxu0
        %v1919 = vpop.f32.mrb[0].mxu0
        %v1920 = vadd.f32 0.0, %v1919
        %v1921 = vpop.f32.mrb[0].mxu0
        %1922 = vdwg.mxu0
        %v1923 = vadd.f32 %v1657, %v1861
        %v1924 = vadd.f32 %v1658, %v1864
        %v1925 = vadd.f32 %v1659, %v1869
        %v1926 = vadd.f32 %v1660, %v1872
        %v1927 = vadd.f32 %v1661, %v1877
        %v1928 = vadd.f32 %v1662, %v1880
        %v1929 = vadd.f32 %v1663, %v1885
        %v1930 = vadd.f32 %v1664, %v1888
        %v1931 = vadd.f32 %v1665, %v1893
        %v1932 = vadd.f32 %v1666, %v1896
        %v1933 = vadd.f32 %v1667, %v1901
        %v1934 = vadd.f32 %v1668, %v1904
        %v1935 = vadd.f32 %v1669, %v1909
        %v1936 = vadd.f32 %v1670, %v1912
        %v1937 = vadd.f32 %v1671, %v1917
        %v1938 = vadd.f32 %v1672, %v1920
        %s1939 = sadd.s32 %s241, 2
        %s1940 = smul.u32 %s1939, 3
        %s1941 = smul.addr %s1940, 4
        %s1942 = scalar_lea.vmem %s233, %s1941
        %v1943 = vld [vmem:[%s1942] sm:$0xf]
        %v1944 = vld [vmem:[%s1942 + $0x4] sm:$0xf]
        %v1945 = vld [vmem:[%s1942 + $0xc] sm:$0xf]
        %v1946 = vld [vmem:[%s1942 + $0x10] sm:$0xf]
        %v1947 = vld [vmem:[%s1942 + $0x18] sm:$0xf]
        %v1948 = vld [vmem:[%s1942 + $0x1c] sm:$0xf]
        %v1949 = vld [vmem:[%s1942 + $0x24] sm:$0xf]
        %v1950 = vld [vmem:[%s1942 + $0x28] sm:$0xf]
        %v1951 = vld [vmem:[%s1942 + $0x30] sm:$0xf]
        %v1952 = vld [vmem:[%s1942 + $0x34] sm:$0xf]
        %v1953 = vld [vmem:[%s1942 + $0x3c] sm:$0xf]
        %v1954 = vld [vmem:[%s1942 + $0x40] sm:$0xf]
        %v1955 = vld [vmem:[%s1942 + $0x48] sm:$0xf]
        %v1956 = vld [vmem:[%s1942 + $0x4c] sm:$0xf]
        %v1957 = vld [vmem:[%s1942 + $0x54] sm:$0xf]
        %v1958 = vld [vmem:[%s1942 + $0x58] sm:$0xf]
        %s1959 = scalar_lea.vmem %s1, 96
        %v1960 = vld [vmem:[%s1959] sm:$0xf]
        %v1961 = vld [vmem:[%s1959 + $0x4] sm:$0xf]
        %v1962 = vld [vmem:[%s1959 + $0x8] sm:$0xf]
        %v1963 = vld [vmem:[%s1959 + $0xc] sm:$0xf]
        %v1980 = vunpack.c.l.b16 %v1943
        %v1981 = vunpack.c.l.b16 %v1944
        %v1982 = vunpack.c.l.b16 %v1945
        %v1983 = vunpack.c.l.b16 %v1946
        %v1984 = vunpack.c.l.b16 %v1947
        %v1985 = vunpack.c.l.b16 %v1948
        %v1986 = vunpack.c.l.b16 %v1949
        %v1987 = vunpack.c.l.b16 %v1950
        %v1988 = vunpack.c.l.b16 %v1951
        %v1989 = vunpack.c.l.b16 %v1952
        %v1990 = vunpack.c.l.b16 %v1953
        %v1991 = vunpack.c.l.b16 %v1954
        %v1992 = vunpack.c.l.b16 %v1955
        %v1993 = vunpack.c.l.b16 %v1956
        %v1994 = vunpack.c.l.b16 %v1957
        %v1995 = vunpack.c.l.b16 %v1958
        %v1996 = vpack.c.b16 %v1981, %v1980
        %v1997 = vpack.c.b16 %v1983, %v1982
        %v1998 = vpack.c.b16 %v1985, %v1984
        %v1999 = vpack.c.b16 %v1987, %v1986
        %v2000 = vpack.c.b16 %v1989, %v1988
        %v2001 = vpack.c.b16 %v1991, %v1990
        %v2002 = vpack.c.b16 %v1993, %v1992
        %v2003 = vpack.c.b16 %v1995, %v1994
        %v2008 = vunpack.c.l.b16 %v1960
        %v2009 = vunpack.c.l.b16 %v1961
        %v2010 = vunpack.c.l.b16 %v1962
        %v2011 = vunpack.c.l.b16 %v1963
        %v2012 = vpack.c.b16 %v2009, %v2008
        %v2013 = vpack.c.b16 %v2011, %v2010
        %v2017 = vsel %vm509, %v1996, 0
        %v2020 = vsel %vm509, %v1997, 0
        %v2023 = vsel %vm509, %v1998, 0
        %v2026 = vsel %vm509, %v1999, 0
        %v2029 = vsel %vm509, %v2000, 0
        %v2032 = vsel %vm509, %v2001, 0
        %v2035 = vsel %vm509, %v2002, 0
        %v2038 = vsel %vm509, %v2003, 0
        %2040 = vmatprep.subr.bf16.mxu0 0
        %2041 = vmatpush1.bf16.msra.mxu0 %v2012
        %2042 = vmatprep.subr.bf16.mxu0 0
        %2043 = vmatpush1.bf16.msra.mxu0 %v2013
        %2044 = vmatprep.subr.bf16.mxu0 0
        %2045 = vmatpush1.bf16.msra.mxu0 0
        %2046 = vmatprep.subr.bf16.mxu0 0
        %2047 = vmatpush1.bf16.msra.mxu0 0
        %2048 = vmatprep.subr.bf16.mxu0 0
        %2049 = vmatpush1.bf16.msra.mxu0 0
        %2050 = vmatprep.subr.bf16.mxu0 0
        %2051 = vmatpush1.bf16.msra.mxu0 0
        %2052 = vmatprep.subr.bf16.mxu0 0
        %2053 = vmatpush1.bf16.msra.mxu0 0
        %2054 = vmatprep.subr.bf16.mxu0 0
        %2055 = vmatpush1.bf16.msra.mxu0 0
        %2056 = vmatprep.subr.bf16.mxu0 0
        %2057 = vmatpush1.bf16.msra.mxu0 0
        %2058 = vmatprep.subr.bf16.mxu0 0
        %2059 = vmatpush1.bf16.msra.mxu0 0
        %2060 = vmatprep.subr.bf16.mxu0 0
        %2061 = vmatpush1.bf16.msra.mxu0 0
        %2062 = vmatprep.subr.bf16.mxu0 0
        %2063 = vmatpush1.bf16.msra.mxu0 0
        %2064 = vmatprep.subr.bf16.mxu0 0
        %2065 = vmatpush1.bf16.msra.mxu0 0
        %2066 = vmatprep.subr.bf16.mxu0 0
        %2067 = vmatpush1.bf16.msra.mxu0 0
        %2068 = vmatprep.subr.bf16.mxu0 0
        %2069 = vmatpush1.bf16.msra.mxu0 0
        %2070 = vmatprep.subr.bf16.mxu0 0
        %2071 = vmatpush1.bf16.msra.mxu0 0
        %2072 = vmatprep.mubr.bf16.mxu0 0
        %2073 = vmatmul.mubr.bf16.gmra.mrb[0].mxu0 %v2017
        %v2074 = vpop.f32.mrb[0].mxu0
        %v2075 = vadd.f32 0.0, %v2074
        %v2076 = vpop.f32.mrb[0].mxu0
        %v2077 = vpop.f32.mrb[0].mxu0
        %v2078 = vadd.f32 0.0, %v2077
        %v2079 = vpop.f32.mrb[0].mxu0
        %2080 = vmatprep.mubr.bf16.mxu0 0
        %2081 = vmatmul.mubr.bf16.gmra.mrb[0].mxu0 %v2020
        %v2082 = vpop.f32.mrb[0].mxu0
        %v2083 = vadd.f32 0.0, %v2082
        %v2084 = vpop.f32.mrb[0].mxu0
        %v2085 = vpop.f32.mrb[0].mxu0
        %v2086 = vadd.f32 0.0, %v2085
        %v2087 = vpop.f32.mrb[0].mxu0
        %2088 = vmatprep.mubr.bf16.mxu0 0
        %2089 = vmatmul.mubr.bf16.gmra.mrb[0].mxu0 %v2023
        %v2090 = vpop.f32.mrb[0].mxu0
        %v2091 = vadd.f32 0.0, %v2090
        %v2092 = vpop.f32.mrb[0].mxu0
        %v2093 = vpop.f32.mrb[0].mxu0
        %v2094 = vadd.f32 0.0, %v2093
        %v2095 = vpop.f32.mrb[0].mxu0
        %2096 = vmatprep.mubr.bf16.mxu0 0
        %2097 = vmatmul.mubr.bf16.gmra.mrb[0].mxu0 %v2026
        %v2098 = vpop.f32.mrb[0].mxu0
        %v2099 = vadd.f32 0.0, %v2098
        %v2100 = vpop.f32.mrb[0].mxu0
        %v2101 = vpop.f32.mrb[0].mxu0
        %v2102 = vadd.f32 0.0, %v2101
        %v2103 = vpop.f32.mrb[0].mxu0
        %2104 = vmatprep.mubr.bf16.mxu0 0
        %2105 = vmatmul.mubr.bf16.gmra.mrb[0].mxu0 %v2029
        %v2106 = vpop.f32.mrb[0].mxu0
        %v2107 = vadd.f32 0.0, %v2106
        %v2108 = vpop.f32.mrb[0].mxu0
        %v2109 = vpop.f32.mrb[0].mxu0
        %v2110 = vadd.f32 0.0, %v2109
        %v2111 = vpop.f32.mrb[0].mxu0
        %2112 = vmatprep.mubr.bf16.mxu0 0
        %2113 = vmatmul.mubr.bf16.gmra.mrb[0].mxu0 %v2032
        %v2114 = vpop.f32.mrb[0].mxu0
        %v2115 = vadd.f32 0.0, %v2114
        %v2116 = vpop.f32.mrb[0].mxu0
        %v2117 = vpop.f32.mrb[0].mxu0
        %v2118 = vadd.f32 0.0, %v2117
        %v2119 = vpop.f32.mrb[0].mxu0
        %2120 = vmatprep.mubr.bf16.mxu0 0
        %2121 = vmatmul.mubr.bf16.gmra.mrb[0].mxu0 %v2035
        %v2122 = vpop.f32.mrb[0].mxu0
        %v2123 = vadd.f32 0.0, %v2122
        %v2124 = vpop.f32.mrb[0].mxu0
        %v2125 = vpop.f32.mrb[0].mxu0
        %v2126 = vadd.f32 0.0, %v2125
        %v2127 = vpop.f32.mrb[0].mxu0
        %2128 = vmatprep.mubr.bf16.mxu0 0
        %2129 = vmatmul.mubr.bf16.gmra.mrb[0].mxu0 %v2038
        %v2130 = vpop.f32.mrb[0].mxu0
        %v2131 = vadd.f32 0.0, %v2130
        %v2132 = vpop.f32.mrb[0].mxu0
        %v2133 = vpop.f32.mrb[0].mxu0
        %v2134 = vadd.f32 0.0, %v2133
        %v2135 = vpop.f32.mrb[0].mxu0
        %2136 = vdwg.mxu0
        %v2137 = vadd.f32 %v1923, %v2075
        %v2138 = vadd.f32 %v1924, %v2078
        %v2139 = vadd.f32 %v1925, %v2083
        %v2140 = vadd.f32 %v1926, %v2086
        %v2141 = vadd.f32 %v1927, %v2091
        %v2142 = vadd.f32 %v1928, %v2094
        %v2143 = vadd.f32 %v1929, %v2099
        %v2144 = vadd.f32 %v1930, %v2102
        %v2145 = vadd.f32 %v1931, %v2107
        %v2146 = vadd.f32 %v1932, %v2110
        %v2147 = vadd.f32 %v1933, %v2115
        %v2148 = vadd.f32 %v1934, %v2118
        %v2149 = vadd.f32 %v1935, %v2123
        %v2150 = vadd.f32 %v1936, %v2126
        %v2151 = vadd.f32 %v1937, %v2131
        %v2152 = vadd.f32 %v1938, %v2134
        %v2153 = vld [vmem:[%s1942] sm:$0xf]
        %v2154 = vld [vmem:[%s1942 + $0x4] sm:$0xf]
        %v2155 = vld [vmem:[%s1942 + $0x8] sm:$0x1]
        %v2156 = vld [vmem:[%s1942 + $0xc] sm:$0xf]
        %v2157 = vld [vmem:[%s1942 + $0x10] sm:$0xf]
        %v2158 = vld [vmem:[%s1942 + $0x14] sm:$0x1]
        %v2159 = vld [vmem:[%s1942 + $0x18] sm:$0xf]
        %v2160 = vld [vmem:[%s1942 + $0x1c] sm:$0xf]
        %v2161 = vld [vmem:[%s1942 + $0x20] sm:$0x1]
        %v2162 = vld [vmem:[%s1942 + $0x24] sm:$0xf]
        %v2163 = vld [vmem:[%s1942 + $0x28] sm:$0xf]
        %v2164 = vld [vmem:[%s1942 + $0x2c] sm:$0x1]
        %v2165 = vld [vmem:[%s1942 + $0x30] sm:$0xf]
        %v2166 = vld [vmem:[%s1942 + $0x34] sm:$0xf]
        %v2167 = vld [vmem:[%s1942 + $0x38] sm:$0x1]
        %v2168 = vld [vmem:[%s1942 + $0x3c] sm:$0xf]
        %v2169 = vld [vmem:[%s1942 + $0x40] sm:$0xf]
        %v2170 = vld [vmem:[%s1942 + $0x44] sm:$0x1]
        %v2171 = vld [vmem:[%s1942 + $0x48] sm:$0xf]
        %v2172 = vld [vmem:[%s1942 + $0x4c] sm:$0xf]
        %v2173 = vld [vmem:[%s1942 + $0x50] sm:$0x1]
        %v2174 = vld [vmem:[%s1942 + $0x54] sm:$0xf]
        %v2175 = vld [vmem:[%s1942 + $0x58] sm:$0xf]
        %v2176 = vld [vmem:[%s1942 + $0x5c] sm:$0x1]
        %v2178 = vshrl.u32 %v2153, 16
        %v2180 = vrot.slane %v2178, 4
        %v2181 = vshll.u32 %v2153, 16
        %v2183 = vrot.slane %v2181, 5
        %v2184 = vor.u32 %v2180, %v2183
        %v2185 = vrot.slane %v2184, 4
        %v2187 = vshll.u32 %v2154, 16
        %v2189 = vrot.slane %v2187, 5
        %v2190 = vsel %vm275, %v2185, %v2189
        %v2191 = vshrl.u32 %v2154, 16
        %v2193 = vrot.slane %v2191, 4
        %v2194 = vor.u32 %v2193, %v2189
        %v2195 = vrot.slane %v2194, 4
        %v2197 = vshll.u32 %v2155, 16
        %v2199 = vrot.slane %v2197, 5
        %v2200 = vsel %vm275, %v2195, %v2199
        %v2202 = vshrl.u32 %v2156, 16
        %v2204 = vrot.slane %v2202, 4
        %v2205 = vshll.u32 %v2156, 16
        %v2207 = vrot.slane %v2205, 5
        %v2208 = vor.u32 %v2204, %v2207
        %v2209 = vrot.slane %v2208, 4
        %v2211 = vshll.u32 %v2157, 16
        %v2213 = vrot.slane %v2211, 5
        %v2214 = vsel %vm275, %v2209, %v2213
        %v2215 = vshrl.u32 %v2157, 16
        %v2217 = vrot.slane %v2215, 4
        %v2218 = vor.u32 %v2217, %v2213
        %v2219 = vrot.slane %v2218, 4
        %v2221 = vshll.u32 %v2158, 16
        %v2223 = vrot.slane %v2221, 5
        %v2224 = vsel %vm275, %v2219, %v2223
        %v2226 = vshrl.u32 %v2159, 16
        %v2228 = vrot.slane %v2226, 4
        %v2229 = vshll.u32 %v2159, 16
        %v2231 = vrot.slane %v2229, 5
        %v2232 = vor.u32 %v2228, %v2231
        %v2233 = vrot.slane %v2232, 4
        %v2235 = vshll.u32 %v2160, 16
        %v2237 = vrot.slane %v2235, 5
        %v2238 = vsel %vm275, %v2233, %v2237
        %v2239 = vshrl.u32 %v2160, 16
        %v2241 = vrot.slane %v2239, 4
        %v2242 = vor.u32 %v2241, %v2237
        %v2243 = vrot.slane %v2242, 4
        %v2245 = vshll.u32 %v2161, 16
        %v2247 = vrot.slane %v2245, 5
        %v2248 = vsel %vm275, %v2243, %v2247
        %v2250 = vshrl.u32 %v2162, 16
        %v2252 = vrot.slane %v2250, 4
        %v2253 = vshll.u32 %v2162, 16
        %v2255 = vrot.slane %v2253, 5
        %v2256 = vor.u32 %v2252, %v2255
        %v2257 = vrot.slane %v2256, 4
        %v2259 = vshll.u32 %v2163, 16
        %v2261 = vrot.slane %v2259, 5
        %v2262 = vsel %vm275, %v2257, %v2261
        %v2263 = vshrl.u32 %v2163, 16
        %v2265 = vrot.slane %v2263, 4
        %v2266 = vor.u32 %v2265, %v2261
        %v2267 = vrot.slane %v2266, 4
        %v2269 = vshll.u32 %v2164, 16
        %v2271 = vrot.slane %v2269, 5
        %v2272 = vsel %vm275, %v2267, %v2271
        %v2274 = vshrl.u32 %v2165, 16
        %v2276 = vrot.slane %v2274, 4
        %v2277 = vshll.u32 %v2165, 16
        %v2279 = vrot.slane %v2277, 5
        %v2280 = vor.u32 %v2276, %v2279
        %v2281 = vrot.slane %v2280, 4
        %v2283 = vshll.u32 %v2166, 16
        %v2285 = vrot.slane %v2283, 5
        %v2286 = vsel %vm275, %v2281, %v2285
        %v2287 = vshrl.u32 %v2166, 16
        %v2289 = vrot.slane %v2287, 4
        %v2290 = vor.u32 %v2289, %v2285
        %v2291 = vrot.slane %v2290, 4
        %v2293 = vshll.u32 %v2167, 16
        %v2295 = vrot.slane %v2293, 5
        %v2296 = vsel %vm275, %v2291, %v2295
        %v2298 = vshrl.u32 %v2168, 16
        %v2300 = vrot.slane %v2298, 4
        %v2301 = vshll.u32 %v2168, 16
        %v2303 = vrot.slane %v2301, 5
        %v2304 = vor.u32 %v2300, %v2303
        %v2305 = vrot.slane %v2304, 4
        %v2307 = vshll.u32 %v2169, 16
        %v2309 = vrot.slane %v2307, 5
        %v2310 = vsel %vm275, %v2305, %v2309
        %v2311 = vshrl.u32 %v2169, 16
        %v2313 = vrot.slane %v2311, 4
        %v2314 = vor.u32 %v2313, %v2309
        %v2315 = vrot.slane %v2314, 4
        %v2317 = vshll.u32 %v2170, 16
        %v2319 = vrot.slane %v2317, 5
        %v2320 = vsel %vm275, %v2315, %v2319
        %v2322 = vshrl.u32 %v2171, 16
        %v2324 = vrot.slane %v2322, 4
        %v2325 = vshll.u32 %v2171, 16
        %v2327 = vrot.slane %v2325, 5
        %v2328 = vor.u32 %v2324, %v2327
        %v2329 = vrot.slane %v2328, 4
        %v2331 = vshll.u32 %v2172, 16
        %v2333 = vrot.slane %v2331, 5
        %v2334 = vsel %vm275, %v2329, %v2333
        %v2335 = vshrl.u32 %v2172, 16
        %v2337 = vrot.slane %v2335, 4
        %v2338 = vor.u32 %v2337, %v2333
        %v2339 = vrot.slane %v2338, 4
        %v2341 = vshll.u32 %v2173, 16
        %v2343 = vrot.slane %v2341, 5
        %v2344 = vsel %vm275, %v2339, %v2343
        %v2346 = vshrl.u32 %v2174, 16
        %v2348 = vrot.slane %v2346, 4
        %v2349 = vshll.u32 %v2174, 16
        %v2351 = vrot.slane %v2349, 5
        %v2352 = vor.u32 %v2348, %v2351
        %v2353 = vrot.slane %v2352, 4
        %v2355 = vshll.u32 %v2175, 16
        %v2357 = vrot.slane %v2355, 5
        %v2358 = vsel %vm275, %v2353, %v2357
        %v2359 = vshrl.u32 %v2175, 16
        %v2361 = vrot.slane %v2359, 4
        %v2362 = vor.u32 %v2361, %v2357
        %v2363 = vrot.slane %v2362, 4
        %v2365 = vshll.u32 %v2176, 16
        %v2367 = vrot.slane %v2365, 5
        %v2368 = vsel %vm275, %v2363, %v2367
        %s2369 = scalar_lea.vmem %s1, 112
        %v2370 = vld [vmem:[%s2369] sm:$0xf]
        %v2371 = vld [vmem:[%s2369 + $0x4] sm:$0xf]
        %v2372 = vld [vmem:[%s2369 + $0x8] sm:$0xf]
        %v2373 = vld [vmem:[%s2369 + $0xc] sm:$0xf]
        %v2374 = vunpack.c.l.b16 %v2190
        %v2375 = vunpack.c.l.b16 %v2200
        %v2376 = vunpack.c.l.b16 %v2214
        %v2377 = vunpack.c.l.b16 %v2224
        %v2378 = vunpack.c.l.b16 %v2238
        %v2379 = vunpack.c.l.b16 %v2248
        %v2380 = vunpack.c.l.b16 %v2262
        %v2381 = vunpack.c.l.b16 %v2272
        %v2382 = vunpack.c.l.b16 %v2286
        %v2383 = vunpack.c.l.b16 %v2296
        %v2384 = vunpack.c.l.b16 %v2310
        %v2385 = vunpack.c.l.b16 %v2320
        %v2386 = vunpack.c.l.b16 %v2334
        %v2387 = vunpack.c.l.b16 %v2344
        %v2388 = vunpack.c.l.b16 %v2358
        %v2389 = vunpack.c.l.b16 %v2368
        %v2390 = vpack.c.b16 %v2375, %v2374
        %v2391 = vpack.c.b16 %v2377, %v2376
        %v2392 = vpack.c.b16 %v2379, %v2378
        %v2393 = vpack.c.b16 %v2381, %v2380
        %v2394 = vpack.c.b16 %v2383, %v2382
        %v2395 = vpack.c.b16 %v2385, %v2384
        %v2396 = vpack.c.b16 %v2387, %v2386
        %v2397 = vpack.c.b16 %v2389, %v2388
        %v2402 = vunpack.c.l.b16 %v2370
        %v2403 = vunpack.c.l.b16 %v2371
        %v2404 = vunpack.c.l.b16 %v2372
        %v2405 = vunpack.c.l.b16 %v2373
        %v2406 = vpack.c.b16 %v2403, %v2402
        %v2407 = vpack.c.b16 %v2405, %v2404
        %v2411 = vsel %vm509, %v2390, 0
        %v2414 = vsel %vm509, %v2391, 0
        %v2417 = vsel %vm509, %v2392, 0
        %v2420 = vsel %vm509, %v2393, 0
        %v2423 = vsel %vm509, %v2394, 0
        %v2426 = vsel %vm509, %v2395, 0
        %v2429 = vsel %vm509, %v2396, 0
        %v2432 = vsel %vm509, %v2397, 0
        %2434 = vmatprep.subr.bf16.mxu0 0
        %2435 = vmatpush1.bf16.msra.mxu0 %v2406
        %2436 = vmatprep.subr.bf16.mxu0 0
        %2437 = vmatpush1.bf16.msra.mxu0 %v2407
        %2438 = vmatprep.subr.bf16.mxu0 0
        %2439 = vmatpush1.bf16.msra.mxu0 0
        %2440 = vmatprep.subr.bf16.mxu0 0
        %2441 = vmatpush1.bf16.msra.mxu0 0
        %2442 = vmatprep.subr.bf16.mxu0 0
        %2443 = vmatpush1.bf16.msra.mxu0 0
        %2444 = vmatprep.subr.bf16.mxu0 0
        %2445 = vmatpush1.bf16.msra.mxu0 0
        %2446 = vmatprep.subr.bf16.mxu0 0
        %2447 = vmatpush1.bf16.msra.mxu0 0
        %2448 = vmatprep.subr.bf16.mxu0 0
        %2449 = vmatpush1.bf16.msra.mxu0 0
        %2450 = vmatprep.subr.bf16.mxu0 0
        %2451 = vmatpush1.bf16.msra.mxu0 0
        %2452 = vmatprep.subr.bf16.mxu0 0
        %2453 = vmatpush1.bf16.msra.mxu0 0
        %2454 = vmatprep.subr.bf16.mxu0 0
        %2455 = vmatpush1.bf16.msra.mxu0 0
        %2456 = vmatprep.subr.bf16.mxu0 0
        %2457 = vmatpush1.bf16.msra.mxu0 0
        %2458 = vmatprep.subr.bf16.mxu0 0
        %2459 = vmatpush1.bf16.msra.mxu0 0
        %2460 = vmatprep.subr.bf16.mxu0 0
        %2461 = vmatpush1.bf16.msra.mxu0 0
        %2462 = vmatprep.subr.bf16.mxu0 0
        %2463 = vmatpush1.bf16.msra.mxu0 0
        %2464 = vmatprep.subr.bf16.mxu0 0
        %2465 = vmatpush1.bf16.msra.mxu0 0
        %2466 = vmatprep.mubr.bf16.mxu0 0
        %2467 = vmatmul.mubr.bf16.gmra.mrb[0].mxu0 %v2411
        %v2468 = vpop.f32.mrb[0].mxu0
        %v2469 = vadd.f32 0.0, %v2468
        %v2470 = vpop.f32.mrb[0].mxu0
        %v2471 = vpop.f32.mrb[0].mxu0
        %v2472 = vadd.f32 0.0, %v2471
        %v2473 = vpop.f32.mrb[0].mxu0
        %2474 = vmatprep.mubr.bf16.mxu0 0
        %2475 = vmatmul.mubr.bf16.gmra.mrb[0].mxu0 %v2414
        %v2476 = vpop.f32.mrb[0].mxu0
        %v2477 = vadd.f32 0.0, %v2476
        %v2478 = vpop.f32.mrb[0].mxu0
        %v2479 = vpop.f32.mrb[0].mxu0
        %v2480 = vadd.f32 0.0, %v2479
        %v2481 = vpop.f32.mrb[0].mxu0
        %2482 = vmatprep.mubr.bf16.mxu0 0
        %2483 = vmatmul.mubr.bf16.gmra.mrb[0].mxu0 %v2417
        %v2484 = vpop.f32.mrb[0].mxu0
        %v2485 = vadd.f32 0.0, %v2484
        %v2486 = vpop.f32.mrb[0].mxu0
        %v2487 = vpop.f32.mrb[0].mxu0
        %v2488 = vadd.f32 0.0, %v2487
        %v2489 = vpop.f32.mrb[0].mxu0
        %2490 = vmatprep.mubr.bf16.mxu0 0
        %2491 = vmatmul.mubr.bf16.gmra.mrb[0].mxu0 %v2420
        %v2492 = vpop.f32.mrb[0].mxu0
        %v2493 = vadd.f32 0.0, %v2492
        %v2494 = vpop.f32.mrb[0].mxu0
        %v2495 = vpop.f32.mrb[0].mxu0
        %v2496 = vadd.f32 0.0, %v2495
        %v2497 = vpop.f32.mrb[0].mxu0
        %2498 = vmatprep.mubr.bf16.mxu0 0
        %2499 = vmatmul.mubr.bf16.gmra.mrb[0].mxu0 %v2423
        %v2500 = vpop.f32.mrb[0].mxu0
        %v2501 = vadd.f32 0.0, %v2500
        %v2502 = vpop.f32.mrb[0].mxu0
        %v2503 = vpop.f32.mrb[0].mxu0
        %v2504 = vadd.f32 0.0, %v2503
        %v2505 = vpop.f32.mrb[0].mxu0
        %2506 = vmatprep.mubr.bf16.mxu0 0
        %2507 = vmatmul.mubr.bf16.gmra.mrb[0].mxu0 %v2426
        %v2508 = vpop.f32.mrb[0].mxu0
        %v2509 = vadd.f32 0.0, %v2508
        %v2510 = vpop.f32.mrb[0].mxu0
        %v2511 = vpop.f32.mrb[0].mxu0
        %v2512 = vadd.f32 0.0, %v2511
        %v2513 = vpop.f32.mrb[0].mxu0
        %2514 = vmatprep.mubr.bf16.mxu0 0
        %2515 = vmatmul.mubr.bf16.gmra.mrb[0].mxu0 %v2429
        %v2516 = vpop.f32.mrb[0].mxu0
        %v2517 = vadd.f32 0.0, %v2516
        %v2518 = vpop.f32.mrb[0].mxu0
        %v2519 = vpop.f32.mrb[0].mxu0
        %v2520 = vadd.f32 0.0, %v2519
        %v2521 = vpop.f32.mrb[0].mxu0
        %2522 = vmatprep.mubr.bf16.mxu0 0
        %2523 = vmatmul.mubr.bf16.gmra.mrb[0].mxu0 %v2432
        %v2524 = vpop.f32.mrb[0].mxu0
        %v2525 = vadd.f32 0.0, %v2524
        %v2526 = vpop.f32.mrb[0].mxu0
        %v2527 = vpop.f32.mrb[0].mxu0
        %v2528 = vadd.f32 0.0, %v2527
        %v2529 = vpop.f32.mrb[0].mxu0
        %2530 = vdwg.mxu0
        %v2531 = vadd.f32 %v2137, %v2469
        %v2532 = vadd.f32 %v2138, %v2472
        %v2533 = vadd.f32 %v2139, %v2477
        %v2534 = vadd.f32 %v2140, %v2480
        %v2535 = vadd.f32 %v2141, %v2485
        %v2536 = vadd.f32 %v2142, %v2488
        %v2537 = vadd.f32 %v2143, %v2493
        %v2538 = vadd.f32 %v2144, %v2496
        %v2539 = vadd.f32 %v2145, %v2501
        %v2540 = vadd.f32 %v2146, %v2504
        %v2541 = vadd.f32 %v2147, %v2509
        %v2542 = vadd.f32 %v2148, %v2512
        %v2543 = vadd.f32 %v2149, %v2517
        %v2544 = vadd.f32 %v2150, %v2520
        %v2545 = vadd.f32 %v2151, %v2525
        %v2546 = vadd.f32 %v2152, %v2528
        %v2547 = vld [vmem:[%s1942] sm:$0xe]
        %v2548 = vld [vmem:[%s1942 + $0xc] sm:$0xe]
        %v2549 = vld [vmem:[%s1942 + $0x18] sm:$0xe]
        %v2550 = vld [vmem:[%s1942 + $0x24] sm:$0xe]
        %v2551 = vld [vmem:[%s1942 + $0x30] sm:$0xe]
        %v2552 = vld [vmem:[%s1942 + $0x3c] sm:$0xe]
        %v2553 = vld [vmem:[%s1942 + $0x48] sm:$0xe]
        %v2554 = vld [vmem:[%s1942 + $0x54] sm:$0xe]
        %v2579 = vrot.slane %v2547, 5
        %v2580 = vrot.slane %v2579, 4
        %v2581 = vrot.slane %v2154, 5
        %v2582 = vsel %vm830, %v2580, %v2581
        %v2583 = vrot.slane %v2581, 4
        %v2584 = vrot.slane %v2155, 5
        %v2585 = vsel %vm830, %v2583, %v2584
        %v2586 = vrot.slane %v2548, 5
        %v2587 = vrot.slane %v2586, 4
        %v2588 = vrot.slane %v2157, 5
        %v2589 = vsel %vm830, %v2587, %v2588
        %v2590 = vrot.slane %v2588, 4
        %v2591 = vrot.slane %v2158, 5
        %v2592 = vsel %vm830, %v2590, %v2591
        %v2593 = vrot.slane %v2549, 5
        %v2594 = vrot.slane %v2593, 4
        %v2595 = vrot.slane %v2160, 5
        %v2596 = vsel %vm830, %v2594, %v2595
        %v2597 = vrot.slane %v2595, 4
        %v2598 = vrot.slane %v2161, 5
        %v2599 = vsel %vm830, %v2597, %v2598
        %v2600 = vrot.slane %v2550, 5
        %v2601 = vrot.slane %v2600, 4
        %v2602 = vrot.slane %v2163, 5
        %v2603 = vsel %vm830, %v2601, %v2602
        %v2604 = vrot.slane %v2602, 4
        %v2605 = vrot.slane %v2164, 5
        %v2606 = vsel %vm830, %v2604, %v2605
        %v2607 = vrot.slane %v2551, 5
        %v2608 = vrot.slane %v2607, 4
        %v2609 = vrot.slane %v2166, 5
        %v2610 = vsel %vm830, %v2608, %v2609
        %v2611 = vrot.slane %v2609, 4
        %v2612 = vrot.slane %v2167, 5
        %v2613 = vsel %vm830, %v2611, %v2612
        %v2614 = vrot.slane %v2552, 5
        %v2615 = vrot.slane %v2614, 4
        %v2616 = vrot.slane %v2169, 5
        %v2617 = vsel %vm830, %v2615, %v2616
        %v2618 = vrot.slane %v2616, 4
        %v2619 = vrot.slane %v2170, 5
        %v2620 = vsel %vm830, %v2618, %v2619
        %v2621 = vrot.slane %v2553, 5
        %v2622 = vrot.slane %v2621, 4
        %v2623 = vrot.slane %v2172, 5
        %v2624 = vsel %vm830, %v2622, %v2623
        %v2625 = vrot.slane %v2623, 4
        %v2626 = vrot.slane %v2173, 5
        %v2627 = vsel %vm830, %v2625, %v2626
        %v2628 = vrot.slane %v2554, 5
        %v2629 = vrot.slane %v2628, 4
        %v2630 = vrot.slane %v2175, 5
        %v2631 = vsel %vm830, %v2629, %v2630
        %v2632 = vrot.slane %v2630, 4
        %v2633 = vrot.slane %v2176, 5
        %v2634 = vsel %vm830, %v2632, %v2633
        %s2635 = scalar_lea.vmem %s1, 128
        %v2636 = vld [vmem:[%s2635] sm:$0xf]
        %v2637 = vld [vmem:[%s2635 + $0x4] sm:$0xf]
        %v2638 = vld [vmem:[%s2635 + $0x8] sm:$0xf]
        %v2639 = vld [vmem:[%s2635 + $0xc] sm:$0xf]
        %v2640 = vunpack.c.l.b16 %v2582
        %v2641 = vunpack.c.l.b16 %v2585
        %v2642 = vunpack.c.l.b16 %v2589
        %v2643 = vunpack.c.l.b16 %v2592
        %v2644 = vunpack.c.l.b16 %v2596
        %v2645 = vunpack.c.l.b16 %v2599
        %v2646 = vunpack.c.l.b16 %v2603
        %v2647 = vunpack.c.l.b16 %v2606
        %v2648 = vunpack.c.l.b16 %v2610
        %v2649 = vunpack.c.l.b16 %v2613
        %v2650 = vunpack.c.l.b16 %v2617
        %v2651 = vunpack.c.l.b16 %v2620
        %v2652 = vunpack.c.l.b16 %v2624
        %v2653 = vunpack.c.l.b16 %v2627
        %v2654 = vunpack.c.l.b16 %v2631
        %v2655 = vunpack.c.l.b16 %v2634
        %v2656 = vpack.c.b16 %v2641, %v2640
        %v2657 = vpack.c.b16 %v2643, %v2642
        %v2658 = vpack.c.b16 %v2645, %v2644
        %v2659 = vpack.c.b16 %v2647, %v2646
        %v2660 = vpack.c.b16 %v2649, %v2648
        %v2661 = vpack.c.b16 %v2651, %v2650
        %v2662 = vpack.c.b16 %v2653, %v2652
        %v2663 = vpack.c.b16 %v2655, %v2654
        %v2668 = vunpack.c.l.b16 %v2636
        %v2669 = vunpack.c.l.b16 %v2637
        %v2670 = vunpack.c.l.b16 %v2638
        %v2671 = vunpack.c.l.b16 %v2639
        %v2672 = vpack.c.b16 %v2669, %v2668
        %v2673 = vpack.c.b16 %v2671, %v2670
        %v2677 = vsel %vm509, %v2656, 0
        %v2680 = vsel %vm509, %v2657, 0
        %v2683 = vsel %vm509, %v2658, 0
        %v2686 = vsel %vm509, %v2659, 0
        %v2689 = vsel %vm509, %v2660, 0
        %v2692 = vsel %vm509, %v2661, 0
        %v2695 = vsel %vm509, %v2662, 0
        %v2698 = vsel %vm509, %v2663, 0
        %2700 = vmatprep.subr.bf16.mxu0 0
        %2701 = vmatpush1.bf16.msra.mxu0 %v2672
        %2702 = vmatprep.subr.bf16.mxu0 0
        %2703 = vmatpush1.bf16.msra.mxu0 %v2673
        %2704 = vmatprep.subr.bf16.mxu0 0
        %2705 = vmatpush1.bf16.msra.mxu0 0
        %2706 = vmatprep.subr.bf16.mxu0 0
        %2707 = vmatpush1.bf16.msra.mxu0 0
        %2708 = vmatprep.subr.bf16.mxu0 0
        %2709 = vmatpush1.bf16.msra.mxu0 0
        %2710 = vmatprep.subr.bf16.mxu0 0
        %2711 = vmatpush1.bf16.msra.mxu0 0
        %2712 = vmatprep.subr.bf16.mxu0 0
        %2713 = vmatpush1.bf16.msra.mxu0 0
        %2714 = vmatprep.subr.bf16.mxu0 0
        %2715 = vmatpush1.bf16.msra.mxu0 0
        %2716 = vmatprep.subr.bf16.mxu0 0
        %2717 = vmatpush1.bf16.msra.mxu0 0
        %2718 = vmatprep.subr.bf16.mxu0 0
        %2719 = vmatpush1.bf16.msra.mxu0 0
        %2720 = vmatprep.subr.bf16.mxu0 0
        %2721 = vmatpush1.bf16.msra.mxu0 0
        %2722 = vmatprep.subr.bf16.mxu0 0
        %2723 = vmatpush1.bf16.msra.mxu0 0
        %2724 = vmatprep.subr.bf16.mxu0 0
        %2725 = vmatpush1.bf16.msra.mxu0 0
        %2726 = vmatprep.subr.bf16.mxu0 0
        %2727 = vmatpush1.bf16.msra.mxu0 0
        %2728 = vmatprep.subr.bf16.mxu0 0
        %2729 = vmatpush1.bf16.msra.mxu0 0
        %2730 = vmatprep.subr.bf16.mxu0 0
        %2731 = vmatpush1.bf16.msra.mxu0 0
        %2732 = vmatprep.mubr.bf16.mxu0 0
        %2733 = vmatmul.mubr.bf16.gmra.mrb[0].mxu0 %v2677
        %v2734 = vpop.f32.mrb[0].mxu0
        %v2735 = vadd.f32 0.0, %v2734
        %v2736 = vpop.f32.mrb[0].mxu0
        %v2737 = vpop.f32.mrb[0].mxu0
        %v2738 = vadd.f32 0.0, %v2737
        %v2739 = vpop.f32.mrb[0].mxu0
        %2740 = vmatprep.mubr.bf16.mxu0 0
        %2741 = vmatmul.mubr.bf16.gmra.mrb[0].mxu0 %v2680
        %v2742 = vpop.f32.mrb[0].mxu0
        %v2743 = vadd.f32 0.0, %v2742
        %v2744 = vpop.f32.mrb[0].mxu0
        %v2745 = vpop.f32.mrb[0].mxu0
        %v2746 = vadd.f32 0.0, %v2745
        %v2747 = vpop.f32.mrb[0].mxu0
        %2748 = vmatprep.mubr.bf16.mxu0 0
        %2749 = vmatmul.mubr.bf16.gmra.mrb[0].mxu0 %v2683
        %v2750 = vpop.f32.mrb[0].mxu0
        %v2751 = vadd.f32 0.0, %v2750
        %v2752 = vpop.f32.mrb[0].mxu0
        %v2753 = vpop.f32.mrb[0].mxu0
        %v2754 = vadd.f32 0.0, %v2753
        %v2755 = vpop.f32.mrb[0].mxu0
        %2756 = vmatprep.mubr.bf16.mxu0 0
        %2757 = vmatmul.mubr.bf16.gmra.mrb[0].mxu0 %v2686
        %v2758 = vpop.f32.mrb[0].mxu0
        %v2759 = vadd.f32 0.0, %v2758
        %v2760 = vpop.f32.mrb[0].mxu0
        %v2761 = vpop.f32.mrb[0].mxu0
        %v2762 = vadd.f32 0.0, %v2761
        %v2763 = vpop.f32.mrb[0].mxu0
        %2764 = vmatprep.mubr.bf16.mxu0 0
        %2765 = vmatmul.mubr.bf16.gmra.mrb[0].mxu0 %v2689
        %v2766 = vpop.f32.mrb[0].mxu0
        %v2767 = vadd.f32 0.0, %v2766
        %v2768 = vpop.f32.mrb[0].mxu0
        %v2769 = vpop.f32.mrb[0].mxu0
        %v2770 = vadd.f32 0.0, %v2769
        %v2771 = vpop.f32.mrb[0].mxu0
        %2772 = vmatprep.mubr.bf16.mxu0 0
        %2773 = vmatmul.mubr.bf16.gmra.mrb[0].mxu0 %v2692
        %v2774 = vpop.f32.mrb[0].mxu0
        %v2775 = vadd.f32 0.0, %v2774
        %v2776 = vpop.f32.mrb[0].mxu0
        %v2777 = vpop.f32.mrb[0].mxu0
        %v2778 = vadd.f32 0.0, %v2777
        %v2779 = vpop.f32.mrb[0].mxu0
        %2780 = vmatprep.mubr.bf16.mxu0 0
        %2781 = vmatmul.mubr.bf16.gmra.mrb[0].mxu0 %v2695
        %v2782 = vpop.f32.mrb[0].mxu0
        %v2783 = vadd.f32 0.0, %v2782
        %v2784 = vpop.f32.mrb[0].mxu0
        %v2785 = vpop.f32.mrb[0].mxu0
        %v2786 = vadd.f32 0.0, %v2785
        %v2787 = vpop.f32.mrb[0].mxu0
        %2788 = vmatprep.mubr.bf16.mxu0 0
        %2789 = vmatmul.mubr.bf16.gmra.mrb[0].mxu0 %v2698
        %v2790 = vpop.f32.mrb[0].mxu0
        %v2791 = vadd.f32 0.0, %v2790
        %v2792 = vpop.f32.mrb[0].mxu0
        %v2793 = vpop.f32.mrb[0].mxu0
        %v2794 = vadd.f32 0.0, %v2793
        %v2795 = vpop.f32.mrb[0].mxu0
        %2796 = vdwg.mxu0
        %v2797 = vadd.f32 %v2531, %v2735
        %v2798 = vadd.f32 %v2532, %v2738
        %v2799 = vadd.f32 %v2533, %v2743
        %v2800 = vadd.f32 %v2534, %v2746
        %v2801 = vadd.f32 %v2535, %v2751
        %v2802 = vadd.f32 %v2536, %v2754
        %v2803 = vadd.f32 %v2537, %v2759
        %v2804 = vadd.f32 %v2538, %v2762
        %v2805 = vadd.f32 %v2539, %v2767
        %v2806 = vadd.f32 %v2540, %v2770
        %v2807 = vadd.f32 %v2541, %v2775
        %v2808 = vadd.f32 %v2542, %v2778
        %v2809 = vadd.f32 %v2543, %v2783
        %v2810 = vadd.f32 %v2544, %v2786
        %v2811 = vadd.f32 %v2545, %v2791
        %v2812 = vadd.f32 %v2546, %v2794
        %v2813 = vld [vmem:[%s2] sm:$0x1]
        %v2815 = vlaneseq
        %v2816 = vshrl.u32 %v2815, 7
        %v2817 = vsub.s32 0, %v2816
        %v2818 = vrot.slane %v2813, %v2817
        %v2820 = vadd.f32 %v2797, %v2818
        %v2821 = vadd.f32 %v2798, %v2818
        %v2822 = vadd.f32 %v2799, %v2818
        %v2823 = vadd.f32 %v2800, %v2818
        %v2824 = vadd.f32 %v2801, %v2818
        %v2825 = vadd.f32 %v2802, %v2818
        %v2826 = vadd.f32 %v2803, %v2818
        %v2827 = vadd.f32 %v2804, %v2818
        %v2828 = vadd.f32 %v2805, %v2818
        %v2829 = vadd.f32 %v2806, %v2818
        %v2830 = vadd.f32 %v2807, %v2818
        %v2831 = vadd.f32 %v2808, %v2818
        %v2832 = vadd.f32 %v2809, %v2818
        %v2833 = vadd.f32 %v2810, %v2818
        %v2834 = vadd.f32 %v2811, %v2818
        %v2835 = vadd.f32 %v2812, %v2818
        %vm2836 = vcmp.gt.f32.partialorder %v2820, 0.0
        %vm2837 = vcmp.gt.f32.partialorder %v2821, 0.0
        %vm2838 = vcmp.gt.f32.partialorder %v2822, 0.0
        %vm2839 = vcmp.gt.f32.partialorder %v2823, 0.0
        %vm2840 = vcmp.gt.f32.partialorder %v2824, 0.0
        %vm2841 = vcmp.gt.f32.partialorder %v2825, 0.0
        %vm2842 = vcmp.gt.f32.partialorder %v2826, 0.0
        %vm2843 = vcmp.gt.f32.partialorder %v2827, 0.0
        %vm2844 = vcmp.gt.f32.partialorder %v2828, 0.0
        %vm2845 = vcmp.gt.f32.partialorder %v2829, 0.0
        %vm2846 = vcmp.gt.f32.partialorder %v2830, 0.0
        %vm2847 = vcmp.gt.f32.partialorder %v2831, 0.0
        %vm2848 = vcmp.gt.f32.partialorder %v2832, 0.0
        %vm2849 = vcmp.gt.f32.partialorder %v2833, 0.0
        %vm2850 = vcmp.gt.f32.partialorder %v2834, 0.0
        %vm2851 = vcmp.gt.f32.partialorder %v2835, 0.0
        %v2852 = vmul.f32 %v2820, 0.2
        %v2853 = vmul.f32 %v2821, 0.2
        %v2854 = vmul.f32 %v2822, 0.2
        %v2855 = vmul.f32 %v2823, 0.2
        %v2856 = vmul.f32 %v2824, 0.2
        %v2857 = vmul.f32 %v2825, 0.2
        %v2858 = vmul.f32 %v2826, 0.2
        %v2859 = vmul.f32 %v2827, 0.2
        %v2860 = vmul.f32 %v2828, 0.2
        %v2861 = vmul.f32 %v2829, 0.2
        %v2862 = vmul.f32 %v2830, 0.2
        %v2863 = vmul.f32 %v2831, 0.2
        %v2864 = vmul.f32 %v2832, 0.2
        %v2865 = vmul.f32 %v2833, 0.2
        %v2866 = vmul.f32 %v2834, 0.2
        %v2867 = vmul.f32 %v2835, 0.2
        %v2868 = vsel %vm2836, %v2820, %v2852
        %v2869 = vsel %vm2837, %v2821, %v2853
        %v2870 = vsel %vm2838, %v2822, %v2854
        %v2871 = vsel %vm2839, %v2823, %v2855
        %v2872 = vsel %vm2840, %v2824, %v2856
        %v2873 = vsel %vm2841, %v2825, %v2857
        %v2874 = vsel %vm2842, %v2826, %v2858
        %v2875 = vsel %vm2843, %v2827, %v2859
        %v2876 = vsel %vm2844, %v2828, %v2860
        %v2877 = vsel %vm2845, %v2829, %v2861
        %v2878 = vsel %vm2846, %v2830, %v2862
        %v2879 = vsel %vm2847, %v2831, %v2863
        %v2880 = vsel %vm2848, %v2832, %v2864
        %v2881 = vsel %vm2849, %v2833, %v2865
        %v2882 = vsel %vm2850, %v2834, %v2866
        %v2883 = vsel %vm2851, %v2835, %v2867
        %v2884 = vstv %s241
        %v2885 = vadd.s32 %v2884, 1
        %v2886 = vadd.s32 %v2884, 2
        %v2887 = vadd.s32 %v2884, 3
        %v2888 = vadd.s32 %v2884, 4
        %v2889 = vadd.s32 %v2884, 5
        %v2890 = vadd.s32 %v2884, 6
        %v2891 = vadd.s32 %v2884, 7
        %vm2892 = vcmp.lt.s32.totalorder %v2884, 15
        %vm2893 = vcmp.lt.s32.totalorder %v2885, 15
        %vm2894 = vcmp.lt.s32.totalorder %v2886, 15
        %vm2895 = vcmp.lt.s32.totalorder %v2887, 15
        %vm2896 = vcmp.lt.s32.totalorder %v2888, 15
        %vm2897 = vcmp.lt.s32.totalorder %v2889, 15
        %vm2898 = vcmp.lt.s32.totalorder %v2890, 15
        %vm2899 = vcmp.lt.s32.totalorder %v2891, 15
        %v2900 = vsel %vm2892, 1, 0
        %v2901 = vsel %vm2893, 1, 0
        %v2902 = vsel %vm2894, 1, 0
        %v2903 = vsel %vm2895, 1, 0
        %v2904 = vsel %vm2896, 1, 0
        %v2905 = vsel %vm2897, 1, 0
        %v2906 = vsel %vm2898, 1, 0
        %v2907 = vsel %vm2899, 1, 0
        %vm2908 = vcmp.eq.s32.totalorder %v2900, 1
        %vm2909 = vcmp.eq.s32.totalorder %v2901, 1
        %vm2910 = vcmp.eq.s32.totalorder %v2902, 1
        %vm2911 = vcmp.eq.s32.totalorder %v2903, 1
        %vm2912 = vcmp.eq.s32.totalorder %v2904, 1
        %vm2913 = vcmp.eq.s32.totalorder %v2905, 1
        %vm2914 = vcmp.eq.s32.totalorder %v2906, 1
        %vm2915 = vcmp.eq.s32.totalorder %v2907, 1
        %v2916 = vsel %vm2908, %v2868, 0.0
        %v2917 = vsel %vm2908, %v2869, 0.0
        %v2918 = vsel %vm2909, %v2870, 0.0
        %v2919 = vsel %vm2909, %v2871, 0.0
        %v2920 = vsel %vm2910, %v2872, 0.0
        %v2921 = vsel %vm2910, %v2873, 0.0
        %v2922 = vsel %vm2911, %v2874, 0.0
        %v2923 = vsel %vm2911, %v2875, 0.0
        %v2924 = vsel %vm2912, %v2876, 0.0
        %v2925 = vsel %vm2912, %v2877, 0.0
        %v2926 = vsel %vm2913, %v2878, 0.0
        %v2927 = vsel %vm2913, %v2879, 0.0
        %v2928 = vsel %vm2914, %v2880, 0.0
        %v2929 = vsel %vm2914, %v2881, 0.0
        %v2930 = vsel %vm2915, %v2882, 0.0
        %v2931 = vsel %vm2915, %v2883, 0.0
        %v2932 = vld [vmem:[#allocation2] sm:$0x1]
        %vm2933 = vcmask 523264
        %v2934 = vsel %vm2933, %v2916, 0.0
        %v2935 = vsel %vm2933, %v2917, 0.0
        %v2936 = vadd.f32 %v2934, %v2935
        %v2937 = vsel %vm2933, %v2918, 0.0
        %v2938 = vadd.f32 %v2936, %v2937
        %v2939 = vsel %vm2933, %v2919, 0.0
        %v2940 = vadd.f32 %v2938, %v2939
        %v2941 = vsel %vm2933, %v2920, 0.0
        %v2942 = vadd.f32 %v2940, %v2941
        %v2943 = vsel %vm2933, %v2921, 0.0
        %v2944 = vadd.f32 %v2942, %v2943
        %v2945 = vsel %vm2933, %v2922, 0.0
        %v2946 = vadd.f32 %v2944, %v2945
        %v2947 = vsel %vm2933, %v2923, 0.0
        %v2948 = vadd.f32 %v2946, %v2947
        %v2949 = vsel %vm2933, %v2924, 0.0
        %v2950 = vadd.f32 %v2948, %v2949
        %v2951 = vsel %vm2933, %v2925, 0.0
        %v2952 = vadd.f32 %v2950, %v2951
        %v2953 = vsel %vm2933, %v2926, 0.0
        %v2954 = vadd.f32 %v2952, %v2953
        %v2955 = vsel %vm2933, %v2927, 0.0
        %v2956 = vadd.f32 %v2954, %v2955
        %v2957 = vsel %vm2933, %v2928, 0.0
        %v2958 = vadd.f32 %v2956, %v2957
        %v2959 = vsel %vm2933, %v2929, 0.0
        %v2960 = vadd.f32 %v2958, %v2959
        %v2961 = vsel %vm2933, %v2930, 0.0
        %v2962 = vadd.f32 %v2960, %v2961
        %v2963 = vsel %vm2933, %v2931, 0.0
        %v2964 = vadd.f32 %v2962, %v2963
        %v2965 = vrot.slane %v2964, 4
        %v2966 = vadd.f32 %v2964, %v2965
        %v2967 = vrot.slane %v2966, 2
        %v2968 = vadd.f32 %v2966, %v2967
        %v2969 = vrot.slane %v2968, 1
        %v2970 = vadd.f32 %v2968, %v2969
        %v2971 = vadd.f32 %v2932, %v2970
        %vm2972 = vcmask 516096
        %2973 = vst.msk [vmem:[#allocation2] sm:$0x1] %vm2972, %v2971
        %p2974 = scmp.eq.s32.totalorder %s24, 1
        // Predicated region
        $region45: #{audio_derivative_encoder.3} parent=39 // pred_check
          %p2975 = pneg %p2974
        $region46: #{audio_derivative_encoder.3} parent=39 // pred_check_branch
          %2977 = sbr.rel (%p2975) target = $region48
        $region47: #{audio_derivative_encoder.3} parent=39 // pred_region
          %v2978 = vld [vmem:[#allocation2] sm:$0x1]
          %v2979 = vmul.f32 %v2978, 0.004166667
          %v2980 = vld [vmem:[%s3] sm:$0xff]
          %v2981 = vld [vmem:[%s3 + $0x8] sm:$0xff]
          %v2982 = vld [vmem:[%s3 + $0x10] sm:$0xff]
          %v2983 = vld [vmem:[%s3 + $0x18] sm:$0xff]
          %v2984 = vld [vmem:[%s3 + $0x20] sm:$0xff]
          %v2985 = vld [vmem:[%s3 + $0x28] sm:$0xff]
          %v2986 = vld [vmem:[%s3 + $0x30] sm:$0xff]
          %v2987 = vld [vmem:[%s3 + $0x38] sm:$0xff]
          %v2988 = vld [vmem:[%s4] sm:$0x1]
          %v2990 = vsel %vm2933, %v2979, 0
          %2992 = vmatprep.subr.mxu0 0.0
          %2993 = vmatpush1.msra.mxu0 %v2980
          %2994 = vmatprep.subr.mxu0 0.0
          %2995 = vmatpush1.msra.mxu0 %v2981
          %2996 = vmatprep.subr.mxu0 0.0
          %2997 = vmatpush1.msra.mxu0 %v2982
          %2998 = vmatprep.subr.mxu0 0.0
          %2999 = vmatpush1.msra.mxu0 %v2983
          %3000 = vmatprep.subr.mxu0 0.0
          %3001 = vmatpush1.msra.mxu0 %v2984
          %3002 = vmatprep.subr.mxu0 0.0
          %3003 = vmatpush1.msra.mxu0 %v2985
          %3004 = vmatprep.subr.mxu0 0.0
          %3005 = vmatpush1.msra.mxu0 %v2986
          %3006 = vmatprep.subr.mxu0 0.0
          %3007 = vmatpush1.msra.mxu0 %v2987
          %3008 = vmatprep.subr.mxu0 0.0
          %3009 = vmatpush1.msra.mxu0 0.0
          %3010 = vmatprep.subr.mxu0 0.0
          %3011 = vmatpush1.msra.mxu0 0.0
          %3012 = vmatprep.subr.mxu0 0.0
          %3013 = vmatpush1.msra.mxu0 0.0
          %3014 = vmatprep.subr.mxu0 0.0
          %3015 = vmatpush1.msra.mxu0 0.0
          %3016 = vmatprep.subr.mxu0 0.0
          %3017 = vmatpush1.msra.mxu0 0.0
          %3018 = vmatprep.subr.mxu0 0.0
          %3019 = vmatpush1.msra.mxu0 0.0
          %3020 = vmatprep.subr.mxu0 0.0
          %3021 = vmatpush1.msra.mxu0 0.0
          %3022 = vmatprep.subr.mxu0 0.0
          %3023 = vmatpush1.msra.mxu0 0.0
          %3024 = vmatprep.subr.mxu0 0.0
          %3025 = vmatpush1.msra.mxu0 0.0
          %3026 = vmatprep.subr.mxu0 0.0
          %3027 = vmatpush1.msra.mxu0 0.0
          %3028 = vmatprep.subr.mxu0 0.0
          %3029 = vmatpush1.msra.mxu0 0.0
          %3030 = vmatprep.subr.mxu0 0.0
          %3031 = vmatpush1.msra.mxu0 0.0
          %3032 = vmatprep.subr.mxu0 0.0
          %3033 = vmatpush1.msra.mxu0 0.0
          %3034 = vmatprep.subr.mxu0 0.0
          %3035 = vmatpush1.msra.mxu0 0.0
          %3036 = vmatprep.subr.mxu0 0.0
          %3037 = vmatpush1.msra.mxu0 0.0
          %3038 = vmatprep.subr.mxu0 0.0
          %3039 = vmatpush1.msra.mxu0 0.0
          %3040 = vmatprep.subr.mxu0 0.0
          %3041 = vmatpush1.msra.mxu0 0.0
          %3042 = vmatprep.subr.mxu0 0.0
          %3043 = vmatpush1.msra.mxu0 0.0
          %3044 = vmatprep.subr.mxu0 0.0
          %3045 = vmatpush1.msra.mxu0 0.0
          %3046 = vmatprep.subr.mxu0 0.0
          %3047 = vmatpush1.msra.mxu0 0.0
          %3048 = vmatprep.subr.mxu0 0.0
          %3049 = vmatpush1.msra.mxu0 0.0
          %3050 = vmatprep.subr.mxu0 0.0
          %3051 = vmatpush1.msra.mxu0 0.0
          %3052 = vmatprep.subr.mxu0 0.0
          %3053 = vmatpush1.msra.mxu0 0.0
          %3054 = vmatprep.subr.mxu0 0.0
          %3055 = vmatpush1.msra.mxu0 0.0
          %3056 = vmatprep.mubr.f32.mxu0 0.0
          %3057 = vmatmul.mubr.f32.gmra.mrb[0].mxu0 %v2990
          %v3058 = vpop.f32.mrb[0].mxu0
          %v3059 = vadd.f32 %v2988, %v3058
          %v3060 = vpop.f32.mrb[0].mxu0
          %3061 = vdwg.mxu0
          %3062 = vst [vmem:[%s228] sm:$0x1] %v3059
        $region48: #{audio_derivative_encoder.3} parent=39 // pred_fallthru
          _
        %s3063 = sand.u32 %s149, 1
        %s3064 = scalar_lea.sflag [#allocation4], %s3063
        %s3065 = sand.u32 %s149, 1
        %s3066 = scalar_lea.vmem [#allocation3], %s3065
        // Predicated region
        $region49: #{audio_derivative_encoder.3} parent=39 // pred_check
          %p3067 = pneg %p159
        $region50: #{audio_derivative_encoder.3} parent=39 // pred_check_branch
          %3069 = sbr.rel (%p3067) target = $region52
        $region51: #{audio_derivative_encoder.3} parent=39 // pred_region
          %s3071 = ssub.s32 16, 16
          %3072 = vsyncadd %s3064, %s3071
          %s3073 = smul.addr %s23, 16
          %s3074 = scalar_lea.hbm %s5, %s3073
          %s3076 = sshll.u32 %s3066, 4
          %s3077 = int_to_ptr.vmem [resolvable:$true] %s3076
          %3079 = dma.vmem_to_hbm [thread:$0]  %s3077, 16, %s3074, %s3064
        $region52: #{audio_derivative_encoder.3} parent=39 // pred_fallthru
          _
      $region40: #{audio_derivative_encoder.3} parent=5 // pred_fallthru
        _
      %p3080 = scmp.le.s32.totalorder 2, %s14
      // Predicated region
      $region53: #{audio_derivative_encoder.3} parent=5 // pred_check
        %p3081 = pneg %p3080
      $region54: #{audio_derivative_encoder.3} parent=5 // pred_check_branch
        %3083 = sbr.rel (%p3081) target = $region56
      $region55: #{audio_derivative_encoder.3} parent=5 // pred_region
        %s3084 = ssub.s32 %s14, 2
        // Predicated region
        $region57: #{audio_derivative_encoder.3} parent=55 // pred_check
          %p3085 = pneg %p165
        $region58: #{audio_derivative_encoder.3} parent=55 // pred_check_branch
          %3087 = sbr.rel (%p3085) target = $region60
        $region59: #{audio_derivative_encoder.3} parent=55 // pred_region
          %s3088 = sand.u32 %s150, 1
          %s3089 = scalar_lea.sflag [#allocation4], %s3088
          %s3090 = sand.u32 %s150, 1
          %s3091 = scalar_lea.vmem [#allocation3], %s3090
          %3092 = dma.done %s3089, 16
        $region60: #{audio_derivative_encoder.3} parent=55 // pred_fallthru
          _
      $region56: #{audio_derivative_encoder.3} parent=5 // pred_fallthru
        _
    $region6: #{audio_derivative_encoder.3} parent=1 // loop_footer
      %s18 = sadd.s32 1, %s14
    $region7: #{audio_derivative_encoder.3} parent=1 // loop_footer_branch
      %13 = sbr.rel target = $region3
    $region8: #{audio_derivative_encoder.3} parent=1 // loop_exit
      _
    %3093 = vsyncpa [#allocation4], 1
    %s3094 = scalar_lea.sflag [#allocation4], 1
    %3095 = vsyncpa %s3094, 1

// kernel: audio_derivative_encoder.2
$region0: #{audio_derivative_encoder.2}
  #allocation0 [shape = 'u32[]', space=smem, size = 0x4, offset = 0x4, fixed_abs, tag = 'smem constant byte address 0x4 - core index']
  #allocation1 [shape = 'u32[144,128]{1,0:T(1,128)}', space=vmem, size = 0x12000, scoped, tag = 'internal scratch']
  %s0 = inlined_call_operand.vmem [shape: bf16[2,26,26,4], index: 0, kind: input, shape index: {}]
  %s1 = inlined_call_operand.vmem [shape: bf16[9,4,32], index: 1, kind: input, shape index: {}]
  %s2 = inlined_call_operand.vmem [shape: f32[1,32], index: 2, kind: input, shape index: {}]
  %s3 = inlined_call_operand.vmem [shape: bf16[2,24,24,32], index: 3, kind: output, shape index: {}]
  %s4 = sld [smem:[#allocation0]]
  $region45: #{audio_derivative_encoder.2} parent=0
    _
  %s6 = ssub.s32 1, %s4
  %s7 = scalar_select 0, %s6, %s4
  loop: start=0, step=1, limit=8
  $region2: #{audio_derivative_encoder.2} parent=0 // loop_pre_header
    _
  $region3: #{audio_derivative_encoder.2} parent=0 // loop_header
    %s9 = sphi 0, %s13
    %p10 = scmp.ge.s32.totalorder %s9, 8
    %s16 = sphi 0, %s28
    %s17 = sphi 0, %s24
    %s18 = sphi 0, %s16
    %s19 = sphi 0, %s17
    %s20 = sphi 0, %s18
    %s21 = sphi 0, %s19
    %s31 = sphi 0, %s33
    %s34 = sphi 0, %s31
    %s35 = sphi 0, %s34
    %s51 = sphi 0, %s35
    %s55 = sphi 0, %s55
    %s57 = sphi 0, %s55
    %s58 = sphi 0, %s57
    %s72 = sphi 0, %s58
    %s76 = sphi 0, %s76
    %s78 = sphi 0, %s76
    %s79 = sphi 0, %s78
    %s93 = sphi 0, %s79
    %s101 = sphi 0, %s103
    %s104 = sphi 0, %s101
    %s105 = sphi 0, %s104
    %s121 = sphi 0, %s105
  $region4: #{audio_derivative_encoder.2} parent=0 // loop_header_branch
    %12 = sbr.rel (%p10) target = $region8
  $region5: #{audio_derivative_encoder.2} parent=0 // loop_body
    %s14 = ssub.s32 %s9, 1
    %s15 = ssub.s32 %s9, 2
    %s22 = sadd.s32 1, %s17
    %p23 = scmp.ge.s32.totalorder %s22, 3
    %s24 = scalar_select %p23, 0, %s22
    %s25 = sadd.s32 1, %s16
    %s26 = scalar_select %p23, %s25, %s16
    %p27 = scmp.ge.s32.totalorder %s26, 2
    %s28 = scalar_select %p27, 0, %s26
    %s29 = ssub.s32 %s16, %s28
    %p30 = scmp.eq.s32.totalorder %s29, 0
    %s32 = sadd.s32 %s31, 1
    %s33 = scalar_select %p30, %s31, %s32
    %p36 = pneg %p30
    %p37 = scmp.eq.s32.totalorder %s9, 5
    %p38 = por %p36, %p37
    %p39 = scmp.ne.s32.totalorder %s31, %s34
    %p40 = scmp.eq.s32.totalorder %s9, 0
    %p41 = por %p39, %p40
    %p42 = scmp.ne.s32.totalorder %s31, %s34
    %p43 = scmp.eq.s32.totalorder %s14, 5
    %p44 = por %p42, %p43
    %p45 = scmp.ne.s32.totalorder %s34, %s35
    %p46 = scmp.eq.s32.totalorder %s14, 0
    %p47 = por %p45, %p46
    %p48 = scmp.ne.s32.totalorder %s34, %s35
    %p49 = scmp.eq.s32.totalorder %s15, 5
    %p50 = por %p48, %p49
    %p52 = scmp.ne.s32.totalorder %s35, %s51
    %p53 = scmp.eq.s32.totalorder %s15, 0
    %p54 = por %p52, %p53
    %s56 = sadd.s32 %s55, 1
    %p59 = scmp.eq.s32.totalorder %s9, 5
    %p60 = scmp.ne.s32.totalorder %s55, %s57
    %p61 = scmp.eq.s32.totalorder %s9, 0
    %p62 = por %p60, %p61
    %p63 = scmp.ne.s32.totalorder %s55, %s57
    %p64 = scmp.eq.s32.totalorder %s14, 5
    %p65 = por %p63, %p64
    %p66 = scmp.ne.s32.totalorder %s57, %s58
    %p67 = scmp.eq.s32.totalorder %s14, 0
    %p68 = por %p66, %p67
    %p69 = scmp.ne.s32.totalorder %s57, %s58
    %p70 = scmp.eq.s32.totalorder %s15, 5
    %p71 = por %p69, %p70
    %p73 = scmp.ne.s32.totalorder %s58, %s72
    %p74 = scmp.eq.s32.totalorder %s15, 0
    %p75 = por %p73, %p74
    %s77 = sadd.s32 %s76, 1
    %p80 = scmp.eq.s32.totalorder %s9, 5
    %p81 = scmp.ne.s32.totalorder %s76, %s78
    %p82 = scmp.eq.s32.totalorder %s9, 0
    %p83 = por %p81, %p82
    %p84 = scmp.ne.s32.totalorder %s76, %s78
    %p85 = scmp.eq.s32.totalorder %s14, 5
    %p86 = por %p84, %p85
    %p87 = scmp.ne.s32.totalorder %s78, %s79
    %p88 = scmp.eq.s32.totalorder %s14, 0
    %p89 = por %p87, %p88
    %p90 = scmp.ne.s32.totalorder %s78, %s79
    %p91 = scmp.eq.s32.totalorder %s15, 5
    %p92 = por %p90, %p91
    %p94 = scmp.ne.s32.totalorder %s79, %s93
    %p95 = scmp.eq.s32.totalorder %s15, 0
    %p96 = por %p94, %p95
    %s97 = ssub.s32 %s16, %s28
    %s98 = ssub.s32 %s17, %s24
    %s99 = sor.u32 %s97, %s98
    %p100 = scmp.eq.s32.totalorder %s99, 0
    %s102 = sadd.s32 %s101, 1
    %s103 = scalar_select %p100, %s101, %s102
    %p106 = pneg %p100
    %p107 = scmp.eq.s32.totalorder %s9, 5
    %p108 = por %p106, %p107
    %p109 = scmp.ne.s32.totalorder %s101, %s104
    %p110 = scmp.eq.s32.totalorder %s9, 0
    %p111 = por %p109, %p110
    %p112 = scmp.ne.s32.totalorder %s101, %s104
    %p113 = scmp.eq.s32.totalorder %s14, 5
    %p114 = por %p112, %p113
    %p115 = scmp.ne.s32.totalorder %s104, %s105
    %p116 = scmp.eq.s32.totalorder %s14, 0
    %p117 = por %p115, %p116
    %p118 = scmp.ne.s32.totalorder %s104, %s105
    %p119 = scmp.eq.s32.totalorder %s15, 5
    %p120 = por %p118, %p119
    %p122 = scmp.ne.s32.totalorder %s105, %s121
    %p123 = scmp.eq.s32.totalorder %s15, 0
    %p124 = por %p122, %p123
    %p125 = scmp.le.s32.totalorder 1, %s9
    %p126 = scmp.lt.s32.totalorder %s9, 7
    %p127 = pnand %p125, %p126
    %p128 = pneg %p127
    // Predicated region
    $region9: #{audio_derivative_encoder.2} parent=5 // pred_check
      _
    $region10: #{audio_derivative_encoder.2} parent=5 // pred_check_branch
      %130 = sbr.rel (%p127) target = $region12
    $region11: #{audio_derivative_encoder.2} parent=5 // pred_region
      %s131 = ssub.s32 %s9, 1
      // Predicated region
      $region13: #{audio_derivative_encoder.2} parent=11 // pred_check
        %p132 = pneg %p68
      $region14: #{audio_derivative_encoder.2} parent=11 // pred_check_branch
        %134 = sbr.rel (%p132) target = $region16
      $region15: #{audio_derivative_encoder.2} parent=11 // pred_region
        _
      $region16: #{audio_derivative_encoder.2} parent=11 // pred_fallthru
        _
      // Predicated region
      $region17: #{audio_derivative_encoder.2} parent=11 // pred_check
        %p135 = pneg %p89
      $region18: #{audio_derivative_encoder.2} parent=11 // pred_check_branch
        %137 = sbr.rel (%p135) target = $region20
      $region19: #{audio_derivative_encoder.2} parent=11 // pred_region
        _
      $region20: #{audio_derivative_encoder.2} parent=11 // pred_fallthru
        _
    $region12: #{audio_derivative_encoder.2} parent=5 // pred_fallthru
      _
    %p138 = scmp.lt.s32.totalorder %s9, 6
    // Predicated region
    $region21: #{audio_derivative_encoder.2} parent=5 // pred_check
      %p139 = pneg %p138
    $region22: #{audio_derivative_encoder.2} parent=5 // pred_check_branch
      %141 = sbr.rel (%p139) target = $region24
    $region23: #{audio_derivative_encoder.2} parent=5 // pred_region
      // Predicated region
      $region25: #{audio_derivative_encoder.2} parent=23 // pred_check
        %p142 = pneg %p41
      $region26: #{audio_derivative_encoder.2} parent=23 // pred_check_branch
        %144 = sbr.rel (%p142) target = $region28
      $region27: #{audio_derivative_encoder.2} parent=23 // pred_region
        %p145 = scmp.lt.s32.totalorder %s16, 1
        %s146 = scalar_select %p145, %s16, 1
        %s147 = smul.addr %s146, 104
        %s148 = smul.addr %s147, 4
        %s149 = scalar_lea.vmem %s0, %s148
      $region28: #{audio_derivative_encoder.2} parent=23 // pred_fallthru
        _
    $region24: #{audio_derivative_encoder.2} parent=5 // pred_fallthru
      _
    %p150 = scmp.le.s32.totalorder 1, %s9
    %p151 = scmp.lt.s32.totalorder %s9, 7
    %p152 = pnand %p150, %p151
    %p153 = pneg %p152
    // Predicated region
    $region29: #{audio_derivative_encoder.2} parent=5 // pred_check
      _
    $region30: #{audio_derivative_encoder.2} parent=5 // pred_check_branch
      %155 = sbr.rel (%p152) target = $region32
    $region31: #{audio_derivative_encoder.2} parent=5 // pred_region
      %s156 = ssub.s32 %s9, 1
      %p157 = scmp.lt.s32.totalorder %s18, 1
      %s158 = scalar_select %p157, %s18, 1
      %s159 = smul.addr %s158, 104
      %s160 = smul.addr %s159, 4
      %s161 = scalar_lea.vmem %s0, %s160
      %p162 = pneg %p47
      %p163 = pneg %p44
      %p164 = pneg %p68
      %p165 = pneg %p65
      %p166 = pneg %p89
      %p167 = pneg %p86
      %p168 = pneg %p117
      %p169 = pneg %p114
      %s170 = smul.u32 8, %s19
      %p171 = scmp.lt.s32.totalorder %s18, 1
      %s172 = scalar_select %p171, %s18, 1
      %p173 = scmp.lt.s32.totalorder %s170, 23
      %s174 = scalar_select %p173, %s170, 23
      %s175 = smul.addr %s174, 3
      %s176 = smul.addr %s172, 72
      %s177 = sadd.s32 %s175, %s176
      %s178 = smul.addr %s177, 4
      %s179 = scalar_lea.vmem %s3, %s178
      %p180 = scmp.lt.s32.totalorder %s18, 1
      %s181 = scalar_select %p180, %s18, 1
      %s182 = smul.addr %s181, 104
      %s183 = smul.addr %s182, 4
      %s184 = scalar_lea.vmem %s0, %s183
      %s185 = smul.u32 8, %s19
      %p186 = scmp.lt.s32.totalorder %s18, 1
      %s187 = scalar_select %p186, %s18, 1
      %p188 = scmp.lt.s32.totalorder %s185, 23
      %s189 = scalar_select %p188, %s185, 23
      %s190 = smul.addr %s189, 3
      %s191 = smul.addr %s187, 72
      %s192 = sadd.s32 %s190, %s191
      %s193 = smul.addr %s192, 4
      %s194 = scalar_lea.vmem %s3, %s193
      %s195 = smul.u32 8, %s19
      %s197 = smul.u32 %s19, 8
      %s198 = smul.u32 %s197, 4
      %s199 = smul.addr %s198, 4
      %s200 = scalar_lea.vmem %s184, %s199
      %v201 = vld [vmem:[%s200] sm:$0xf]
      %v202 = vld [vmem:[%s200 + $0x4] sm:$0xf]
      %v203 = vld [vmem:[%s200 + $0x8] sm:$0xf]
      %v204 = vld [vmem:[%s200 + $0x10] sm:$0xf]
      %v205 = vld [vmem:[%s200 + $0x14] sm:$0xf]
      %v206 = vld [vmem:[%s200 + $0x18] sm:$0xf]
      %v207 = vld [vmem:[%s200 + $0x20] sm:$0xf]
      %v208 = vld [vmem:[%s200 + $0x24] sm:$0xf]
      %v209 = vld [vmem:[%s200 + $0x28] sm:$0xf]
      %v210 = vld [vmem:[%s200 + $0x30] sm:$0xf]
      %v211 = vld [vmem:[%s200 + $0x34] sm:$0xf]
      %v212 = vld [vmem:[%s200 + $0x38] sm:$0xf]
      %v213 = vld [vmem:[%s200 + $0x40] sm:$0xf]
      %v214 = vld [vmem:[%s200 + $0x44] sm:$0xf]
      %v215 = vld [vmem:[%s200 + $0x48] sm:$0xf]
      %v216 = vld [vmem:[%s200 + $0x50] sm:$0xf]
      %v217 = vld [vmem:[%s200 + $0x54] sm:$0xf]
      %v218 = vld [vmem:[%s200 + $0x58] sm:$0xf]
      %v219 = vld [vmem:[%s200 + $0x60] sm:$0xf]
      %v220 = vld [vmem:[%s200 + $0x64] sm:$0xf]
      %v221 = vld [vmem:[%s200 + $0x68] sm:$0xf]
      %v222 = vld [vmem:[%s200 + $0x70] sm:$0xf]
      %v223 = vld [vmem:[%s200 + $0x74] sm:$0xf]
      %v224 = vld [vmem:[%s200 + $0x78] sm:$0xf]
      %v225 = vld [vmem:[%s1] sm:$0x3]
      %v226 = vld [vmem:[%s200 + $0xc] sm:$0x1]
      %v227 = vld [vmem:[%s200 + $0x1c] sm:$0x1]
      %v228 = vld [vmem:[%s200 + $0x2c] sm:$0x1]
      %v229 = vld [vmem:[%s200 + $0x3c] sm:$0x1]
      %v230 = vld [vmem:[%s200 + $0x4c] sm:$0x1]
      %v231 = vld [vmem:[%s200 + $0x5c] sm:$0x1]
      %v232 = vld [vmem:[%s200 + $0x6c] sm:$0x1]
      %v233 = vld [vmem:[%s200 + $0x7c] sm:$0x1]
      %vm234 = vsmask.f32 3328
      %vm235 = vsmask.f32 7440
      %vm236 = vmor %vm234, %vm235
      %v238 = vshrl.u32 %v201, 16
      %v240 = vrot.slane %v238, 4
      %v241 = vshll.u32 %v201, 16
      %v243 = vrot.slane %v241, 5
      %v244 = vor.u32 %v240, %v243
      %v245 = vrot.slane %v244, 4
      %v247 = vshll.u32 %v202, 16
      %v249 = vrot.slane %v247, 5
      %v250 = vsel %vm236, %v245, %v249
      %v251 = vshrl.u32 %v202, 16
      %v253 = vrot.slane %v251, 4
      %v254 = vor.u32 %v253, %v249
      %v255 = vrot.slane %v254, 4
      %v257 = vshll.u32 %v203, 16
      %v259 = vrot.slane %v257, 5
      %v260 = vsel %vm236, %v255, %v259
      %v261 = vshrl.u32 %v203, 16
      %v263 = vrot.slane %v261, 4
      %v264 = vor.u32 %v263, %v259
      %v265 = vrot.slane %v264, 4
      %v267 = vshll.u32 %v226, 16
      %v269 = vrot.slane %v267, 5
      %v270 = vsel %vm236, %v265, %v269
      %v272 = vshrl.u32 %v204, 16
      %v274 = vrot.slane %v272, 4
      %v275 = vshll.u32 %v204, 16
      %v277 = vrot.slane %v275, 5
      %v278 = vor.u32 %v274, %v277
      %v279 = vrot.slane %v278, 4
      %v281 = vshll.u32 %v205, 16
      %v283 = vrot.slane %v281, 5
      %v284 = vsel %vm236, %v279, %v283
      %v285 = vshrl.u32 %v205, 16
      %v287 = vrot.slane %v285, 4
      %v288 = vor.u32 %v287, %v283
      %v289 = vrot.slane %v288, 4
      %v291 = vshll.u32 %v206, 16
      %v293 = vrot.slane %v291, 5
      %v294 = vsel %vm236, %v289, %v293
      %v295 = vshrl.u32 %v206, 16
      %v297 = vrot.slane %v295, 4
      %v298 = vor.u32 %v297, %v293
      %v299 = vrot.slane %v298, 4
      %v301 = vshll.u32 %v227, 16
      %v303 = vrot.slane %v301, 5
      %v304 = vsel %vm236, %v299, %v303
      %v306 = vshrl.u32 %v207, 16
      %v308 = vrot.slane %v306, 4
      %v309 = vshll.u32 %v207, 16
      %v311 = vrot.slane %v309, 5
      %v312 = vor.u32 %v308, %v311
      %v313 = vrot.slane %v312, 4
      %v315 = vshll.u32 %v208, 16
      %v317 = vrot.slane %v315, 5
      %v318 = vsel %vm236, %v313, %v317
      %v319 = vshrl.u32 %v208, 16
      %v321 = vrot.slane %v319, 4
      %v322 = vor.u32 %v321, %v317
      %v323 = vrot.slane %v322, 4
      %v325 = vshll.u32 %v209, 16
      %v327 = vrot.slane %v325, 5
      %v328 = vsel %vm236, %v323, %v327
      %v329 = vshrl.u32 %v209, 16
      %v331 = vrot.slane %v329, 4
      %v332 = vor.u32 %v331, %v327
      %v333 = vrot.slane %v332, 4
      %v335 = vshll.u32 %v228, 16
      %v337 = vrot.slane %v335, 5
      %v338 = vsel %vm236, %v333, %v337
      %v340 = vshrl.u32 %v210, 16
      %v342 = vrot.slane %v340, 4
      %v343 = vshll.u32 %v210, 16
      %v345 = vrot.slane %v343, 5
      %v346 = vor.u32 %v342, %v345
      %v347 = vrot.slane %v346, 4
      %v349 = vshll.u32 %v211, 16
      %v351 = vrot.slane %v349, 5
      %v352 = vsel %vm236, %v347, %v351
      %v353 = vshrl.u32 %v211, 16
      %v355 = vrot.slane %v353, 4
      %v356 = vor.u32 %v355, %v351
      %v357 = vrot.slane %v356, 4
      %v359 = vshll.u32 %v212, 16
      %v361 = vrot.slane %v359, 5
      %v362 = vsel %vm236, %v357, %v361
      %v363 = vshrl.u32 %v212, 16
      %v365 = vrot.slane %v363, 4
      %v366 = vor.u32 %v365, %v361
      %v367 = vrot.slane %v366, 4
      %v369 = vshll.u32 %v229, 16
      %v371 = vrot.slane %v369, 5
      %v372 = vsel %vm236, %v367, %v371
      %v374 = vshrl.u32 %v213, 16
      %v376 = vrot.slane %v374, 4
      %v377 = vshll.u32 %v213, 16
      %v379 = vrot.slane %v377, 5
      %v380 = vor.u32 %v376, %v379
      %v381 = vrot.slane %v380, 4
      %v383 = vshll.u32 %v214, 16
      %v385 = vrot.slane %v383, 5
      %v386 = vsel %vm236, %v381, %v385
      %v387 = vshrl.u32 %v214, 16
      %v389 = vrot.slane %v387, 4
      %v390 = vor.u32 %v389, %v385
      %v391 = vrot.slane %v390, 4
      %v393 = vshll.u32 %v215, 16
      %v395 = vrot.slane %v393, 5
      %v396 = vsel %vm236, %v391, %v395
      %v397 = vshrl.u32 %v215, 16
      %v399 = vrot.slane %v397, 4
      %v400 = vor.u32 %v399, %v395
      %v401 = vrot.slane %v400, 4
      %v403 = vshll.u32 %v230, 16
      %v405 = vrot.slane %v403, 5
      %v406 = vsel %vm236, %v401, %v405
      %v408 = vshrl.u32 %v216, 16
      %v410 = vrot.slane %v408, 4
      %v411 = vshll.u32 %v216, 16
      %v413 = vrot.slane %v411, 5
      %v414 = vor.u32 %v410, %v413
      %v415 = vrot.slane %v414, 4
      %v417 = vshll.u32 %v217, 16
      %v419 = vrot.slane %v417, 5
      %v420 = vsel %vm236, %v415, %v419
      %v421 = vshrl.u32 %v217, 16
      %v423 = vrot.slane %v421, 4
      %v424 = vor.u32 %v423, %v419
      %v425 = vrot.slane %v424, 4
      %v427 = vshll.u32 %v218, 16
      %v429 = vrot.slane %v427, 5
      %v430 = vsel %vm236, %v425, %v429
      %v431 = vshrl.u32 %v218, 16
      %v433 = vrot.slane %v431, 4
      %v434 = vor.u32 %v433, %v429
      %v435 = vrot.slane %v434, 4
      %v437 = vshll.u32 %v231, 16
      %v439 = vrot.slane %v437, 5
      %v440 = vsel %vm236, %v435, %v439
      %v442 = vshrl.u32 %v219, 16
      %v444 = vrot.slane %v442, 4
      %v445 = vshll.u32 %v219, 16
      %v447 = vrot.slane %v445, 5
      %v448 = vor.u32 %v444, %v447
      %v449 = vrot.slane %v448, 4
      %v451 = vshll.u32 %v220, 16
      %v453 = vrot.slane %v451, 5
      %v454 = vsel %vm236, %v449, %v453
      %v455 = vshrl.u32 %v220, 16
      %v457 = vrot.slane %v455, 4
      %v458 = vor.u32 %v457, %v453
      %v459 = vrot.slane %v458, 4
      %v461 = vshll.u32 %v221, 16
      %v463 = vrot.slane %v461, 5
      %v464 = vsel %vm236, %v459, %v463
      %v465 = vshrl.u32 %v221, 16
      %v467 = vrot.slane %v465, 4
      %v468 = vor.u32 %v467, %v463
      %v469 = vrot.slane %v468, 4
      %v471 = vshll.u32 %v232, 16
      %v473 = vrot.slane %v471, 5
      %v474 = vsel %vm236, %v469, %v473
      %v476 = vshrl.u32 %v222, 16
      %v478 = vrot.slane %v476, 4
      %v479 = vshll.u32 %v222, 16
      %v481 = vrot.slane %v479, 5
      %v482 = vor.u32 %v478, %v481
      %v483 = vrot.slane %v482, 4
      %v485 = vshll.u32 %v223, 16
      %v487 = vrot.slane %v485, 5
      %v488 = vsel %vm236, %v483, %v487
      %v489 = vshrl.u32 %v223, 16
      %v491 = vrot.slane %v489, 4
      %v492 = vor.u32 %v491, %v487
      %v493 = vrot.slane %v492, 4
      %v495 = vshll.u32 %v224, 16
      %v497 = vrot.slane %v495, 5
      %v498 = vsel %vm236, %v493, %v497
      %v499 = vshrl.u32 %v224, 16
      %v501 = vrot.slane %v499, 4
      %v502 = vor.u32 %v501, %v497
      %v503 = vrot.slane %v502, 4
      %v505 = vshll.u32 %v233, 16
      %v507 = vrot.slane %v505, 5
      %v508 = vsel %vm236, %v503, %v507
      %s509 = scalar_lea.vmem %s1, 2
      %v510 = vld [vmem:[%s509] sm:$0x3]
      %v511 = vunpack.c.l.b16 %v250
      %v512 = vunpack.c.l.b16 %v260
      %v513 = vunpack.c.l.b16 %v270
      %v514 = vunpack.c.l.b16 %v284
      %v515 = vunpack.c.l.b16 %v294
      %v516 = vunpack.c.l.b16 %v304
      %v517 = vunpack.c.l.b16 %v318
      %v518 = vunpack.c.l.b16 %v328
      %v519 = vunpack.c.l.b16 %v338
      %v520 = vunpack.c.l.b16 %v352
      %v521 = vunpack.c.l.b16 %v362
      %v522 = vunpack.c.l.b16 %v372
      %v523 = vunpack.c.l.b16 %v386
      %v524 = vunpack.c.l.b16 %v396
      %v525 = vunpack.c.l.b16 %v406
      %v526 = vunpack.c.l.b16 %v420
      %v527 = vunpack.c.l.b16 %v430
      %v528 = vunpack.c.l.b16 %v440
      %v529 = vunpack.c.l.b16 %v454
      %v530 = vunpack.c.l.b16 %v464
      %v531 = vunpack.c.l.b16 %v474
      %v532 = vunpack.c.l.b16 %v488
      %v533 = vunpack.c.l.b16 %v498
      %v534 = vunpack.c.l.b16 %v508
      %v535 = vpack.c.b16 %v512, %v511
      %v536 = vpack.c.b16 %v514, %v513
      %v537 = vpack.c.b16 %v516, %v515
      %v538 = vpack.c.b16 %v518, %v517
      %v539 = vpack.c.b16 %v520, %v519
      %v540 = vpack.c.b16 %v522, %v521
      %v541 = vpack.c.b16 %v524, %v523
      %v542 = vpack.c.b16 %v526, %v525
      %v543 = vpack.c.b16 %v528, %v527
      %v544 = vpack.c.b16 %v530, %v529
      %v545 = vpack.c.b16 %v532, %v531
      %v546 = vpack.c.b16 %v534, %v533
      %vm547 = vcmask 31744
      %v549 = vsel %vm547, %v535, 0
      %v552 = vsel %vm547, %v536, 0
      %v555 = vsel %vm547, %v537, 0
      %v558 = vsel %vm547, %v538, 0
      %v561 = vsel %vm547, %v539, 0
      %v564 = vsel %vm547, %v540, 0
      %v567 = vsel %vm547, %v541, 0
      %v570 = vsel %vm547, %v542, 0
      %v573 = vsel %vm547, %v543, 0
      %v576 = vsel %vm547, %v544, 0
      %v579 = vsel %vm547, %v545, 0
      %v582 = vsel %vm547, %v546, 0
      %vm584 = vcmask 1041408
      %v586 = vsel %vm584, %v510, 0
      %588 = vmatprep.subr.bf16.mxu0 0
      %589 = vmatpush1.bf16.msra.mxu0 %v586
      %590 = vmatprep.subr.bf16.mxu0 0
      %591 = vmatpush1.bf16.msra.mxu0 0
      %592 = vmatprep.subr.bf16.mxu0 0
      %593 = vmatpush1.bf16.msra.mxu0 0
      %594 = vmatprep.subr.bf16.mxu0 0
      %595 = vmatpush1.bf16.msra.mxu0 0
      %596 = vmatprep.subr.bf16.mxu0 0
      %597 = vmatpush1.bf16.msra.mxu0 0
      %598 = vmatprep.subr.bf16.mxu0 0
      %599 = vmatpush1.bf16.msra.mxu0 0
      %600 = vmatprep.subr.bf16.mxu0 0
      %601 = vmatpush1.bf16.msra.mxu0 0
      %602 = vmatprep.subr.bf16.mxu0 0
      %603 = vmatpush1.bf16.msra.mxu0 0
      %604 = vmatprep.subr.bf16.mxu0 0
      %605 = vmatpush1.bf16.msra.mxu0 0
      %606 = vmatprep.subr.bf16.mxu0 0
      %607 = vmatpush1.bf16.msra.mxu0 0
      %608 = vmatprep.subr.bf16.mxu0 0
      %609 = vmatpush1.bf16.msra.mxu0 0
      %610 = vmatprep.subr.bf16.mxu0 0
      %611 = vmatpush1.bf16.msra.mxu0 0
      %612 = vmatprep.subr.bf16.mxu0 0
      %613 = vmatpush1.bf16.msra.mxu0 0
      %614 = vmatprep.subr.bf16.mxu0 0
      %615 = vmatpush1.bf16.msra.mxu0 0
      %616 = vmatprep.subr.bf16.mxu0 0
      %617 = vmatpush1.bf16.msra.mxu0 0
      %618 = vmatprep.subr.bf16.mxu0 0
      %619 = vmatpush1.bf16.msra.mxu0 0
      %620 = vmatprep.mubr.bf16.mxu0 0
      %621 = vmatmul.mubr.bf16.gmra.mrb[0].mxu0 %v549
      %v622 = vpop.f32.mrb[0].mxu0
      %v623 = vadd.f32 0.0, %v622
      %v624 = vpop.f32.mrb[0].mxu0
      %v625 = vpop.f32.mrb[0].mxu0
      %v626 = vadd.f32 0.0, %v625
      %v627 = vpop.f32.mrb[0].mxu0
      %628 = vmatprep.mubr.bf16.mxu0 0
      %629 = vmatmul.mubr.bf16.gmra.mrb[0].mxu0 %v552
      %v630 = vpop.f32.mrb[0].mxu0
      %v631 = vadd.f32 0.0, %v630
      %v632 = vpop.f32.mrb[0].mxu0
      %v633 = vpop.f32.mrb[0].mxu0
      %v634 = vadd.f32 0.0, %v633
      %v635 = vpop.f32.mrb[0].mxu0
      %636 = vmatprep.mubr.bf16.mxu0 0
      %637 = vmatmul.mubr.bf16.gmra.mrb[0].mxu0 %v555
      %v638 = vpop.f32.mrb[0].mxu0
      %v639 = vadd.f32 0.0, %v638
      %v640 = vpop.f32.mrb[0].mxu0
      %v641 = vpop.f32.mrb[0].mxu0
      %v642 = vadd.f32 0.0, %v641
      %v643 = vpop.f32.mrb[0].mxu0
      %644 = vmatprep.mubr.bf16.mxu0 0
      %645 = vmatmul.mubr.bf16.gmra.mrb[0].mxu0 %v558
      %v646 = vpop.f32.mrb[0].mxu0
      %v647 = vadd.f32 0.0, %v646
      %v648 = vpop.f32.mrb[0].mxu0
      %v649 = vpop.f32.mrb[0].mxu0
      %v650 = vadd.f32 0.0, %v649
      %v651 = vpop.f32.mrb[0].mxu0
      %652 = vmatprep.mubr.bf16.mxu0 0
      %653 = vmatmul.mubr.bf16.gmra.mrb[0].mxu0 %v561
      %v654 = vpop.f32.mrb[0].mxu0
      %v655 = vadd.f32 0.0, %v654
      %v656 = vpop.f32.mrb[0].mxu0
      %v657 = vpop.f32.mrb[0].mxu0
      %v658 = vadd.f32 0.0, %v657
      %v659 = vpop.f32.mrb[0].mxu0
      %660 = vmatprep.mubr.bf16.mxu0 0
      %661 = vmatmul.mubr.bf16.gmra.mrb[0].mxu0 %v564
      %v662 = vpop.f32.mrb[0].mxu0
      %v663 = vadd.f32 0.0, %v662
      %v664 = vpop.f32.mrb[0].mxu0
      %v665 = vpop.f32.mrb[0].mxu0
      %v666 = vadd.f32 0.0, %v665
      %v667 = vpop.f32.mrb[0].mxu0
      %668 = vmatprep.mubr.bf16.mxu0 0
      %669 = vmatmul.mubr.bf16.gmra.mrb[0].mxu0 %v567
      %v670 = vpop.f32.mrb[0].mxu0
      %v671 = vadd.f32 0.0, %v670
      %v672 = vpop.f32.mrb[0].mxu0
      %v673 = vpop.f32.mrb[0].mxu0
      %v674 = vadd.f32 0.0, %v673
      %v675 = vpop.f32.mrb[0].mxu0
      %676 = vmatprep.mubr.bf16.mxu0 0
      %677 = vmatmul.mubr.bf16.gmra.mrb[0].mxu0 %v570
      %v678 = vpop.f32.mrb[0].mxu0
      %v679 = vadd.f32 0.0, %v678
      %v680 = vpop.f32.mrb[0].mxu0
      %v681 = vpop.f32.mrb[0].mxu0
      %v682 = vadd.f32 0.0, %v681
      %v683 = vpop.f32.mrb[0].mxu0
      %684 = vmatprep.mubr.bf16.mxu0 0
      %685 = vmatmul.mubr.bf16.gmra.mrb[0].mxu0 %v573
      %v686 = vpop.f32.mrb[0].mxu0
      %v687 = vadd.f32 0.0, %v686
      %v688 = vpop.f32.mrb[0].mxu0
      %v689 = vpop.f32.mrb[0].mxu0
      %v690 = vadd.f32 0.0, %v689
      %v691 = vpop.f32.mrb[0].mxu0
      %692 = vmatprep.mubr.bf16.mxu0 0
      %693 = vmatmul.mubr.bf16.gmra.mrb[0].mxu0 %v576
      %v694 = vpop.f32.mrb[0].mxu0
      %v695 = vadd.f32 0.0, %v694
      %v696 = vpop.f32.mrb[0].mxu0
      %v697 = vpop.f32.mrb[0].mxu0
      %v698 = vadd.f32 0.0, %v697
      %v699 = vpop.f32.mrb[0].mxu0
      %700 = vmatprep.mubr.bf16.mxu0 0
      %701 = vmatmul.mubr.bf16.gmra.mrb[0].mxu0 %v579
      %v702 = vpop.f32.mrb[0].mxu0
      %v703 = vadd.f32 0.0, %v702
      %v704 = vpop.f32.mrb[0].mxu0
      %v705 = vpop.f32.mrb[0].mxu0
      %v706 = vadd.f32 0.0, %v705
      %v707 = vpop.f32.mrb[0].mxu0
      %708 = vmatprep.mubr.bf16.mxu0 0
      %709 = vmatmul.mubr.bf16.gmra.mrb[0].mxu0 %v582
      %v710 = vpop.f32.mrb[0].mxu0
      %v711 = vadd.f32 0.0, %v710
      %v712 = vpop.f32.mrb[0].mxu0
      %v713 = vpop.f32.mrb[0].mxu0
      %v714 = vadd.f32 0.0, %v713
      %v715 = vpop.f32.mrb[0].mxu0
      %716 = vdwg.mxu0
      %v741 = vunpack.c.l.b16 %v201
      %v742 = vunpack.c.l.b16 %v202
      %v743 = vunpack.c.l.b16 %v203
      %v744 = vunpack.c.l.b16 %v204
      %v745 = vunpack.c.l.b16 %v205
      %v746 = vunpack.c.l.b16 %v206
      %v747 = vunpack.c.l.b16 %v207
      %v748 = vunpack.c.l.b16 %v208
      %v749 = vunpack.c.l.b16 %v209
      %v750 = vunpack.c.l.b16 %v210
      %v751 = vunpack.c.l.b16 %v211
      %v752 = vunpack.c.l.b16 %v212
      %v753 = vunpack.c.l.b16 %v213
      %v754 = vunpack.c.l.b16 %v214
      %v755 = vunpack.c.l.b16 %v215
      %v756 = vunpack.c.l.b16 %v216
      %v757 = vunpack.c.l.b16 %v217
      %v758 = vunpack.c.l.b16 %v218
      %v759 = vunpack.c.l.b16 %v219
      %v760 = vunpack.c.l.b16 %v220
      %v761 = vunpack.c.l.b16 %v221
      %v762 = vunpack.c.l.b16 %v222
      %v763 = vunpack.c.l.b16 %v223
      %v764 = vunpack.c.l.b16 %v224
      %v765 = vpack.c.b16 %v742, %v741
      %v766 = vpack.c.b16 %v744, %v743
      %v767 = vpack.c.b16 %v746, %v745
      %v768 = vpack.c.b16 %v748, %v747
      %v769 = vpack.c.b16 %v750, %v749
      %v770 = vpack.c.b16 %v752, %v751
      %v771 = vpack.c.b16 %v754, %v753
      %v772 = vpack.c.b16 %v756, %v755
      %v773 = vpack.c.b16 %v758, %v757
      %v774 = vpack.c.b16 %v760, %v759
      %v775 = vpack.c.b16 %v762, %v761
      %v776 = vpack.c.b16 %v764, %v763
      %v778 = vsel %vm547, %v765, 0
      %v781 = vsel %vm547, %v766, 0
      %v784 = vsel %vm547, %v767, 0
      %v787 = vsel %vm547, %v768, 0
      %v790 = vsel %vm547, %v769, 0
      %v793 = vsel %vm547, %v770, 0
      %v796 = vsel %vm547, %v771, 0
      %v799 = vsel %vm547, %v772, 0
      %v802 = vsel %vm547, %v773, 0
      %v805 = vsel %vm547, %v774, 0
      %v808 = vsel %vm547, %v775, 0
      %v811 = vsel %vm547, %v776, 0
      %v814 = vsel %vm584, %v225, 0
      %816 = vmatprep.subr.bf16.mxu0 0
      %817 = vmatpush1.bf16.msra.mxu0 %v814
      %818 = vmatprep.subr.bf16.mxu0 0
      %819 = vmatpush1.bf16.msra.mxu0 0
      %820 = vmatprep.subr.bf16.mxu0 0
      %821 = vmatpush1.bf16.msra.mxu0 0
      %822 = vmatprep.subr.bf16.mxu0 0
      %823 = vmatpush1.bf16.msra.mxu0 0
      %824 = vmatprep.subr.bf16.mxu0 0
      %825 = vmatpush1.bf16.msra.mxu0 0
      %826 = vmatprep.subr.bf16.mxu0 0
      %827 = vmatpush1.bf16.msra.mxu0 0
      %828 = vmatprep.subr.bf16.mxu0 0
      %829 = vmatpush1.bf16.msra.mxu0 0
      %830 = vmatprep.subr.bf16.mxu0 0
      %831 = vmatpush1.bf16.msra.mxu0 0
      %832 = vmatprep.subr.bf16.mxu0 0
      %833 = vmatpush1.bf16.msra.mxu0 0
      %834 = vmatprep.subr.bf16.mxu0 0
      %835 = vmatpush1.bf16.msra.mxu0 0
      %836 = vmatprep.subr.bf16.mxu0 0
      %837 = vmatpush1.bf16.msra.mxu0 0
      %838 = vmatprep.subr.bf16.mxu0 0
      %839 = vmatpush1.bf16.msra.mxu0 0
      %840 = vmatprep.subr.bf16.mxu0 0
      %841 = vmatpush1.bf16.msra.mxu0 0
      %842 = vmatprep.subr.bf16.mxu0 0
      %843 = vmatpush1.bf16.msra.mxu0 0
      %844 = vmatprep.subr.bf16.mxu0 0
      %845 = vmatpush1.bf16.msra.mxu0 0
      %846 = vmatprep.subr.bf16.mxu0 0
      %847 = vmatpush1.bf16.msra.mxu0 0
      %848 = vmatprep.mubr.bf16.mxu0 0
      %849 = vmatmul.mubr.bf16.gmra.mrb[0].mxu0 %v778
      %v850 = vpop.f32.mrb[0].mxu0
      %v851 = vadd.f32 %v623, %v850
      %v852 = vpop.f32.mrb[0].mxu0
      %v853 = vpop.f32.mrb[0].mxu0
      %v854 = vadd.f32 %v626, %v853
      %v855 = vpop.f32.mrb[0].mxu0
      %856 = vmatprep.mubr.bf16.mxu0 0
      %857 = vmatmul.mubr.bf16.gmra.mrb[0].mxu0 %v781
      %v858 = vpop.f32.mrb[0].mxu0
      %v859 = vadd.f32 %v631, %v858
      %v860 = vpop.f32.mrb[0].mxu0
      %v861 = vpop.f32.mrb[0].mxu0
      %v862 = vadd.f32 %v634, %v861
      %v863 = vpop.f32.mrb[0].mxu0
      %864 = vmatprep.mubr.bf16.mxu0 0
      %865 = vmatmul.mubr.bf16.gmra.mrb[0].mxu0 %v784
      %v866 = vpop.f32.mrb[0].mxu0
      %v867 = vadd.f32 %v639, %v866
      %v868 = vpop.f32.mrb[0].mxu0
      %v869 = vpop.f32.mrb[0].mxu0
      %v870 = vadd.f32 %v642, %v869
      %v871 = vpop.f32.mrb[0].mxu0
      %872 = vmatprep.mubr.bf16.mxu0 0
      %873 = vmatmul.mubr.bf16.gmra.mrb[0].mxu0 %v787
      %v874 = vpop.f32.mrb[0].mxu0
      %v875 = vadd.f32 %v647, %v874
      %v876 = vpop.f32.mrb[0].mxu0
      %v877 = vpop.f32.mrb[0].mxu0
      %v878 = vadd.f32 %v650, %v877
      %v879 = vpop.f32.mrb[0].mxu0
      %880 = vmatprep.mubr.bf16.mxu0 0
      %881 = vmatmul.mubr.bf16.gmra.mrb[0].mxu0 %v790
      %v882 = vpop.f32.mrb[0].mxu0
      %v883 = vadd.f32 %v655, %v882
      %v884 = vpop.f32.mrb[0].mxu0
      %v885 = vpop.f32.mrb[0].mxu0
      %v886 = vadd.f32 %v658, %v885
      %v887 = vpop.f32.mrb[0].mxu0
      %888 = vmatprep.mubr.bf16.mxu0 0
      %889 = vmatmul.mubr.bf16.gmra.mrb[0].mxu0 %v793
      %v890 = vpop.f32.mrb[0].mxu0
      %v891 = vadd.f32 %v663, %v890
      %v892 = vpop.f32.mrb[0].mxu0
      %v893 = vpop.f32.mrb[0].mxu0
      %v894 = vadd.f32 %v666, %v893
      %v895 = vpop.f32.mrb[0].mxu0
      %896 = vmatprep.mubr.bf16.mxu0 0
      %897 = vmatmul.mubr.bf16.gmra.mrb[0].mxu0 %v796
      %v898 = vpop.f32.mrb[0].mxu0
      %v899 = vadd.f32 %v671, %v898
      %v900 = vpop.f32.mrb[0].mxu0
      %v901 = vpop.f32.mrb[0].mxu0
      %v902 = vadd.f32 %v674, %v901
      %v903 = vpop.f32.mrb[0].mxu0
      %904 = vmatprep.mubr.bf16.mxu0 0
      %905 = vmatmul.mubr.bf16.gmra.mrb[0].mxu0 %v799
      %v906 = vpop.f32.mrb[0].mxu0
      %v907 = vadd.f32 %v679, %v906
      %v908 = vpop.f32.mrb[0].mxu0
      %v909 = vpop.f32.mrb[0].mxu0
      %v910 = vadd.f32 %v682, %v909
      %v911 = vpop.f32.mrb[0].mxu0
      %912 = vmatprep.mubr.bf16.mxu0 0
      %913 = vmatmul.mubr.bf16.gmra.mrb[0].mxu0 %v802
      %v914 = vpop.f32.mrb[0].mxu0
      %v915 = vadd.f32 %v687, %v914
      %v916 = vpop.f32.mrb[0].mxu0
      %v917 = vpop.f32.mrb[0].mxu0
      %v918 = vadd.f32 %v690, %v917
      %v919 = vpop.f32.mrb[0].mxu0
      %920 = vmatprep.mubr.bf16.mxu0 0
      %921 = vmatmul.mubr.bf16.gmra.mrb[0].mxu0 %v805
      %v922 = vpop.f32.mrb[0].mxu0
      %v923 = vadd.f32 %v695, %v922
      %v924 = vpop.f32.mrb[0].mxu0
      %v925 = vpop.f32.mrb[0].mxu0
      %v926 = vadd.f32 %v698, %v925
      %v927 = vpop.f32.mrb[0].mxu0
      %928 = vmatprep.mubr.bf16.mxu0 0
      %929 = vmatmul.mubr.bf16.gmra.mrb[0].mxu0 %v808
      %v930 = vpop.f32.mrb[0].mxu0
      %v931 = vadd.f32 %v703, %v930
      %v932 = vpop.f32.mrb[0].mxu0
      %v933 = vpop.f32.mrb[0].mxu0
      %v934 = vadd.f32 %v706, %v933
      %v935 = vpop.f32.mrb[0].mxu0
      %936 = vmatprep.mubr.bf16.mxu0 0
      %937 = vmatmul.mubr.bf16.gmra.mrb[0].mxu0 %v811
      %v938 = vpop.f32.mrb[0].mxu0
      %v939 = vadd.f32 %v711, %v938
      %v940 = vpop.f32.mrb[0].mxu0
      %v941 = vpop.f32.mrb[0].mxu0
      %v942 = vadd.f32 %v714, %v941
      %v943 = vpop.f32.mrb[0].mxu0
      %944 = vdwg.mxu0
      %v945 = vld [vmem:[%s200] sm:$0xe]
      %v946 = vld [vmem:[%s200 + $0x10] sm:$0xe]
      %v947 = vld [vmem:[%s200 + $0x20] sm:$0xe]
      %v948 = vld [vmem:[%s200 + $0x30] sm:$0xe]
      %v949 = vld [vmem:[%s200 + $0x40] sm:$0xe]
      %v950 = vld [vmem:[%s200 + $0x50] sm:$0xe]
      %v951 = vld [vmem:[%s200 + $0x60] sm:$0xe]
      %v952 = vld [vmem:[%s200 + $0x70] sm:$0xe]
      %vm969 = vcmask 1042432
      %vm970 = vcmask 1046532
      %vm971 = vmor %vm969, %vm970
      %v972 = vrot.slane %v945, 5
      %v973 = vrot.slane %v972, 4
      %v974 = vrot.slane %v202, 5
      %v975 = vsel %vm971, %v973, %v974
      %v976 = vrot.slane %v974, 4
      %v977 = vrot.slane %v203, 5
      %v978 = vsel %vm971, %v976, %v977
      %v979 = vrot.slane %v977, 4
      %v980 = vrot.slane %v226, 5
      %v981 = vsel %vm971, %v979, %v980
      %v982 = vrot.slane %v946, 5
      %v983 = vrot.slane %v982, 4
      %v984 = vrot.slane %v205, 5
      %v985 = vsel %vm971, %v983, %v984
      %v986 = vrot.slane %v984, 4
      %v987 = vrot.slane %v206, 5
      %v988 = vsel %vm971, %v986, %v987
      %v989 = vrot.slane %v987, 4
      %v990 = vrot.slane %v227, 5
      %v991 = vsel %vm971, %v989, %v990
      %v992 = vrot.slane %v947, 5
      %v993 = vrot.slane %v992, 4
      %v994 = vrot.slane %v208, 5
      %v995 = vsel %vm971, %v993, %v994
      %v996 = vrot.slane %v994, 4
      %v997 = vrot.slane %v209, 5
      %v998 = vsel %vm971, %v996, %v997
      %v999 = vrot.slane %v997, 4
      %v1000 = vrot.slane %v228, 5
      %v1001 = vsel %vm971, %v999, %v1000
      %v1002 = vrot.slane %v948, 5
      %v1003 = vrot.slane %v1002, 4
      %v1004 = vrot.slane %v211, 5
      %v1005 = vsel %vm971, %v1003, %v1004
      %v1006 = vrot.slane %v1004, 4
      %v1007 = vrot.slane %v212, 5
      %v1008 = vsel %vm971, %v1006, %v1007
      %v1009 = vrot.slane %v1007, 4
      %v1010 = vrot.slane %v229, 5
      %v1011 = vsel %vm971, %v1009, %v1010
      %v1012 = vrot.slane %v949, 5
      %v1013 = vrot.slane %v1012, 4
      %v1014 = vrot.slane %v214, 5
      %v1015 = vsel %vm971, %v1013, %v1014
      %v1016 = vrot.slane %v1014, 4
      %v1017 = vrot.slane %v215, 5
      %v1018 = vsel %vm971, %v1016, %v1017
      %v1019 = vrot.slane %v1017, 4
      %v1020 = vrot.slane %v230, 5
      %v1021 = vsel %vm971, %v1019, %v1020
      %v1022 = vrot.slane %v950, 5
      %v1023 = vrot.slane %v1022, 4
      %v1024 = vrot.slane %v217, 5
      %v1025 = vsel %vm971, %v1023, %v1024
      %v1026 = vrot.slane %v1024, 4
      %v1027 = vrot.slane %v218, 5
      %v1028 = vsel %vm971, %v1026, %v1027
      %v1029 = vrot.slane %v1027, 4
      %v1030 = vrot.slane %v231, 5
      %v1031 = vsel %vm971, %v1029, %v1030
      %v1032 = vrot.slane %v951, 5
      %v1033 = vrot.slane %v1032, 4
      %v1034 = vrot.slane %v220, 5
      %v1035 = vsel %vm971, %v1033, %v1034
      %v1036 = vrot.slane %v1034, 4
      %v1037 = vrot.slane %v221, 5
      %v1038 = vsel %vm971, %v1036, %v1037
      %v1039 = vrot.slane %v1037, 4
      %v1040 = vrot.slane %v232, 5
      %v1041 = vsel %vm971, %v1039, %v1040
      %v1042 = vrot.slane %v952, 5
      %v1043 = vrot.slane %v1042, 4
      %v1044 = vrot.slane %v223, 5
      %v1045 = vsel %vm971, %v1043, %v1044
      %v1046 = vrot.slane %v1044, 4
      %v1047 = vrot.slane %v224, 5
      %v1048 = vsel %vm971, %v1046, %v1047
      %v1049 = vrot.slane %v1047, 4
      %v1050 = vrot.slane %v233, 5
      %v1051 = vsel %vm971, %v1049, %v1050
      %s1052 = scalar_lea.vmem %s1, 4
      %v1053 = vld [vmem:[%s1052] sm:$0x3]
      %v1054 = vunpack.c.l.b16 %v975
      %v1055 = vunpack.c.l.b16 %v978
      %v1056 = vunpack.c.l.b16 %v981
      %v1057 = vunpack.c.l.b16 %v985
      %v1058 = vunpack.c.l.b16 %v988
      %v1059 = vunpack.c.l.b16 %v991
      %v1060 = vunpack.c.l.b16 %v995
      %v1061 = vunpack.c.l.b16 %v998
      %v1062 = vunpack.c.l.b16 %v1001
      %v1063 = vunpack.c.l.b16 %v1005
      %v1064 = vunpack.c.l.b16 %v1008
      %v1065 = vunpack.c.l.b16 %v1011
      %v1066 = vunpack.c.l.b16 %v1015
      %v1067 = vunpack.c.l.b16 %v1018
      %v1068 = vunpack.c.l.b16 %v1021
      %v1069 = vunpack.c.l.b16 %v1025
      %v1070 = vunpack.c.l.b16 %v1028
      %v1071 = vunpack.c.l.b16 %v1031
      %v1072 = vunpack.c.l.b16 %v1035
      %v1073 = vunpack.c.l.b16 %v1038
      %v1074 = vunpack.c.l.b16 %v1041
      %v1075 = vunpack.c.l.b16 %v1045
      %v1076 = vunpack.c.l.b16 %v1048
      %v1077 = vunpack.c.l.b16 %v1051
      %v1078 = vpack.c.b16 %v1055, %v1054
      %v1079 = vpack.c.b16 %v1057, %v1056
      %v1080 = vpack.c.b16 %v1059, %v1058
      %v1081 = vpack.c.b16 %v1061, %v1060
      %v1082 = vpack.c.b16 %v1063, %v1062
      %v1083 = vpack.c.b16 %v1065, %v1064
      %v1084 = vpack.c.b16 %v1067, %v1066
      %v1085 = vpack.c.b16 %v1069, %v1068
      %v1086 = vpack.c.b16 %v1071, %v1070
      %v1087 = vpack.c.b16 %v1073, %v1072
      %v1088 = vpack.c.b16 %v1075, %v1074
      %v1089 = vpack.c.b16 %v1077, %v1076
      %v1091 = vsel %vm547, %v1078, 0
      %v1094 = vsel %vm547, %v1079, 0
      %v1097 = vsel %vm547, %v1080, 0
      %v1100 = vsel %vm547, %v1081, 0
      %v1103 = vsel %vm547, %v1082, 0
      %v1106 = vsel %vm547, %v1083, 0
      %v1109 = vsel %vm547, %v1084, 0
      %v1112 = vsel %vm547, %v1085, 0
      %v1115 = vsel %vm547, %v1086, 0
      %v1118 = vsel %vm547, %v1087, 0
      %v1121 = vsel %vm547, %v1088, 0
      %v1124 = vsel %vm547, %v1089, 0
      %v1127 = vsel %vm584, %v1053, 0
      %1129 = vmatprep.subr.bf16.mxu0 0
      %1130 = vmatpush1.bf16.msra.mxu0 %v1127
      %1131 = vmatprep.subr.bf16.mxu0 0
      %1132 = vmatpush1.bf16.msra.mxu0 0
      %1133 = vmatprep.subr.bf16.mxu0 0
      %1134 = vmatpush1.bf16.msra.mxu0 0
      %1135 = vmatprep.subr.bf16.mxu0 0
      %1136 = vmatpush1.bf16.msra.mxu0 0
      %1137 = vmatprep.subr.bf16.mxu0 0
      %1138 = vmatpush1.bf16.msra.mxu0 0
      %1139 = vmatprep.subr.bf16.mxu0 0
      %1140 = vmatpush1.bf16.msra.mxu0 0
      %1141 = vmatprep.subr.bf16.mxu0 0
      %1142 = vmatpush1.bf16.msra.mxu0 0
      %1143 = vmatprep.subr.bf16.mxu0 0
      %1144 = vmatpush1.bf16.msra.mxu0 0
      %1145 = vmatprep.subr.bf16.mxu0 0
      %1146 = vmatpush1.bf16.msra.mxu0 0
      %1147 = vmatprep.subr.bf16.mxu0 0
      %1148 = vmatpush1.bf16.msra.mxu0 0
      %1149 = vmatprep.subr.bf16.mxu0 0
      %1150 = vmatpush1.bf16.msra.mxu0 0
      %1151 = vmatprep.subr.bf16.mxu0 0
      %1152 = vmatpush1.bf16.msra.mxu0 0
      %1153 = vmatprep.subr.bf16.mxu0 0
      %1154 = vmatpush1.bf16.msra.mxu0 0
      %1155 = vmatprep.subr.bf16.mxu0 0
      %1156 = vmatpush1.bf16.msra.mxu0 0
      %1157 = vmatprep.subr.bf16.mxu0 0
      %1158 = vmatpush1.bf16.msra.mxu0 0
      %1159 = vmatprep.subr.bf16.mxu0 0
      %1160 = vmatpush1.bf16.msra.mxu0 0
      %1161 = vmatprep.mubr.bf16.mxu0 0
      %1162 = vmatmul.mubr.bf16.gmra.mrb[0].mxu0 %v1091
      %v1163 = vpop.f32.mrb[0].mxu0
      %v1164 = vadd.f32 0.0, %v1163
      %v1165 = vpop.f32.mrb[0].mxu0
      %v1166 = vpop.f32.mrb[0].mxu0
      %v1167 = vadd.f32 0.0, %v1166
      %v1168 = vpop.f32.mrb[0].mxu0
      %1169 = vmatprep.mubr.bf16.mxu0 0
      %1170 = vmatmul.mubr.bf16.gmra.mrb[0].mxu0 %v1094
      %v1171 = vpop.f32.mrb[0].mxu0
      %v1172 = vadd.f32 0.0, %v1171
      %v1173 = vpop.f32.mrb[0].mxu0
      %v1174 = vpop.f32.mrb[0].mxu0
      %v1175 = vadd.f32 0.0, %v1174
      %v1176 = vpop.f32.mrb[0].mxu0
      %1177 = vmatprep.mubr.bf16.mxu0 0
      %1178 = vmatmul.mubr.bf16.gmra.mrb[0].mxu0 %v1097
      %v1179 = vpop.f32.mrb[0].mxu0
      %v1180 = vadd.f32 0.0, %v1179
      %v1181 = vpop.f32.mrb[0].mxu0
      %v1182 = vpop.f32.mrb[0].mxu0
      %v1183 = vadd.f32 0.0, %v1182
      %v1184 = vpop.f32.mrb[0].mxu0
      %1185 = vmatprep.mubr.bf16.mxu0 0
      %1186 = vmatmul.mubr.bf16.gmra.mrb[0].mxu0 %v1100
      %v1187 = vpop.f32.mrb[0].mxu0
      %v1188 = vadd.f32 0.0, %v1187
      %v1189 = vpop.f32.mrb[0].mxu0
      %v1190 = vpop.f32.mrb[0].mxu0
      %v1191 = vadd.f32 0.0, %v1190
      %v1192 = vpop.f32.mrb[0].mxu0
      %1193 = vmatprep.mubr.bf16.mxu0 0
      %1194 = vmatmul.mubr.bf16.gmra.mrb[0].mxu0 %v1103
      %v1195 = vpop.f32.mrb[0].mxu0
      %v1196 = vadd.f32 0.0, %v1195
      %v1197 = vpop.f32.mrb[0].mxu0
      %v1198 = vpop.f32.mrb[0].mxu0
      %v1199 = vadd.f32 0.0, %v1198
      %v1200 = vpop.f32.mrb[0].mxu0
      %1201 = vmatprep.mubr.bf16.mxu0 0
      %1202 = vmatmul.mubr.bf16.gmra.mrb[0].mxu0 %v1106
      %v1203 = vpop.f32.mrb[0].mxu0
      %v1204 = vadd.f32 0.0, %v1203
      %v1205 = vpop.f32.mrb[0].mxu0
      %v1206 = vpop.f32.mrb[0].mxu0
      %v1207 = vadd.f32 0.0, %v1206
      %v1208 = vpop.f32.mrb[0].mxu0
      %1209 = vmatprep.mubr.bf16.mxu0 0
      %1210 = vmatmul.mubr.bf16.gmra.mrb[0].mxu0 %v1109
      %v1211 = vpop.f32.mrb[0].mxu0
      %v1212 = vadd.f32 0.0, %v1211
      %v1213 = vpop.f32.mrb[0].mxu0
      %v1214 = vpop.f32.mrb[0].mxu0
      %v1215 = vadd.f32 0.0, %v1214
      %v1216 = vpop.f32.mrb[0].mxu0
      %1217 = vmatprep.mubr.bf16.mxu0 0
      %1218 = vmatmul.mubr.bf16.gmra.mrb[0].mxu0 %v1112
      %v1219 = vpop.f32.mrb[0].mxu0
      %v1220 = vadd.f32 0.0, %v1219
      %v1221 = vpop.f32.mrb[0].mxu0
      %v1222 = vpop.f32.mrb[0].mxu0
      %v1223 = vadd.f32 0.0, %v1222
      %v1224 = vpop.f32.mrb[0].mxu0
      %1225 = vmatprep.mubr.bf16.mxu0 0
      %1226 = vmatmul.mubr.bf16.gmra.mrb[0].mxu0 %v1115
      %v1227 = vpop.f32.mrb[0].mxu0
      %v1228 = vadd.f32 0.0, %v1227
      %v1229 = vpop.f32.mrb[0].mxu0
      %v1230 = vpop.f32.mrb[0].mxu0
      %v1231 = vadd.f32 0.0, %v1230
      %v1232 = vpop.f32.mrb[0].mxu0
      %1233 = vmatprep.mubr.bf16.mxu0 0
      %1234 = vmatmul.mubr.bf16.gmra.mrb[0].mxu0 %v1118
      %v1235 = vpop.f32.mrb[0].mxu0
      %v1236 = vadd.f32 0.0, %v1235
      %v1237 = vpop.f32.mrb[0].mxu0
      %v1238 = vpop.f32.mrb[0].mxu0
      %v1239 = vadd.f32 0.0, %v1238
      %v1240 = vpop.f32.mrb[0].mxu0
      %1241 = vmatprep.mubr.bf16.mxu0 0
      %1242 = vmatmul.mubr.bf16.gmra.mrb[0].mxu0 %v1121
      %v1243 = vpop.f32.mrb[0].mxu0
      %v1244 = vadd.f32 0.0, %v1243
      %v1245 = vpop.f32.mrb[0].mxu0
      %v1246 = vpop.f32.mrb[0].mxu0
      %v1247 = vadd.f32 0.0, %v1246
      %v1248 = vpop.f32.mrb[0].mxu0
      %1249 = vmatprep.mubr.bf16.mxu0 0
      %1250 = vmatmul.mubr.bf16.gmra.mrb[0].mxu0 %v1124
      %v1251 = vpop.f32.mrb[0].mxu0
      %v1252 = vadd.f32 0.0, %v1251
      %v1253 = vpop.f32.mrb[0].mxu0
      %v1254 = vpop.f32.mrb[0].mxu0
      %v1255 = vadd.f32 0.0, %v1254
      %v1256 = vpop.f32.mrb[0].mxu0
      %1257 = vdwg.mxu0
      %v1258 = vadd.f32 %v851, %v1164
      %v1259 = vadd.f32 %v854, %v1167
      %v1260 = vadd.f32 %v859, %v1172
      %v1261 = vadd.f32 %v862, %v1175
      %v1262 = vadd.f32 %v867, %v1180
      %v1263 = vadd.f32 %v870, %v1183
      %v1264 = vadd.f32 %v875, %v1188
      %v1265 = vadd.f32 %v878, %v1191
      %v1266 = vadd.f32 %v883, %v1196
      %v1267 = vadd.f32 %v886, %v1199
      %v1268 = vadd.f32 %v891, %v1204
      %v1269 = vadd.f32 %v894, %v1207
      %v1270 = vadd.f32 %v899, %v1212
      %v1271 = vadd.f32 %v902, %v1215
      %v1272 = vadd.f32 %v907, %v1220
      %v1273 = vadd.f32 %v910, %v1223
      %v1274 = vadd.f32 %v915, %v1228
      %v1275 = vadd.f32 %v918, %v1231
      %v1276 = vadd.f32 %v923, %v1236
      %v1277 = vadd.f32 %v926, %v1239
      %v1278 = vadd.f32 %v931, %v1244
      %v1279 = vadd.f32 %v934, %v1247
      %v1280 = vadd.f32 %v939, %v1252
      %v1281 = vadd.f32 %v942, %v1255
      %s1282 = sadd.s32 %s197, 1
      %s1283 = smul.u32 %s1282, 4
      %s1284 = smul.addr %s1283, 4
      %s1285 = scalar_lea.vmem %s184, %s1284
      %v1286 = vld [vmem:[%s1285] sm:$0xf]
      %v1287 = vld [vmem:[%s1285 + $0x4] sm:$0xf]
      %v1288 = vld [vmem:[%s1285 + $0x8] sm:$0xf]
      %v1289 = vld [vmem:[%s1285 + $0x10] sm:$0xf]
      %v1290 = vld [vmem:[%s1285 + $0x14] sm:$0xf]
      %v1291 = vld [vmem:[%s1285 + $0x18] sm:$0xf]
      %v1292 = vld [vmem:[%s1285 + $0x20] sm:$0xf]
      %v1293 = vld [vmem:[%s1285 + $0x24] sm:$0xf]
      %v1294 = vld [vmem:[%s1285 + $0x28] sm:$0xf]
      %v1295 = vld [vmem:[%s1285 + $0x30] sm:$0xf]
      %v1296 = vld [vmem:[%s1285 + $0x34] sm:$0xf]
      %v1297 = vld [vmem:[%s1285 + $0x38] sm:$0xf]
      %v1298 = vld [vmem:[%s1285 + $0x40] sm:$0xf]
      %v1299 = vld [vmem:[%s1285 + $0x44] sm:$0xf]
      %v1300 = vld [vmem:[%s1285 + $0x48] sm:$0xf]
      %v1301 = vld [vmem:[%s1285 + $0x50] sm:$0xf]
      %v1302 = vld [vmem:[%s1285 + $0x54] sm:$0xf]
      %v1303 = vld [vmem:[%s1285 + $0x58] sm:$0xf]
      %v1304 = vld [vmem:[%s1285 + $0x60] sm:$0xf]
      %v1305 = vld [vmem:[%s1285 + $0x64] sm:$0xf]
      %v1306 = vld [vmem:[%s1285 + $0x68] sm:$0xf]
      %v1307 = vld [vmem:[%s1285 + $0x70] sm:$0xf]
      %v1308 = vld [vmem:[%s1285 + $0x74] sm:$0xf]
      %v1309 = vld [vmem:[%s1285 + $0x78] sm:$0xf]
      %s1310 = scalar_lea.vmem %s1, 6
      %v1311 = vld [vmem:[%s1310] sm:$0x3]
      %v1336 = vunpack.c.l.b16 %v1286
      %v1337 = vunpack.c.l.b16 %v1287
      %v1338 = vunpack.c.l.b16 %v1288
      %v1339 = vunpack.c.l.b16 %v1289
      %v1340 = vunpack.c.l.b16 %v1290
      %v1341 = vunpack.c.l.b16 %v1291
      %v1342 = vunpack.c.l.b16 %v1292
      %v1343 = vunpack.c.l.b16 %v1293
      %v1344 = vunpack.c.l.b16 %v1294
      %v1345 = vunpack.c.l.b16 %v1295
      %v1346 = vunpack.c.l.b16 %v1296
      %v1347 = vunpack.c.l.b16 %v1297
      %v1348 = vunpack.c.l.b16 %v1298
      %v1349 = vunpack.c.l.b16 %v1299
      %v1350 = vunpack.c.l.b16 %v1300
      %v1351 = vunpack.c.l.b16 %v1301
      %v1352 = vunpack.c.l.b16 %v1302
      %v1353 = vunpack.c.l.b16 %v1303
      %v1354 = vunpack.c.l.b16 %v1304
      %v1355 = vunpack.c.l.b16 %v1305
      %v1356 = vunpack.c.l.b16 %v1306
      %v1357 = vunpack.c.l.b16 %v1307
      %v1358 = vunpack.c.l.b16 %v1308
      %v1359 = vunpack.c.l.b16 %v1309
      %v1360 = vpack.c.b16 %v1337, %v1336
      %v1361 = vpack.c.b16 %v1339, %v1338
      %v1362 = vpack.c.b16 %v1341, %v1340
      %v1363 = vpack.c.b16 %v1343, %v1342
      %v1364 = vpack.c.b16 %v1345, %v1344
      %v1365 = vpack.c.b16 %v1347, %v1346
      %v1366 = vpack.c.b16 %v1349, %v1348
      %v1367 = vpack.c.b16 %v1351, %v1350
      %v1368 = vpack.c.b16 %v1353, %v1352
      %v1369 = vpack.c.b16 %v1355, %v1354
      %v1370 = vpack.c.b16 %v1357, %v1356
      %v1371 = vpack.c.b16 %v1359, %v1358
      %v1373 = vsel %vm547, %v1360, 0
      %v1376 = vsel %vm547, %v1361, 0
      %v1379 = vsel %vm547, %v1362, 0
      %v1382 = vsel %vm547, %v1363, 0
      %v1385 = vsel %vm547, %v1364, 0
      %v1388 = vsel %vm547, %v1365, 0
      %v1391 = vsel %vm547, %v1366, 0
      %v1394 = vsel %vm547, %v1367, 0
      %v1397 = vsel %vm547, %v1368, 0
      %v1400 = vsel %vm547, %v1369, 0
      %v1403 = vsel %vm547, %v1370, 0
      %v1406 = vsel %vm547, %v1371, 0
      %v1409 = vsel %vm584, %v1311, 0
      %1411 = vmatprep.subr.bf16.mxu0 0
      %1412 = vmatpush1.bf16.msra.mxu0 %v1409
      %1413 = vmatprep.subr.bf16.mxu0 0
      %1414 = vmatpush1.bf16.msra.mxu0 0
      %1415 = vmatprep.subr.bf16.mxu0 0
      %1416 = vmatpush1.bf16.msra.mxu0 0
      %1417 = vmatprep.subr.bf16.mxu0 0
      %1418 = vmatpush1.bf16.msra.mxu0 0
      %1419 = vmatprep.subr.bf16.mxu0 0
      %1420 = vmatpush1.bf16.msra.mxu0 0
      %1421 = vmatprep.subr.bf16.mxu0 0
      %1422 = vmatpush1.bf16.msra.mxu0 0
      %1423 = vmatprep.subr.bf16.mxu0 0
      %1424 = vmatpush1.bf16.msra.mxu0 0
      %1425 = vmatprep.subr.bf16.mxu0 0
      %1426 = vmatpush1.bf16.msra.mxu0 0
      %1427 = vmatprep.subr.bf16.mxu0 0
      %1428 = vmatpush1.bf16.msra.mxu0 0
      %1429 = vmatprep.subr.bf16.mxu0 0
      %1430 = vmatpush1.bf16.msra.mxu0 0
      %1431 = vmatprep.subr.bf16.mxu0 0
      %1432 = vmatpush1.bf16.msra.mxu0 0
      %1433 = vmatprep.subr.bf16.mxu0 0
      %1434 = vmatpush1.bf16.msra.mxu0 0
      %1435 = vmatprep.subr.bf16.mxu0 0
      %1436 = vmatpush1.bf16.msra.mxu0 0
      %1437 = vmatprep.subr.bf16.mxu0 0
      %1438 = vmatpush1.bf16.msra.mxu0 0
      %1439 = vmatprep.subr.bf16.mxu0 0
      %1440 = vmatpush1.bf16.msra.mxu0 0
      %1441 = vmatprep.subr.bf16.mxu0 0
      %1442 = vmatpush1.bf16.msra.mxu0 0
      %1443 = vmatprep.mubr.bf16.mxu0 0
      %1444 = vmatmul.mubr.bf16.gmra.mrb[0].mxu0 %v1373
      %v1445 = vpop.f32.mrb[0].mxu0
      %v1446 = vadd.f32 0.0, %v1445
      %v1447 = vpop.f32.mrb[0].mxu0
      %v1448 = vpop.f32.mrb[0].mxu0
      %v1449 = vadd.f32 0.0, %v1448
      %v1450 = vpop.f32.mrb[0].mxu0
      %1451 = vmatprep.mubr.bf16.mxu0 0
      %1452 = vmatmul.mubr.bf16.gmra.mrb[0].mxu0 %v1376
      %v1453 = vpop.f32.mrb[0].mxu0
      %v1454 = vadd.f32 0.0, %v1453
      %v1455 = vpop.f32.mrb[0].mxu0
      %v1456 = vpop.f32.mrb[0].mxu0
      %v1457 = vadd.f32 0.0, %v1456
      %v1458 = vpop.f32.mrb[0].mxu0
      %1459 = vmatprep.mubr.bf16.mxu0 0
      %1460 = vmatmul.mubr.bf16.gmra.mrb[0].mxu0 %v1379
      %v1461 = vpop.f32.mrb[0].mxu0
      %v1462 = vadd.f32 0.0, %v1461
      %v1463 = vpop.f32.mrb[0].mxu0
      %v1464 = vpop.f32.mrb[0].mxu0
      %v1465 = vadd.f32 0.0, %v1464
      %v1466 = vpop.f32.mrb[0].mxu0
      %1467 = vmatprep.mubr.bf16.mxu0 0
      %1468 = vmatmul.mubr.bf16.gmra.mrb[0].mxu0 %v1382
      %v1469 = vpop.f32.mrb[0].mxu0
      %v1470 = vadd.f32 0.0, %v1469
      %v1471 = vpop.f32.mrb[0].mxu0
      %v1472 = vpop.f32.mrb[0].mxu0
      %v1473 = vadd.f32 0.0, %v1472
      %v1474 = vpop.f32.mrb[0].mxu0
      %1475 = vmatprep.mubr.bf16.mxu0 0
      %1476 = vmatmul.mubr.bf16.gmra.mrb[0].mxu0 %v1385
      %v1477 = vpop.f32.mrb[0].mxu0
      %v1478 = vadd.f32 0.0, %v1477
      %v1479 = vpop.f32.mrb[0].mxu0
      %v1480 = vpop.f32.mrb[0].mxu0
      %v1481 = vadd.f32 0.0, %v1480
      %v1482 = vpop.f32.mrb[0].mxu0
      %1483 = vmatprep.mubr.bf16.mxu0 0
      %1484 = vmatmul.mubr.bf16.gmra.mrb[0].mxu0 %v1388
      %v1485 = vpop.f32.mrb[0].mxu0
      %v1486 = vadd.f32 0.0, %v1485
      %v1487 = vpop.f32.mrb[0].mxu0
      %v1488 = vpop.f32.mrb[0].mxu0
      %v1489 = vadd.f32 0.0, %v1488
      %v1490 = vpop.f32.mrb[0].mxu0
      %1491 = vmatprep.mubr.bf16.mxu0 0
      %1492 = vmatmul.mubr.bf16.gmra.mrb[0].mxu0 %v1391
      %v1493 = vpop.f32.mrb[0].mxu0
      %v1494 = vadd.f32 0.0, %v1493
      %v1495 = vpop.f32.mrb[0].mxu0
      %v1496 = vpop.f32.mrb[0].mxu0
      %v1497 = vadd.f32 0.0, %v1496
      %v1498 = vpop.f32.mrb[0].mxu0
      %1499 = vmatprep.mubr.bf16.mxu0 0
      %1500 = vmatmul.mubr.bf16.gmra.mrb[0].mxu0 %v1394
      %v1501 = vpop.f32.mrb[0].mxu0
      %v1502 = vadd.f32 0.0, %v1501
      %v1503 = vpop.f32.mrb[0].mxu0
      %v1504 = vpop.f32.mrb[0].mxu0
      %v1505 = vadd.f32 0.0, %v1504
      %v1506 = vpop.f32.mrb[0].mxu0
      %1507 = vmatprep.mubr.bf16.mxu0 0
      %1508 = vmatmul.mubr.bf16.gmra.mrb[0].mxu0 %v1397
      %v1509 = vpop.f32.mrb[0].mxu0
      %v1510 = vadd.f32 0.0, %v1509
      %v1511 = vpop.f32.mrb[0].mxu0
      %v1512 = vpop.f32.mrb[0].mxu0
      %v1513 = vadd.f32 0.0, %v1512
      %v1514 = vpop.f32.mrb[0].mxu0
      %1515 = vmatprep.mubr.bf16.mxu0 0
      %1516 = vmatmul.mubr.bf16.gmra.mrb[0].mxu0 %v1400
      %v1517 = vpop.f32.mrb[0].mxu0
      %v1518 = vadd.f32 0.0, %v1517
      %v1519 = vpop.f32.mrb[0].mxu0
      %v1520 = vpop.f32.mrb[0].mxu0
      %v1521 = vadd.f32 0.0, %v1520
      %v1522 = vpop.f32.mrb[0].mxu0
      %1523 = vmatprep.mubr.bf16.mxu0 0
      %1524 = vmatmul.mubr.bf16.gmra.mrb[0].mxu0 %v1403
      %v1525 = vpop.f32.mrb[0].mxu0
      %v1526 = vadd.f32 0.0, %v1525
      %v1527 = vpop.f32.mrb[0].mxu0
      %v1528 = vpop.f32.mrb[0].mxu0
      %v1529 = vadd.f32 0.0, %v1528
      %v1530 = vpop.f32.mrb[0].mxu0
      %1531 = vmatprep.mubr.bf16.mxu0 0
      %1532 = vmatmul.mubr.bf16.gmra.mrb[0].mxu0 %v1406
      %v1533 = vpop.f32.mrb[0].mxu0
      %v1534 = vadd.f32 0.0, %v1533
      %v1535 = vpop.f32.mrb[0].mxu0
      %v1536 = vpop.f32.mrb[0].mxu0
      %v1537 = vadd.f32 0.0, %v1536
      %v1538 = vpop.f32.mrb[0].mxu0
      %1539 = vdwg.mxu0
      %v1540 = vadd.f32 %v1258, %v1446
      %v1541 = vadd.f32 %v1259, %v1449
      %v1542 = vadd.f32 %v1260, %v1454
      %v1543 = vadd.f32 %v1261, %v1457
      %v1544 = vadd.f32 %v1262, %v1462
      %v1545 = vadd.f32 %v1263, %v1465
      %v1546 = vadd.f32 %v1264, %v1470
      %v1547 = vadd.f32 %v1265, %v1473
      %v1548 = vadd.f32 %v1266, %v1478
      %v1549 = vadd.f32 %v1267, %v1481
      %v1550 = vadd.f32 %v1268, %v1486
      %v1551 = vadd.f32 %v1269, %v1489
      %v1552 = vadd.f32 %v1270, %v1494
      %v1553 = vadd.f32 %v1271, %v1497
      %v1554 = vadd.f32 %v1272, %v1502
      %v1555 = vadd.f32 %v1273, %v1505
      %v1556 = vadd.f32 %v1274, %v1510
      %v1557 = vadd.f32 %v1275, %v1513
      %v1558 = vadd.f32 %v1276, %v1518
      %v1559 = vadd.f32 %v1277, %v1521
      %v1560 = vadd.f32 %v1278, %v1526
      %v1561 = vadd.f32 %v1279, %v1529
      %v1562 = vadd.f32 %v1280, %v1534
      %v1563 = vadd.f32 %v1281, %v1537
      %v1564 = vld [vmem:[%s1285] sm:$0xf]
      %v1565 = vld [vmem:[%s1285 + $0x4] sm:$0xf]
      %v1566 = vld [vmem:[%s1285 + $0x8] sm:$0xf]
      %v1567 = vld [vmem:[%s1285 + $0xc] sm:$0x1]
      %v1568 = vld [vmem:[%s1285 + $0x10] sm:$0xf]
      %v1569 = vld [vmem:[%s1285 + $0x14] sm:$0xf]
      %v1570 = vld [vmem:[%s1285 + $0x18] sm:$0xf]
      %v1571 = vld [vmem:[%s1285 + $0x1c] sm:$0x1]
      %v1572 = vld [vmem:[%s1285 + $0x20] sm:$0xf]
      %v1573 = vld [vmem:[%s1285 + $0x24] sm:$0xf]
      %v1574 = vld [vmem:[%s1285 + $0x28] sm:$0xf]
      %v1575 = vld [vmem:[%s1285 + $0x2c] sm:$0x1]
      %v1576 = vld [vmem:[%s1285 + $0x30] sm:$0xf]
      %v1577 = vld [vmem:[%s1285 + $0x34] sm:$0xf]
      %v1578 = vld [vmem:[%s1285 + $0x38] sm:$0xf]
      %v1579 = vld [vmem:[%s1285 + $0x3c] sm:$0x1]
      %v1580 = vld [vmem:[%s1285 + $0x40] sm:$0xf]
      %v1581 = vld [vmem:[%s1285 + $0x44] sm:$0xf]
      %v1582 = vld [vmem:[%s1285 + $0x48] sm:$0xf]
      %v1583 = vld [vmem:[%s1285 + $0x4c] sm:$0x1]
      %v1584 = vld [vmem:[%s1285 + $0x50] sm:$0xf]
      %v1585 = vld [vmem:[%s1285 + $0x54] sm:$0xf]
      %v1586 = vld [vmem:[%s1285 + $0x58] sm:$0xf]
      %v1587 = vld [vmem:[%s1285 + $0x5c] sm:$0x1]
      %v1588 = vld [vmem:[%s1285 + $0x60] sm:$0xf]
      %v1589 = vld [vmem:[%s1285 + $0x64] sm:$0xf]
      %v1590 = vld [vmem:[%s1285 + $0x68] sm:$0xf]
      %v1591 = vld [vmem:[%s1285 + $0x6c] sm:$0x1]
      %v1592 = vld [vmem:[%s1285 + $0x70] sm:$0xf]
      %v1593 = vld [vmem:[%s1285 + $0x74] sm:$0xf]
      %v1594 = vld [vmem:[%s1285 + $0x78] sm:$0xf]
      %v1595 = vld [vmem:[%s1285 + $0x7c] sm:$0x1]
      %v1597 = vshrl.u32 %v1564, 16
      %v1599 = vrot.slane %v1597, 4
      %v1600 = vshll.u32 %v1564, 16
      %v1602 = vrot.slane %v1600, 5
      %v1603 = vor.u32 %v1599, %v1602
      %v1604 = vrot.slane %v1603, 4
      %v1606 = vshll.u32 %v1565, 16
      %v1608 = vrot.slane %v1606, 5
      %v1609 = vsel %vm236, %v1604, %v1608
      %v1610 = vshrl.u32 %v1565, 16
      %v1612 = vrot.slane %v1610, 4
      %v1613 = vor.u32 %v1612, %v1608
      %v1614 = vrot.slane %v1613, 4
      %v1616 = vshll.u32 %v1566, 16
      %v1618 = vrot.slane %v1616, 5
      %v1619 = vsel %vm236, %v1614, %v1618
      %v1620 = vshrl.u32 %v1566, 16
      %v1622 = vrot.slane %v1620, 4
      %v1623 = vor.u32 %v1622, %v1618
      %v1624 = vrot.slane %v1623, 4
      %v1626 = vshll.u32 %v1567, 16
      %v1628 = vrot.slane %v1626, 5
      %v1629 = vsel %vm236, %v1624, %v1628
      %v1631 = vshrl.u32 %v1568, 16
      %v1633 = vrot.slane %v1631, 4
      %v1634 = vshll.u32 %v1568, 16
      %v1636 = vrot.slane %v1634, 5
      %v1637 = vor.u32 %v1633, %v1636
      %v1638 = vrot.slane %v1637, 4
      %v1640 = vshll.u32 %v1569, 16
      %v1642 = vrot.slane %v1640, 5
      %v1643 = vsel %vm236, %v1638, %v1642
      %v1644 = vshrl.u32 %v1569, 16
      %v1646 = vrot.slane %v1644, 4
      %v1647 = vor.u32 %v1646, %v1642
      %v1648 = vrot.slane %v1647, 4
      %v1650 = vshll.u32 %v1570, 16
      %v1652 = vrot.slane %v1650, 5
      %v1653 = vsel %vm236, %v1648, %v1652
      %v1654 = vshrl.u32 %v1570, 16
      %v1656 = vrot.slane %v1654, 4
      %v1657 = vor.u32 %v1656, %v1652
      %v1658 = vrot.slane %v1657, 4
      %v1660 = vshll.u32 %v1571, 16
      %v1662 = vrot.slane %v1660, 5
      %v1663 = vsel %vm236, %v1658, %v1662
      %v1665 = vshrl.u32 %v1572, 16
      %v1667 = vrot.slane %v1665, 4
      %v1668 = vshll.u32 %v1572, 16
      %v1670 = vrot.slane %v1668, 5
      %v1671 = vor.u32 %v1667, %v1670
      %v1672 = vrot.slane %v1671, 4
      %v1674 = vshll.u32 %v1573, 16
      %v1676 = vrot.slane %v1674, 5
      %v1677 = vsel %vm236, %v1672, %v1676
      %v1678 = vshrl.u32 %v1573, 16
      %v1680 = vrot.slane %v1678, 4
      %v1681 = vor.u32 %v1680, %v1676
      %v1682 = vrot.slane %v1681, 4
      %v1684 = vshll.u32 %v1574, 16
      %v1686 = vrot.slane %v1684, 5
      %v1687 = vsel %vm236, %v1682, %v1686
      %v1688 = vshrl.u32 %v1574, 16
      %v1690 = vrot.slane %v1688, 4
      %v1691 = vor.u32 %v1690, %v1686
      %v1692 = vrot.slane %v1691, 4
      %v1694 = vshll.u32 %v1575, 16
      %v1696 = vrot.slane %v1694, 5
      %v1697 = vsel %vm236, %v1692, %v1696
      %v1699 = vshrl.u32 %v1576, 16
      %v1701 = vrot.slane %v1699, 4
      %v1702 = vshll.u32 %v1576, 16
      %v1704 = vrot.slane %v1702, 5
      %v1705 = vor.u32 %v1701, %v1704
      %v1706 = vrot.slane %v1705, 4
      %v1708 = vshll.u32 %v1577, 16
      %v1710 = vrot.slane %v1708, 5
      %v1711 = vsel %vm236, %v1706, %v1710
      %v1712 = vshrl.u32 %v1577, 16
      %v1714 = vrot.slane %v1712, 4
      %v1715 = vor.u32 %v1714, %v1710
      %v1716 = vrot.slane %v1715, 4
      %v1718 = vshll.u32 %v1578, 16
      %v1720 = vrot.slane %v1718, 5
      %v1721 = vsel %vm236, %v1716, %v1720
      %v1722 = vshrl.u32 %v1578, 16
      %v1724 = vrot.slane %v1722, 4
      %v1725 = vor.u32 %v1724, %v1720
      %v1726 = vrot.slane %v1725, 4
      %v1728 = vshll.u32 %v1579, 16
      %v1730 = vrot.slane %v1728, 5
      %v1731 = vsel %vm236, %v1726, %v1730
      %v1733 = vshrl.u32 %v1580, 16
      %v1735 = vrot.slane %v1733, 4
      %v1736 = vshll.u32 %v1580, 16
      %v1738 = vrot.slane %v1736, 5
      %v1739 = vor.u32 %v1735, %v1738
      %v1740 = vrot.slane %v1739, 4
      %v1742 = vshll.u32 %v1581, 16
      %v1744 = vrot.slane %v1742, 5
      %v1745 = vsel %vm236, %v1740, %v1744
      %v1746 = vshrl.u32 %v1581, 16
      %v1748 = vrot.slane %v1746, 4
      %v1749 = vor.u32 %v1748, %v1744
      %v1750 = vrot.slane %v1749, 4
      %v1752 = vshll.u32 %v1582, 16
      %v1754 = vrot.slane %v1752, 5
      %v1755 = vsel %vm236, %v1750, %v1754
      %v1756 = vshrl.u32 %v1582, 16
      %v1758 = vrot.slane %v1756, 4
      %v1759 = vor.u32 %v1758, %v1754
      %v1760 = vrot.slane %v1759, 4
      %v1762 = vshll.u32 %v1583, 16
      %v1764 = vrot.slane %v1762, 5
      %v1765 = vsel %vm236, %v1760, %v1764
      %v1767 = vshrl.u32 %v1584, 16
      %v1769 = vrot.slane %v1767, 4
      %v1770 = vshll.u32 %v1584, 16
      %v1772 = vrot.slane %v1770, 5
      %v1773 = vor.u32 %v1769, %v1772
      %v1774 = vrot.slane %v1773, 4
      %v1776 = vshll.u32 %v1585, 16
      %v1778 = vrot.slane %v1776, 5
      %v1779 = vsel %vm236, %v1774, %v1778
      %v1780 = vshrl.u32 %v1585, 16
      %v1782 = vrot.slane %v1780, 4
      %v1783 = vor.u32 %v1782, %v1778
      %v1784 = vrot.slane %v1783, 4
      %v1786 = vshll.u32 %v1586, 16
      %v1788 = vrot.slane %v1786, 5
      %v1789 = vsel %vm236, %v1784, %v1788
      %v1790 = vshrl.u32 %v1586, 16
      %v1792 = vrot.slane %v1790, 4
      %v1793 = vor.u32 %v1792, %v1788
      %v1794 = vrot.slane %v1793, 4
      %v1796 = vshll.u32 %v1587, 16
      %v1798 = vrot.slane %v1796, 5
      %v1799 = vsel %vm236, %v1794, %v1798
      %v1801 = vshrl.u32 %v1588, 16
      %v1803 = vrot.slane %v1801, 4
      %v1804 = vshll.u32 %v1588, 16
      %v1806 = vrot.slane %v1804, 5
      %v1807 = vor.u32 %v1803, %v1806
      %v1808 = vrot.slane %v1807, 4
      %v1810 = vshll.u32 %v1589, 16
      %v1812 = vrot.slane %v1810, 5
      %v1813 = vsel %vm236, %v1808, %v1812
      %v1814 = vshrl.u32 %v1589, 16
      %v1816 = vrot.slane %v1814, 4
      %v1817 = vor.u32 %v1816, %v1812
      %v1818 = vrot.slane %v1817, 4
      %v1820 = vshll.u32 %v1590, 16
      %v1822 = vrot.slane %v1820, 5
      %v1823 = vsel %vm236, %v1818, %v1822
      %v1824 = vshrl.u32 %v1590, 16
      %v1826 = vrot.slane %v1824, 4
      %v1827 = vor.u32 %v1826, %v1822
      %v1828 = vrot.slane %v1827, 4
      %v1830 = vshll.u32 %v1591, 16
      %v1832 = vrot.slane %v1830, 5
      %v1833 = vsel %vm236, %v1828, %v1832
      %v1835 = vshrl.u32 %v1592, 16
      %v1837 = vrot.slane %v1835, 4
      %v1838 = vshll.u32 %v1592, 16
      %v1840 = vrot.slane %v1838, 5
      %v1841 = vor.u32 %v1837, %v1840
      %v1842 = vrot.slane %v1841, 4
      %v1844 = vshll.u32 %v1593, 16
      %v1846 = vrot.slane %v1844, 5
      %v1847 = vsel %vm236, %v1842, %v1846
      %v1848 = vshrl.u32 %v1593, 16
      %v1850 = vrot.slane %v1848, 4
      %v1851 = vor.u32 %v1850, %v1846
      %v1852 = vrot.slane %v1851, 4
      %v1854 = vshll.u32 %v1594, 16
      %v1856 = vrot.slane %v1854, 5
      %v1857 = vsel %vm236, %v1852, %v1856
      %v1858 = vshrl.u32 %v1594, 16
      %v1860 = vrot.slane %v1858, 4
      %v1861 = vor.u32 %v1860, %v1856
      %v1862 = vrot.slane %v1861, 4
      %v1864 = vshll.u32 %v1595, 16
      %v1866 = vrot.slane %v1864, 5
      %v1867 = vsel %vm236, %v1862, %v1866
      %s1868 = scalar_lea.vmem %s1, 8
      %v1869 = vld [vmem:[%s1868] sm:$0x3]
      %v1870 = vunpack.c.l.b16 %v1609
      %v1871 = vunpack.c.l.b16 %v1619
      %v1872 = vunpack.c.l.b16 %v1629
      %v1873 = vunpack.c.l.b16 %v1643
      %v1874 = vunpack.c.l.b16 %v1653
      %v1875 = vunpack.c.l.b16 %v1663
      %v1876 = vunpack.c.l.b16 %v1677
      %v1877 = vunpack.c.l.b16 %v1687
      %v1878 = vunpack.c.l.b16 %v1697
      %v1879 = vunpack.c.l.b16 %v1711
      %v1880 = vunpack.c.l.b16 %v1721
      %v1881 = vunpack.c.l.b16 %v1731
      %v1882 = vunpack.c.l.b16 %v1745
      %v1883 = vunpack.c.l.b16 %v1755
      %v1884 = vunpack.c.l.b16 %v1765
      %v1885 = vunpack.c.l.b16 %v1779
      %v1886 = vunpack.c.l.b16 %v1789
      %v1887 = vunpack.c.l.b16 %v1799
      %v1888 = vunpack.c.l.b16 %v1813
      %v1889 = vunpack.c.l.b16 %v1823
      %v1890 = vunpack.c.l.b16 %v1833
      %v1891 = vunpack.c.l.b16 %v1847
      %v1892 = vunpack.c.l.b16 %v1857
      %v1893 = vunpack.c.l.b16 %v1867
      %v1894 = vpack.c.b16 %v1871, %v1870
      %v1895 = vpack.c.b16 %v1873, %v1872
      %v1896 = vpack.c.b16 %v1875, %v1874
      %v1897 = vpack.c.b16 %v1877, %v1876
      %v1898 = vpack.c.b16 %v1879, %v1878
      %v1899 = vpack.c.b16 %v1881, %v1880
      %v1900 = vpack.c.b16 %v1883, %v1882
      %v1901 = vpack.c.b16 %v1885, %v1884
      %v1902 = vpack.c.b16 %v1887, %v1886
      %v1903 = vpack.c.b16 %v1889, %v1888
      %v1904 = vpack.c.b16 %v1891, %v1890
      %v1905 = vpack.c.b16 %v1893, %v1892
      %v1907 = vsel %vm547, %v1894, 0
      %v1910 = vsel %vm547, %v1895, 0
      %v1913 = vsel %vm547, %v1896, 0
      %v1916 = vsel %vm547, %v1897, 0
      %v1919 = vsel %vm547, %v1898, 0
      %v1922 = vsel %vm547, %v1899, 0
      %v1925 = vsel %vm547, %v1900, 0
      %v1928 = vsel %vm547, %v1901, 0
      %v1931 = vsel %vm547, %v1902, 0
      %v1934 = vsel %vm547, %v1903, 0
      %v1937 = vsel %vm547, %v1904, 0
      %v1940 = vsel %vm547, %v1905, 0
      %v1943 = vsel %vm584, %v1869, 0
      %1945 = vmatprep.subr.bf16.mxu0 0
      %1946 = vmatpush1.bf16.msra.mxu0 %v1943
      %1947 = vmatprep.subr.bf16.mxu0 0
      %1948 = vmatpush1.bf16.msra.mxu0 0
      %1949 = vmatprep.subr.bf16.mxu0 0
      %1950 = vmatpush1.bf16.msra.mxu0 0
      %1951 = vmatprep.subr.bf16.mxu0 0
      %1952 = vmatpush1.bf16.msra.mxu0 0
      %1953 = vmatprep.subr.bf16.mxu0 0
      %1954 = vmatpush1.bf16.msra.mxu0 0
      %1955 = vmatprep.subr.bf16.mxu0 0
      %1956 = vmatpush1.bf16.msra.mxu0 0
      %1957 = vmatprep.subr.bf16.mxu0 0
      %1958 = vmatpush1.bf16.msra.mxu0 0
      %1959 = vmatprep.subr.bf16.mxu0 0
      %1960 = vmatpush1.bf16.msra.mxu0 0
      %1961 = vmatprep.subr.bf16.mxu0 0
      %1962 = vmatpush1.bf16.msra.mxu0 0
      %1963 = vmatprep.subr.bf16.mxu0 0
      %1964 = vmatpush1.bf16.msra.mxu0 0
      %1965 = vmatprep.subr.bf16.mxu0 0
      %1966 = vmatpush1.bf16.msra.mxu0 0
      %1967 = vmatprep.subr.bf16.mxu0 0
      %1968 = vmatpush1.bf16.msra.mxu0 0
      %1969 = vmatprep.subr.bf16.mxu0 0
      %1970 = vmatpush1.bf16.msra.mxu0 0
      %1971 = vmatprep.subr.bf16.mxu0 0
      %1972 = vmatpush1.bf16.msra.mxu0 0
      %1973 = vmatprep.subr.bf16.mxu0 0
      %1974 = vmatpush1.bf16.msra.mxu0 0
      %1975 = vmatprep.subr.bf16.mxu0 0
      %1976 = vmatpush1.bf16.msra.mxu0 0
      %1977 = vmatprep.mubr.bf16.mxu0 0
      %1978 = vmatmul.mubr.bf16.gmra.mrb[0].mxu0 %v1907
      %v1979 = vpop.f32.mrb[0].mxu0
      %v1980 = vadd.f32 0.0, %v1979
      %v1981 = vpop.f32.mrb[0].mxu0
      %v1982 = vpop.f32.mrb[0].mxu0
      %v1983 = vadd.f32 0.0, %v1982
      %v1984 = vpop.f32.mrb[0].mxu0
      %1985 = vmatprep.mubr.bf16.mxu0 0
      %1986 = vmatmul.mubr.bf16.gmra.mrb[0].mxu0 %v1910
      %v1987 = vpop.f32.mrb[0].mxu0
      %v1988 = vadd.f32 0.0, %v1987
      %v1989 = vpop.f32.mrb[0].mxu0
      %v1990 = vpop.f32.mrb[0].mxu0
      %v1991 = vadd.f32 0.0, %v1990
      %v1992 = vpop.f32.mrb[0].mxu0
      %1993 = vmatprep.mubr.bf16.mxu0 0
      %1994 = vmatmul.mubr.bf16.gmra.mrb[0].mxu0 %v1913
      %v1995 = vpop.f32.mrb[0].mxu0
      %v1996 = vadd.f32 0.0, %v1995
      %v1997 = vpop.f32.mrb[0].mxu0
      %v1998 = vpop.f32.mrb[0].mxu0
      %v1999 = vadd.f32 0.0, %v1998
      %v2000 = vpop.f32.mrb[0].mxu0
      %2001 = vmatprep.mubr.bf16.mxu0 0
      %2002 = vmatmul.mubr.bf16.gmra.mrb[0].mxu0 %v1916
      %v2003 = vpop.f32.mrb[0].mxu0
      %v2004 = vadd.f32 0.0, %v2003
      %v2005 = vpop.f32.mrb[0].mxu0
      %v2006 = vpop.f32.mrb[0].mxu0
      %v2007 = vadd.f32 0.0, %v2006
      %v2008 = vpop.f32.mrb[0].mxu0
      %2009 = vmatprep.mubr.bf16.mxu0 0
      %2010 = vmatmul.mubr.bf16.gmra.mrb[0].mxu0 %v1919
      %v2011 = vpop.f32.mrb[0].mxu0
      %v2012 = vadd.f32 0.0, %v2011
      %v2013 = vpop.f32.mrb[0].mxu0
      %v2014 = vpop.f32.mrb[0].mxu0
      %v2015 = vadd.f32 0.0, %v2014
      %v2016 = vpop.f32.mrb[0].mxu0
      %2017 = vmatprep.mubr.bf16.mxu0 0
      %2018 = vmatmul.mubr.bf16.gmra.mrb[0].mxu0 %v1922
      %v2019 = vpop.f32.mrb[0].mxu0
      %v2020 = vadd.f32 0.0, %v2019
      %v2021 = vpop.f32.mrb[0].mxu0
      %v2022 = vpop.f32.mrb[0].mxu0
      %v2023 = vadd.f32 0.0, %v2022
      %v2024 = vpop.f32.mrb[0].mxu0
      %2025 = vmatprep.mubr.bf16.mxu0 0
      %2026 = vmatmul.mubr.bf16.gmra.mrb[0].mxu0 %v1925
      %v2027 = vpop.f32.mrb[0].mxu0
      %v2028 = vadd.f32 0.0, %v2027
      %v2029 = vpop.f32.mrb[0].mxu0
      %v2030 = vpop.f32.mrb[0].mxu0
      %v2031 = vadd.f32 0.0, %v2030
      %v2032 = vpop.f32.mrb[0].mxu0
      %2033 = vmatprep.mubr.bf16.mxu0 0
      %2034 = vmatmul.mubr.bf16.gmra.mrb[0].mxu0 %v1928
      %v2035 = vpop.f32.mrb[0].mxu0
      %v2036 = vadd.f32 0.0, %v2035
      %v2037 = vpop.f32.mrb[0].mxu0
      %v2038 = vpop.f32.mrb[0].mxu0
      %v2039 = vadd.f32 0.0, %v2038
      %v2040 = vpop.f32.mrb[0].mxu0
      %2041 = vmatprep.mubr.bf16.mxu0 0
      %2042 = vmatmul.mubr.bf16.gmra.mrb[0].mxu0 %v1931
      %v2043 = vpop.f32.mrb[0].mxu0
      %v2044 = vadd.f32 0.0, %v2043
      %v2045 = vpop.f32.mrb[0].mxu0
      %v2046 = vpop.f32.mrb[0].mxu0
      %v2047 = vadd.f32 0.0, %v2046
      %v2048 = vpop.f32.mrb[0].mxu0
      %2049 = vmatprep.mubr.bf16.mxu0 0
      %2050 = vmatmul.mubr.bf16.gmra.mrb[0].mxu0 %v1934
      %v2051 = vpop.f32.mrb[0].mxu0
      %v2052 = vadd.f32 0.0, %v2051
      %v2053 = vpop.f32.mrb[0].mxu0
      %v2054 = vpop.f32.mrb[0].mxu0
      %v2055 = vadd.f32 0.0, %v2054
      %v2056 = vpop.f32.mrb[0].mxu0
      %2057 = vmatprep.mubr.bf16.mxu0 0
      %2058 = vmatmul.mubr.bf16.gmra.mrb[0].mxu0 %v1937
      %v2059 = vpop.f32.mrb[0].mxu0
      %v2060 = vadd.f32 0.0, %v2059
      %v2061 = vpop.f32.mrb[0].mxu0
      %v2062 = vpop.f32.mrb[0].mxu0
      %v2063 = vadd.f32 0.0, %v2062
      %v2064 = vpop.f32.mrb[0].mxu0
      %2065 = vmatprep.mubr.bf16.mxu0 0
      %2066 = vmatmul.mubr.bf16.gmra.mrb[0].mxu0 %v1940
      %v2067 = vpop.f32.mrb[0].mxu0
      %v2068 = vadd.f32 0.0, %v2067
      %v2069 = vpop.f32.mrb[0].mxu0
      %v2070 = vpop.f32.mrb[0].mxu0
      %v2071 = vadd.f32 0.0, %v2070
      %v2072 = vpop.f32.mrb[0].mxu0
      %2073 = vdwg.mxu0
      %v2074 = vadd.f32 %v1540, %v1980
      %v2075 = vadd.f32 %v1541, %v1983
      %v2076 = vadd.f32 %v1542, %v1988
      %v2077 = vadd.f32 %v1543, %v1991
      %v2078 = vadd.f32 %v1544, %v1996
      %v2079 = vadd.f32 %v1545, %v1999
      %v2080 = vadd.f32 %v1546, %v2004
      %v2081 = vadd.f32 %v1547, %v2007
      %v2082 = vadd.f32 %v1548, %v2012
      %v2083 = vadd.f32 %v1549, %v2015
      %v2084 = vadd.f32 %v1550, %v2020
      %v2085 = vadd.f32 %v1551, %v2023
      %v2086 = vadd.f32 %v1552, %v2028
      %v2087 = vadd.f32 %v1553, %v2031
      %v2088 = vadd.f32 %v1554, %v2036
      %v2089 = vadd.f32 %v1555, %v2039
      %v2090 = vadd.f32 %v1556, %v2044
      %v2091 = vadd.f32 %v1557, %v2047
      %v2092 = vadd.f32 %v1558, %v2052
      %v2093 = vadd.f32 %v1559, %v2055
      %v2094 = vadd.f32 %v1560, %v2060
      %v2095 = vadd.f32 %v1561, %v2063
      %v2096 = vadd.f32 %v1562, %v2068
      %v2097 = vadd.f32 %v1563, %v2071
      %v2098 = vld [vmem:[%s1285] sm:$0xe]
      %v2099 = vld [vmem:[%s1285 + $0x10] sm:$0xe]
      %v2100 = vld [vmem:[%s1285 + $0x20] sm:$0xe]
      %v2101 = vld [vmem:[%s1285 + $0x30] sm:$0xe]
      %v2102 = vld [vmem:[%s1285 + $0x40] sm:$0xe]
      %v2103 = vld [vmem:[%s1285 + $0x50] sm:$0xe]
      %v2104 = vld [vmem:[%s1285 + $0x60] sm:$0xe]
      %v2105 = vld [vmem:[%s1285 + $0x70] sm:$0xe]
      %v2138 = vrot.slane %v2098, 5
      %v2139 = vrot.slane %v2138, 4
      %v2140 = vrot.slane %v1565, 5
      %v2141 = vsel %vm971, %v2139, %v2140
      %v2142 = vrot.slane %v2140, 4
      %v2143 = vrot.slane %v1566, 5
      %v2144 = vsel %vm971, %v2142, %v2143
      %v2145 = vrot.slane %v2143, 4
      %v2146 = vrot.slane %v1567, 5
      %v2147 = vsel %vm971, %v2145, %v2146
      %v2148 = vrot.slane %v2099, 5
      %v2149 = vrot.slane %v2148, 4
      %v2150 = vrot.slane %v1569, 5
      %v2151 = vsel %vm971, %v2149, %v2150
      %v2152 = vrot.slane %v2150, 4
      %v2153 = vrot.slane %v1570, 5
      %v2154 = vsel %vm971, %v2152, %v2153
      %v2155 = vrot.slane %v2153, 4
      %v2156 = vrot.slane %v1571, 5
      %v2157 = vsel %vm971, %v2155, %v2156
      %v2158 = vrot.slane %v2100, 5
      %v2159 = vrot.slane %v2158, 4
      %v2160 = vrot.slane %v1573, 5
      %v2161 = vsel %vm971, %v2159, %v2160
      %v2162 = vrot.slane %v2160, 4
      %v2163 = vrot.slane %v1574, 5
      %v2164 = vsel %vm971, %v2162, %v2163
      %v2165 = vrot.slane %v2163, 4
      %v2166 = vrot.slane %v1575, 5
      %v2167 = vsel %vm971, %v2165, %v2166
      %v2168 = vrot.slane %v2101, 5
      %v2169 = vrot.slane %v2168, 4
      %v2170 = vrot.slane %v1577, 5
      %v2171 = vsel %vm971, %v2169, %v2170
      %v2172 = vrot.slane %v2170, 4
      %v2173 = vrot.slane %v1578, 5
      %v2174 = vsel %vm971, %v2172, %v2173
      %v2175 = vrot.slane %v2173, 4
      %v2176 = vrot.slane %v1579, 5
      %v2177 = vsel %vm971, %v2175, %v2176
      %v2178 = vrot.slane %v2102, 5
      %v2179 = vrot.slane %v2178, 4
      %v2180 = vrot.slane %v1581, 5
      %v2181 = vsel %vm971, %v2179, %v2180
      %v2182 = vrot.slane %v2180, 4
      %v2183 = vrot.slane %v1582, 5
      %v2184 = vsel %vm971, %v2182, %v2183
      %v2185 = vrot.slane %v2183, 4
      %v2186 = vrot.slane %v1583, 5
      %v2187 = vsel %vm971, %v2185, %v2186
      %v2188 = vrot.slane %v2103, 5
      %v2189 = vrot.slane %v2188, 4
      %v2190 = vrot.slane %v1585, 5
      %v2191 = vsel %vm971, %v2189, %v2190
      %v2192 = vrot.slane %v2190, 4
      %v2193 = vrot.slane %v1586, 5
      %v2194 = vsel %vm971, %v2192, %v2193
      %v2195 = vrot.slane %v2193, 4
      %v2196 = vrot.slane %v1587, 5
      %v2197 = vsel %vm971, %v2195, %v2196
      %v2198 = vrot.slane %v2104, 5
      %v2199 = vrot.slane %v2198, 4
      %v2200 = vrot.slane %v1589, 5
      %v2201 = vsel %vm971, %v2199, %v2200
      %v2202 = vrot.slane %v2200, 4
      %v2203 = vrot.slane %v1590, 5
      %v2204 = vsel %vm971, %v2202, %v2203
      %v2205 = vrot.slane %v2203, 4
      %v2206 = vrot.slane %v1591, 5
      %v2207 = vsel %vm971, %v2205, %v2206
      %v2208 = vrot.slane %v2105, 5
      %v2209 = vrot.slane %v2208, 4
      %v2210 = vrot.slane %v1593, 5
      %v2211 = vsel %vm971, %v2209, %v2210
      %v2212 = vrot.slane %v2210, 4
      %v2213 = vrot.slane %v1594, 5
      %v2214 = vsel %vm971, %v2212, %v2213
      %v2215 = vrot.slane %v2213, 4
      %v2216 = vrot.slane %v1595, 5
      %v2217 = vsel %vm971, %v2215, %v2216
      %s2218 = scalar_lea.vmem %s1, 10
      %v2219 = vld [vmem:[%s2218] sm:$0x3]
      %v2220 = vunpack.c.l.b16 %v2141
      %v2221 = vunpack.c.l.b16 %v2144
      %v2222 = vunpack.c.l.b16 %v2147
      %v2223 = vunpack.c.l.b16 %v2151
      %v2224 = vunpack.c.l.b16 %v2154
      %v2225 = vunpack.c.l.b16 %v2157
      %v2226 = vunpack.c.l.b16 %v2161
      %v2227 = vunpack.c.l.b16 %v2164
      %v2228 = vunpack.c.l.b16 %v2167
      %v2229 = vunpack.c.l.b16 %v2171
      %v2230 = vunpack.c.l.b16 %v2174
      %v2231 = vunpack.c.l.b16 %v2177
      %v2232 = vunpack.c.l.b16 %v2181
      %v2233 = vunpack.c.l.b16 %v2184
      %v2234 = vunpack.c.l.b16 %v2187
      %v2235 = vunpack.c.l.b16 %v2191
      %v2236 = vunpack.c.l.b16 %v2194
      %v2237 = vunpack.c.l.b16 %v2197
      %v2238 = vunpack.c.l.b16 %v2201
      %v2239 = vunpack.c.l.b16 %v2204
      %v2240 = vunpack.c.l.b16 %v2207
      %v2241 = vunpack.c.l.b16 %v2211
      %v2242 = vunpack.c.l.b16 %v2214
      %v2243 = vunpack.c.l.b16 %v2217
      %v2244 = vpack.c.b16 %v2221, %v2220
      %v2245 = vpack.c.b16 %v2223, %v2222
      %v2246 = vpack.c.b16 %v2225, %v2224
      %v2247 = vpack.c.b16 %v2227, %v2226
      %v2248 = vpack.c.b16 %v2229, %v2228
      %v2249 = vpack.c.b16 %v2231, %v2230
      %v2250 = vpack.c.b16 %v2233, %v2232
      %v2251 = vpack.c.b16 %v2235, %v2234
      %v2252 = vpack.c.b16 %v2237, %v2236
      %v2253 = vpack.c.b16 %v2239, %v2238
      %v2254 = vpack.c.b16 %v2241, %v2240
      %v2255 = vpack.c.b16 %v2243, %v2242
      %v2257 = vsel %vm547, %v2244, 0
      %v2260 = vsel %vm547, %v2245, 0
      %v2263 = vsel %vm547, %v2246, 0
      %v2266 = vsel %vm547, %v2247, 0
      %v2269 = vsel %vm547, %v2248, 0
      %v2272 = vsel %vm547, %v2249, 0
      %v2275 = vsel %vm547, %v2250, 0
      %v2278 = vsel %vm547, %v2251, 0
      %v2281 = vsel %vm547, %v2252, 0
      %v2284 = vsel %vm547, %v2253, 0
      %v2287 = vsel %vm547, %v2254, 0
      %v2290 = vsel %vm547, %v2255, 0
      %v2293 = vsel %vm584, %v2219, 0
      %2295 = vmatprep.subr.bf16.mxu0 0
      %2296 = vmatpush1.bf16.msra.mxu0 %v2293
      %2297 = vmatprep.subr.bf16.mxu0 0
      %2298 = vmatpush1.bf16.msra.mxu0 0
      %2299 = vmatprep.subr.bf16.mxu0 0
      %2300 = vmatpush1.bf16.msra.mxu0 0
      %2301 = vmatprep.subr.bf16.mxu0 0
      %2302 = vmatpush1.bf16.msra.mxu0 0
      %2303 = vmatprep.subr.bf16.mxu0 0
      %2304 = vmatpush1.bf16.msra.mxu0 0
      %2305 = vmatprep.subr.bf16.mxu0 0
      %2306 = vmatpush1.bf16.msra.mxu0 0
      %2307 = vmatprep.subr.bf16.mxu0 0
      %2308 = vmatpush1.bf16.msra.mxu0 0
      %2309 = vmatprep.subr.bf16.mxu0 0
      %2310 = vmatpush1.bf16.msra.mxu0 0
      %2311 = vmatprep.subr.bf16.mxu0 0
      %2312 = vmatpush1.bf16.msra.mxu0 0
      %2313 = vmatprep.subr.bf16.mxu0 0
      %2314 = vmatpush1.bf16.msra.mxu0 0
      %2315 = vmatprep.subr.bf16.mxu0 0
      %2316 = vmatpush1.bf16.msra.mxu0 0
      %2317 = vmatprep.subr.bf16.mxu0 0
      %2318 = vmatpush1.bf16.msra.mxu0 0
      %2319 = vmatprep.subr.bf16.mxu0 0
      %2320 = vmatpush1.bf16.msra.mxu0 0
      %2321 = vmatprep.subr.bf16.mxu0 0
      %2322 = vmatpush1.bf16.msra.mxu0 0
      %2323 = vmatprep.subr.bf16.mxu0 0
      %2324 = vmatpush1.bf16.msra.mxu0 0
      %2325 = vmatprep.subr.bf16.mxu0 0
      %2326 = vmatpush1.bf16.msra.mxu0 0
      %2327 = vmatprep.mubr.bf16.mxu0 0
      %2328 = vmatmul.mubr.bf16.gmra.mrb[0].mxu0 %v2257
      %v2329 = vpop.f32.mrb[0].mxu0
      %v2330 = vadd.f32 0.0, %v2329
      %v2331 = vpop.f32.mrb[0].mxu0
      %v2332 = vpop.f32.mrb[0].mxu0
      %v2333 = vadd.f32 0.0, %v2332
      %v2334 = vpop.f32.mrb[0].mxu0
      %2335 = vmatprep.mubr.bf16.mxu0 0
      %2336 = vmatmul.mubr.bf16.gmra.mrb[0].mxu0 %v2260
      %v2337 = vpop.f32.mrb[0].mxu0
      %v2338 = vadd.f32 0.0, %v2337
      %v2339 = vpop.f32.mrb[0].mxu0
      %v2340 = vpop.f32.mrb[0].mxu0
      %v2341 = vadd.f32 0.0, %v2340
      %v2342 = vpop.f32.mrb[0].mxu0
      %2343 = vmatprep.mubr.bf16.mxu0 0
      %2344 = vmatmul.mubr.bf16.gmra.mrb[0].mxu0 %v2263
      %v2345 = vpop.f32.mrb[0].mxu0
      %v2346 = vadd.f32 0.0, %v2345
      %v2347 = vpop.f32.mrb[0].mxu0
      %v2348 = vpop.f32.mrb[0].mxu0
      %v2349 = vadd.f32 0.0, %v2348
      %v2350 = vpop.f32.mrb[0].mxu0
      %2351 = vmatprep.mubr.bf16.mxu0 0
      %2352 = vmatmul.mubr.bf16.gmra.mrb[0].mxu0 %v2266
      %v2353 = vpop.f32.mrb[0].mxu0
      %v2354 = vadd.f32 0.0, %v2353
      %v2355 = vpop.f32.mrb[0].mxu0
      %v2356 = vpop.f32.mrb[0].mxu0
      %v2357 = vadd.f32 0.0, %v2356
      %v2358 = vpop.f32.mrb[0].mxu0
      %2359 = vmatprep.mubr.bf16.mxu0 0
      %2360 = vmatmul.mubr.bf16.gmra.mrb[0].mxu0 %v2269
      %v2361 = vpop.f32.mrb[0].mxu0
      %v2362 = vadd.f32 0.0, %v2361
      %v2363 = vpop.f32.mrb[0].mxu0
      %v2364 = vpop.f32.mrb[0].mxu0
      %v2365 = vadd.f32 0.0, %v2364
      %v2366 = vpop.f32.mrb[0].mxu0
      %2367 = vmatprep.mubr.bf16.mxu0 0
      %2368 = vmatmul.mubr.bf16.gmra.mrb[0].mxu0 %v2272
      %v2369 = vpop.f32.mrb[0].mxu0
      %v2370 = vadd.f32 0.0, %v2369
      %v2371 = vpop.f32.mrb[0].mxu0
      %v2372 = vpop.f32.mrb[0].mxu0
      %v2373 = vadd.f32 0.0, %v2372
      %v2374 = vpop.f32.mrb[0].mxu0
      %2375 = vmatprep.mubr.bf16.mxu0 0
      %2376 = vmatmul.mubr.bf16.gmra.mrb[0].mxu0 %v2275
      %v2377 = vpop.f32.mrb[0].mxu0
      %v2378 = vadd.f32 0.0, %v2377
      %v2379 = vpop.f32.mrb[0].mxu0
      %v2380 = vpop.f32.mrb[0].mxu0
      %v2381 = vadd.f32 0.0, %v2380
      %v2382 = vpop.f32.mrb[0].mxu0
      %2383 = vmatprep.mubr.bf16.mxu0 0
      %2384 = vmatmul.mubr.bf16.gmra.mrb[0].mxu0 %v2278
      %v2385 = vpop.f32.mrb[0].mxu0
      %v2386 = vadd.f32 0.0, %v2385
      %v2387 = vpop.f32.mrb[0].mxu0
      %v2388 = vpop.f32.mrb[0].mxu0
      %v2389 = vadd.f32 0.0, %v2388
      %v2390 = vpop.f32.mrb[0].mxu0
      %2391 = vmatprep.mubr.bf16.mxu0 0
      %2392 = vmatmul.mubr.bf16.gmra.mrb[0].mxu0 %v2281
      %v2393 = vpop.f32.mrb[0].mxu0
      %v2394 = vadd.f32 0.0, %v2393
      %v2395 = vpop.f32.mrb[0].mxu0
      %v2396 = vpop.f32.mrb[0].mxu0
      %v2397 = vadd.f32 0.0, %v2396
      %v2398 = vpop.f32.mrb[0].mxu0
      %2399 = vmatprep.mubr.bf16.mxu0 0
      %2400 = vmatmul.mubr.bf16.gmra.mrb[0].mxu0 %v2284
      %v2401 = vpop.f32.mrb[0].mxu0
      %v2402 = vadd.f32 0.0, %v2401
      %v2403 = vpop.f32.mrb[0].mxu0
      %v2404 = vpop.f32.mrb[0].mxu0
      %v2405 = vadd.f32 0.0, %v2404
      %v2406 = vpop.f32.mrb[0].mxu0
      %2407 = vmatprep.mubr.bf16.mxu0 0
      %2408 = vmatmul.mubr.bf16.gmra.mrb[0].mxu0 %v2287
      %v2409 = vpop.f32.mrb[0].mxu0
      %v2410 = vadd.f32 0.0, %v2409
      %v2411 = vpop.f32.mrb[0].mxu0
      %v2412 = vpop.f32.mrb[0].mxu0
      %v2413 = vadd.f32 0.0, %v2412
      %v2414 = vpop.f32.mrb[0].mxu0
      %2415 = vmatprep.mubr.bf16.mxu0 0
      %2416 = vmatmul.mubr.bf16.gmra.mrb[0].mxu0 %v2290
      %v2417 = vpop.f32.mrb[0].mxu0
      %v2418 = vadd.f32 0.0, %v2417
      %v2419 = vpop.f32.mrb[0].mxu0
      %v2420 = vpop.f32.mrb[0].mxu0
      %v2421 = vadd.f32 0.0, %v2420
      %v2422 = vpop.f32.mrb[0].mxu0
      %2423 = vdwg.mxu0
      %v2424 = vadd.f32 %v2074, %v2330
      %v2425 = vadd.f32 %v2075, %v2333
      %v2426 = vadd.f32 %v2076, %v2338
      %v2427 = vadd.f32 %v2077, %v2341
      %v2428 = vadd.f32 %v2078, %v2346
      %v2429 = vadd.f32 %v2079, %v2349
      %v2430 = vadd.f32 %v2080, %v2354
      %v2431 = vadd.f32 %v2081, %v2357
      %v2432 = vadd.f32 %v2082, %v2362
      %v2433 = vadd.f32 %v2083, %v2365
      %v2434 = vadd.f32 %v2084, %v2370
      %v2435 = vadd.f32 %v2085, %v2373
      %v2436 = vadd.f32 %v2086, %v2378
      %v2437 = vadd.f32 %v2087, %v2381
      %v2438 = vadd.f32 %v2088, %v2386
      %v2439 = vadd.f32 %v2089, %v2389
      %v2440 = vadd.f32 %v2090, %v2394
      %v2441 = vadd.f32 %v2091, %v2397
      %v2442 = vadd.f32 %v2092, %v2402
      %v2443 = vadd.f32 %v2093, %v2405
      %v2444 = vadd.f32 %v2094, %v2410
      %v2445 = vadd.f32 %v2095, %v2413
      %v2446 = vadd.f32 %v2096, %v2418
      %v2447 = vadd.f32 %v2097, %v2421
      %s2448 = sadd.s32 %s197, 2
      %s2449 = smul.u32 %s2448, 4
      %s2450 = smul.addr %s2449, 4
      %s2451 = scalar_lea.vmem %s184, %s2450
      %v2452 = vld [vmem:[%s2451] sm:$0xf]
      %v2453 = vld [vmem:[%s2451 + $0x4] sm:$0xf]
      %v2454 = vld [vmem:[%s2451 + $0x8] sm:$0xf]
      %v2455 = vld [vmem:[%s2451 + $0x10] sm:$0xf]
      %v2456 = vld [vmem:[%s2451 + $0x14] sm:$0xf]
      %v2457 = vld [vmem:[%s2451 + $0x18] sm:$0xf]
      %v2458 = vld [vmem:[%s2451 + $0x20] sm:$0xf]
      %v2459 = vld [vmem:[%s2451 + $0x24] sm:$0xf]
      %v2460 = vld [vmem:[%s2451 + $0x28] sm:$0xf]
      %v2461 = vld [vmem:[%s2451 + $0x30] sm:$0xf]
      %v2462 = vld [vmem:[%s2451 + $0x34] sm:$0xf]
      %v2463 = vld [vmem:[%s2451 + $0x38] sm:$0xf]
      %v2464 = vld [vmem:[%s2451 + $0x40] sm:$0xf]
      %v2465 = vld [vmem:[%s2451 + $0x44] sm:$0xf]
      %v2466 = vld [vmem:[%s2451 + $0x48] sm:$0xf]
      %v2467 = vld [vmem:[%s2451 + $0x50] sm:$0xf]
      %v2468 = vld [vmem:[%s2451 + $0x54] sm:$0xf]
      %v2469 = vld [vmem:[%s2451 + $0x58] sm:$0xf]
      %v2470 = vld [vmem:[%s2451 + $0x60] sm:$0xf]
      %v2471 = vld [vmem:[%s2451 + $0x64] sm:$0xf]
      %v2472 = vld [vmem:[%s2451 + $0x68] sm:$0xf]
      %v2473 = vld [vmem:[%s2451 + $0x70] sm:$0xf]
      %v2474 = vld [vmem:[%s2451 + $0x74] sm:$0xf]
      %v2475 = vld [vmem:[%s2451 + $0x78] sm:$0xf]
      %s2476 = scalar_lea.vmem %s1, 12
      %v2477 = vld [vmem:[%s2476] sm:$0x3]
      %v2502 = vunpack.c.l.b16 %v2452
      %v2503 = vunpack.c.l.b16 %v2453
      %v2504 = vunpack.c.l.b16 %v2454
      %v2505 = vunpack.c.l.b16 %v2455
      %v2506 = vunpack.c.l.b16 %v2456
      %v2507 = vunpack.c.l.b16 %v2457
      %v2508 = vunpack.c.l.b16 %v2458
      %v2509 = vunpack.c.l.b16 %v2459
      %v2510 = vunpack.c.l.b16 %v2460
      %v2511 = vunpack.c.l.b16 %v2461
      %v2512 = vunpack.c.l.b16 %v2462
      %v2513 = vunpack.c.l.b16 %v2463
      %v2514 = vunpack.c.l.b16 %v2464
      %v2515 = vunpack.c.l.b16 %v2465
      %v2516 = vunpack.c.l.b16 %v2466
      %v2517 = vunpack.c.l.b16 %v2467
      %v2518 = vunpack.c.l.b16 %v2468
      %v2519 = vunpack.c.l.b16 %v2469
      %v2520 = vunpack.c.l.b16 %v2470
      %v2521 = vunpack.c.l.b16 %v2471
      %v2522 = vunpack.c.l.b16 %v2472
      %v2523 = vunpack.c.l.b16 %v2473
      %v2524 = vunpack.c.l.b16 %v2474
      %v2525 = vunpack.c.l.b16 %v2475
      %v2526 = vpack.c.b16 %v2503, %v2502
      %v2527 = vpack.c.b16 %v2505, %v2504
      %v2528 = vpack.c.b16 %v2507, %v2506
      %v2529 = vpack.c.b16 %v2509, %v2508
      %v2530 = vpack.c.b16 %v2511, %v2510
      %v2531 = vpack.c.b16 %v2513, %v2512
      %v2532 = vpack.c.b16 %v2515, %v2514
      %v2533 = vpack.c.b16 %v2517, %v2516
      %v2534 = vpack.c.b16 %v2519, %v2518
      %v2535 = vpack.c.b16 %v2521, %v2520
      %v2536 = vpack.c.b16 %v2523, %v2522
      %v2537 = vpack.c.b16 %v2525, %v2524
      %v2539 = vsel %vm547, %v2526, 0
      %v2542 = vsel %vm547, %v2527, 0
      %v2545 = vsel %vm547, %v2528, 0
      %v2548 = vsel %vm547, %v2529, 0
      %v2551 = vsel %vm547, %v2530, 0
      %v2554 = vsel %vm547, %v2531, 0
      %v2557 = vsel %vm547, %v2532, 0
      %v2560 = vsel %vm547, %v2533, 0
      %v2563 = vsel %vm547, %v2534, 0
      %v2566 = vsel %vm547, %v2535, 0
      %v2569 = vsel %vm547, %v2536, 0
      %v2572 = vsel %vm547, %v2537, 0
      %v2575 = vsel %vm584, %v2477, 0
      %2577 = vmatprep.subr.bf16.mxu0 0
      %2578 = vmatpush1.bf16.msra.mxu0 %v2575
      %2579 = vmatprep.subr.bf16.mxu0 0
      %2580 = vmatpush1.bf16.msra.mxu0 0
      %2581 = vmatprep.subr.bf16.mxu0 0
      %2582 = vmatpush1.bf16.msra.mxu0 0
      %2583 = vmatprep.subr.bf16.mxu0 0
      %2584 = vmatpush1.bf16.msra.mxu0 0
      %2585 = vmatprep.subr.bf16.mxu0 0
      %2586 = vmatpush1.bf16.msra.mxu0 0
      %2587 = vmatprep.subr.bf16.mxu0 0
      %2588 = vmatpush1.bf16.msra.mxu0 0
      %2589 = vmatprep.subr.bf16.mxu0 0
      %2590 = vmatpush1.bf16.msra.mxu0 0
      %2591 = vmatprep.subr.bf16.mxu0 0
      %2592 = vmatpush1.bf16.msra.mxu0 0
      %2593 = vmatprep.subr.bf16.mxu0 0
      %2594 = vmatpush1.bf16.msra.mxu0 0
      %2595 = vmatprep.subr.bf16.mxu0 0
      %2596 = vmatpush1.bf16.msra.mxu0 0
      %2597 = vmatprep.subr.bf16.mxu0 0
      %2598 = vmatpush1.bf16.msra.mxu0 0
      %2599 = vmatprep.subr.bf16.mxu0 0
      %2600 = vmatpush1.bf16.msra.mxu0 0
      %2601 = vmatprep.subr.bf16.mxu0 0
      %2602 = vmatpush1.bf16.msra.mxu0 0
      %2603 = vmatprep.subr.bf16.mxu0 0
      %2604 = vmatpush1.bf16.msra.mxu0 0
      %2605 = vmatprep.subr.bf16.mxu0 0
      %2606 = vmatpush1.bf16.msra.mxu0 0
      %2607 = vmatprep.subr.bf16.mxu0 0
      %2608 = vmatpush1.bf16.msra.mxu0 0
      %2609 = vmatprep.mubr.bf16.mxu0 0
      %2610 = vmatmul.mubr.bf16.gmra.mrb[0].mxu0 %v2539
      %v2611 = vpop.f32.mrb[0].mxu0
      %v2612 = vadd.f32 0.0, %v2611
      %v2613 = vpop.f32.mrb[0].mxu0
      %v2614 = vpop.f32.mrb[0].mxu0
      %v2615 = vadd.f32 0.0, %v2614
      %v2616 = vpop.f32.mrb[0].mxu0
      %2617 = vmatprep.mubr.bf16.mxu0 0
      %2618 = vmatmul.mubr.bf16.gmra.mrb[0].mxu0 %v2542
      %v2619 = vpop.f32.mrb[0].mxu0
      %v2620 = vadd.f32 0.0, %v2619
      %v2621 = vpop.f32.mrb[0].mxu0
      %v2622 = vpop.f32.mrb[0].mxu0
      %v2623 = vadd.f32 0.0, %v2622
      %v2624 = vpop.f32.mrb[0].mxu0
      %2625 = vmatprep.mubr.bf16.mxu0 0
      %2626 = vmatmul.mubr.bf16.gmra.mrb[0].mxu0 %v2545
      %v2627 = vpop.f32.mrb[0].mxu0
      %v2628 = vadd.f32 0.0, %v2627
      %v2629 = vpop.f32.mrb[0].mxu0
      %v2630 = vpop.f32.mrb[0].mxu0
      %v2631 = vadd.f32 0.0, %v2630
      %v2632 = vpop.f32.mrb[0].mxu0
      %2633 = vmatprep.mubr.bf16.mxu0 0
      %2634 = vmatmul.mubr.bf16.gmra.mrb[0].mxu0 %v2548
      %v2635 = vpop.f32.mrb[0].mxu0
      %v2636 = vadd.f32 0.0, %v2635
      %v2637 = vpop.f32.mrb[0].mxu0
      %v2638 = vpop.f32.mrb[0].mxu0
      %v2639 = vadd.f32 0.0, %v2638
      %v2640 = vpop.f32.mrb[0].mxu0
      %2641 = vmatprep.mubr.bf16.mxu0 0
      %2642 = vmatmul.mubr.bf16.gmra.mrb[0].mxu0 %v2551
      %v2643 = vpop.f32.mrb[0].mxu0
      %v2644 = vadd.f32 0.0, %v2643
      %v2645 = vpop.f32.mrb[0].mxu0
      %v2646 = vpop.f32.mrb[0].mxu0
      %v2647 = vadd.f32 0.0, %v2646
      %v2648 = vpop.f32.mrb[0].mxu0
      %2649 = vmatprep.mubr.bf16.mxu0 0
      %2650 = vmatmul.mubr.bf16.gmra.mrb[0].mxu0 %v2554
      %v2651 = vpop.f32.mrb[0].mxu0
      %v2652 = vadd.f32 0.0, %v2651
      %v2653 = vpop.f32.mrb[0].mxu0
      %v2654 = vpop.f32.mrb[0].mxu0
      %v2655 = vadd.f32 0.0, %v2654
      %v2656 = vpop.f32.mrb[0].mxu0
      %2657 = vmatprep.mubr.bf16.mxu0 0
      %2658 = vmatmul.mubr.bf16.gmra.mrb[0].mxu0 %v2557
      %v2659 = vpop.f32.mrb[0].mxu0
      %v2660 = vadd.f32 0.0, %v2659
      %v2661 = vpop.f32.mrb[0].mxu0
      %v2662 = vpop.f32.mrb[0].mxu0
      %v2663 = vadd.f32 0.0, %v2662
      %v2664 = vpop.f32.mrb[0].mxu0
      %2665 = vmatprep.mubr.bf16.mxu0 0
      %2666 = vmatmul.mubr.bf16.gmra.mrb[0].mxu0 %v2560
      %v2667 = vpop.f32.mrb[0].mxu0
      %v2668 = vadd.f32 0.0, %v2667
      %v2669 = vpop.f32.mrb[0].mxu0
      %v2670 = vpop.f32.mrb[0].mxu0
      %v2671 = vadd.f32 0.0, %v2670
      %v2672 = vpop.f32.mrb[0].mxu0
      %2673 = vmatprep.mubr.bf16.mxu0 0
      %2674 = vmatmul.mubr.bf16.gmra.mrb[0].mxu0 %v2563
      %v2675 = vpop.f32.mrb[0].mxu0
      %v2676 = vadd.f32 0.0, %v2675
      %v2677 = vpop.f32.mrb[0].mxu0
      %v2678 = vpop.f32.mrb[0].mxu0
      %v2679 = vadd.f32 0.0, %v2678
      %v2680 = vpop.f32.mrb[0].mxu0
      %2681 = vmatprep.mubr.bf16.mxu0 0
      %2682 = vmatmul.mubr.bf16.gmra.mrb[0].mxu0 %v2566
      %v2683 = vpop.f32.mrb[0].mxu0
      %v2684 = vadd.f32 0.0, %v2683
      %v2685 = vpop.f32.mrb[0].mxu0
      %v2686 = vpop.f32.mrb[0].mxu0
      %v2687 = vadd.f32 0.0, %v2686
      %v2688 = vpop.f32.mrb[0].mxu0
      %2689 = vmatprep.mubr.bf16.mxu0 0
      %2690 = vmatmul.mubr.bf16.gmra.mrb[0].mxu0 %v2569
      %v2691 = vpop.f32.mrb[0].mxu0
      %v2692 = vadd.f32 0.0, %v2691
      %v2693 = vpop.f32.mrb[0].mxu0
      %v2694 = vpop.f32.mrb[0].mxu0
      %v2695 = vadd.f32 0.0, %v2694
      %v2696 = vpop.f32.mrb[0].mxu0
      %2697 = vmatprep.mubr.bf16.mxu0 0
      %2698 = vmatmul.mubr.bf16.gmra.mrb[0].mxu0 %v2572
      %v2699 = vpop.f32.mrb[0].mxu0
      %v2700 = vadd.f32 0.0, %v2699
      %v2701 = vpop.f32.mrb[0].mxu0
      %v2702 = vpop.f32.mrb[0].mxu0
      %v2703 = vadd.f32 0.0, %v2702
      %v2704 = vpop.f32.mrb[0].mxu0
      %2705 = vdwg.mxu0
      %v2706 = vadd.f32 %v2424, %v2612
      %v2707 = vadd.f32 %v2425, %v2615
      %v2708 = vadd.f32 %v2426, %v2620
      %v2709 = vadd.f32 %v2427, %v2623
      %v2710 = vadd.f32 %v2428, %v2628
      %v2711 = vadd.f32 %v2429, %v2631
      %v2712 = vadd.f32 %v2430, %v2636
      %v2713 = vadd.f32 %v2431, %v2639
      %v2714 = vadd.f32 %v2432, %v2644
      %v2715 = vadd.f32 %v2433, %v2647
      %v2716 = vadd.f32 %v2434, %v2652
      %v2717 = vadd.f32 %v2435, %v2655
      %v2718 = vadd.f32 %v2436, %v2660
      %v2719 = vadd.f32 %v2437, %v2663
      %v2720 = vadd.f32 %v2438, %v2668
      %v2721 = vadd.f32 %v2439, %v2671
      %v2722 = vadd.f32 %v2440, %v2676
      %v2723 = vadd.f32 %v2441, %v2679
      %v2724 = vadd.f32 %v2442, %v2684
      %v2725 = vadd.f32 %v2443, %v2687
      %v2726 = vadd.f32 %v2444, %v2692
      %v2727 = vadd.f32 %v2445, %v2695
      %v2728 = vadd.f32 %v2446, %v2700
      %v2729 = vadd.f32 %v2447, %v2703
      %v2730 = vld [vmem:[%s2451] sm:$0xf]
      %v2731 = vld [vmem:[%s2451 + $0x4] sm:$0xf]
      %v2732 = vld [vmem:[%s2451 + $0x8] sm:$0xf]
      %v2733 = vld [vmem:[%s2451 + $0xc] sm:$0x1]
      %v2734 = vld [vmem:[%s2451 + $0x10] sm:$0xf]
      %v2735 = vld [vmem:[%s2451 + $0x14] sm:$0xf]
      %v2736 = vld [vmem:[%s2451 + $0x18] sm:$0xf]
      %v2737 = vld [vmem:[%s2451 + $0x1c] sm:$0x1]
      %v2738 = vld [vmem:[%s2451 + $0x20] sm:$0xf]
      %v2739 = vld [vmem:[%s2451 + $0x24] sm:$0xf]
      %v2740 = vld [vmem:[%s2451 + $0x28] sm:$0xf]
      %v2741 = vld [vmem:[%s2451 + $0x2c] sm:$0x1]
      %v2742 = vld [vmem:[%s2451 + $0x30] sm:$0xf]
      %v2743 = vld [vmem:[%s2451 + $0x34] sm:$0xf]
      %v2744 = vld [vmem:[%s2451 + $0x38] sm:$0xf]
      %v2745 = vld [vmem:[%s2451 + $0x3c] sm:$0x1]
      %v2746 = vld [vmem:[%s2451 + $0x40] sm:$0xf]
      %v2747 = vld [vmem:[%s2451 + $0x44] sm:$0xf]
      %v2748 = vld [vmem:[%s2451 + $0x48] sm:$0xf]
      %v2749 = vld [vmem:[%s2451 + $0x4c] sm:$0x1]
      %v2750 = vld [vmem:[%s2451 + $0x50] sm:$0xf]
      %v2751 = vld [vmem:[%s2451 + $0x54] sm:$0xf]
      %v2752 = vld [vmem:[%s2451 + $0x58] sm:$0xf]
      %v2753 = vld [vmem:[%s2451 + $0x5c] sm:$0x1]
      %v2754 = vld [vmem:[%s2451 + $0x60] sm:$0xf]
      %v2755 = vld [vmem:[%s2451 + $0x64] sm:$0xf]
      %v2756 = vld [vmem:[%s2451 + $0x68] sm:$0xf]
      %v2757 = vld [vmem:[%s2451 + $0x6c] sm:$0x1]
      %v2758 = vld [vmem:[%s2451 + $0x70] sm:$0xf]
      %v2759 = vld [vmem:[%s2451 + $0x74] sm:$0xf]
      %v2760 = vld [vmem:[%s2451 + $0x78] sm:$0xf]
      %v2761 = vld [vmem:[%s2451 + $0x7c] sm:$0x1]
      %v2763 = vshrl.u32 %v2730, 16
      %v2765 = vrot.slane %v2763, 4
      %v2766 = vshll.u32 %v2730, 16
      %v2768 = vrot.slane %v2766, 5
      %v2769 = vor.u32 %v2765, %v2768
      %v2770 = vrot.slane %v2769, 4
      %v2772 = vshll.u32 %v2731, 16
      %v2774 = vrot.slane %v2772, 5
      %v2775 = vsel %vm236, %v2770, %v2774
      %v2776 = vshrl.u32 %v2731, 16
      %v2778 = vrot.slane %v2776, 4
      %v2779 = vor.u32 %v2778, %v2774
      %v2780 = vrot.slane %v2779, 4
      %v2782 = vshll.u32 %v2732, 16
      %v2784 = vrot.slane %v2782, 5
      %v2785 = vsel %vm236, %v2780, %v2784
      %v2786 = vshrl.u32 %v2732, 16
      %v2788 = vrot.slane %v2786, 4
      %v2789 = vor.u32 %v2788, %v2784
      %v2790 = vrot.slane %v2789, 4
      %v2792 = vshll.u32 %v2733, 16
      %v2794 = vrot.slane %v2792, 5
      %v2795 = vsel %vm236, %v2790, %v2794
      %v2797 = vshrl.u32 %v2734, 16
      %v2799 = vrot.slane %v2797, 4
      %v2800 = vshll.u32 %v2734, 16
      %v2802 = vrot.slane %v2800, 5
      %v2803 = vor.u32 %v2799, %v2802
      %v2804 = vrot.slane %v2803, 4
      %v2806 = vshll.u32 %v2735, 16
      %v2808 = vrot.slane %v2806, 5
      %v2809 = vsel %vm236, %v2804, %v2808
      %v2810 = vshrl.u32 %v2735, 16
      %v2812 = vrot.slane %v2810, 4
      %v2813 = vor.u32 %v2812, %v2808
      %v2814 = vrot.slane %v2813, 4
      %v2816 = vshll.u32 %v2736, 16
      %v2818 = vrot.slane %v2816, 5
      %v2819 = vsel %vm236, %v2814, %v2818
      %v2820 = vshrl.u32 %v2736, 16
      %v2822 = vrot.slane %v2820, 4
      %v2823 = vor.u32 %v2822, %v2818
      %v2824 = vrot.slane %v2823, 4
      %v2826 = vshll.u32 %v2737, 16
      %v2828 = vrot.slane %v2826, 5
      %v2829 = vsel %vm236, %v2824, %v2828
      %v2831 = vshrl.u32 %v2738, 16
      %v2833 = vrot.slane %v2831, 4
      %v2834 = vshll.u32 %v2738, 16
      %v2836 = vrot.slane %v2834, 5
      %v2837 = vor.u32 %v2833, %v2836
      %v2838 = vrot.slane %v2837, 4
      %v2840 = vshll.u32 %v2739, 16
      %v2842 = vrot.slane %v2840, 5
      %v2843 = vsel %vm236, %v2838, %v2842
      %v2844 = vshrl.u32 %v2739, 16
      %v2846 = vrot.slane %v2844, 4
      %v2847 = vor.u32 %v2846, %v2842
      %v2848 = vrot.slane %v2847, 4
      %v2850 = vshll.u32 %v2740, 16
      %v2852 = vrot.slane %v2850, 5
      %v2853 = vsel %vm236, %v2848, %v2852
      %v2854 = vshrl.u32 %v2740, 16
      %v2856 = vrot.slane %v2854, 4
      %v2857 = vor.u32 %v2856, %v2852
      %v2858 = vrot.slane %v2857, 4
      %v2860 = vshll.u32 %v2741, 16
      %v2862 = vrot.slane %v2860, 5
      %v2863 = vsel %vm236, %v2858, %v2862
      %v2865 = vshrl.u32 %v2742, 16
      %v2867 = vrot.slane %v2865, 4
      %v2868 = vshll.u32 %v2742, 16
      %v2870 = vrot.slane %v2868, 5
      %v2871 = vor.u32 %v2867, %v2870
      %v2872 = vrot.slane %v2871, 4
      %v2874 = vshll.u32 %v2743, 16
      %v2876 = vrot.slane %v2874, 5
      %v2877 = vsel %vm236, %v2872, %v2876
      %v2878 = vshrl.u32 %v2743, 16
      %v2880 = vrot.slane %v2878, 4
      %v2881 = vor.u32 %v2880, %v2876
      %v2882 = vrot.slane %v2881, 4
      %v2884 = vshll.u32 %v2744, 16
      %v2886 = vrot.slane %v2884, 5
      %v2887 = vsel %vm236, %v2882, %v2886
      %v2888 = vshrl.u32 %v2744, 16
      %v2890 = vrot.slane %v2888, 4
      %v2891 = vor.u32 %v2890, %v2886
      %v2892 = vrot.slane %v2891, 4
      %v2894 = vshll.u32 %v2745, 16
      %v2896 = vrot.slane %v2894, 5
      %v2897 = vsel %vm236, %v2892, %v2896
      %v2899 = vshrl.u32 %v2746, 16
      %v2901 = vrot.slane %v2899, 4
      %v2902 = vshll.u32 %v2746, 16
      %v2904 = vrot.slane %v2902, 5
      %v2905 = vor.u32 %v2901, %v2904
      %v2906 = vrot.slane %v2905, 4
      %v2908 = vshll.u32 %v2747, 16
      %v2910 = vrot.slane %v2908, 5
      %v2911 = vsel %vm236, %v2906, %v2910
      %v2912 = vshrl.u32 %v2747, 16
      %v2914 = vrot.slane %v2912, 4
      %v2915 = vor.u32 %v2914, %v2910
      %v2916 = vrot.slane %v2915, 4
      %v2918 = vshll.u32 %v2748, 16
      %v2920 = vrot.slane %v2918, 5
      %v2921 = vsel %vm236, %v2916, %v2920
      %v2922 = vshrl.u32 %v2748, 16
      %v2924 = vrot.slane %v2922, 4
      %v2925 = vor.u32 %v2924, %v2920
      %v2926 = vrot.slane %v2925, 4
      %v2928 = vshll.u32 %v2749, 16
      %v2930 = vrot.slane %v2928, 5
      %v2931 = vsel %vm236, %v2926, %v2930
      %v2933 = vshrl.u32 %v2750, 16
      %v2935 = vrot.slane %v2933, 4
      %v2936 = vshll.u32 %v2750, 16
      %v2938 = vrot.slane %v2936, 5
      %v2939 = vor.u32 %v2935, %v2938
      %v2940 = vrot.slane %v2939, 4
      %v2942 = vshll.u32 %v2751, 16
      %v2944 = vrot.slane %v2942, 5
      %v2945 = vsel %vm236, %v2940, %v2944
      %v2946 = vshrl.u32 %v2751, 16
      %v2948 = vrot.slane %v2946, 4
      %v2949 = vor.u32 %v2948, %v2944
      %v2950 = vrot.slane %v2949, 4
      %v2952 = vshll.u32 %v2752, 16
      %v2954 = vrot.slane %v2952, 5
      %v2955 = vsel %vm236, %v2950, %v2954
      %v2956 = vshrl.u32 %v2752, 16
      %v2958 = vrot.slane %v2956, 4
      %v2959 = vor.u32 %v2958, %v2954
      %v2960 = vrot.slane %v2959, 4
      %v2962 = vshll.u32 %v2753, 16
      %v2964 = vrot.slane %v2962, 5
      %v2965 = vsel %vm236, %v2960, %v2964
      %v2967 = vshrl.u32 %v2754, 16
      %v2969 = vrot.slane %v2967, 4
      %v2970 = vshll.u32 %v2754, 16
      %v2972 = vrot.slane %v2970, 5
      %v2973 = vor.u32 %v2969, %v2972
      %v2974 = vrot.slane %v2973, 4
      %v2976 = vshll.u32 %v2755, 16
      %v2978 = vrot.slane %v2976, 5
      %v2979 = vsel %vm236, %v2974, %v2978
      %v2980 = vshrl.u32 %v2755, 16
      %v2982 = vrot.slane %v2980, 4
      %v2983 = vor.u32 %v2982, %v2978
      %v2984 = vrot.slane %v2983, 4
      %v2986 = vshll.u32 %v2756, 16
      %v2988 = vrot.slane %v2986, 5
      %v2989 = vsel %vm236, %v2984, %v2988
      %v2990 = vshrl.u32 %v2756, 16
      %v2992 = vrot.slane %v2990, 4
      %v2993 = vor.u32 %v2992, %v2988
      %v2994 = vrot.slane %v2993, 4
      %v2996 = vshll.u32 %v2757, 16
      %v2998 = vrot.slane %v2996, 5
      %v2999 = vsel %vm236, %v2994, %v2998
      %v3001 = vshrl.u32 %v2758, 16
      %v3003 = vrot.slane %v3001, 4
      %v3004 = vshll.u32 %v2758, 16
      %v3006 = vrot.slane %v3004, 5
      %v3007 = vor.u32 %v3003, %v3006
      %v3008 = vrot.slane %v3007, 4
      %v3010 = vshll.u32 %v2759, 16
      %v3012 = vrot.slane %v3010, 5
      %v3013 = vsel %vm236, %v3008, %v3012
      %v3014 = vshrl.u32 %v2759, 16
      %v3016 = vrot.slane %v3014, 4
      %v3017 = vor.u32 %v3016, %v3012
      %v3018 = vrot.slane %v3017, 4
      %v3020 = vshll.u32 %v2760, 16
      %v3022 = vrot.slane %v3020, 5
      %v3023 = vsel %vm236, %v3018, %v3022
      %v3024 = vshrl.u32 %v2760, 16
      %v3026 = vrot.slane %v3024, 4
      %v3027 = vor.u32 %v3026, %v3022
      %v3028 = vrot.slane %v3027, 4
      %v3030 = vshll.u32 %v2761, 16
      %v3032 = vrot.slane %v3030, 5
      %v3033 = vsel %vm236, %v3028, %v3032
      %s3034 = scalar_lea.vmem %s1, 14
      %v3035 = vld [vmem:[%s3034] sm:$0x3]
      %v3036 = vunpack.c.l.b16 %v2775
      %v3037 = vunpack.c.l.b16 %v2785
      %v3038 = vunpack.c.l.b16 %v2795
      %v3039 = vunpack.c.l.b16 %v2809
      %v3040 = vunpack.c.l.b16 %v2819
      %v3041 = vunpack.c.l.b16 %v2829
      %v3042 = vunpack.c.l.b16 %v2843
      %v3043 = vunpack.c.l.b16 %v2853
      %v3044 = vunpack.c.l.b16 %v2863
      %v3045 = vunpack.c.l.b16 %v2877
      %v3046 = vunpack.c.l.b16 %v2887
      %v3047 = vunpack.c.l.b16 %v2897
      %v3048 = vunpack.c.l.b16 %v2911
      %v3049 = vunpack.c.l.b16 %v2921
      %v3050 = vunpack.c.l.b16 %v2931
      %v3051 = vunpack.c.l.b16 %v2945
      %v3052 = vunpack.c.l.b16 %v2955
      %v3053 = vunpack.c.l.b16 %v2965
      %v3054 = vunpack.c.l.b16 %v2979
      %v3055 = vunpack.c.l.b16 %v2989
      %v3056 = vunpack.c.l.b16 %v2999
      %v3057 = vunpack.c.l.b16 %v3013
      %v3058 = vunpack.c.l.b16 %v3023
      %v3059 = vunpack.c.l.b16 %v3033
      %v3060 = vpack.c.b16 %v3037, %v3036
      %v3061 = vpack.c.b16 %v3039, %v3038
      %v3062 = vpack.c.b16 %v3041, %v3040
      %v3063 = vpack.c.b16 %v3043, %v3042
      %v3064 = vpack.c.b16 %v3045, %v3044
      %v3065 = vpack.c.b16 %v3047, %v3046
      %v3066 = vpack.c.b16 %v3049, %v3048
      %v3067 = vpack.c.b16 %v3051, %v3050
      %v3068 = vpack.c.b16 %v3053, %v3052
      %v3069 = vpack.c.b16 %v3055, %v3054
      %v3070 = vpack.c.b16 %v3057, %v3056
      %v3071 = vpack.c.b16 %v3059, %v3058
      %v3073 = vsel %vm547, %v3060, 0
      %v3076 = vsel %vm547, %v3061, 0
      %v3079 = vsel %vm547, %v3062, 0
      %v3082 = vsel %vm547, %v3063, 0
      %v3085 = vsel %vm547, %v3064, 0
      %v3088 = vsel %vm547, %v3065, 0
      %v3091 = vsel %vm547, %v3066, 0
      %v3094 = vsel %vm547, %v3067, 0
      %v3097 = vsel %vm547, %v3068, 0
      %v3100 = vsel %vm547, %v3069, 0
      %v3103 = vsel %vm547, %v3070, 0
      %v3106 = vsel %vm547, %v3071, 0
      %v3109 = vsel %vm584, %v3035, 0
      %3111 = vmatprep.subr.bf16.mxu0 0
      %3112 = vmatpush1.bf16.msra.mxu0 %v3109
      %3113 = vmatprep.subr.bf16.mxu0 0
      %3114 = vmatpush1.bf16.msra.mxu0 0
      %3115 = vmatprep.subr.bf16.mxu0 0
      %3116 = vmatpush1.bf16.msra.mxu0 0
      %3117 = vmatprep.subr.bf16.mxu0 0
      %3118 = vmatpush1.bf16.msra.mxu0 0
      %3119 = vmatprep.subr.bf16.mxu0 0
      %3120 = vmatpush1.bf16.msra.mxu0 0
      %3121 = vmatprep.subr.bf16.mxu0 0
      %3122 = vmatpush1.bf16.msra.mxu0 0
      %3123 = vmatprep.subr.bf16.mxu0 0
      %3124 = vmatpush1.bf16.msra.mxu0 0
      %3125 = vmatprep.subr.bf16.mxu0 0
      %3126 = vmatpush1.bf16.msra.mxu0 0
      %3127 = vmatprep.subr.bf16.mxu0 0
      %3128 = vmatpush1.bf16.msra.mxu0 0
      %3129 = vmatprep.subr.bf16.mxu0 0
      %3130 = vmatpush1.bf16.msra.mxu0 0
      %3131 = vmatprep.subr.bf16.mxu0 0
      %3132 = vmatpush1.bf16.msra.mxu0 0
      %3133 = vmatprep.subr.bf16.mxu0 0
      %3134 = vmatpush1.bf16.msra.mxu0 0
      %3135 = vmatprep.subr.bf16.mxu0 0
      %3136 = vmatpush1.bf16.msra.mxu0 0
      %3137 = vmatprep.subr.bf16.mxu0 0
      %3138 = vmatpush1.bf16.msra.mxu0 0
      %3139 = vmatprep.subr.bf16.mxu0 0
      %3140 = vmatpush1.bf16.msra.mxu0 0
      %3141 = vmatprep.subr.bf16.mxu0 0
      %3142 = vmatpush1.bf16.msra.mxu0 0
      %3143 = vmatprep.mubr.bf16.mxu0 0
      %3144 = vmatmul.mubr.bf16.gmra.mrb[0].mxu0 %v3073
      %v3145 = vpop.f32.mrb[0].mxu0
      %v3146 = vadd.f32 0.0, %v3145
      %v3147 = vpop.f32.mrb[0].mxu0
      %v3148 = vpop.f32.mrb[0].mxu0
      %v3149 = vadd.f32 0.0, %v3148
      %v3150 = vpop.f32.mrb[0].mxu0
      %3151 = vmatprep.mubr.bf16.mxu0 0
      %3152 = vmatmul.mubr.bf16.gmra.mrb[0].mxu0 %v3076
      %v3153 = vpop.f32.mrb[0].mxu0
      %v3154 = vadd.f32 0.0, %v3153
      %v3155 = vpop.f32.mrb[0].mxu0
      %v3156 = vpop.f32.mrb[0].mxu0
      %v3157 = vadd.f32 0.0, %v3156
      %v3158 = vpop.f32.mrb[0].mxu0
      %3159 = vmatprep.mubr.bf16.mxu0 0
      %3160 = vmatmul.mubr.bf16.gmra.mrb[0].mxu0 %v3079
      %v3161 = vpop.f32.mrb[0].mxu0
      %v3162 = vadd.f32 0.0, %v3161
      %v3163 = vpop.f32.mrb[0].mxu0
      %v3164 = vpop.f32.mrb[0].mxu0
      %v3165 = vadd.f32 0.0, %v3164
      %v3166 = vpop.f32.mrb[0].mxu0
      %3167 = vmatprep.mubr.bf16.mxu0 0
      %3168 = vmatmul.mubr.bf16.gmra.mrb[0].mxu0 %v3082
      %v3169 = vpop.f32.mrb[0].mxu0
      %v3170 = vadd.f32 0.0, %v3169
      %v3171 = vpop.f32.mrb[0].mxu0
      %v3172 = vpop.f32.mrb[0].mxu0
      %v3173 = vadd.f32 0.0, %v3172
      %v3174 = vpop.f32.mrb[0].mxu0
      %3175 = vmatprep.mubr.bf16.mxu0 0
      %3176 = vmatmul.mubr.bf16.gmra.mrb[0].mxu0 %v3085
      %v3177 = vpop.f32.mrb[0].mxu0
      %v3178 = vadd.f32 0.0, %v3177
      %v3179 = vpop.f32.mrb[0].mxu0
      %v3180 = vpop.f32.mrb[0].mxu0
      %v3181 = vadd.f32 0.0, %v3180
      %v3182 = vpop.f32.mrb[0].mxu0
      %3183 = vmatprep.mubr.bf16.mxu0 0
      %3184 = vmatmul.mubr.bf16.gmra.mrb[0].mxu0 %v3088
      %v3185 = vpop.f32.mrb[0].mxu0
      %v3186 = vadd.f32 0.0, %v3185
      %v3187 = vpop.f32.mrb[0].mxu0
      %v3188 = vpop.f32.mrb[0].mxu0
      %v3189 = vadd.f32 0.0, %v3188
      %v3190 = vpop.f32.mrb[0].mxu0
      %3191 = vmatprep.mubr.bf16.mxu0 0
      %3192 = vmatmul.mubr.bf16.gmra.mrb[0].mxu0 %v3091
      %v3193 = vpop.f32.mrb[0].mxu0
      %v3194 = vadd.f32 0.0, %v3193
      %v3195 = vpop.f32.mrb[0].mxu0
      %v3196 = vpop.f32.mrb[0].mxu0
      %v3197 = vadd.f32 0.0, %v3196
      %v3198 = vpop.f32.mrb[0].mxu0
      %3199 = vmatprep.mubr.bf16.mxu0 0
      %3200 = vmatmul.mubr.bf16.gmra.mrb[0].mxu0 %v3094
      %v3201 = vpop.f32.mrb[0].mxu0
      %v3202 = vadd.f32 0.0, %v3201
      %v3203 = vpop.f32.mrb[0].mxu0
      %v3204 = vpop.f32.mrb[0].mxu0
      %v3205 = vadd.f32 0.0, %v3204
      %v3206 = vpop.f32.mrb[0].mxu0
      %3207 = vmatprep.mubr.bf16.mxu0 0
      %3208 = vmatmul.mubr.bf16.gmra.mrb[0].mxu0 %v3097
      %v3209 = vpop.f32.mrb[0].mxu0
      %v3210 = vadd.f32 0.0, %v3209
      %v3211 = vpop.f32.mrb[0].mxu0
      %v3212 = vpop.f32.mrb[0].mxu0
      %v3213 = vadd.f32 0.0, %v3212
      %v3214 = vpop.f32.mrb[0].mxu0
      %3215 = vmatprep.mubr.bf16.mxu0 0
      %3216 = vmatmul.mubr.bf16.gmra.mrb[0].mxu0 %v3100
      %v3217 = vpop.f32.mrb[0].mxu0
      %v3218 = vadd.f32 0.0, %v3217
      %v3219 = vpop.f32.mrb[0].mxu0
      %v3220 = vpop.f32.mrb[0].mxu0
      %v3221 = vadd.f32 0.0, %v3220
      %v3222 = vpop.f32.mrb[0].mxu0
      %3223 = vmatprep.mubr.bf16.mxu0 0
      %3224 = vmatmul.mubr.bf16.gmra.mrb[0].mxu0 %v3103
      %v3225 = vpop.f32.mrb[0].mxu0
      %v3226 = vadd.f32 0.0, %v3225
      %v3227 = vpop.f32.mrb[0].mxu0
      %v3228 = vpop.f32.mrb[0].mxu0
      %v3229 = vadd.f32 0.0, %v3228
      %v3230 = vpop.f32.mrb[0].mxu0
      %3231 = vmatprep.mubr.bf16.mxu0 0
      %3232 = vmatmul.mubr.bf16.gmra.mrb[0].mxu0 %v3106
      %v3233 = vpop.f32.mrb[0].mxu0
      %v3234 = vadd.f32 0.0, %v3233
      %v3235 = vpop.f32.mrb[0].mxu0
      %v3236 = vpop.f32.mrb[0].mxu0
      %v3237 = vadd.f32 0.0, %v3236
      %v3238 = vpop.f32.mrb[0].mxu0
      %3239 = vdwg.mxu0
      %v3240 = vadd.f32 %v2706, %v3146
      %v3241 = vadd.f32 %v2707, %v3149
      %v3242 = vadd.f32 %v2708, %v3154
      %v3243 = vadd.f32 %v2709, %v3157
      %v3244 = vadd.f32 %v2710, %v3162
      %v3245 = vadd.f32 %v2711, %v3165
      %v3246 = vadd.f32 %v2712, %v3170
      %v3247 = vadd.f32 %v2713, %v3173
      %v3248 = vadd.f32 %v2714, %v3178
      %v3249 = vadd.f32 %v2715, %v3181
      %v3250 = vadd.f32 %v2716, %v3186
      %v3251 = vadd.f32 %v2717, %v3189
      %v3252 = vadd.f32 %v2718, %v3194
      %v3253 = vadd.f32 %v2719, %v3197
      %v3254 = vadd.f32 %v2720, %v3202
      %v3255 = vadd.f32 %v2721, %v3205
      %v3256 = vadd.f32 %v2722, %v3210
      %v3257 = vadd.f32 %v2723, %v3213
      %v3258 = vadd.f32 %v2724, %v3218
      %v3259 = vadd.f32 %v2725, %v3221
      %v3260 = vadd.f32 %v2726, %v3226
      %v3261 = vadd.f32 %v2727, %v3229
      %v3262 = vadd.f32 %v2728, %v3234
      %v3263 = vadd.f32 %v2729, %v3237
      %v3264 = vld [vmem:[%s2451] sm:$0xe]
      %v3265 = vld [vmem:[%s2451 + $0x10] sm:$0xe]
      %v3266 = vld [vmem:[%s2451 + $0x20] sm:$0xe]
      %v3267 = vld [vmem:[%s2451 + $0x30] sm:$0xe]
      %v3268 = vld [vmem:[%s2451 + $0x40] sm:$0xe]
      %v3269 = vld [vmem:[%s2451 + $0x50] sm:$0xe]
      %v3270 = vld [vmem:[%s2451 + $0x60] sm:$0xe]
      %v3271 = vld [vmem:[%s2451 + $0x70] sm:$0xe]
      %v3304 = vrot.slane %v3264, 5
      %v3305 = vrot.slane %v3304, 4
      %v3306 = vrot.slane %v2731, 5
      %v3307 = vsel %vm971, %v3305, %v3306
      %v3308 = vrot.slane %v3306, 4
      %v3309 = vrot.slane %v2732, 5
      %v3310 = vsel %vm971, %v3308, %v3309
      %v3311 = vrot.slane %v3309, 4
      %v3312 = vrot.slane %v2733, 5
      %v3313 = vsel %vm971, %v3311, %v3312
      %v3314 = vrot.slane %v3265, 5
      %v3315 = vrot.slane %v3314, 4
      %v3316 = vrot.slane %v2735, 5
      %v3317 = vsel %vm971, %v3315, %v3316
      %v3318 = vrot.slane %v3316, 4
      %v3319 = vrot.slane %v2736, 5
      %v3320 = vsel %vm971, %v3318, %v3319
      %v3321 = vrot.slane %v3319, 4
      %v3322 = vrot.slane %v2737, 5
      %v3323 = vsel %vm971, %v3321, %v3322
      %v3324 = vrot.slane %v3266, 5
      %v3325 = vrot.slane %v3324, 4
      %v3326 = vrot.slane %v2739, 5
      %v3327 = vsel %vm971, %v3325, %v3326
      %v3328 = vrot.slane %v3326, 4
      %v3329 = vrot.slane %v2740, 5
      %v3330 = vsel %vm971, %v3328, %v3329
      %v3331 = vrot.slane %v3329, 4
      %v3332 = vrot.slane %v2741, 5
      %v3333 = vsel %vm971, %v3331, %v3332
      %v3334 = vrot.slane %v3267, 5
      %v3335 = vrot.slane %v3334, 4
      %v3336 = vrot.slane %v2743, 5
      %v3337 = vsel %vm971, %v3335, %v3336
      %v3338 = vrot.slane %v3336, 4
      %v3339 = vrot.slane %v2744, 5
      %v3340 = vsel %vm971, %v3338, %v3339
      %v3341 = vrot.slane %v3339, 4
      %v3342 = vrot.slane %v2745, 5
      %v3343 = vsel %vm971, %v3341, %v3342
      %v3344 = vrot.slane %v3268, 5
      %v3345 = vrot.slane %v3344, 4
      %v3346 = vrot.slane %v2747, 5
      %v3347 = vsel %vm971, %v3345, %v3346
      %v3348 = vrot.slane %v3346, 4
      %v3349 = vrot.slane %v2748, 5
      %v3350 = vsel %vm971, %v3348, %v3349
      %v3351 = vrot.slane %v3349, 4
      %v3352 = vrot.slane %v2749, 5
      %v3353 = vsel %vm971, %v3351, %v3352
      %v3354 = vrot.slane %v3269, 5
      %v3355 = vrot.slane %v3354, 4
      %v3356 = vrot.slane %v2751, 5
      %v3357 = vsel %vm971, %v3355, %v3356
      %v3358 = vrot.slane %v3356, 4
      %v3359 = vrot.slane %v2752, 5
      %v3360 = vsel %vm971, %v3358, %v3359
      %v3361 = vrot.slane %v3359, 4
      %v3362 = vrot.slane %v2753, 5
      %v3363 = vsel %vm971, %v3361, %v3362
      %v3364 = vrot.slane %v3270, 5
      %v3365 = vrot.slane %v3364, 4
      %v3366 = vrot.slane %v2755, 5
      %v3367 = vsel %vm971, %v3365, %v3366
      %v3368 = vrot.slane %v3366, 4
      %v3369 = vrot.slane %v2756, 5
      %v3370 = vsel %vm971, %v3368, %v3369
      %v3371 = vrot.slane %v3369, 4
      %v3372 = vrot.slane %v2757, 5
      %v3373 = vsel %vm971, %v3371, %v3372
      %v3374 = vrot.slane %v3271, 5
      %v3375 = vrot.slane %v3374, 4
      %v3376 = vrot.slane %v2759, 5
      %v3377 = vsel %vm971, %v3375, %v3376
      %v3378 = vrot.slane %v3376, 4
      %v3379 = vrot.slane %v2760, 5
      %v3380 = vsel %vm971, %v3378, %v3379
      %v3381 = vrot.slane %v3379, 4
      %v3382 = vrot.slane %v2761, 5
      %v3383 = vsel %vm971, %v3381, %v3382
      %s3384 = scalar_lea.vmem %s1, 16
      %v3385 = vld [vmem:[%s3384] sm:$0x3]
      %v3386 = vunpack.c.l.b16 %v3307
      %v3387 = vunpack.c.l.b16 %v3310
      %v3388 = vunpack.c.l.b16 %v3313
      %v3389 = vunpack.c.l.b16 %v3317
      %v3390 = vunpack.c.l.b16 %v3320
      %v3391 = vunpack.c.l.b16 %v3323
      %v3392 = vunpack.c.l.b16 %v3327
      %v3393 = vunpack.c.l.b16 %v3330
      %v3394 = vunpack.c.l.b16 %v3333
      %v3395 = vunpack.c.l.b16 %v3337
      %v3396 = vunpack.c.l.b16 %v3340
      %v3397 = vunpack.c.l.b16 %v3343
      %v3398 = vunpack.c.l.b16 %v3347
      %v3399 = vunpack.c.l.b16 %v3350
      %v3400 = vunpack.c.l.b16 %v3353
      %v3401 = vunpack.c.l.b16 %v3357
      %v3402 = vunpack.c.l.b16 %v3360
      %v3403 = vunpack.c.l.b16 %v3363
      %v3404 = vunpack.c.l.b16 %v3367
      %v3405 = vunpack.c.l.b16 %v3370
      %v3406 = vunpack.c.l.b16 %v3373
      %v3407 = vunpack.c.l.b16 %v3377
      %v3408 = vunpack.c.l.b16 %v3380
      %v3409 = vunpack.c.l.b16 %v3383
      %v3410 = vpack.c.b16 %v3387, %v3386
      %v3411 = vpack.c.b16 %v3389, %v3388
      %v3412 = vpack.c.b16 %v3391, %v3390
      %v3413 = vpack.c.b16 %v3393, %v3392
      %v3414 = vpack.c.b16 %v3395, %v3394
      %v3415 = vpack.c.b16 %v3397, %v3396
      %v3416 = vpack.c.b16 %v3399, %v3398
      %v3417 = vpack.c.b16 %v3401, %v3400
      %v3418 = vpack.c.b16 %v3403, %v3402
      %v3419 = vpack.c.b16 %v3405, %v3404
      %v3420 = vpack.c.b16 %v3407, %v3406
      %v3421 = vpack.c.b16 %v3409, %v3408
      %v3423 = vsel %vm547, %v3410, 0
      %v3426 = vsel %vm547, %v3411, 0
      %v3429 = vsel %vm547, %v3412, 0
      %v3432 = vsel %vm547, %v3413, 0
      %v3435 = vsel %vm547, %v3414, 0
      %v3438 = vsel %vm547, %v3415, 0
      %v3441 = vsel %vm547, %v3416, 0
      %v3444 = vsel %vm547, %v3417, 0
      %v3447 = vsel %vm547, %v3418, 0
      %v3450 = vsel %vm547, %v3419, 0
      %v3453 = vsel %vm547, %v3420, 0
      %v3456 = vsel %vm547, %v3421, 0
      %v3459 = vsel %vm584, %v3385, 0
      %3461 = vmatprep.subr.bf16.mxu0 0
      %3462 = vmatpush1.bf16.msra.mxu0 %v3459
      %3463 = vmatprep.subr.bf16.mxu0 0
      %3464 = vmatpush1.bf16.msra.mxu0 0
      %3465 = vmatprep.subr.bf16.mxu0 0
      %3466 = vmatpush1.bf16.msra.mxu0 0
      %3467 = vmatprep.subr.bf16.mxu0 0
      %3468 = vmatpush1.bf16.msra.mxu0 0
      %3469 = vmatprep.subr.bf16.mxu0 0
      %3470 = vmatpush1.bf16.msra.mxu0 0
      %3471 = vmatprep.subr.bf16.mxu0 0
      %3472 = vmatpush1.bf16.msra.mxu0 0
      %3473 = vmatprep.subr.bf16.mxu0 0
      %3474 = vmatpush1.bf16.msra.mxu0 0
      %3475 = vmatprep.subr.bf16.mxu0 0
      %3476 = vmatpush1.bf16.msra.mxu0 0
      %3477 = vmatprep.subr.bf16.mxu0 0
      %3478 = vmatpush1.bf16.msra.mxu0 0
      %3479 = vmatprep.subr.bf16.mxu0 0
      %3480 = vmatpush1.bf16.msra.mxu0 0
      %3481 = vmatprep.subr.bf16.mxu0 0
      %3482 = vmatpush1.bf16.msra.mxu0 0
      %3483 = vmatprep.subr.bf16.mxu0 0
      %3484 = vmatpush1.bf16.msra.mxu0 0
      %3485 = vmatprep.subr.bf16.mxu0 0
      %3486 = vmatpush1.bf16.msra.mxu0 0
      %3487 = vmatprep.subr.bf16.mxu0 0
      %3488 = vmatpush1.bf16.msra.mxu0 0
      %3489 = vmatprep.subr.bf16.mxu0 0
      %3490 = vmatpush1.bf16.msra.mxu0 0
      %3491 = vmatprep.subr.bf16.mxu0 0
      %3492 = vmatpush1.bf16.msra.mxu0 0
      %3493 = vmatprep.mubr.bf16.mxu0 0
      %3494 = vmatmul.mubr.bf16.gmra.mrb[0].mxu0 %v3423
      %v3495 = vpop.f32.mrb[0].mxu0
      %v3496 = vadd.f32 0.0, %v3495
      %v3497 = vpop.f32.mrb[0].mxu0
      %v3498 = vpop.f32.mrb[0].mxu0
      %v3499 = vadd.f32 0.0, %v3498
      %v3500 = vpop.f32.mrb[0].mxu0
      %3501 = vmatprep.mubr.bf16.mxu0 0
      %3502 = vmatmul.mubr.bf16.gmra.mrb[0].mxu0 %v3426
      %v3503 = vpop.f32.mrb[0].mxu0
      %v3504 = vadd.f32 0.0, %v3503
      %v3505 = vpop.f32.mrb[0].mxu0
      %v3506 = vpop.f32.mrb[0].mxu0
      %v3507 = vadd.f32 0.0, %v3506
      %v3508 = vpop.f32.mrb[0].mxu0
      %3509 = vmatprep.mubr.bf16.mxu0 0
      %3510 = vmatmul.mubr.bf16.gmra.mrb[0].mxu0 %v3429
      %v3511 = vpop.f32.mrb[0].mxu0
      %v3512 = vadd.f32 0.0, %v3511
      %v3513 = vpop.f32.mrb[0].mxu0
      %v3514 = vpop.f32.mrb[0].mxu0
      %v3515 = vadd.f32 0.0, %v3514
      %v3516 = vpop.f32.mrb[0].mxu0
      %3517 = vmatprep.mubr.bf16.mxu0 0
      %3518 = vmatmul.mubr.bf16.gmra.mrb[0].mxu0 %v3432
      %v3519 = vpop.f32.mrb[0].mxu0
      %v3520 = vadd.f32 0.0, %v3519
      %v3521 = vpop.f32.mrb[0].mxu0
      %v3522 = vpop.f32.mrb[0].mxu0
      %v3523 = vadd.f32 0.0, %v3522
      %v3524 = vpop.f32.mrb[0].mxu0
      %3525 = vmatprep.mubr.bf16.mxu0 0
      %3526 = vmatmul.mubr.bf16.gmra.mrb[0].mxu0 %v3435
      %v3527 = vpop.f32.mrb[0].mxu0
      %v3528 = vadd.f32 0.0, %v3527
      %v3529 = vpop.f32.mrb[0].mxu0
      %v3530 = vpop.f32.mrb[0].mxu0
      %v3531 = vadd.f32 0.0, %v3530
      %v3532 = vpop.f32.mrb[0].mxu0
      %3533 = vmatprep.mubr.bf16.mxu0 0
      %3534 = vmatmul.mubr.bf16.gmra.mrb[0].mxu0 %v3438
      %v3535 = vpop.f32.mrb[0].mxu0
      %v3536 = vadd.f32 0.0, %v3535
      %v3537 = vpop.f32.mrb[0].mxu0
      %v3538 = vpop.f32.mrb[0].mxu0
      %v3539 = vadd.f32 0.0, %v3538
      %v3540 = vpop.f32.mrb[0].mxu0
      %3541 = vmatprep.mubr.bf16.mxu0 0
      %3542 = vmatmul.mubr.bf16.gmra.mrb[0].mxu0 %v3441
      %v3543 = vpop.f32.mrb[0].mxu0
      %v3544 = vadd.f32 0.0, %v3543
      %v3545 = vpop.f32.mrb[0].mxu0
      %v3546 = vpop.f32.mrb[0].mxu0
      %v3547 = vadd.f32 0.0, %v3546
      %v3548 = vpop.f32.mrb[0].mxu0
      %3549 = vmatprep.mubr.bf16.mxu0 0
      %3550 = vmatmul.mubr.bf16.gmra.mrb[0].mxu0 %v3444
      %v3551 = vpop.f32.mrb[0].mxu0
      %v3552 = vadd.f32 0.0, %v3551
      %v3553 = vpop.f32.mrb[0].mxu0
      %v3554 = vpop.f32.mrb[0].mxu0
      %v3555 = vadd.f32 0.0, %v3554
      %v3556 = vpop.f32.mrb[0].mxu0
      %3557 = vmatprep.mubr.bf16.mxu0 0
      %3558 = vmatmul.mubr.bf16.gmra.mrb[0].mxu0 %v3447
      %v3559 = vpop.f32.mrb[0].mxu0
      %v3560 = vadd.f32 0.0, %v3559
      %v3561 = vpop.f32.mrb[0].mxu0
      %v3562 = vpop.f32.mrb[0].mxu0
      %v3563 = vadd.f32 0.0, %v3562
      %v3564 = vpop.f32.mrb[0].mxu0
      %3565 = vmatprep.mubr.bf16.mxu0 0
      %3566 = vmatmul.mubr.bf16.gmra.mrb[0].mxu0 %v3450
      %v3567 = vpop.f32.mrb[0].mxu0
      %v3568 = vadd.f32 0.0, %v3567
      %v3569 = vpop.f32.mrb[0].mxu0
      %v3570 = vpop.f32.mrb[0].mxu0
      %v3571 = vadd.f32 0.0, %v3570
      %v3572 = vpop.f32.mrb[0].mxu0
      %3573 = vmatprep.mubr.bf16.mxu0 0
      %3574 = vmatmul.mubr.bf16.gmra.mrb[0].mxu0 %v3453
      %v3575 = vpop.f32.mrb[0].mxu0
      %v3576 = vadd.f32 0.0, %v3575
      %v3577 = vpop.f32.mrb[0].mxu0
      %v3578 = vpop.f32.mrb[0].mxu0
      %v3579 = vadd.f32 0.0, %v3578
      %v3580 = vpop.f32.mrb[0].mxu0
      %3581 = vmatprep.mubr.bf16.mxu0 0
      %3582 = vmatmul.mubr.bf16.gmra.mrb[0].mxu0 %v3456
      %v3583 = vpop.f32.mrb[0].mxu0
      %v3584 = vadd.f32 0.0, %v3583
      %v3585 = vpop.f32.mrb[0].mxu0
      %v3586 = vpop.f32.mrb[0].mxu0
      %v3587 = vadd.f32 0.0, %v3586
      %v3588 = vpop.f32.mrb[0].mxu0
      %3589 = vdwg.mxu0
      %v3590 = vadd.f32 %v3240, %v3496
      %v3591 = vadd.f32 %v3241, %v3499
      %v3592 = vadd.f32 %v3242, %v3504
      %v3593 = vadd.f32 %v3243, %v3507
      %v3594 = vadd.f32 %v3244, %v3512
      %v3595 = vadd.f32 %v3245, %v3515
      %v3596 = vadd.f32 %v3246, %v3520
      %v3597 = vadd.f32 %v3247, %v3523
      %v3598 = vadd.f32 %v3248, %v3528
      %v3599 = vadd.f32 %v3249, %v3531
      %v3600 = vadd.f32 %v3250, %v3536
      %v3601 = vadd.f32 %v3251, %v3539
      %v3602 = vadd.f32 %v3252, %v3544
      %v3603 = vadd.f32 %v3253, %v3547
      %v3604 = vadd.f32 %v3254, %v3552
      %v3605 = vadd.f32 %v3255, %v3555
      %v3606 = vadd.f32 %v3256, %v3560
      %v3607 = vadd.f32 %v3257, %v3563
      %v3608 = vadd.f32 %v3258, %v3568
      %v3609 = vadd.f32 %v3259, %v3571
      %v3610 = vadd.f32 %v3260, %v3576
      %v3611 = vadd.f32 %v3261, %v3579
      %v3612 = vadd.f32 %v3262, %v3584
      %v3613 = vadd.f32 %v3263, %v3587
      %v3614 = vld [vmem:[%s2] sm:$0x1]
      %v3616 = vlaneseq
      %v3617 = vshrl.u32 %v3616, 7
      %v3618 = vsub.s32 0, %v3617
      %v3619 = vrot.slane %v3614, %v3618
      %v3621 = vadd.f32 %v3590, %v3619
      %v3622 = vadd.f32 %v3591, %v3619
      %v3623 = vadd.f32 %v3592, %v3619
      %v3624 = vadd.f32 %v3593, %v3619
      %v3625 = vadd.f32 %v3594, %v3619
      %v3626 = vadd.f32 %v3595, %v3619
      %v3627 = vadd.f32 %v3596, %v3619
      %v3628 = vadd.f32 %v3597, %v3619
      %v3629 = vadd.f32 %v3598, %v3619
      %v3630 = vadd.f32 %v3599, %v3619
      %v3631 = vadd.f32 %v3600, %v3619
      %v3632 = vadd.f32 %v3601, %v3619
      %v3633 = vadd.f32 %v3602, %v3619
      %v3634 = vadd.f32 %v3603, %v3619
      %v3635 = vadd.f32 %v3604, %v3619
      %v3636 = vadd.f32 %v3605, %v3619
      %v3637 = vadd.f32 %v3606, %v3619
      %v3638 = vadd.f32 %v3607, %v3619
      %v3639 = vadd.f32 %v3608, %v3619
      %v3640 = vadd.f32 %v3609, %v3619
      %v3641 = vadd.f32 %v3610, %v3619
      %v3642 = vadd.f32 %v3611, %v3619
      %v3643 = vadd.f32 %v3612, %v3619
      %v3644 = vadd.f32 %v3613, %v3619
      %vm3645 = vcmp.gt.f32.partialorder %v3621, 0.0
      %vm3646 = vcmp.gt.f32.partialorder %v3622, 0.0
      %vm3647 = vcmp.gt.f32.partialorder %v3623, 0.0
      %vm3648 = vcmp.gt.f32.partialorder %v3624, 0.0
      %vm3649 = vcmp.gt.f32.partialorder %v3625, 0.0
      %vm3650 = vcmp.gt.f32.partialorder %v3626, 0.0
      %vm3651 = vcmp.gt.f32.partialorder %v3627, 0.0
      %vm3652 = vcmp.gt.f32.partialorder %v3628, 0.0
      %vm3653 = vcmp.gt.f32.partialorder %v3629, 0.0
      %vm3654 = vcmp.gt.f32.partialorder %v3630, 0.0
      %vm3655 = vcmp.gt.f32.partialorder %v3631, 0.0
      %vm3656 = vcmp.gt.f32.partialorder %v3632, 0.0
      %vm3657 = vcmp.gt.f32.partialorder %v3633, 0.0
      %vm3658 = vcmp.gt.f32.partialorder %v3634, 0.0
      %vm3659 = vcmp.gt.f32.partialorder %v3635, 0.0
      %vm3660 = vcmp.gt.f32.partialorder %v3636, 0.0
      %vm3661 = vcmp.gt.f32.partialorder %v3637, 0.0
      %vm3662 = vcmp.gt.f32.partialorder %v3638, 0.0
      %vm3663 = vcmp.gt.f32.partialorder %v3639, 0.0
      %vm3664 = vcmp.gt.f32.partialorder %v3640, 0.0
      %vm3665 = vcmp.gt.f32.partialorder %v3641, 0.0
      %vm3666 = vcmp.gt.f32.partialorder %v3642, 0.0
      %vm3667 = vcmp.gt.f32.partialorder %v3643, 0.0
      %vm3668 = vcmp.gt.f32.partialorder %v3644, 0.0
      %v3669 = vmul.f32 %v3621, 0.2
      %v3670 = vmul.f32 %v3622, 0.2
      %v3671 = vmul.f32 %v3623, 0.2
      %v3672 = vmul.f32 %v3624, 0.2
      %v3673 = vmul.f32 %v3625, 0.2
      %v3674 = vmul.f32 %v3626, 0.2
      %v3675 = vmul.f32 %v3627, 0.2
      %v3676 = vmul.f32 %v3628, 0.2
      %v3677 = vmul.f32 %v3629, 0.2
      %v3678 = vmul.f32 %v3630, 0.2
      %v3679 = vmul.f32 %v3631, 0.2
      %v3680 = vmul.f32 %v3632, 0.2
      %v3681 = vmul.f32 %v3633, 0.2
      %v3682 = vmul.f32 %v3634, 0.2
      %v3683 = vmul.f32 %v3635, 0.2
      %v3684 = vmul.f32 %v3636, 0.2
      %v3685 = vmul.f32 %v3637, 0.2
      %v3686 = vmul.f32 %v3638, 0.2
      %v3687 = vmul.f32 %v3639, 0.2
      %v3688 = vmul.f32 %v3640, 0.2
      %v3689 = vmul.f32 %v3641, 0.2
      %v3690 = vmul.f32 %v3642, 0.2
      %v3691 = vmul.f32 %v3643, 0.2
      %v3692 = vmul.f32 %v3644, 0.2
      %v3693 = vsel %vm3645, %v3621, %v3669
      %v3694 = vsel %vm3646, %v3622, %v3670
      %v3695 = vsel %vm3647, %v3623, %v3671
      %v3696 = vsel %vm3648, %v3624, %v3672
      %v3697 = vsel %vm3649, %v3625, %v3673
      %v3698 = vsel %vm3650, %v3626, %v3674
      %v3699 = vsel %vm3651, %v3627, %v3675
      %v3700 = vsel %vm3652, %v3628, %v3676
      %v3701 = vsel %vm3653, %v3629, %v3677
      %v3702 = vsel %vm3654, %v3630, %v3678
      %v3703 = vsel %vm3655, %v3631, %v3679
      %v3704 = vsel %vm3656, %v3632, %v3680
      %v3705 = vsel %vm3657, %v3633, %v3681
      %v3706 = vsel %vm3658, %v3634, %v3682
      %v3707 = vsel %vm3659, %v3635, %v3683
      %v3708 = vsel %vm3660, %v3636, %v3684
      %v3709 = vsel %vm3661, %v3637, %v3685
      %v3710 = vsel %vm3662, %v3638, %v3686
      %v3711 = vsel %vm3663, %v3639, %v3687
      %v3712 = vsel %vm3664, %v3640, %v3688
      %v3713 = vsel %vm3665, %v3641, %v3689
      %v3714 = vsel %vm3666, %v3642, %v3690
      %v3715 = vsel %vm3667, %v3643, %v3691
      %v3716 = vsel %vm3668, %v3644, %v3692
      %v3717 = vstv %s197
      %v3718 = vadd.s32 %v3717, 1
      %v3719 = vadd.s32 %v3717, 2
      %v3720 = vadd.s32 %v3717, 3
      %v3721 = vadd.s32 %v3717, 4
      %v3722 = vadd.s32 %v3717, 5
      %v3723 = vadd.s32 %v3717, 6
      %v3724 = vadd.s32 %v3717, 7
      %v3725 = vlaneseq
      %v3726 = vshrl.u32 %v3725, 7
      %v3727 = vadd.s32 %v3726, 8
      %v3728 = vadd.s32 %v3726, 16
      %vm3729 = vcmp.ge.s32.totalorder %v3717, 1
      %vm3730 = vcmp.ge.s32.totalorder %v3718, 1
      %vm3731 = vcmp.ge.s32.totalorder %v3719, 1
      %vm3732 = vcmp.ge.s32.totalorder %v3720, 1
      %vm3733 = vcmp.ge.s32.totalorder %v3721, 1
      %vm3734 = vcmp.ge.s32.totalorder %v3722, 1
      %vm3735 = vcmp.ge.s32.totalorder %v3723, 1
      %vm3736 = vcmp.ge.s32.totalorder %v3724, 1
      %vm3737 = vcmp.le.s32.totalorder %v3717, 15
      %vm3738 = vcmp.le.s32.totalorder %v3718, 15
      %vm3739 = vcmp.le.s32.totalorder %v3719, 15
      %vm3740 = vcmp.le.s32.totalorder %v3720, 15
      %vm3741 = vcmp.le.s32.totalorder %v3721, 15
      %vm3742 = vcmp.le.s32.totalorder %v3722, 15
      %vm3743 = vcmp.le.s32.totalorder %v3723, 15
      %vm3744 = vcmp.le.s32.totalorder %v3724, 15
      %vm3745 = vmand %vm3729, %vm3737
      %vm3746 = vmand %vm3730, %vm3738
      %vm3747 = vmand %vm3731, %vm3739
      %vm3748 = vmand %vm3732, %vm3740
      %vm3749 = vmand %vm3733, %vm3741
      %vm3750 = vmand %vm3734, %vm3742
      %vm3751 = vmand %vm3735, %vm3743
      %vm3752 = vmand %vm3736, %vm3744
      %vm3753 = vcmp.ge.s32.totalorder %v3726, 1
      %vm3754 = vcmp.ge.s32.totalorder %v3727, 1
      %vm3755 = vcmp.ge.s32.totalorder %v3728, 1
      %vm3756 = vmand %vm3745, %vm3753
      %vm3757 = vmand %vm3745, %vm3754
      %vm3758 = vmand %vm3745, %vm3755
      %vm3759 = vmand %vm3746, %vm3753
      %vm3760 = vmand %vm3746, %vm3754
      %vm3761 = vmand %vm3746, %vm3755
      %vm3762 = vmand %vm3747, %vm3753
      %vm3763 = vmand %vm3747, %vm3754
      %vm3764 = vmand %vm3747, %vm3755
      %vm3765 = vmand %vm3748, %vm3753
      %vm3766 = vmand %vm3748, %vm3754
      %vm3767 = vmand %vm3748, %vm3755
      %vm3768 = vmand %vm3749, %vm3753
      %vm3769 = vmand %vm3749, %vm3754
      %vm3770 = vmand %vm3749, %vm3755
      %vm3771 = vmand %vm3750, %vm3753
      %vm3772 = vmand %vm3750, %vm3754
      %vm3773 = vmand %vm3750, %vm3755
      %vm3774 = vmand %vm3751, %vm3753
      %vm3775 = vmand %vm3751, %vm3754
      %vm3776 = vmand %vm3751, %vm3755
      %vm3777 = vmand %vm3752, %vm3753
      %vm3778 = vmand %vm3752, %vm3754
      %vm3779 = vmand %vm3752, %vm3755
      %vm3780 = vcmp.le.s32.totalorder %v3726, 16
      %vm3781 = vcmp.le.s32.totalorder %v3727, 16
      %vm3782 = vcmp.le.s32.totalorder %v3728, 16
      %vm3783 = vmand %vm3756, %vm3780
      %vm3784 = vmand %vm3757, %vm3781
      %vm3785 = vmand %vm3758, %vm3782
      %vm3786 = vmand %vm3759, %vm3780
      %vm3787 = vmand %vm3760, %vm3781
      %vm3788 = vmand %vm3761, %vm3782
      %vm3789 = vmand %vm3762, %vm3780
      %vm3790 = vmand %vm3763, %vm3781
      %vm3791 = vmand %vm3764, %vm3782
      %vm3792 = vmand %vm3765, %vm3780
      %vm3793 = vmand %vm3766, %vm3781
      %vm3794 = vmand %vm3767, %vm3782
      %vm3795 = vmand %vm3768, %vm3780
      %vm3796 = vmand %vm3769, %vm3781
      %vm3797 = vmand %vm3770, %vm3782
      %vm3798 = vmand %vm3771, %vm3780
      %vm3799 = vmand %vm3772, %vm3781
      %vm3800 = vmand %vm3773, %vm3782
      %vm3801 = vmand %vm3774, %vm3780
      %vm3802 = vmand %vm3775, %vm3781
      %vm3803 = vmand %vm3776, %vm3782
      %vm3804 = vmand %vm3777, %vm3780
      %vm3805 = vmand %vm3778, %vm3781
      %vm3806 = vmand %vm3779, %vm3782
      %v3807 = vsel %vm3783, 1, 0
      %v3808 = vsel %vm3784, 1, 0
      %v3809 = vsel %vm3785, 1, 0
      %v3810 = vsel %vm3786, 1, 0
      %v3811 = vsel %vm3787, 1, 0
      %v3812 = vsel %vm3788, 1, 0
      %v3813 = vsel %vm3789, 1, 0
      %v3814 = vsel %vm3790, 1, 0
      %v3815 = vsel %vm3791, 1, 0
      %v3816 = vsel %vm3792, 1, 0
      %v3817 = vsel %vm3793, 1, 0
      %v3818 = vsel %vm3794, 1, 0
      %v3819 = vsel %vm3795, 1, 0
      %v3820 = vsel %vm3796, 1, 0
      %v3821 = vsel %vm3797, 1, 0
      %v3822 = vsel %vm3798, 1, 0
      %v3823 = vsel %vm3799, 1, 0
      %v3824 = vsel %vm3800, 1, 0
      %v3825 = vsel %vm3801, 1, 0
      %v3826 = vsel %vm3802, 1, 0
      %v3827 = vsel %vm3803, 1, 0
      %v3828 = vsel %vm3804, 1, 0
      %v3829 = vsel %vm3805, 1, 0
      %v3830 = vsel %vm3806, 1, 0
      %vm3831 = vcmp.eq.s32.totalorder %v3807, 1
      %vm3832 = vcmp.eq.s32.totalorder %v3808, 1
      %vm3833 = vcmp.eq.s32.totalorder %v3809, 1
      %vm3834 = vcmp.eq.s32.totalorder %v3810, 1
      %vm3835 = vcmp.eq.s32.totalorder %v3811, 1
      %vm3836 = vcmp.eq.s32.totalorder %v3812, 1
      %vm3837 = vcmp.eq.s32.totalorder %v3813, 1
      %vm3838 = vcmp.eq.s32.totalorder %v3814, 1
      %vm3839 = vcmp.eq.s32.totalorder %v3815, 1
      %vm3840 = vcmp.eq.s32.totalorder %v3816, 1
      %vm3841 = vcmp.eq.s32.totalorder %v3817, 1
      %vm3842 = vcmp.eq.s32.totalorder %v3818, 1
      %vm3843 = vcmp.eq.s32.totalorder %v3819, 1
      %vm3844 = vcmp.eq.s32.totalorder %v3820, 1
      %vm3845 = vcmp.eq.s32.totalorder %v3821, 1
      %vm3846 = vcmp.eq.s32.totalorder %v3822, 1
      %vm3847 = vcmp.eq.s32.totalorder %v3823, 1
      %vm3848 = vcmp.eq.s32.totalorder %v3824, 1
      %vm3849 = vcmp.eq.s32.totalorder %v3825, 1
      %vm3850 = vcmp.eq.s32.totalorder %v3826, 1
      %vm3851 = vcmp.eq.s32.totalorder %v3827, 1
      %vm3852 = vcmp.eq.s32.totalorder %v3828, 1
      %vm3853 = vcmp.eq.s32.totalorder %v3829, 1
      %vm3854 = vcmp.eq.s32.totalorder %v3830, 1
      %v3855 = vsel %vm3831, %v3693, 0.0
      %v3856 = vsel %vm3832, %v3694, 0.0
      %v3857 = vsel %vm3833, %v3695, 0.0
      %v3858 = vsel %vm3834, %v3696, 0.0
      %v3859 = vsel %vm3835, %v3697, 0.0
      %v3860 = vsel %vm3836, %v3698, 0.0
      %v3861 = vsel %vm3837, %v3699, 0.0
      %v3862 = vsel %vm3838, %v3700, 0.0
      %v3863 = vsel %vm3839, %v3701, 0.0
      %v3864 = vsel %vm3840, %v3702, 0.0
      %v3865 = vsel %vm3841, %v3703, 0.0
      %v3866 = vsel %vm3842, %v3704, 0.0
      %v3867 = vsel %vm3843, %v3705, 0.0
      %v3868 = vsel %vm3844, %v3706, 0.0
      %v3869 = vsel %vm3845, %v3707, 0.0
      %v3870 = vsel %vm3846, %v3708, 0.0
      %v3871 = vsel %vm3847, %v3709, 0.0
      %v3872 = vsel %vm3848, %v3710, 0.0
      %v3873 = vsel %vm3849, %v3711, 0.0
      %v3874 = vsel %vm3850, %v3712, 0.0
      %v3875 = vsel %vm3851, %v3713, 0.0
      %v3876 = vsel %vm3852, %v3714, 0.0
      %v3877 = vsel %vm3853, %v3715, 0.0
      %v3878 = vsel %vm3854, %v3716, 0.0
      %v3879 = vpack.c.bf16 %v3856, %v3855
      %v3880 = vpack.c.bf16 %v3857, %v3857
      %v3881 = vpack.c.bf16 %v3859, %v3858
      %v3882 = vpack.c.bf16 %v3860, %v3860
      %v3883 = vpack.c.bf16 %v3862, %v3861
      %v3884 = vpack.c.bf16 %v3863, %v3863
      %v3885 = vpack.c.bf16 %v3865, %v3864
      %v3886 = vpack.c.bf16 %v3866, %v3866
      %v3887 = vpack.c.bf16 %v3868, %v3867
      %v3888 = vpack.c.bf16 %v3869, %v3869
      %v3889 = vpack.c.bf16 %v3871, %v3870
      %v3890 = vpack.c.bf16 %v3872, %v3872
      %v3891 = vpack.c.bf16 %v3874, %v3873
      %v3892 = vpack.c.bf16 %v3875, %v3875
      %v3893 = vpack.c.bf16 %v3877, %v3876
      %v3894 = vpack.c.bf16 %v3878, %v3878
      %v3911 = vunpack.c.l.b16 %v3879
      %v3912 = vunpack.c.h.b16 %v3879
      %v3913 = vunpack.c.l.b16 %v3880
      %v3914 = vunpack.c.l.b16 %v3881
      %v3915 = vunpack.c.h.b16 %v3881
      %v3916 = vunpack.c.l.b16 %v3882
      %v3917 = vunpack.c.l.b16 %v3883
      %v3918 = vunpack.c.h.b16 %v3883
      %v3919 = vunpack.c.l.b16 %v3884
      %v3920 = vunpack.c.l.b16 %v3885
      %v3921 = vunpack.c.h.b16 %v3885
      %v3922 = vunpack.c.l.b16 %v3886
      %v3923 = vunpack.c.l.b16 %v3887
      %v3924 = vunpack.c.h.b16 %v3887
      %v3925 = vunpack.c.l.b16 %v3888
      %v3926 = vunpack.c.l.b16 %v3889
      %v3927 = vunpack.c.h.b16 %v3889
      %v3928 = vunpack.c.l.b16 %v3890
      %v3929 = vunpack.c.l.b16 %v3891
      %v3930 = vunpack.c.h.b16 %v3891
      %v3931 = vunpack.c.l.b16 %v3892
      %v3932 = vunpack.c.l.b16 %v3893
      %v3933 = vunpack.c.h.b16 %v3893
      %v3934 = vunpack.c.l.b16 %v3894
      %v3935 = vpack.c.b16 %v3911, %v3911
      %v3936 = vpack.c.b16 %v3912, %v3912
      %v3937 = vpack.c.b16 %v3913, %v3913
      %v3938 = vpack.c.b16 %v3914, %v3914
      %v3939 = vpack.c.b16 %v3915, %v3915
      %v3940 = vpack.c.b16 %v3916, %v3916
      %v3941 = vpack.c.b16 %v3917, %v3917
      %v3942 = vpack.c.b16 %v3918, %v3918
      %v3943 = vpack.c.b16 %v3919, %v3919
      %v3944 = vpack.c.b16 %v3920, %v3920
      %v3945 = vpack.c.b16 %v3921, %v3921
      %v3946 = vpack.c.b16 %v3922, %v3922
      %v3947 = vpack.c.b16 %v3923, %v3923
      %v3948 = vpack.c.b16 %v3924, %v3924
      %v3949 = vpack.c.b16 %v3925, %v3925
      %v3950 = vpack.c.b16 %v3926, %v3926
      %v3951 = vpack.c.b16 %v3927, %v3927
      %v3952 = vpack.c.b16 %v3928, %v3928
      %v3953 = vpack.c.b16 %v3929, %v3929
      %v3954 = vpack.c.b16 %v3930, %v3930
      %v3955 = vpack.c.b16 %v3931, %v3931
      %v3956 = vpack.c.b16 %v3932, %v3932
      %v3957 = vpack.c.b16 %v3933, %v3933
      %v3958 = vpack.c.b16 %v3934, %v3934
      %vm3983 = vcmask 257024
      %3984 = vst.msk [vmem:[%s194] sm:$0xf] %vm3983, %v3935
      %3985 = vst.msk [vmem:[%s194 + $0x4] sm:$0xf] %vm3983, %v3936
      %3986 = vst.msk [vmem:[%s194 + $0x8] sm:$0xf] %vm3983, %v3937
      %3987 = vst.msk [vmem:[%s194 + $0xc] sm:$0xf] %vm3983, %v3938
      %3988 = vst.msk [vmem:[%s194 + $0x10] sm:$0xf] %vm3983, %v3939
      %3989 = vst.msk [vmem:[%s194 + $0x14] sm:$0xf] %vm3983, %v3940
      %3990 = vst.msk [vmem:[%s194 + $0x18] sm:$0xf] %vm3983, %v3941
      %3991 = vst.msk [vmem:[%s194 + $0x1c] sm:$0xf] %vm3983, %v3942
      %3992 = vst.msk [vmem:[%s194 + $0x20] sm:$0xf] %vm3983, %v3943
      %3993 = vst.msk [vmem:[%s194 + $0x24] sm:$0xf] %vm3983, %v3944
      %3994 = vst.msk [vmem:[%s194 + $0x28] sm:$0xf] %vm3983, %v3945
      %3995 = vst.msk [vmem:[%s194 + $0x2c] sm:$0xf] %vm3983, %v3946
      %3996 = vst.msk [vmem:[%s194 + $0x30] sm:$0xf] %vm3983, %v3947
      %3997 = vst.msk [vmem:[%s194 + $0x34] sm:$0xf] %vm3983, %v3948
      %3998 = vst.msk [vmem:[%s194 + $0x38] sm:$0xf] %vm3983, %v3949
      %3999 = vst.msk [vmem:[%s194 + $0x3c] sm:$0xf] %vm3983, %v3950
      %4000 = vst.msk [vmem:[%s194 + $0x40] sm:$0xf] %vm3983, %v3951
      %4001 = vst.msk [vmem:[%s194 + $0x44] sm:$0xf] %vm3983, %v3952
      %4002 = vst.msk [vmem:[%s194 + $0x48] sm:$0xf] %vm3983, %v3953
      %4003 = vst.msk [vmem:[%s194 + $0x4c] sm:$0xf] %vm3983, %v3954
      %4004 = vst.msk [vmem:[%s194 + $0x50] sm:$0xf] %vm3983, %v3955
      %4005 = vst.msk [vmem:[%s194 + $0x54] sm:$0xf] %vm3983, %v3956
      %4006 = vst.msk [vmem:[%s194 + $0x58] sm:$0xf] %vm3983, %v3957
      %4007 = vst.msk [vmem:[%s194 + $0x5c] sm:$0xf] %vm3983, %v3958
      %s4008 = smul.u32 8, %s19
      %p4009 = scmp.lt.s32.totalorder %s18, 1
      %s4010 = scalar_select %p4009, %s18, 1
      %p4011 = scmp.lt.s32.totalorder %s4008, 23
      %s4012 = scalar_select %p4011, %s4008, 23
      %s4013 = smul.addr %s4012, 3
      %s4014 = smul.addr %s4010, 72
      %s4015 = sadd.s32 %s4013, %s4014
      %s4016 = smul.addr %s4015, 4
      %s4017 = scalar_lea.vmem %s3, %s4016
      // Predicated region
      $region33: #{audio_derivative_encoder.2} parent=31 // pred_check
        %p4018 = pneg %p114
      $region34: #{audio_derivative_encoder.2} parent=31 // pred_check_branch
        %4020 = sbr.rel (%p4018) target = $region36
      $region35: #{audio_derivative_encoder.2} parent=31 // pred_region
        %s4021 = smul.u32 8, %s19
      $region36: #{audio_derivative_encoder.2} parent=31 // pred_fallthru
        _
    $region32: #{audio_derivative_encoder.2} parent=5 // pred_fallthru
      _
    %p4022 = scmp.le.s32.totalorder 2, %s9
    // Predicated region
    $region37: #{audio_derivative_encoder.2} parent=5 // pred_check
      %p4023 = pneg %p4022
    $region38: #{audio_derivative_encoder.2} parent=5 // pred_check_branch
      %4025 = sbr.rel (%p4023) target = $region40
    $region39: #{audio_derivative_encoder.2} parent=5 // pred_region
      %s4026 = ssub.s32 %s9, 2
      // Predicated region
      $region41: #{audio_derivative_encoder.2} parent=39 // pred_check
        %p4027 = pneg %p120
      $region42: #{audio_derivative_encoder.2} parent=39 // pred_check_branch
        %4029 = sbr.rel (%p4027) target = $region44
      $region43: #{audio_derivative_encoder.2} parent=39 // pred_region
        %s4030 = smul.u32 8, %s21
        %p4031 = scmp.lt.s32.totalorder %s20, 1
        %s4032 = scalar_select %p4031, %s20, 1
        %p4033 = scmp.lt.s32.totalorder %s4030, 23
        %s4034 = scalar_select %p4033, %s4030, 23
        %s4035 = smul.addr %s4034, 3
        %s4036 = smul.addr %s4032, 72
        %s4037 = sadd.s32 %s4035, %s4036
        %s4038 = smul.addr %s4037, 4
        %s4039 = scalar_lea.vmem %s3, %s4038
      $region44: #{audio_derivative_encoder.2} parent=39 // pred_fallthru
        _
    $region40: #{audio_derivative_encoder.2} parent=5 // pred_fallthru
      _
  $region6: #{audio_derivative_encoder.2} parent=0 // loop_footer
    %s13 = sadd.s32 1, %s9
  $region7: #{audio_derivative_encoder.2} parent=0 // loop_footer_branch
    %8 = sbr.rel target = $region3
  $region8: #{audio_derivative_encoder.2} parent=0 // loop_exit
    _

</llo_original>
